<compile_context>
chip_gen: v7x
topology: tpu7x:2x2x1
jax: 0.10.0
libtpu: 0.0.40
codegen_flags: <defaults>
</compile_context>

<pallas_src>
import functools

import jax
import jax.numpy as jnp
from jax import lax
from jax.experimental import pallas as pl
from jax.experimental.pallas import tpu as pltpu


# ----------------------------------------------------------------------------
# Pallas kernel: in-kernel tap-accumulated conv + bias + LeakyReLU(0.3) + BN
# ----------------------------------------------------------------------------
def _conv_block_kernel(x_ref, w_ref, aff_ref, o_ref, *, m_rows, ws, k2):
    # x_ref:   (HS*WS, C2)       bf16  space-to-depth'd, padded, flattened rows
    # w_ref:   (k2*k2, C2, Cout) bf16  per-tap weight slabs (resident)
    # aff_ref: (3, Cout)         f32   rows = [conv bias; bn scale; bn shift]
    # o_ref:   (OH*WS, Cout)           output; cols ow >= OW are junk, sliced
    #                                  off by the caller.
    acc = jnp.zeros(o_ref.shape, jnp.float32)
    for ta in range(k2):            # s2d row tap
        for tb in range(k2):        # s2d col tap
            off = ta * ws + tb      # static row offset into the flattened slab
            lhs = x_ref[off:off + m_rows, :]
            acc = acc + jnp.dot(lhs, w_ref[ta * k2 + tb],
                                preferred_element_type=jnp.float32)
    y = acc + aff_ref[0:1, :]                                  # conv bias
    y = jnp.where(y >= 0, y, jnp.float32(0.3) * y)             # LeakyReLU(0.3)
    o_ref[...] = (y * aff_ref[1:2, :] + aff_ref[2:3, :]).astype(o_ref.dtype)


def _fused_conv_matmul(xs2, w2, aff, *, oh, ws, k2, out_dtype):
    """xs2: (N, HS*WS, C2) bf16, w2: (k2*k2, C2, Cout) bf16 -> (N, OH*WS, Cout)."""
    N, R, C2 = xs2.shape
    T, _, Cout = w2.shape
    M = oh * ws

    kern = functools.partial(_conv_block_kernel, m_rows=M, ws=ws, k2=k2)

    cost = pl.CostEstimate(
        flops=2 * N * M * C2 * Cout * T,
        transcendentals=0,
        bytes_accessed=(N * R * C2 * 2) + (T * C2 * Cout * 2)
                       + (N * M * Cout * jnp.dtype(out_dtype).itemsize)
                       + (3 * Cout * 4),
    )

    return pl.pallas_call(
        kern,
        out_shape=jax.ShapeDtypeStruct((N, M, Cout), out_dtype),
        grid=(N,),
        in_specs=[
            pl.BlockSpec((None, R, C2), lambda n: (n, 0, 0)),   # per-sample slab
            pl.BlockSpec((T, C2, Cout), lambda n: (0, 0, 0)),   # resident weights
            pl.BlockSpec((3, Cout), lambda n: (0, 0)),          # resident affine
        ],
        out_specs=pl.BlockSpec((None, M, Cout), lambda n: (n, 0, 0)),
        compiler_params=pltpu.CompilerParams(
            dimension_semantics=("parallel",),
            vmem_limit_bytes=32 * 1024 * 1024,
        ),
        cost_estimate=cost,
    )(xs2, w2, aff)


# ----------------------------------------------------------------------------
# Glue (plain JAX, zero byte expansion): pad + space-to-depth + weight reorder
# ----------------------------------------------------------------------------
def _prep_input(x_nhwc, kernel, stride, padding):
    """Pad + space-to-depth by the stride + flatten rows.

    Returns xs2 (N, HS*WS, S*S*Cin) bf16 with
      xs2[n, i*WS + j, (a*S + b)*Cin + c] = xpad[n, S*i + a, S*j + b, c].
    """
    N, H, W, Cin = x_nhwc.shape
    K, S, P = kernel, stride, padding
    OH = (H + 2 * P - K) // S + 1
    OW = (W + 2 * P - K) // S + 1
    K2 = -(-K // S)                 # ceil(K / S): s2d kernel extent
    HS = OH + K2                    # one extra s2d row: flattened-slice overrun guard
    WS = OW + K2 - 1
    Hp, Wp = S * HS, S * WS
    pad_h, pad_w = Hp - H - P, Wp - W - P
    assert pad_h >= 0 and pad_w >= 0, (pad_h, pad_w)

    xp = jnp.pad(x_nhwc.astype(jnp.bfloat16),
                 ((0, 0), (P, pad_h), (P, pad_w), (0, 0)))
    xs = xp.reshape(N, HS, S, WS, S, Cin)
    xs = jnp.transpose(xs, (0, 1, 3, 2, 4, 5)).reshape(N, HS * WS, S * S * Cin)
    return xs, OH, OW, WS, K2


def _prep_weight(w, kernel, stride):
    """(Cout, Cin, K, K) torch layout -> (K2*K2, S*S*Cin, Cout) bf16 tap slabs."""
    Cout, Cin, K, _ = w.shape
    S = stride
    K2 = -(-K // S)
    wt = jnp.transpose(w, (2, 3, 1, 0))                            # (K, K, Cin, Cout)
    wt = jnp.pad(wt, ((0, S * K2 - K), (0, S * K2 - K), (0, 0), (0, 0)))
    wt = wt.reshape(K2, S, K2, S, Cin, Cout)
    wt = jnp.transpose(wt, (0, 2, 1, 3, 4, 5))                     # (a',b',a,b,c,co)
    return wt.reshape(K2 * K2, S * S * Cin, Cout).astype(jnp.bfloat16)


def encode_block(x_nhwc, params, kernel, stride, padding, out_dtype=jnp.bfloat16):
    """One EncodeBlock (eval mode). (N,H,W,Cin) -> (N,OH,OW,Cout)."""
    w = params["conv_w"]
    eps = 1e-5
    scale = (params["bn_gamma"] / jnp.sqrt(params["bn_var"] + eps)).astype(jnp.float32)
    shift = (params["bn_beta"] - params["bn_mean"] * scale).astype(jnp.float32)
    aff = jnp.stack([params["conv_b"].astype(jnp.float32), scale, shift], axis=0)

    xs2, OH, OW, WS, K2 = _prep_input(x_nhwc, kernel, stride, padding)
    w2 = _prep_weight(w, kernel, stride)
    Cout = w.shape[0]
    N = x_nhwc.shape[0]

    out = _fused_conv_matmul(xs2, w2, aff, oh=OH, ws=WS, k2=K2, out_dtype=out_dtype)
    # Drop the junk columns ow >= OW introduced by the flattened-row trick.
    return out.reshape(N, OH, WS, Cout)[:, :, :OW, :]


_BLOCK_CFG = [
    # (in_ch, out_ch, kernel, stride, padding)
    (3, 8, 7, 2, 3),
    (8, 16, 3, 2, 1),
    (16, 32, 3, 2, 1),
    (32, 64, 3, 2, 1),
]


def init_encoder_params(key, channels=3):
    cfgs = []
    cin = channels
    for (_, cout, k, s, p) in _BLOCK_CFG:
        cfgs.append((cin, cout, k, s, p))
        cin = cout

    params = []
    for (cin, cout, k, _, _) in cfgs:
        key, k1, k2, k3, k4, k5, k6 = jax.random.split(key, 7)
        fan_in = cin * k * k
        params.append({
            "conv_w": jax.random.normal(k1, (cout, cin, k, k), jnp.float32)
                      * (1.0 / jnp.sqrt(fan_in)),
            "conv_b": jax.random.normal(k2, (cout,), jnp.float32) * 0.1,
            "bn_gamma": 1.0 + 0.1 * jax.random.normal(k3, (cout,), jnp.float32),
            "bn_beta": 0.1 * jax.random.normal(k4, (cout,), jnp.float32),
            "bn_mean": 0.1 * jax.random.normal(k5, (cout,), jnp.float32),
            "bn_var": jax.random.uniform(k6, (cout,), jnp.float32,
                                         minval=0.5, maxval=1.5),
        })
    return params


@jax.jit
def encoder_forward(x_nchw, params):
    """Encoder forward. x_nchw: (N, C, H, W) -> (N, 64, H/16, W/16), NCHW."""
    out = jnp.transpose(x_nchw, (0, 2, 3, 1))        # NCHW -> NHWC
    n_blocks = len(_BLOCK_CFG)
    for i, (p, cfg) in enumerate(zip(params, _BLOCK_CFG)):
        _, _, k, s, pad = cfg
        dt = jnp.float32 if i == n_blocks - 1 else jnp.bfloat16
        out = encode_block(out, p, k, s, pad, out_dtype=dt)
    return jnp.transpose(out, (0, 3, 1, 2))           # NHWC -> NCHW


# ----------------------------------------------------------------------------
# Pure-JAX reference (lax.conv, f32) for a correctness sanity check
# ----------------------------------------------------------------------------
def _reference_forward(x_nchw, params):
    out = x_nchw
    for p, cfg in zip(params, _BLOCK_CFG):
        _, _, k, s, pad = cfg
        conv = lax.conv_general_dilated(
            out, p["conv_w"], window_strides=(s, s),
            padding=[(pad, pad), (pad, pad)],
            dimension_numbers=("NCHW", "OIHW", "NCHW"))
        conv = conv + p["conv_b"][None, :, None, None]
        act = jnp.where(conv >= 0, conv, 0.3 * conv)
        eps = 1e-5
        scale = p["bn_gamma"] / jnp.sqrt(p["bn_var"] + eps)
        shift = p["bn_beta"] - p["bn_mean"] * scale
        out = act * scale[None, :, None, None] + shift[None, :, None, None]
    return out


if __name__ == "__main__":
    key = jax.random.PRNGKey(0)
    kp, kx = jax.random.split(key)
    params = init_encoder_params(kp, channels=3)

    # small input: batch=2, channels=3, spatial=32 (stride-2 x4 -> 2x2 output)
    x = jax.random.normal(kx, (2, 3, 32, 32), jnp.float32)

    y = encoder_forward(x, params)
    y = jax.block_until_ready(y)
    assert y.shape == (2, 64, 2, 2), y.shape

    y_ref = _reference_forward(x, params)
    max_err = float(jnp.max(jnp.abs(y - y_ref)))
    # bf16 activations/weights across 4 chained blocks -> modest tolerance
    assert jnp.allclose(y, y_ref, rtol=5e-2, atol=5e-2), max_err

    print("KERNEL_OK")
</pallas_src>

<mosaic_0001>
module attributes {stable_mosaic.version = 11 : i64} {
  func.func @_conv_block_kernel(%arg0: i32, %arg1: memref<1x380x12xbf16, #tpu.memory_space<vmem>>, %arg2: memref<16x12x8xbf16, #tpu.memory_space<vmem>>, %arg3: memref<3x8xf32, #tpu.memory_space<vmem>>, %arg4: memref<1x304x8xbf16, #tpu.memory_space<vmem>>) attributes {dimension_semantics = [#tpu.dimension_semantics<parallel>], iteration_bounds = array<i64: 2>, scalar_prefetch = 0 : i64, scratch_operands = 0 : i64, tpu.core_type = #tpu.core_type<tc>, window_params = [{transform_indices = @transform_0, window_bounds = array<i64: 1, 380, 12>}, {pipeline_mode = #tpu.pipeline_mode<synchronous>, transform_indices = @transform_1, window_bounds = array<i64: 16, 12, 8>}, {pipeline_mode = #tpu.pipeline_mode<synchronous>, transform_indices = @transform_2, window_bounds = array<i64: 3, 8>}, {transform_indices = @transform_3, window_bounds = array<i64: 1, 304, 8>}]} {
    %cst = arith.constant 0.000000e+00 : f32
    %0 = vector.broadcast %cst : f32 to vector<304x8xf32>
    %c0 = arith.constant 0 : index
    %c0_0 = arith.constant 0 : index
    %c0_1 = arith.constant 0 : index
    %1 = vector.load %arg1[%c0, %c0_0, %c0_1] : memref<1x380x12xbf16, #tpu.memory_space<vmem>>, vector<1x304x12xbf16>
    %2 = vector.shape_cast %1 : vector<1x304x12xbf16> to vector<304x12xbf16>
    %c0_2 = arith.constant 0 : index
    %c0_3 = arith.constant 0 : index
    %c0_4 = arith.constant 0 : index
    %3 = vector.load %arg2[%c0_2, %c0_3, %c0_4] : memref<16x12x8xbf16, #tpu.memory_space<vmem>>, vector<1x12x8xbf16>
    %4 = vector.shape_cast %3 : vector<1x12x8xbf16> to vector<12x8xbf16>
    %cst_5 = arith.constant dense<0.000000e+00> : vector<304x8xf32>
    %5 = tpu.matmul %2, %4, %cst_5 {dimension_numbers = #tpu.dot_dimension_numbers<[1], [0], [0], [1], [0, 0, 1, 1], [], []>} : vector<304x12xbf16>, vector<12x8xbf16>, vector<304x8xf32> -> vector<304x8xf32>
    %6 = arith.addf %0, %5 : vector<304x8xf32>
    %c0_6 = arith.constant 0 : index
    %c1 = arith.constant 1 : index
    %c0_7 = arith.constant 0 : index
    %7 = vector.load %arg1[%c0_6, %c1, %c0_7] : memref<1x380x12xbf16, #tpu.memory_space<vmem>>, vector<1x304x12xbf16>
    %8 = vector.shape_cast %7 : vector<1x304x12xbf16> to vector<304x12xbf16>
    %c1_8 = arith.constant 1 : index
    %c0_9 = arith.constant 0 : index
    %c0_10 = arith.constant 0 : index
    %9 = vector.load %arg2[%c1_8, %c0_9, %c0_10] : memref<16x12x8xbf16, #tpu.memory_space<vmem>>, vector<1x12x8xbf16>
    %10 = vector.shape_cast %9 : vector<1x12x8xbf16> to vector<12x8xbf16>
    %cst_11 = arith.constant dense<0.000000e+00> : vector<304x8xf32>
    %11 = tpu.matmul %8, %10, %cst_11 {dimension_numbers = #tpu.dot_dimension_numbers<[1], [0], [0], [1], [0, 0, 1, 1], [], []>} : vector<304x12xbf16>, vector<12x8xbf16>, vector<304x8xf32> -> vector<304x8xf32>
    %12 = arith.addf %6, %11 : vector<304x8xf32>
    %c0_12 = arith.constant 0 : index
    %c2 = arith.constant 2 : index
    %c0_13 = arith.constant 0 : index
    %13 = vector.load %arg1[%c0_12, %c2, %c0_13] : memref<1x380x12xbf16, #tpu.memory_space<vmem>>, vector<1x304x12xbf16>
    %14 = vector.shape_cast %13 : vector<1x304x12xbf16> to vector<304x12xbf16>
    %c2_14 = arith.constant 2 : index
    %c0_15 = arith.constant 0 : index
    %c0_16 = arith.constant 0 : index
    %15 = vector.load %arg2[%c2_14, %c0_15, %c0_16] : memref<16x12x8xbf16, #tpu.memory_space<vmem>>, vector<1x12x8xbf16>
    %16 = vector.shape_cast %15 : vector<1x12x8xbf16> to vector<12x8xbf16>
    %cst_17 = arith.constant dense<0.000000e+00> : vector<304x8xf32>
    %17 = tpu.matmul %14, %16, %cst_17 {dimension_numbers = #tpu.dot_dimension_numbers<[1], [0], [0], [1], [0, 0, 1, 1], [], []>} : vector<304x12xbf16>, vector<12x8xbf16>, vector<304x8xf32> -> vector<304x8xf32>
    %18 = arith.addf %12, %17 : vector<304x8xf32>
    %c0_18 = arith.constant 0 : index
    %c3 = arith.constant 3 : index
    %c0_19 = arith.constant 0 : index
    %19 = vector.load %arg1[%c0_18, %c3, %c0_19] : memref<1x380x12xbf16, #tpu.memory_space<vmem>>, vector<1x304x12xbf16>
    %20 = vector.shape_cast %19 : vector<1x304x12xbf16> to vector<304x12xbf16>
    %c3_20 = arith.constant 3 : index
    %c0_21 = arith.constant 0 : index
    %c0_22 = arith.constant 0 : index
    %21 = vector.load %arg2[%c3_20, %c0_21, %c0_22] : memref<16x12x8xbf16, #tpu.memory_space<vmem>>, vector<1x12x8xbf16>
    %22 = vector.shape_cast %21 : vector<1x12x8xbf16> to vector<12x8xbf16>
    %cst_23 = arith.constant dense<0.000000e+00> : vector<304x8xf32>
    %23 = tpu.matmul %20, %22, %cst_23 {dimension_numbers = #tpu.dot_dimension_numbers<[1], [0], [0], [1], [0, 0, 1, 1], [], []>} : vector<304x12xbf16>, vector<12x8xbf16>, vector<304x8xf32> -> vector<304x8xf32>
    %24 = arith.addf %18, %23 : vector<304x8xf32>
    %c0_24 = arith.constant 0 : index
    %c19 = arith.constant 19 : index
    %c0_25 = arith.constant 0 : index
    %25 = vector.load %arg1[%c0_24, %c19, %c0_25] : memref<1x380x12xbf16, #tpu.memory_space<vmem>>, vector<1x304x12xbf16>
    %26 = vector.shape_cast %25 : vector<1x304x12xbf16> to vector<304x12xbf16>
    %c4 = arith.constant 4 : index
    %c0_26 = arith.constant 0 : index
    %c0_27 = arith.constant 0 : index
    %27 = vector.load %arg2[%c4, %c0_26, %c0_27] : memref<16x12x8xbf16, #tpu.memory_space<vmem>>, vector<1x12x8xbf16>
    %28 = vector.shape_cast %27 : vector<1x12x8xbf16> to vector<12x8xbf16>
    %cst_28 = arith.constant dense<0.000000e+00> : vector<304x8xf32>
    %29 = tpu.matmul %26, %28, %cst_28 {dimension_numbers = #tpu.dot_dimension_numbers<[1], [0], [0], [1], [0, 0, 1, 1], [], []>} : vector<304x12xbf16>, vector<12x8xbf16>, vector<304x8xf32> -> vector<304x8xf32>
    %30 = arith.addf %24, %29 : vector<304x8xf32>
    %c0_29 = arith.constant 0 : index
    %c20 = arith.constant 20 : index
    %c0_30 = arith.constant 0 : index
    %31 = vector.load %arg1[%c0_29, %c20, %c0_30] : memref<1x380x12xbf16, #tpu.memory_space<vmem>>, vector<1x304x12xbf16>
    %32 = vector.shape_cast %31 : vector<1x304x12xbf16> to vector<304x12xbf16>
    %c5 = arith.constant 5 : index
    %c0_31 = arith.constant 0 : index
    %c0_32 = arith.constant 0 : index
    %33 = vector.load %arg2[%c5, %c0_31, %c0_32] : memref<16x12x8xbf16, #tpu.memory_space<vmem>>, vector<1x12x8xbf16>
    %34 = vector.shape_cast %33 : vector<1x12x8xbf16> to vector<12x8xbf16>
    %cst_33 = arith.constant dense<0.000000e+00> : vector<304x8xf32>
    %35 = tpu.matmul %32, %34, %cst_33 {dimension_numbers = #tpu.dot_dimension_numbers<[1], [0], [0], [1], [0, 0, 1, 1], [], []>} : vector<304x12xbf16>, vector<12x8xbf16>, vector<304x8xf32> -> vector<304x8xf32>
    %36 = arith.addf %30, %35 : vector<304x8xf32>
    %c0_34 = arith.constant 0 : index
    %c21 = arith.constant 21 : index
    %c0_35 = arith.constant 0 : index
    %37 = vector.load %arg1[%c0_34, %c21, %c0_35] : memref<1x380x12xbf16, #tpu.memory_space<vmem>>, vector<1x304x12xbf16>
    %38 = vector.shape_cast %37 : vector<1x304x12xbf16> to vector<304x12xbf16>
    %c6 = arith.constant 6 : index
    %c0_36 = arith.constant 0 : index
    %c0_37 = arith.constant 0 : index
    %39 = vector.load %arg2[%c6, %c0_36, %c0_37] : memref<16x12x8xbf16, #tpu.memory_space<vmem>>, vector<1x12x8xbf16>
    %40 = vector.shape_cast %39 : vector<1x12x8xbf16> to vector<12x8xbf16>
    %cst_38 = arith.constant dense<0.000000e+00> : vector<304x8xf32>
    %41 = tpu.matmul %38, %40, %cst_38 {dimension_numbers = #tpu.dot_dimension_numbers<[1], [0], [0], [1], [0, 0, 1, 1], [], []>} : vector<304x12xbf16>, vector<12x8xbf16>, vector<304x8xf32> -> vector<304x8xf32>
    %42 = arith.addf %36, %41 : vector<304x8xf32>
    %c0_39 = arith.constant 0 : index
    %c22 = arith.constant 22 : index
    %c0_40 = arith.constant 0 : index
    %43 = vector.load %arg1[%c0_39, %c22, %c0_40] : memref<1x380x12xbf16, #tpu.memory_space<vmem>>, vector<1x304x12xbf16>
    %44 = vector.shape_cast %43 : vector<1x304x12xbf16> to vector<304x12xbf16>
    %c7 = arith.constant 7 : index
    %c0_41 = arith.constant 0 : index
    %c0_42 = arith.constant 0 : index
    %45 = vector.load %arg2[%c7, %c0_41, %c0_42] : memref<16x12x8xbf16, #tpu.memory_space<vmem>>, vector<1x12x8xbf16>
    %46 = vector.shape_cast %45 : vector<1x12x8xbf16> to vector<12x8xbf16>
    %cst_43 = arith.constant dense<0.000000e+00> : vector<304x8xf32>
    %47 = tpu.matmul %44, %46, %cst_43 {dimension_numbers = #tpu.dot_dimension_numbers<[1], [0], [0], [1], [0, 0, 1, 1], [], []>} : vector<304x12xbf16>, vector<12x8xbf16>, vector<304x8xf32> -> vector<304x8xf32>
    %48 = arith.addf %42, %47 : vector<304x8xf32>
    %c0_44 = arith.constant 0 : index
    %c38 = arith.constant 38 : index
    %c0_45 = arith.constant 0 : index
    %49 = vector.load %arg1[%c0_44, %c38, %c0_45] : memref<1x380x12xbf16, #tpu.memory_space<vmem>>, vector<1x304x12xbf16>
    %50 = vector.shape_cast %49 : vector<1x304x12xbf16> to vector<304x12xbf16>
    %c8 = arith.constant 8 : index
    %c0_46 = arith.constant 0 : index
    %c0_47 = arith.constant 0 : index
    %51 = vector.load %arg2[%c8, %c0_46, %c0_47] : memref<16x12x8xbf16, #tpu.memory_space<vmem>>, vector<1x12x8xbf16>
    %52 = vector.shape_cast %51 : vector<1x12x8xbf16> to vector<12x8xbf16>
    %cst_48 = arith.constant dense<0.000000e+00> : vector<304x8xf32>
    %53 = tpu.matmul %50, %52, %cst_48 {dimension_numbers = #tpu.dot_dimension_numbers<[1], [0], [0], [1], [0, 0, 1, 1], [], []>} : vector<304x12xbf16>, vector<12x8xbf16>, vector<304x8xf32> -> vector<304x8xf32>
    %54 = arith.addf %48, %53 : vector<304x8xf32>
    %c0_49 = arith.constant 0 : index
    %c39 = arith.constant 39 : index
    %c0_50 = arith.constant 0 : index
    %55 = vector.load %arg1[%c0_49, %c39, %c0_50] : memref<1x380x12xbf16, #tpu.memory_space<vmem>>, vector<1x304x12xbf16>
    %56 = vector.shape_cast %55 : vector<1x304x12xbf16> to vector<304x12xbf16>
    %c9 = arith.constant 9 : index
    %c0_51 = arith.constant 0 : index
    %c0_52 = arith.constant 0 : index
    %57 = vector.load %arg2[%c9, %c0_51, %c0_52] : memref<16x12x8xbf16, #tpu.memory_space<vmem>>, vector<1x12x8xbf16>
    %58 = vector.shape_cast %57 : vector<1x12x8xbf16> to vector<12x8xbf16>
    %cst_53 = arith.constant dense<0.000000e+00> : vector<304x8xf32>
    %59 = tpu.matmul %56, %58, %cst_53 {dimension_numbers = #tpu.dot_dimension_numbers<[1], [0], [0], [1], [0, 0, 1, 1], [], []>} : vector<304x12xbf16>, vector<12x8xbf16>, vector<304x8xf32> -> vector<304x8xf32>
    %60 = arith.addf %54, %59 : vector<304x8xf32>
    %c0_54 = arith.constant 0 : index
    %c40 = arith.constant 40 : index
    %c0_55 = arith.constant 0 : index
    %61 = vector.load %arg1[%c0_54, %c40, %c0_55] : memref<1x380x12xbf16, #tpu.memory_space<vmem>>, vector<1x304x12xbf16>
    %62 = vector.shape_cast %61 : vector<1x304x12xbf16> to vector<304x12xbf16>
    %c10 = arith.constant 10 : index
    %c0_56 = arith.constant 0 : index
    %c0_57 = arith.constant 0 : index
    %63 = vector.load %arg2[%c10, %c0_56, %c0_57] : memref<16x12x8xbf16, #tpu.memory_space<vmem>>, vector<1x12x8xbf16>
    %64 = vector.shape_cast %63 : vector<1x12x8xbf16> to vector<12x8xbf16>
    %cst_58 = arith.constant dense<0.000000e+00> : vector<304x8xf32>
    %65 = tpu.matmul %62, %64, %cst_58 {dimension_numbers = #tpu.dot_dimension_numbers<[1], [0], [0], [1], [0, 0, 1, 1], [], []>} : vector<304x12xbf16>, vector<12x8xbf16>, vector<304x8xf32> -> vector<304x8xf32>
    %66 = arith.addf %60, %65 : vector<304x8xf32>
    %c0_59 = arith.constant 0 : index
    %c41 = arith.constant 41 : index
    %c0_60 = arith.constant 0 : index
    %67 = vector.load %arg1[%c0_59, %c41, %c0_60] : memref<1x380x12xbf16, #tpu.memory_space<vmem>>, vector<1x304x12xbf16>
    %68 = vector.shape_cast %67 : vector<1x304x12xbf16> to vector<304x12xbf16>
    %c11 = arith.constant 11 : index
    %c0_61 = arith.constant 0 : index
    %c0_62 = arith.constant 0 : index
    %69 = vector.load %arg2[%c11, %c0_61, %c0_62] : memref<16x12x8xbf16, #tpu.memory_space<vmem>>, vector<1x12x8xbf16>
    %70 = vector.shape_cast %69 : vector<1x12x8xbf16> to vector<12x8xbf16>
    %cst_63 = arith.constant dense<0.000000e+00> : vector<304x8xf32>
    %71 = tpu.matmul %68, %70, %cst_63 {dimension_numbers = #tpu.dot_dimension_numbers<[1], [0], [0], [1], [0, 0, 1, 1], [], []>} : vector<304x12xbf16>, vector<12x8xbf16>, vector<304x8xf32> -> vector<304x8xf32>
    %72 = arith.addf %66, %71 : vector<304x8xf32>
    %c0_64 = arith.constant 0 : index
    %c57 = arith.constant 57 : index
    %c0_65 = arith.constant 0 : index
    %73 = vector.load %arg1[%c0_64, %c57, %c0_65] : memref<1x380x12xbf16, #tpu.memory_space<vmem>>, vector<1x304x12xbf16>
    %74 = vector.shape_cast %73 : vector<1x304x12xbf16> to vector<304x12xbf16>
    %c12 = arith.constant 12 : index
    %c0_66 = arith.constant 0 : index
    %c0_67 = arith.constant 0 : index
    %75 = vector.load %arg2[%c12, %c0_66, %c0_67] : memref<16x12x8xbf16, #tpu.memory_space<vmem>>, vector<1x12x8xbf16>
    %76 = vector.shape_cast %75 : vector<1x12x8xbf16> to vector<12x8xbf16>
    %cst_68 = arith.constant dense<0.000000e+00> : vector<304x8xf32>
    %77 = tpu.matmul %74, %76, %cst_68 {dimension_numbers = #tpu.dot_dimension_numbers<[1], [0], [0], [1], [0, 0, 1, 1], [], []>} : vector<304x12xbf16>, vector<12x8xbf16>, vector<304x8xf32> -> vector<304x8xf32>
    %78 = arith.addf %72, %77 : vector<304x8xf32>
    %c0_69 = arith.constant 0 : index
    %c58 = arith.constant 58 : index
    %c0_70 = arith.constant 0 : index
    %79 = vector.load %arg1[%c0_69, %c58, %c0_70] : memref<1x380x12xbf16, #tpu.memory_space<vmem>>, vector<1x304x12xbf16>
    %80 = vector.shape_cast %79 : vector<1x304x12xbf16> to vector<304x12xbf16>
    %c13 = arith.constant 13 : index
    %c0_71 = arith.constant 0 : index
    %c0_72 = arith.constant 0 : index
    %81 = vector.load %arg2[%c13, %c0_71, %c0_72] : memref<16x12x8xbf16, #tpu.memory_space<vmem>>, vector<1x12x8xbf16>
    %82 = vector.shape_cast %81 : vector<1x12x8xbf16> to vector<12x8xbf16>
    %cst_73 = arith.constant dense<0.000000e+00> : vector<304x8xf32>
    %83 = tpu.matmul %80, %82, %cst_73 {dimension_numbers = #tpu.dot_dimension_numbers<[1], [0], [0], [1], [0, 0, 1, 1], [], []>} : vector<304x12xbf16>, vector<12x8xbf16>, vector<304x8xf32> -> vector<304x8xf32>
    %84 = arith.addf %78, %83 : vector<304x8xf32>
    %c0_74 = arith.constant 0 : index
    %c59 = arith.constant 59 : index
    %c0_75 = arith.constant 0 : index
    %85 = vector.load %arg1[%c0_74, %c59, %c0_75] : memref<1x380x12xbf16, #tpu.memory_space<vmem>>, vector<1x304x12xbf16>
    %86 = vector.shape_cast %85 : vector<1x304x12xbf16> to vector<304x12xbf16>
    %c14 = arith.constant 14 : index
    %c0_76 = arith.constant 0 : index
    %c0_77 = arith.constant 0 : index
    %87 = vector.load %arg2[%c14, %c0_76, %c0_77] : memref<16x12x8xbf16, #tpu.memory_space<vmem>>, vector<1x12x8xbf16>
    %88 = vector.shape_cast %87 : vector<1x12x8xbf16> to vector<12x8xbf16>
    %cst_78 = arith.constant dense<0.000000e+00> : vector<304x8xf32>
    %89 = tpu.matmul %86, %88, %cst_78 {dimension_numbers = #tpu.dot_dimension_numbers<[1], [0], [0], [1], [0, 0, 1, 1], [], []>} : vector<304x12xbf16>, vector<12x8xbf16>, vector<304x8xf32> -> vector<304x8xf32>
    %90 = arith.addf %84, %89 : vector<304x8xf32>
    %c0_79 = arith.constant 0 : index
    %c60 = arith.constant 60 : index
    %c0_80 = arith.constant 0 : index
    %91 = vector.load %arg1[%c0_79, %c60, %c0_80] : memref<1x380x12xbf16, #tpu.memory_space<vmem>>, vector<1x304x12xbf16>
    %92 = vector.shape_cast %91 : vector<1x304x12xbf16> to vector<304x12xbf16>
    %c15 = arith.constant 15 : index
    %c0_81 = arith.constant 0 : index
    %c0_82 = arith.constant 0 : index
    %93 = vector.load %arg2[%c15, %c0_81, %c0_82] : memref<16x12x8xbf16, #tpu.memory_space<vmem>>, vector<1x12x8xbf16>
    %94 = vector.shape_cast %93 : vector<1x12x8xbf16> to vector<12x8xbf16>
    %cst_83 = arith.constant dense<0.000000e+00> : vector<304x8xf32>
    %95 = tpu.matmul %92, %94, %cst_83 {dimension_numbers = #tpu.dot_dimension_numbers<[1], [0], [0], [1], [0, 0, 1, 1], [], []>} : vector<304x12xbf16>, vector<12x8xbf16>, vector<304x8xf32> -> vector<304x8xf32>
    %96 = arith.addf %90, %95 : vector<304x8xf32>
    %c0_84 = arith.constant 0 : index
    %c0_85 = arith.constant 0 : index
    %97 = vector.load %arg3[%c0_84, %c0_85] : memref<3x8xf32, #tpu.memory_space<vmem>>, vector<1x8xf32>
    %98 = vector.broadcast %97 : vector<1x8xf32> to vector<304x8xf32>
    %99 = arith.addf %96, %98 : vector<304x8xf32>
    %cst_86 = arith.constant 0.000000e+00 : f32
    %100 = vector.broadcast %cst_86 : f32 to vector<304x8xf32>
    %101 = arith.cmpf oge, %99, %100 : vector<304x8xf32>
    %cst_87 = arith.constant 3.000000e-01 : f32
    %102 = vector.broadcast %cst_87 : f32 to vector<304x8xf32>
    %103 = arith.mulf %102, %99 : vector<304x8xf32>
    %104 = arith.select %101, %99, %103 : vector<304x8xi1>, vector<304x8xf32>
    %c1_88 = arith.constant 1 : index
    %c0_89 = arith.constant 0 : index
    %105 = vector.load %arg3[%c1_88, %c0_89] : memref<3x8xf32, #tpu.memory_space<vmem>>, vector<1x8xf32>
    %106 = vector.broadcast %105 : vector<1x8xf32> to vector<304x8xf32>
    %107 = arith.mulf %104, %106 : vector<304x8xf32>
    %c2_90 = arith.constant 2 : index
    %c0_91 = arith.constant 0 : index
    %108 = vector.load %arg3[%c2_90, %c0_91] : memref<3x8xf32, #tpu.memory_space<vmem>>, vector<1x8xf32>
    %109 = vector.broadcast %108 : vector<1x8xf32> to vector<304x8xf32>
    %110 = arith.addf %107, %109 : vector<304x8xf32>
    %111 = arith.truncf %110 : vector<304x8xf32> to vector<304x8xbf16>
    %c0_92 = arith.constant 0 : index
    %c0_93 = arith.constant 0 : index
    %c0_94 = arith.constant 0 : index
    %112 = vector.load %arg4[%c0_92, %c0_93, %c0_94] : memref<1x304x8xbf16, #tpu.memory_space<vmem>>, vector<1x304x8xbf16>
    %113 = vector.shape_cast %112 : vector<1x304x8xbf16> to vector<304x8xbf16>
    %114 = vector.shape_cast %111 : vector<304x8xbf16> to vector<1x304x8xbf16>
    tpu.vector_store %arg4[%c0_92, %c0_93, %c0_94], %114 {strides = array<i32>} : memref<1x304x8xbf16, #tpu.memory_space<vmem>>, vector<1x304x8xbf16>,
    return
  }
  func.func @transform_0(%arg0: i32) -> (i32, i32, i32) {
    %c0_i32 = arith.constant 0 : i32
    %c0_i32_0 = arith.constant 0 : i32
    %c0_i32_1 = arith.constant 0 : i32
    return %arg0, %c0_i32, %c0_i32_0 : i32, i32, i32
  }
  func.func @transform_1(%arg0: i32) -> (i32, i32, i32) {
    %c0_i32 = arith.constant 0 : i32
    %c0_i32_0 = arith.constant 0 : i32
    %c0_i32_1 = arith.constant 0 : i32
    %c0_i32_2 = arith.constant 0 : i32
    return %c0_i32, %c0_i32_0, %c0_i32_1 : i32, i32, i32
  }
  func.func @transform_2(%arg0: i32) -> (i32, i32) {
    %c0_i32 = arith.constant 0 : i32
    %c0_i32_0 = arith.constant 0 : i32
    %c0_i32_1 = arith.constant 0 : i32
    return %c0_i32, %c0_i32_0 : i32, i32
  }
  func.func @transform_3(%arg0: i32) -> (i32, i32, i32) {
    %c0_i32 = arith.constant 0 : i32
    %c0_i32_0 = arith.constant 0 : i32
    %c0_i32_1 = arith.constant 0 : i32
    return %arg0, %c0_i32, %c0_i32_0 : i32, i32, i32
  }
}

module attributes {stable_mosaic.version = 11 : i64} {
  func.func @_conv_block_kernel(%arg0: i32, %arg1: memref<1x90x32xbf16, #tpu.memory_space<vmem>>, %arg2: memref<4x32x16xbf16, #tpu.memory_space<vmem>>, %arg3: memref<3x16xf32, #tpu.memory_space<vmem>>, %arg4: memref<1x72x16xbf16, #tpu.memory_space<vmem>>) attributes {dimension_semantics = [#tpu.dimension_semantics<parallel>], iteration_bounds = array<i64: 2>, scalar_prefetch = 0 : i64, scratch_operands = 0 : i64, tpu.core_type = #tpu.core_type<tc>, window_params = [{transform_indices = @transform_0, window_bounds = array<i64: 1, 90, 32>}, {pipeline_mode = #tpu.pipeline_mode<synchronous>, transform_indices = @transform_1, window_bounds = array<i64: 4, 32, 16>}, {pipeline_mode = #tpu.pipeline_mode<synchronous>, transform_indices = @transform_2, window_bounds = array<i64: 3, 16>}, {transform_indices = @transform_3, window_bounds = array<i64: 1, 72, 16>}]} {
    %cst = arith.constant 0.000000e+00 : f32
    %0 = vector.broadcast %cst : f32 to vector<72x16xf32>
    %c0 = arith.constant 0 : index
    %c0_0 = arith.constant 0 : index
    %c0_1 = arith.constant 0 : index
    %1 = vector.load %arg1[%c0, %c0_0, %c0_1] : memref<1x90x32xbf16, #tpu.memory_space<vmem>>, vector<1x72x32xbf16>
    %2 = vector.shape_cast %1 : vector<1x72x32xbf16> to vector<72x32xbf16>
    %c0_2 = arith.constant 0 : index
    %c0_3 = arith.constant 0 : index
    %c0_4 = arith.constant 0 : index
    %3 = vector.load %arg2[%c0_2, %c0_3, %c0_4] : memref<4x32x16xbf16, #tpu.memory_space<vmem>>, vector<1x32x16xbf16>
    %4 = vector.shape_cast %3 : vector<1x32x16xbf16> to vector<32x16xbf16>
    %cst_5 = arith.constant dense<0.000000e+00> : vector<72x16xf32>
    %5 = tpu.matmul %2, %4, %cst_5 {dimension_numbers = #tpu.dot_dimension_numbers<[1], [0], [0], [1], [0, 0, 1, 1], [], []>} : vector<72x32xbf16>, vector<32x16xbf16>, vector<72x16xf32> -> vector<72x16xf32>
    %6 = arith.addf %0, %5 : vector<72x16xf32>
    %c0_6 = arith.constant 0 : index
    %c1 = arith.constant 1 : index
    %c0_7 = arith.constant 0 : index
    %7 = vector.load %arg1[%c0_6, %c1, %c0_7] : memref<1x90x32xbf16, #tpu.memory_space<vmem>>, vector<1x72x32xbf16>
    %8 = vector.shape_cast %7 : vector<1x72x32xbf16> to vector<72x32xbf16>
    %c1_8 = arith.constant 1 : index
    %c0_9 = arith.constant 0 : index
    %c0_10 = arith.constant 0 : index
    %9 = vector.load %arg2[%c1_8, %c0_9, %c0_10] : memref<4x32x16xbf16, #tpu.memory_space<vmem>>, vector<1x32x16xbf16>
    %10 = vector.shape_cast %9 : vector<1x32x16xbf16> to vector<32x16xbf16>
    %cst_11 = arith.constant dense<0.000000e+00> : vector<72x16xf32>
    %11 = tpu.matmul %8, %10, %cst_11 {dimension_numbers = #tpu.dot_dimension_numbers<[1], [0], [0], [1], [0, 0, 1, 1], [], []>} : vector<72x32xbf16>, vector<32x16xbf16>, vector<72x16xf32> -> vector<72x16xf32>
    %12 = arith.addf %6, %11 : vector<72x16xf32>
    %c0_12 = arith.constant 0 : index
    %c9 = arith.constant 9 : index
    %c0_13 = arith.constant 0 : index
    %13 = vector.load %arg1[%c0_12, %c9, %c0_13] : memref<1x90x32xbf16, #tpu.memory_space<vmem>>, vector<1x72x32xbf16>
    %14 = vector.shape_cast %13 : vector<1x72x32xbf16> to vector<72x32xbf16>
    %c2 = arith.constant 2 : index
    %c0_14 = arith.constant 0 : index
    %c0_15 = arith.constant 0 : index
    %15 = vector.load %arg2[%c2, %c0_14, %c0_15] : memref<4x32x16xbf16, #tpu.memory_space<vmem>>, vector<1x32x16xbf16>
    %16 = vector.shape_cast %15 : vector<1x32x16xbf16> to vector<32x16xbf16>
    %cst_16 = arith.constant dense<0.000000e+00> : vector<72x16xf32>
    %17 = tpu.matmul %14, %16, %cst_16 {dimension_numbers = #tpu.dot_dimension_numbers<[1], [0], [0], [1], [0, 0, 1, 1], [], []>} : vector<72x32xbf16>, vector<32x16xbf16>, vector<72x16xf32> -> vector<72x16xf32>
    %18 = arith.addf %12, %17 : vector<72x16xf32>
    %c0_17 = arith.constant 0 : index
    %c10 = arith.constant 10 : index
    %c0_18 = arith.constant 0 : index
    %19 = vector.load %arg1[%c0_17, %c10, %c0_18] : memref<1x90x32xbf16, #tpu.memory_space<vmem>>, vector<1x72x32xbf16>
    %20 = vector.shape_cast %19 : vector<1x72x32xbf16> to vector<72x32xbf16>
    %c3 = arith.constant 3 : index
    %c0_19 = arith.constant 0 : index
    %c0_20 = arith.constant 0 : index
    %21 = vector.load %arg2[%c3, %c0_19, %c0_20] : memref<4x32x16xbf16, #tpu.memory_space<vmem>>, vector<1x32x16xbf16>
    %22 = vector.shape_cast %21 : vector<1x32x16xbf16> to vector<32x16xbf16>
    %cst_21 = arith.constant dense<0.000000e+00> : vector<72x16xf32>
    %23 = tpu.matmul %20, %22, %cst_21 {dimension_numbers = #tpu.dot_dimension_numbers<[1], [0], [0], [1], [0, 0, 1, 1], [], []>} : vector<72x32xbf16>, vector<32x16xbf16>, vector<72x16xf32> -> vector<72x16xf32>
    %24 = arith.addf %18, %23 : vector<72x16xf32>
    %c0_22 = arith.constant 0 : index
    %c0_23 = arith.constant 0 : index
    %25 = vector.load %arg3[%c0_22, %c0_23] : memref<3x16xf32, #tpu.memory_space<vmem>>, vector<1x16xf32>
    %26 = vector.broadcast %25 : vector<1x16xf32> to vector<72x16xf32>
    %27 = arith.addf %24, %26 : vector<72x16xf32>
    %cst_24 = arith.constant 0.000000e+00 : f32
    %28 = vector.broadcast %cst_24 : f32 to vector<72x16xf32>
    %29 = arith.cmpf oge, %27, %28 : vector<72x16xf32>
    %cst_25 = arith.constant 3.000000e-01 : f32
    %30 = vector.broadcast %cst_25 : f32 to vector<72x16xf32>
    %31 = arith.mulf %30, %27 : vector<72x16xf32>
    %32 = arith.select %29, %27, %31 : vector<72x16xi1>, vector<72x16xf32>
    %c1_26 = arith.constant 1 : index
    %c0_27 = arith.constant 0 : index
    %33 = vector.load %arg3[%c1_26, %c0_27] : memref<3x16xf32, #tpu.memory_space<vmem>>, vector<1x16xf32>
    %34 = vector.broadcast %33 : vector<1x16xf32> to vector<72x16xf32>
    %35 = arith.mulf %32, %34 : vector<72x16xf32>
    %c2_28 = arith.constant 2 : index
    %c0_29 = arith.constant 0 : index
    %36 = vector.load %arg3[%c2_28, %c0_29] : memref<3x16xf32, #tpu.memory_space<vmem>>, vector<1x16xf32>
    %37 = vector.broadcast %36 : vector<1x16xf32> to vector<72x16xf32>
    %38 = arith.addf %35, %37 : vector<72x16xf32>
    %39 = arith.truncf %38 : vector<72x16xf32> to vector<72x16xbf16>
    %c0_30 = arith.constant 0 : index
    %c0_31 = arith.constant 0 : index
    %c0_32 = arith.constant 0 : index
    %40 = vector.load %arg4[%c0_30, %c0_31, %c0_32] : memref<1x72x16xbf16, #tpu.memory_space<vmem>>, vector<1x72x16xbf16>
    %41 = vector.shape_cast %40 : vector<1x72x16xbf16> to vector<72x16xbf16>
    %42 = vector.shape_cast %39 : vector<72x16xbf16> to vector<1x72x16xbf16>
    tpu.vector_store %arg4[%c0_30, %c0_31, %c0_32], %42 {strides = array<i32>} : memref<1x72x16xbf16, #tpu.memory_space<vmem>>, vector<1x72x16xbf16>,
    return
  }
  func.func @transform_0(%arg0: i32) -> (i32, i32, i32) {
    %c0_i32 = arith.constant 0 : i32
    %c0_i32_0 = arith.constant 0 : i32
    %c0_i32_1 = arith.constant 0 : i32
    return %arg0, %c0_i32, %c0_i32_0 : i32, i32, i32
  }
  func.func @transform_1(%arg0: i32) -> (i32, i32, i32) {
    %c0_i32 = arith.constant 0 : i32
    %c0_i32_0 = arith.constant 0 : i32
    %c0_i32_1 = arith.constant 0 : i32
    %c0_i32_2 = arith.constant 0 : i32
    return %c0_i32, %c0_i32_0, %c0_i32_1 : i32, i32, i32
  }
  func.func @transform_2(%arg0: i32) -> (i32, i32) {
    %c0_i32 = arith.constant 0 : i32
    %c0_i32_0 = arith.constant 0 : i32
    %c0_i32_1 = arith.constant 0 : i32
    return %c0_i32, %c0_i32_0 : i32, i32
  }
  func.func @transform_3(%arg0: i32) -> (i32, i32, i32) {
    %c0_i32 = arith.constant 0 : i32
    %c0_i32_0 = arith.constant 0 : i32
    %c0_i32_1 = arith.constant 0 : i32
    return %arg0, %c0_i32, %c0_i32_0 : i32, i32, i32
  }
}

module attributes {stable_mosaic.version = 11 : i64} {
  func.func @_conv_block_kernel(%arg0: i32, %arg1: memref<1x30x64xbf16, #tpu.memory_space<vmem>>, %arg2: memref<4x64x32xbf16, #tpu.memory_space<vmem>>, %arg3: memref<3x32xf32, #tpu.memory_space<vmem>>, %arg4: memref<1x20x32xbf16, #tpu.memory_space<vmem>>) attributes {dimension_semantics = [#tpu.dimension_semantics<parallel>], iteration_bounds = array<i64: 2>, scalar_prefetch = 0 : i64, scratch_operands = 0 : i64, tpu.core_type = #tpu.core_type<tc>, window_params = [{transform_indices = @transform_0, window_bounds = array<i64: 1, 30, 64>}, {pipeline_mode = #tpu.pipeline_mode<synchronous>, transform_indices = @transform_1, window_bounds = array<i64: 4, 64, 32>}, {pipeline_mode = #tpu.pipeline_mode<synchronous>, transform_indices = @transform_2, window_bounds = array<i64: 3, 32>}, {transform_indices = @transform_3, window_bounds = array<i64: 1, 20, 32>}]} {
    %cst = arith.constant 0.000000e+00 : f32
    %0 = vector.broadcast %cst : f32 to vector<20x32xf32>
    %c0 = arith.constant 0 : index
    %c0_0 = arith.constant 0 : index
    %c0_1 = arith.constant 0 : index
    %1 = vector.load %arg1[%c0, %c0_0, %c0_1] : memref<1x30x64xbf16, #tpu.memory_space<vmem>>, vector<1x20x64xbf16>
    %2 = vector.shape_cast %1 : vector<1x20x64xbf16> to vector<20x64xbf16>
    %c0_2 = arith.constant 0 : index
    %c0_3 = arith.constant 0 : index
    %c0_4 = arith.constant 0 : index
    %3 = vector.load %arg2[%c0_2, %c0_3, %c0_4] : memref<4x64x32xbf16, #tpu.memory_space<vmem>>, vector<1x64x32xbf16>
    %4 = vector.shape_cast %3 : vector<1x64x32xbf16> to vector<64x32xbf16>
    %cst_5 = arith.constant dense<0.000000e+00> : vector<20x32xf32>
    %5 = tpu.matmul %2, %4, %cst_5 {dimension_numbers = #tpu.dot_dimension_numbers<[1], [0], [0], [1], [0, 0, 1, 1], [], []>} : vector<20x64xbf16>, vector<64x32xbf16>, vector<20x32xf32> -> vector<20x32xf32>
    %6 = arith.addf %0, %5 : vector<20x32xf32>
    %c0_6 = arith.constant 0 : index
    %c1 = arith.constant 1 : index
    %c0_7 = arith.constant 0 : index
    %7 = vector.load %arg1[%c0_6, %c1, %c0_7] : memref<1x30x64xbf16, #tpu.memory_space<vmem>>, vector<1x20x64xbf16>
    %8 = vector.shape_cast %7 : vector<1x20x64xbf16> to vector<20x64xbf16>
    %c1_8 = arith.constant 1 : index
    %c0_9 = arith.constant 0 : index
    %c0_10 = arith.constant 0 : index
    %9 = vector.load %arg2[%c1_8, %c0_9, %c0_10] : memref<4x64x32xbf16, #tpu.memory_space<vmem>>, vector<1x64x32xbf16>
    %10 = vector.shape_cast %9 : vector<1x64x32xbf16> to vector<64x32xbf16>
    %cst_11 = arith.constant dense<0.000000e+00> : vector<20x32xf32>
    %11 = tpu.matmul %8, %10, %cst_11 {dimension_numbers = #tpu.dot_dimension_numbers<[1], [0], [0], [1], [0, 0, 1, 1], [], []>} : vector<20x64xbf16>, vector<64x32xbf16>, vector<20x32xf32> -> vector<20x32xf32>
    %12 = arith.addf %6, %11 : vector<20x32xf32>
    %c0_12 = arith.constant 0 : index
    %c5 = arith.constant 5 : index
    %c0_13 = arith.constant 0 : index
    %13 = vector.load %arg1[%c0_12, %c5, %c0_13] : memref<1x30x64xbf16, #tpu.memory_space<vmem>>, vector<1x20x64xbf16>
    %14 = vector.shape_cast %13 : vector<1x20x64xbf16> to vector<20x64xbf16>
    %c2 = arith.constant 2 : index
    %c0_14 = arith.constant 0 : index
    %c0_15 = arith.constant 0 : index
    %15 = vector.load %arg2[%c2, %c0_14, %c0_15] : memref<4x64x32xbf16, #tpu.memory_space<vmem>>, vector<1x64x32xbf16>
    %16 = vector.shape_cast %15 : vector<1x64x32xbf16> to vector<64x32xbf16>
    %cst_16 = arith.constant dense<0.000000e+00> : vector<20x32xf32>
    %17 = tpu.matmul %14, %16, %cst_16 {dimension_numbers = #tpu.dot_dimension_numbers<[1], [0], [0], [1], [0, 0, 1, 1], [], []>} : vector<20x64xbf16>, vector<64x32xbf16>, vector<20x32xf32> -> vector<20x32xf32>
    %18 = arith.addf %12, %17 : vector<20x32xf32>
    %c0_17 = arith.constant 0 : index
    %c6 = arith.constant 6 : index
    %c0_18 = arith.constant 0 : index
    %19 = vector.load %arg1[%c0_17, %c6, %c0_18] : memref<1x30x64xbf16, #tpu.memory_space<vmem>>, vector<1x20x64xbf16>
    %20 = vector.shape_cast %19 : vector<1x20x64xbf16> to vector<20x64xbf16>
    %c3 = arith.constant 3 : index
    %c0_19 = arith.constant 0 : index
    %c0_20 = arith.constant 0 : index
    %21 = vector.load %arg2[%c3, %c0_19, %c0_20] : memref<4x64x32xbf16, #tpu.memory_space<vmem>>, vector<1x64x32xbf16>
    %22 = vector.shape_cast %21 : vector<1x64x32xbf16> to vector<64x32xbf16>
    %cst_21 = arith.constant dense<0.000000e+00> : vector<20x32xf32>
    %23 = tpu.matmul %20, %22, %cst_21 {dimension_numbers = #tpu.dot_dimension_numbers<[1], [0], [0], [1], [0, 0, 1, 1], [], []>} : vector<20x64xbf16>, vector<64x32xbf16>, vector<20x32xf32> -> vector<20x32xf32>
    %24 = arith.addf %18, %23 : vector<20x32xf32>
    %c0_22 = arith.constant 0 : index
    %c0_23 = arith.constant 0 : index
    %25 = vector.load %arg3[%c0_22, %c0_23] : memref<3x32xf32, #tpu.memory_space<vmem>>, vector<1x32xf32>
    %26 = vector.broadcast %25 : vector<1x32xf32> to vector<20x32xf32>
    %27 = arith.addf %24, %26 : vector<20x32xf32>
    %cst_24 = arith.constant 0.000000e+00 : f32
    %28 = vector.broadcast %cst_24 : f32 to vector<20x32xf32>
    %29 = arith.cmpf oge, %27, %28 : vector<20x32xf32>
    %cst_25 = arith.constant 3.000000e-01 : f32
    %30 = vector.broadcast %cst_25 : f32 to vector<20x32xf32>
    %31 = arith.mulf %30, %27 : vector<20x32xf32>
    %32 = arith.select %29, %27, %31 : vector<20x32xi1>, vector<20x32xf32>
    %c1_26 = arith.constant 1 : index
    %c0_27 = arith.constant 0 : index
    %33 = vector.load %arg3[%c1_26, %c0_27] : memref<3x32xf32, #tpu.memory_space<vmem>>, vector<1x32xf32>
    %34 = vector.broadcast %33 : vector<1x32xf32> to vector<20x32xf32>
    %35 = arith.mulf %32, %34 : vector<20x32xf32>
    %c2_28 = arith.constant 2 : index
    %c0_29 = arith.constant 0 : index
    %36 = vector.load %arg3[%c2_28, %c0_29] : memref<3x32xf32, #tpu.memory_space<vmem>>, vector<1x32xf32>
    %37 = vector.broadcast %36 : vector<1x32xf32> to vector<20x32xf32>
    %38 = arith.addf %35, %37 : vector<20x32xf32>
    %39 = arith.truncf %38 : vector<20x32xf32> to vector<20x32xbf16>
    %c0_30 = arith.constant 0 : index
    %c0_31 = arith.constant 0 : index
    %c0_32 = arith.constant 0 : index
    %40 = vector.load %arg4[%c0_30, %c0_31, %c0_32] : memref<1x20x32xbf16, #tpu.memory_space<vmem>>, vector<1x20x32xbf16>
    %41 = vector.shape_cast %40 : vector<1x20x32xbf16> to vector<20x32xbf16>
    %42 = vector.shape_cast %39 : vector<20x32xbf16> to vector<1x20x32xbf16>
    tpu.vector_store %arg4[%c0_30, %c0_31, %c0_32], %42 {strides = array<i32>} : memref<1x20x32xbf16, #tpu.memory_space<vmem>>, vector<1x20x32xbf16>,
    return
  }
  func.func @transform_0(%arg0: i32) -> (i32, i32, i32) {
    %c0_i32 = arith.constant 0 : i32
    %c0_i32_0 = arith.constant 0 : i32
    %c0_i32_1 = arith.constant 0 : i32
    return %arg0, %c0_i32, %c0_i32_0 : i32, i32, i32
  }
  func.func @transform_1(%arg0: i32) -> (i32, i32, i32) {
    %c0_i32 = arith.constant 0 : i32
    %c0_i32_0 = arith.constant 0 : i32
    %c0_i32_1 = arith.constant 0 : i32
    %c0_i32_2 = arith.constant 0 : i32
    return %c0_i32, %c0_i32_0, %c0_i32_1 : i32, i32, i32
  }
  func.func @transform_2(%arg0: i32) -> (i32, i32) {
    %c0_i32 = arith.constant 0 : i32
    %c0_i32_0 = arith.constant 0 : i32
    %c0_i32_1 = arith.constant 0 : i32
    return %c0_i32, %c0_i32_0 : i32, i32
  }
  func.func @transform_3(%arg0: i32) -> (i32, i32, i32) {
    %c0_i32 = arith.constant 0 : i32
    %c0_i32_0 = arith.constant 0 : i32
    %c0_i32_1 = arith.constant 0 : i32
    return %arg0, %c0_i32, %c0_i32_0 : i32, i32, i32
  }
}

module attributes {stable_mosaic.version = 11 : i64} {
  func.func @_conv_block_kernel(%arg0: i32, %arg1: memref<1x12x128xbf16, #tpu.memory_space<vmem>>, %arg2: memref<4x128x64xbf16, #tpu.memory_space<vmem>>, %arg3: memref<3x64xf32, #tpu.memory_space<vmem>>, %arg4: memref<1x6x64xf32, #tpu.memory_space<vmem>>) attributes {dimension_semantics = [#tpu.dimension_semantics<parallel>], iteration_bounds = array<i64: 2>, scalar_prefetch = 0 : i64, scratch_operands = 0 : i64, tpu.core_type = #tpu.core_type<tc>, window_params = [{transform_indices = @transform_0, window_bounds = array<i64: 1, 12, 128>}, {pipeline_mode = #tpu.pipeline_mode<synchronous>, transform_indices = @transform_1, window_bounds = array<i64: 4, 128, 64>}, {pipeline_mode = #tpu.pipeline_mode<synchronous>, transform_indices = @transform_2, window_bounds = array<i64: 3, 64>}, {transform_indices = @transform_3, window_bounds = array<i64: 1, 6, 64>}]} {
    %cst = arith.constant 0.000000e+00 : f32
    %0 = vector.broadcast %cst : f32 to vector<6x64xf32>
    %c0 = arith.constant 0 : index
    %c0_0 = arith.constant 0 : index
    %c0_1 = arith.constant 0 : index
    %1 = vector.load %arg1[%c0, %c0_0, %c0_1] : memref<1x12x128xbf16, #tpu.memory_space<vmem>>, vector<1x6x128xbf16>
    %2 = vector.shape_cast %1 : vector<1x6x128xbf16> to vector<6x128xbf16>
    %c0_2 = arith.constant 0 : index
    %c0_3 = arith.constant 0 : index
    %c0_4 = arith.constant 0 : index
    %3 = vector.load %arg2[%c0_2, %c0_3, %c0_4] : memref<4x128x64xbf16, #tpu.memory_space<vmem>>, vector<1x128x64xbf16>
    %4 = vector.shape_cast %3 : vector<1x128x64xbf16> to vector<128x64xbf16>
    %cst_5 = arith.constant dense<0.000000e+00> : vector<6x64xf32>
    %5 = tpu.matmul %2, %4, %cst_5 {dimension_numbers = #tpu.dot_dimension_numbers<[1], [0], [0], [1], [0, 0, 1, 1], [], []>} : vector<6x128xbf16>, vector<128x64xbf16>, vector<6x64xf32> -> vector<6x64xf32>
    %6 = arith.addf %0, %5 : vector<6x64xf32>
    %c0_6 = arith.constant 0 : index
    %c1 = arith.constant 1 : index
    %c0_7 = arith.constant 0 : index
    %7 = vector.load %arg1[%c0_6, %c1, %c0_7] : memref<1x12x128xbf16, #tpu.memory_space<vmem>>, vector<1x6x128xbf16>
    %8 = vector.shape_cast %7 : vector<1x6x128xbf16> to vector<6x128xbf16>
    %c1_8 = arith.constant 1 : index
    %c0_9 = arith.constant 0 : index
    %c0_10 = arith.constant 0 : index
    %9 = vector.load %arg2[%c1_8, %c0_9, %c0_10] : memref<4x128x64xbf16, #tpu.memory_space<vmem>>, vector<1x128x64xbf16>
    %10 = vector.shape_cast %9 : vector<1x128x64xbf16> to vector<128x64xbf16>
    %cst_11 = arith.constant dense<0.000000e+00> : vector<6x64xf32>
    %11 = tpu.matmul %8, %10, %cst_11 {dimension_numbers = #tpu.dot_dimension_numbers<[1], [0], [0], [1], [0, 0, 1, 1], [], []>} : vector<6x128xbf16>, vector<128x64xbf16>, vector<6x64xf32> -> vector<6x64xf32>
    %12 = arith.addf %6, %11 : vector<6x64xf32>
    %c0_12 = arith.constant 0 : index
    %c3 = arith.constant 3 : index
    %c0_13 = arith.constant 0 : index
    %13 = vector.load %arg1[%c0_12, %c3, %c0_13] : memref<1x12x128xbf16, #tpu.memory_space<vmem>>, vector<1x6x128xbf16>
    %14 = vector.shape_cast %13 : vector<1x6x128xbf16> to vector<6x128xbf16>
    %c2 = arith.constant 2 : index
    %c0_14 = arith.constant 0 : index
    %c0_15 = arith.constant 0 : index
    %15 = vector.load %arg2[%c2, %c0_14, %c0_15] : memref<4x128x64xbf16, #tpu.memory_space<vmem>>, vector<1x128x64xbf16>
    %16 = vector.shape_cast %15 : vector<1x128x64xbf16> to vector<128x64xbf16>
    %cst_16 = arith.constant dense<0.000000e+00> : vector<6x64xf32>
    %17 = tpu.matmul %14, %16, %cst_16 {dimension_numbers = #tpu.dot_dimension_numbers<[1], [0], [0], [1], [0, 0, 1, 1], [], []>} : vector<6x128xbf16>, vector<128x64xbf16>, vector<6x64xf32> -> vector<6x64xf32>
    %18 = arith.addf %12, %17 : vector<6x64xf32>
    %c0_17 = arith.constant 0 : index
    %c4 = arith.constant 4 : index
    %c0_18 = arith.constant 0 : index
    %19 = vector.load %arg1[%c0_17, %c4, %c0_18] : memref<1x12x128xbf16, #tpu.memory_space<vmem>>, vector<1x6x128xbf16>
    %20 = vector.shape_cast %19 : vector<1x6x128xbf16> to vector<6x128xbf16>
    %c3_19 = arith.constant 3 : index
    %c0_20 = arith.constant 0 : index
    %c0_21 = arith.constant 0 : index
    %21 = vector.load %arg2[%c3_19, %c0_20, %c0_21] : memref<4x128x64xbf16, #tpu.memory_space<vmem>>, vector<1x128x64xbf16>
    %22 = vector.shape_cast %21 : vector<1x128x64xbf16> to vector<128x64xbf16>
    %cst_22 = arith.constant dense<0.000000e+00> : vector<6x64xf32>
    %23 = tpu.matmul %20, %22, %cst_22 {dimension_numbers = #tpu.dot_dimension_numbers<[1], [0], [0], [1], [0, 0, 1, 1], [], []>} : vector<6x128xbf16>, vector<128x64xbf16>, vector<6x64xf32> -> vector<6x64xf32>
    %24 = arith.addf %18, %23 : vector<6x64xf32>
    %c0_23 = arith.constant 0 : index
    %c0_24 = arith.constant 0 : index
    %25 = vector.load %arg3[%c0_23, %c0_24] : memref<3x64xf32, #tpu.memory_space<vmem>>, vector<1x64xf32>
    %26 = vector.broadcast %25 : vector<1x64xf32> to vector<6x64xf32>
    %27 = arith.addf %24, %26 : vector<6x64xf32>
    %cst_25 = arith.constant 0.000000e+00 : f32
    %28 = vector.broadcast %cst_25 : f32 to vector<6x64xf32>
    %29 = arith.cmpf oge, %27, %28 : vector<6x64xf32>
    %cst_26 = arith.constant 3.000000e-01 : f32
    %30 = vector.broadcast %cst_26 : f32 to vector<6x64xf32>
    %31 = arith.mulf %30, %27 : vector<6x64xf32>
    %32 = arith.select %29, %27, %31 : vector<6x64xi1>, vector<6x64xf32>
    %c1_27 = arith.constant 1 : index
    %c0_28 = arith.constant 0 : index
    %33 = vector.load %arg3[%c1_27, %c0_28] : memref<3x64xf32, #tpu.memory_space<vmem>>, vector<1x64xf32>
    %34 = vector.broadcast %33 : vector<1x64xf32> to vector<6x64xf32>
    %35 = arith.mulf %32, %34 : vector<6x64xf32>
    %c2_29 = arith.constant 2 : index
    %c0_30 = arith.constant 0 : index
    %36 = vector.load %arg3[%c2_29, %c0_30] : memref<3x64xf32, #tpu.memory_space<vmem>>, vector<1x64xf32>
    %37 = vector.broadcast %36 : vector<1x64xf32> to vector<6x64xf32>
    %38 = arith.addf %35, %37 : vector<6x64xf32>
    %c0_31 = arith.constant 0 : index
    %c0_32 = arith.constant 0 : index
    %c0_33 = arith.constant 0 : index
    %39 = vector.load %arg4[%c0_31, %c0_32, %c0_33] : memref<1x6x64xf32, #tpu.memory_space<vmem>>, vector<1x6x64xf32>
    %40 = vector.shape_cast %39 : vector<1x6x64xf32> to vector<6x64xf32>
    %41 = vector.shape_cast %38 : vector<6x64xf32> to vector<1x6x64xf32>
    tpu.vector_store %arg4[%c0_31, %c0_32, %c0_33], %41 {strides = array<i32>} : memref<1x6x64xf32, #tpu.memory_space<vmem>>, vector<1x6x64xf32>,
    return
  }
  func.func @transform_0(%arg0: i32) -> (i32, i32, i32) {
    %c0_i32 = arith.constant 0 : i32
    %c0_i32_0 = arith.constant 0 : i32
    %c0_i32_1 = arith.constant 0 : i32
    return %arg0, %c0_i32, %c0_i32_0 : i32, i32, i32
  }
  func.func @transform_1(%arg0: i32) -> (i32, i32, i32) {
    %c0_i32 = arith.constant 0 : i32
    %c0_i32_0 = arith.constant 0 : i32
    %c0_i32_1 = arith.constant 0 : i32
    %c0_i32_2 = arith.constant 0 : i32
    return %c0_i32, %c0_i32_0, %c0_i32_1 : i32, i32, i32
  }
  func.func @transform_2(%arg0: i32) -> (i32, i32) {
    %c0_i32 = arith.constant 0 : i32
    %c0_i32_0 = arith.constant 0 : i32
    %c0_i32_1 = arith.constant 0 : i32
    return %c0_i32, %c0_i32_0 : i32, i32
  }
  func.func @transform_3(%arg0: i32) -> (i32, i32, i32) {
    %c0_i32 = arith.constant 0 : i32
    %c0_i32_0 = arith.constant 0 : i32
    %c0_i32_1 = arith.constant 0 : i32
    return %arg0, %c0_i32, %c0_i32_0 : i32, i32, i32
  }
}

</mosaic_0001>

<llo_original>
// kernel: encoder_forward.4
$region0: #{encoder_forward.4}
  #allocation0 [shape = 'u32[]', space=smem, size = 0x4, offset = 0x4, fixed_abs, tag = 'smem constant byte address 0x4 - core index']
  #allocation1 [shape = 'u32[144,128]{1,0:T(1,128)}', space=vmem, size = 0x12000, scoped, tag = 'internal scratch']
  %s0 = inlined_call_operand.vmem [shape: bf16[2,380,12], index: 0, kind: input, shape index: {}]
  %s1 = inlined_call_operand.vmem [shape: bf16[16,12,8], index: 1, kind: input, shape index: {}]
  %s2 = inlined_call_operand.vmem [shape: f32[3,8], index: 2, kind: input, shape index: {}]
  %s3 = inlined_call_operand.vmem [shape: bf16[2,304,8], index: 3, kind: output, shape index: {}]
  %s4 = sld [smem:[#allocation0]]
  $region45: #{encoder_forward.4} parent=0
    _
  %s6 = ssub.s32 1, %s4
  %s7 = scalar_select 0, %s6, %s4
  loop: start=0, step=1, limit=4
  $region2: #{encoder_forward.4} parent=0 // loop_pre_header
    _
  $region3: #{encoder_forward.4} parent=0 // loop_header
    %s9 = sphi 0, %s13
    %p10 = scmp.ge.s32.totalorder %s9, 4
    %s19 = sphi 0, %s21
    %s22 = sphi 0, %s19
    %s23 = sphi 0, %s22
    %s39 = sphi 0, %s23
    %s43 = sphi 0, %s43
    %s45 = sphi 0, %s43
    %s46 = sphi 0, %s45
    %s60 = sphi 0, %s46
    %s64 = sphi 0, %s64
    %s66 = sphi 0, %s64
    %s67 = sphi 0, %s66
    %s81 = sphi 0, %s67
    %s87 = sphi 0, %s89
    %s90 = sphi 0, %s87
    %s91 = sphi 0, %s90
    %s107 = sphi 0, %s91
  $region4: #{encoder_forward.4} parent=0 // loop_header_branch
    %12 = sbr.rel (%p10) target = $region8
  $region5: #{encoder_forward.4} parent=0 // loop_body
    %s14 = ssub.s32 %s9, 1
    %s15 = ssub.s32 %s9, 2
    %s16 = sadd.s32 %s9, 1
    %s17 = ssub.s32 %s9, %s16
    %p18 = scmp.eq.s32.totalorder %s17, 0
    %s20 = sadd.s32 %s19, 1
    %s21 = scalar_select %p18, %s19, %s20
    %p24 = pneg %p18
    %p25 = scmp.eq.s32.totalorder %s9, 1
    %p26 = por %p24, %p25
    %p27 = scmp.ne.s32.totalorder %s19, %s22
    %p28 = scmp.eq.s32.totalorder %s9, 0
    %p29 = por %p27, %p28
    %p30 = scmp.ne.s32.totalorder %s19, %s22
    %p31 = scmp.eq.s32.totalorder %s14, 1
    %p32 = por %p30, %p31
    %p33 = scmp.ne.s32.totalorder %s22, %s23
    %p34 = scmp.eq.s32.totalorder %s14, 0
    %p35 = por %p33, %p34
    %p36 = scmp.ne.s32.totalorder %s22, %s23
    %p37 = scmp.eq.s32.totalorder %s15, 1
    %p38 = por %p36, %p37
    %p40 = scmp.ne.s32.totalorder %s23, %s39
    %p41 = scmp.eq.s32.totalorder %s15, 0
    %p42 = por %p40, %p41
    %s44 = sadd.s32 %s43, 1
    %p47 = scmp.eq.s32.totalorder %s9, 1
    %p48 = scmp.ne.s32.totalorder %s43, %s45
    %p49 = scmp.eq.s32.totalorder %s9, 0
    %p50 = por %p48, %p49
    %p51 = scmp.ne.s32.totalorder %s43, %s45
    %p52 = scmp.eq.s32.totalorder %s14, 1
    %p53 = por %p51, %p52
    %p54 = scmp.ne.s32.totalorder %s45, %s46
    %p55 = scmp.eq.s32.totalorder %s14, 0
    %p56 = por %p54, %p55
    %p57 = scmp.ne.s32.totalorder %s45, %s46
    %p58 = scmp.eq.s32.totalorder %s15, 1
    %p59 = por %p57, %p58
    %p61 = scmp.ne.s32.totalorder %s46, %s60
    %p62 = scmp.eq.s32.totalorder %s15, 0
    %p63 = por %p61, %p62
    %s65 = sadd.s32 %s64, 1
    %p68 = scmp.eq.s32.totalorder %s9, 1
    %p69 = scmp.ne.s32.totalorder %s64, %s66
    %p70 = scmp.eq.s32.totalorder %s9, 0
    %p71 = por %p69, %p70
    %p72 = scmp.ne.s32.totalorder %s64, %s66
    %p73 = scmp.eq.s32.totalorder %s14, 1
    %p74 = por %p72, %p73
    %p75 = scmp.ne.s32.totalorder %s66, %s67
    %p76 = scmp.eq.s32.totalorder %s14, 0
    %p77 = por %p75, %p76
    %p78 = scmp.ne.s32.totalorder %s66, %s67
    %p79 = scmp.eq.s32.totalorder %s15, 1
    %p80 = por %p78, %p79
    %p82 = scmp.ne.s32.totalorder %s67, %s81
    %p83 = scmp.eq.s32.totalorder %s15, 0
    %p84 = por %p82, %p83
    %s85 = ssub.s32 %s9, %s16
    %p86 = scmp.eq.s32.totalorder %s85, 0
    %s88 = sadd.s32 %s87, 1
    %s89 = scalar_select %p86, %s87, %s88
    %p92 = pneg %p86
    %p93 = scmp.eq.s32.totalorder %s9, 1
    %p94 = por %p92, %p93
    %p95 = scmp.ne.s32.totalorder %s87, %s90
    %p96 = scmp.eq.s32.totalorder %s9, 0
    %p97 = por %p95, %p96
    %p98 = scmp.ne.s32.totalorder %s87, %s90
    %p99 = scmp.eq.s32.totalorder %s14, 1
    %p100 = por %p98, %p99
    %p101 = scmp.ne.s32.totalorder %s90, %s91
    %p102 = scmp.eq.s32.totalorder %s14, 0
    %p103 = por %p101, %p102
    %p104 = scmp.ne.s32.totalorder %s90, %s91
    %p105 = scmp.eq.s32.totalorder %s15, 1
    %p106 = por %p104, %p105
    %p108 = scmp.ne.s32.totalorder %s91, %s107
    %p109 = scmp.eq.s32.totalorder %s15, 0
    %p110 = por %p108, %p109
    %p111 = scmp.le.s32.totalorder 1, %s9
    %p112 = scmp.lt.s32.totalorder %s9, 3
    %p113 = pnand %p111, %p112
    %p114 = pneg %p113
    // Predicated region
    $region9: #{encoder_forward.4} parent=5 // pred_check
      _
    $region10: #{encoder_forward.4} parent=5 // pred_check_branch
      %116 = sbr.rel (%p113) target = $region12
    $region11: #{encoder_forward.4} parent=5 // pred_region
      %s117 = ssub.s32 %s9, 1
      // Predicated region
      $region13: #{encoder_forward.4} parent=11 // pred_check
        %p118 = pneg %p56
      $region14: #{encoder_forward.4} parent=11 // pred_check_branch
        %120 = sbr.rel (%p118) target = $region16
      $region15: #{encoder_forward.4} parent=11 // pred_region
        _
      $region16: #{encoder_forward.4} parent=11 // pred_fallthru
        _
      // Predicated region
      $region17: #{encoder_forward.4} parent=11 // pred_check
        %p121 = pneg %p77
      $region18: #{encoder_forward.4} parent=11 // pred_check_branch
        %123 = sbr.rel (%p121) target = $region20
      $region19: #{encoder_forward.4} parent=11 // pred_region
        _
      $region20: #{encoder_forward.4} parent=11 // pred_fallthru
        _
    $region12: #{encoder_forward.4} parent=5 // pred_fallthru
      _
    %p124 = scmp.lt.s32.totalorder %s9, 2
    // Predicated region
    $region21: #{encoder_forward.4} parent=5 // pred_check
      %p125 = pneg %p124
    $region22: #{encoder_forward.4} parent=5 // pred_check_branch
      %127 = sbr.rel (%p125) target = $region24
    $region23: #{encoder_forward.4} parent=5 // pred_region
      // Predicated region
      $region25: #{encoder_forward.4} parent=23 // pred_check
        %p128 = pneg %p29
      $region26: #{encoder_forward.4} parent=23 // pred_check_branch
        %130 = sbr.rel (%p128) target = $region28
      $region27: #{encoder_forward.4} parent=23 // pred_region
        %p131 = scmp.lt.s32.totalorder %s9, 1
        %s132 = scalar_select %p131, %s9, 1
        %s133 = smul.addr %s132, 48
        %s134 = smul.addr %s133, 4
        %s135 = scalar_lea.vmem %s0, %s134
      $region28: #{encoder_forward.4} parent=23 // pred_fallthru
        _
    $region24: #{encoder_forward.4} parent=5 // pred_fallthru
      _
    %p136 = scmp.le.s32.totalorder 1, %s9
    %p137 = scmp.lt.s32.totalorder %s9, 3
    %p138 = pnand %p136, %p137
    %p139 = pneg %p138
    // Predicated region
    $region29: #{encoder_forward.4} parent=5 // pred_check
      _
    $region30: #{encoder_forward.4} parent=5 // pred_check_branch
      %141 = sbr.rel (%p138) target = $region32
    $region31: #{encoder_forward.4} parent=5 // pred_region
      %s142 = ssub.s32 %s9, 1
      %p143 = scmp.lt.s32.totalorder %s14, 1
      %s144 = scalar_select %p143, %s14, 1
      %s145 = smul.addr %s144, 48
      %s146 = smul.addr %s145, 4
      %s147 = scalar_lea.vmem %s0, %s146
      %p148 = pneg %p35
      %p149 = pneg %p32
      %p150 = pneg %p56
      %p151 = pneg %p53
      %p152 = pneg %p77
      %p153 = pneg %p74
      %p154 = pneg %p103
      %p155 = pneg %p100
      %p156 = scmp.lt.s32.totalorder %s14, 1
      %s157 = scalar_select %p156, %s14, 1
      %s158 = smul.addr %s157, 38
      %s159 = smul.addr %s158, 4
      %s160 = scalar_lea.vmem %s3, %s159
      %p161 = scmp.lt.s32.totalorder %s14, 1
      %s162 = scalar_select %p161, %s14, 1
      %s163 = smul.addr %s162, 48
      %s164 = smul.addr %s163, 4
      %s165 = scalar_lea.vmem %s0, %s164
      %p166 = scmp.lt.s32.totalorder %s14, 1
      %s167 = scalar_select %p166, %s14, 1
      %s168 = smul.addr %s167, 38
      %s169 = smul.addr %s168, 4
      %s170 = scalar_lea.vmem %s3, %s169
      %v172 = vld [vmem:[%s165] sm:$0xf]
      %v173 = vld [vmem:[%s165 + $0x4] sm:$0xf]
      %v174 = vld [vmem:[%s165 + $0x8] sm:$0xf]
      %v175 = vld [vmem:[%s165 + $0xc] sm:$0xf]
      %v176 = vld [vmem:[%s165 + $0x10] sm:$0xf]
      %v177 = vld [vmem:[%s165 + $0x14] sm:$0xf]
      %v178 = vld [vmem:[%s165 + $0x18] sm:$0xf]
      %v179 = vld [vmem:[%s165 + $0x1c] sm:$0xf]
      %v180 = vld [vmem:[%s165 + $0x20] sm:$0xf]
      %v181 = vld [vmem:[%s165 + $0x24] sm:$0xf]
      %v182 = vld [vmem:[%s165 + $0x28] sm:$0xf]
      %v183 = vld [vmem:[%s165 + $0x2c] sm:$0xf]
      %v184 = vld [vmem:[%s165 + $0x30] sm:$0xf]
      %v185 = vld [vmem:[%s165 + $0x34] sm:$0xf]
      %v186 = vld [vmem:[%s165 + $0x38] sm:$0xf]
      %v187 = vld [vmem:[%s165 + $0x3c] sm:$0xf]
      %v188 = vld [vmem:[%s165 + $0x40] sm:$0xf]
      %v189 = vld [vmem:[%s165 + $0x44] sm:$0xf]
      %v190 = vld [vmem:[%s165 + $0x48] sm:$0xf]
      %v191 = vld [vmem:[%s165 + $0x4c] sm:$0xf]
      %v192 = vld [vmem:[%s165 + $0x50] sm:$0xf]
      %v193 = vld [vmem:[%s165 + $0x54] sm:$0xf]
      %v194 = vld [vmem:[%s165 + $0x58] sm:$0xf]
      %v195 = vld [vmem:[%s165 + $0x5c] sm:$0xf]
      %v196 = vld [vmem:[%s165 + $0x60] sm:$0xf]
      %v197 = vld [vmem:[%s165 + $0x64] sm:$0xf]
      %v198 = vld [vmem:[%s165 + $0x68] sm:$0xf]
      %v199 = vld [vmem:[%s165 + $0x6c] sm:$0xf]
      %v200 = vld [vmem:[%s165 + $0x70] sm:$0xf]
      %v201 = vld [vmem:[%s165 + $0x74] sm:$0xf]
      %v202 = vld [vmem:[%s165 + $0x78] sm:$0xf]
      %v203 = vld [vmem:[%s165 + $0x7c] sm:$0xf]
      %v204 = vld [vmem:[%s165 + $0x80] sm:$0xf]
      %v205 = vld [vmem:[%s165 + $0x84] sm:$0xf]
      %v206 = vld [vmem:[%s165 + $0x88] sm:$0xf]
      %v207 = vld [vmem:[%s165 + $0x8c] sm:$0xf]
      %v208 = vld [vmem:[%s165 + $0x90] sm:$0xf]
      %v209 = vld [vmem:[%s165 + $0x94] sm:$0xf]
      %v210 = vld [vmem:[%s1] sm:$0xf]
      %v211 = vld [vmem:[%s1 + $0x4] sm:$0x3]
      %v212 = vld [vmem:[%s165 + $0x98] sm:$0x1]
      %s213 = scalar_lea.vmem %s1, 8
      %v214 = vld [vmem:[%s213] sm:$0xf]
      %v215 = vld [vmem:[%s213 + $0x4] sm:$0x3]
      %v255 = vunpack.c.l.b16 %v172
      %v256 = vunpack.c.l.b16 %v173
      %v257 = vunpack.c.l.b16 %v174
      %v258 = vunpack.c.l.b16 %v175
      %v259 = vunpack.c.l.b16 %v176
      %v260 = vunpack.c.l.b16 %v177
      %v261 = vunpack.c.l.b16 %v178
      %v262 = vunpack.c.l.b16 %v179
      %v263 = vunpack.c.l.b16 %v180
      %v264 = vunpack.c.l.b16 %v181
      %v265 = vunpack.c.l.b16 %v182
      %v266 = vunpack.c.l.b16 %v183
      %v267 = vunpack.c.l.b16 %v184
      %v268 = vunpack.c.l.b16 %v185
      %v269 = vunpack.c.l.b16 %v186
      %v270 = vunpack.c.l.b16 %v187
      %v271 = vunpack.c.l.b16 %v188
      %v272 = vunpack.c.l.b16 %v189
      %v273 = vunpack.c.l.b16 %v190
      %v274 = vunpack.c.l.b16 %v191
      %v275 = vunpack.c.l.b16 %v192
      %v276 = vunpack.c.l.b16 %v193
      %v277 = vunpack.c.l.b16 %v194
      %v278 = vunpack.c.l.b16 %v195
      %v279 = vunpack.c.l.b16 %v196
      %v280 = vunpack.c.l.b16 %v197
      %v281 = vunpack.c.l.b16 %v198
      %v282 = vunpack.c.l.b16 %v199
      %v283 = vunpack.c.l.b16 %v200
      %v284 = vunpack.c.l.b16 %v201
      %v285 = vunpack.c.l.b16 %v202
      %v286 = vunpack.c.l.b16 %v203
      %v287 = vunpack.c.l.b16 %v204
      %v288 = vunpack.c.l.b16 %v205
      %v289 = vunpack.c.l.b16 %v206
      %v290 = vunpack.c.l.b16 %v207
      %v291 = vunpack.c.l.b16 %v208
      %v292 = vunpack.c.l.b16 %v209
      %v293 = vunpack.c.l.b16 %v212
      %v294 = vpack.c.b16 %v256, %v255
      %v295 = vpack.c.b16 %v258, %v257
      %v296 = vpack.c.b16 %v260, %v259
      %v297 = vpack.c.b16 %v262, %v261
      %v298 = vpack.c.b16 %v264, %v263
      %v299 = vpack.c.b16 %v266, %v265
      %v300 = vpack.c.b16 %v268, %v267
      %v301 = vpack.c.b16 %v270, %v269
      %v302 = vpack.c.b16 %v272, %v271
      %v303 = vpack.c.b16 %v274, %v273
      %v304 = vpack.c.b16 %v276, %v275
      %v305 = vpack.c.b16 %v278, %v277
      %v306 = vpack.c.b16 %v280, %v279
      %v307 = vpack.c.b16 %v282, %v281
      %v308 = vpack.c.b16 %v284, %v283
      %v309 = vpack.c.b16 %v286, %v285
      %v310 = vpack.c.b16 %v288, %v287
      %v311 = vpack.c.b16 %v290, %v289
      %v312 = vpack.c.b16 %v292, %v291
      %v313 = vpack.c.b16 %v293, %v293
      %vm314 = vsmask.f32 7424
      %v316 = vshrl.u32 %v294, 16
      %v318 = vshll.u32 %v294, 16
      %v320 = vrot.slane %v318, 1
      %v321 = vor.u32 %v316, %v320
      %v323 = vshll.u32 %v295, 16
      %v325 = vrot.slane %v323, 1
      %v326 = vsel %vm314, %v321, %v325
      %v327 = vshrl.u32 %v295, 16
      %v329 = vor.u32 %v327, %v325
      %v331 = vshll.u32 %v296, 16
      %v333 = vrot.slane %v331, 1
      %v334 = vsel %vm314, %v329, %v333
      %v335 = vshrl.u32 %v296, 16
      %v337 = vor.u32 %v335, %v333
      %v339 = vshll.u32 %v297, 16
      %v341 = vrot.slane %v339, 1
      %v342 = vsel %vm314, %v337, %v341
      %v343 = vshrl.u32 %v297, 16
      %v345 = vor.u32 %v343, %v341
      %v347 = vshll.u32 %v298, 16
      %v349 = vrot.slane %v347, 1
      %v350 = vsel %vm314, %v345, %v349
      %v351 = vshrl.u32 %v298, 16
      %v353 = vor.u32 %v351, %v349
      %v355 = vshll.u32 %v299, 16
      %v357 = vrot.slane %v355, 1
      %v358 = vsel %vm314, %v353, %v357
      %v359 = vshrl.u32 %v299, 16
      %v361 = vor.u32 %v359, %v357
      %v363 = vshll.u32 %v300, 16
      %v365 = vrot.slane %v363, 1
      %v366 = vsel %vm314, %v361, %v365
      %v367 = vshrl.u32 %v300, 16
      %v369 = vor.u32 %v367, %v365
      %v371 = vshll.u32 %v301, 16
      %v373 = vrot.slane %v371, 1
      %v374 = vsel %vm314, %v369, %v373
      %v375 = vshrl.u32 %v301, 16
      %v377 = vor.u32 %v375, %v373
      %v379 = vshll.u32 %v302, 16
      %v381 = vrot.slane %v379, 1
      %v382 = vsel %vm314, %v377, %v381
      %v383 = vshrl.u32 %v302, 16
      %v385 = vor.u32 %v383, %v381
      %v387 = vshll.u32 %v303, 16
      %v389 = vrot.slane %v387, 1
      %v390 = vsel %vm314, %v385, %v389
      %v391 = vshrl.u32 %v303, 16
      %v393 = vor.u32 %v391, %v389
      %v395 = vshll.u32 %v304, 16
      %v397 = vrot.slane %v395, 1
      %v398 = vsel %vm314, %v393, %v397
      %v399 = vshrl.u32 %v304, 16
      %v401 = vor.u32 %v399, %v397
      %v403 = vshll.u32 %v305, 16
      %v405 = vrot.slane %v403, 1
      %v406 = vsel %vm314, %v401, %v405
      %v407 = vshrl.u32 %v305, 16
      %v409 = vor.u32 %v407, %v405
      %v411 = vshll.u32 %v306, 16
      %v413 = vrot.slane %v411, 1
      %v414 = vsel %vm314, %v409, %v413
      %v415 = vshrl.u32 %v306, 16
      %v417 = vor.u32 %v415, %v413
      %v419 = vshll.u32 %v307, 16
      %v421 = vrot.slane %v419, 1
      %v422 = vsel %vm314, %v417, %v421
      %v423 = vshrl.u32 %v307, 16
      %v425 = vor.u32 %v423, %v421
      %v427 = vshll.u32 %v308, 16
      %v429 = vrot.slane %v427, 1
      %v430 = vsel %vm314, %v425, %v429
      %v431 = vshrl.u32 %v308, 16
      %v433 = vor.u32 %v431, %v429
      %v435 = vshll.u32 %v309, 16
      %v437 = vrot.slane %v435, 1
      %v438 = vsel %vm314, %v433, %v437
      %v439 = vshrl.u32 %v309, 16
      %v441 = vor.u32 %v439, %v437
      %v443 = vshll.u32 %v310, 16
      %v445 = vrot.slane %v443, 1
      %v446 = vsel %vm314, %v441, %v445
      %v447 = vshrl.u32 %v310, 16
      %v449 = vor.u32 %v447, %v445
      %v451 = vshll.u32 %v311, 16
      %v453 = vrot.slane %v451, 1
      %v454 = vsel %vm314, %v449, %v453
      %v455 = vshrl.u32 %v311, 16
      %v457 = vor.u32 %v455, %v453
      %v459 = vshll.u32 %v312, 16
      %v461 = vrot.slane %v459, 1
      %v462 = vsel %vm314, %v457, %v461
      %v463 = vshrl.u32 %v312, 16
      %v465 = vor.u32 %v463, %v461
      %v467 = vshll.u32 %v313, 16
      %v469 = vrot.slane %v467, 1
      %v470 = vsel %vm314, %v465, %v469
      %v473 = vunpack.c.l.b16 %v214
      %v474 = vunpack.c.l.b16 %v215
      %v475 = vpack.c.b16 %v474, %v473
      %vm476 = vcmask 97280
      %v478 = vsel %vm476, %v326, 0
      %v481 = vsel %vm476, %v334, 0
      %v484 = vsel %vm476, %v342, 0
      %v487 = vsel %vm476, %v350, 0
      %v490 = vsel %vm476, %v358, 0
      %v493 = vsel %vm476, %v366, 0
      %v496 = vsel %vm476, %v374, 0
      %v499 = vsel %vm476, %v382, 0
      %v502 = vsel %vm476, %v390, 0
      %v505 = vsel %vm476, %v398, 0
      %v508 = vsel %vm476, %v406, 0
      %v511 = vsel %vm476, %v414, 0
      %v514 = vsel %vm476, %v422, 0
      %v517 = vsel %vm476, %v430, 0
      %v520 = vsel %vm476, %v438, 0
      %v523 = vsel %vm476, %v446, 0
      %v526 = vsel %vm476, %v454, 0
      %v529 = vsel %vm476, %v462, 0
      %v532 = vsel %vm476, %v470, 0
      %vm534 = vcmask 1045504
      %v536 = vsel %vm534, %v475, 0
      %538 = vmatprep.subr.bf16.mxu0 0
      %539 = vmatpush1.bf16.msra.mxu0 %v536
      %540 = vmatprep.subr.bf16.mxu0 0
      %541 = vmatpush1.bf16.msra.mxu0 0
      %542 = vmatprep.subr.bf16.mxu0 0
      %543 = vmatpush1.bf16.msra.mxu0 0
      %544 = vmatprep.subr.bf16.mxu0 0
      %545 = vmatpush1.bf16.msra.mxu0 0
      %546 = vmatprep.subr.bf16.mxu0 0
      %547 = vmatpush1.bf16.msra.mxu0 0
      %548 = vmatprep.subr.bf16.mxu0 0
      %549 = vmatpush1.bf16.msra.mxu0 0
      %550 = vmatprep.subr.bf16.mxu0 0
      %551 = vmatpush1.bf16.msra.mxu0 0
      %552 = vmatprep.subr.bf16.mxu0 0
      %553 = vmatpush1.bf16.msra.mxu0 0
      %554 = vmatprep.subr.bf16.mxu0 0
      %555 = vmatpush1.bf16.msra.mxu0 0
      %556 = vmatprep.subr.bf16.mxu0 0
      %557 = vmatpush1.bf16.msra.mxu0 0
      %558 = vmatprep.subr.bf16.mxu0 0
      %559 = vmatpush1.bf16.msra.mxu0 0
      %560 = vmatprep.subr.bf16.mxu0 0
      %561 = vmatpush1.bf16.msra.mxu0 0
      %562 = vmatprep.subr.bf16.mxu0 0
      %563 = vmatpush1.bf16.msra.mxu0 0
      %564 = vmatprep.subr.bf16.mxu0 0
      %565 = vmatpush1.bf16.msra.mxu0 0
      %566 = vmatprep.subr.bf16.mxu0 0
      %567 = vmatpush1.bf16.msra.mxu0 0
      %568 = vmatprep.subr.bf16.mxu0 0
      %569 = vmatpush1.bf16.msra.mxu0 0
      %570 = vmatprep.mubr.bf16.mxu0 0
      %571 = vmatmul.mubr.bf16.gmra.mrb[0].mxu0 %v478
      %v572 = vpop.f32.mrb[0].mxu0
      %v573 = vadd.f32 0.0, %v572
      %v574 = vpop.f32.mrb[0].mxu0
      %v575 = vpop.f32.mrb[0].mxu0
      %v576 = vadd.f32 0.0, %v575
      %v577 = vpop.f32.mrb[0].mxu0
      %578 = vmatprep.mubr.bf16.mxu0 0
      %579 = vmatmul.mubr.bf16.gmra.mrb[0].mxu0 %v481
      %v580 = vpop.f32.mrb[0].mxu0
      %v581 = vadd.f32 0.0, %v580
      %v582 = vpop.f32.mrb[0].mxu0
      %v583 = vpop.f32.mrb[0].mxu0
      %v584 = vadd.f32 0.0, %v583
      %v585 = vpop.f32.mrb[0].mxu0
      %586 = vmatprep.mubr.bf16.mxu0 0
      %587 = vmatmul.mubr.bf16.gmra.mrb[0].mxu0 %v484
      %v588 = vpop.f32.mrb[0].mxu0
      %v589 = vadd.f32 0.0, %v588
      %v590 = vpop.f32.mrb[0].mxu0
      %v591 = vpop.f32.mrb[0].mxu0
      %v592 = vadd.f32 0.0, %v591
      %v593 = vpop.f32.mrb[0].mxu0
      %594 = vmatprep.mubr.bf16.mxu0 0
      %595 = vmatmul.mubr.bf16.gmra.mrb[0].mxu0 %v487
      %v596 = vpop.f32.mrb[0].mxu0
      %v597 = vadd.f32 0.0, %v596
      %v598 = vpop.f32.mrb[0].mxu0
      %v599 = vpop.f32.mrb[0].mxu0
      %v600 = vadd.f32 0.0, %v599
      %v601 = vpop.f32.mrb[0].mxu0
      %602 = vmatprep.mubr.bf16.mxu0 0
      %603 = vmatmul.mubr.bf16.gmra.mrb[0].mxu0 %v490
      %v604 = vpop.f32.mrb[0].mxu0
      %v605 = vadd.f32 0.0, %v604
      %v606 = vpop.f32.mrb[0].mxu0
      %v607 = vpop.f32.mrb[0].mxu0
      %v608 = vadd.f32 0.0, %v607
      %v609 = vpop.f32.mrb[0].mxu0
      %610 = vmatprep.mubr.bf16.mxu0 0
      %611 = vmatmul.mubr.bf16.gmra.mrb[0].mxu0 %v493
      %v612 = vpop.f32.mrb[0].mxu0
      %v613 = vadd.f32 0.0, %v612
      %v614 = vpop.f32.mrb[0].mxu0
      %v615 = vpop.f32.mrb[0].mxu0
      %v616 = vadd.f32 0.0, %v615
      %v617 = vpop.f32.mrb[0].mxu0
      %618 = vmatprep.mubr.bf16.mxu0 0
      %619 = vmatmul.mubr.bf16.gmra.mrb[0].mxu0 %v496
      %v620 = vpop.f32.mrb[0].mxu0
      %v621 = vadd.f32 0.0, %v620
      %v622 = vpop.f32.mrb[0].mxu0
      %v623 = vpop.f32.mrb[0].mxu0
      %v624 = vadd.f32 0.0, %v623
      %v625 = vpop.f32.mrb[0].mxu0
      %626 = vmatprep.mubr.bf16.mxu0 0
      %627 = vmatmul.mubr.bf16.gmra.mrb[0].mxu0 %v499
      %v628 = vpop.f32.mrb[0].mxu0
      %v629 = vadd.f32 0.0, %v628
      %v630 = vpop.f32.mrb[0].mxu0
      %v631 = vpop.f32.mrb[0].mxu0
      %v632 = vadd.f32 0.0, %v631
      %v633 = vpop.f32.mrb[0].mxu0
      %634 = vmatprep.mubr.bf16.mxu0 0
      %635 = vmatmul.mubr.bf16.gmra.mrb[0].mxu0 %v502
      %v636 = vpop.f32.mrb[0].mxu0
      %v637 = vadd.f32 0.0, %v636
      %v638 = vpop.f32.mrb[0].mxu0
      %v639 = vpop.f32.mrb[0].mxu0
      %v640 = vadd.f32 0.0, %v639
      %v641 = vpop.f32.mrb[0].mxu0
      %642 = vmatprep.mubr.bf16.mxu0 0
      %643 = vmatmul.mubr.bf16.gmra.mrb[0].mxu0 %v505
      %v644 = vpop.f32.mrb[0].mxu0
      %v645 = vadd.f32 0.0, %v644
      %v646 = vpop.f32.mrb[0].mxu0
      %v647 = vpop.f32.mrb[0].mxu0
      %v648 = vadd.f32 0.0, %v647
      %v649 = vpop.f32.mrb[0].mxu0
      %650 = vmatprep.mubr.bf16.mxu0 0
      %651 = vmatmul.mubr.bf16.gmra.mrb[0].mxu0 %v508
      %v652 = vpop.f32.mrb[0].mxu0
      %v653 = vadd.f32 0.0, %v652
      %v654 = vpop.f32.mrb[0].mxu0
      %v655 = vpop.f32.mrb[0].mxu0
      %v656 = vadd.f32 0.0, %v655
      %v657 = vpop.f32.mrb[0].mxu0
      %658 = vmatprep.mubr.bf16.mxu0 0
      %659 = vmatmul.mubr.bf16.gmra.mrb[0].mxu0 %v511
      %v660 = vpop.f32.mrb[0].mxu0
      %v661 = vadd.f32 0.0, %v660
      %v662 = vpop.f32.mrb[0].mxu0
      %v663 = vpop.f32.mrb[0].mxu0
      %v664 = vadd.f32 0.0, %v663
      %v665 = vpop.f32.mrb[0].mxu0
      %666 = vmatprep.mubr.bf16.mxu0 0
      %667 = vmatmul.mubr.bf16.gmra.mrb[0].mxu0 %v514
      %v668 = vpop.f32.mrb[0].mxu0
      %v669 = vadd.f32 0.0, %v668
      %v670 = vpop.f32.mrb[0].mxu0
      %v671 = vpop.f32.mrb[0].mxu0
      %v672 = vadd.f32 0.0, %v671
      %v673 = vpop.f32.mrb[0].mxu0
      %674 = vmatprep.mubr.bf16.mxu0 0
      %675 = vmatmul.mubr.bf16.gmra.mrb[0].mxu0 %v517
      %v676 = vpop.f32.mrb[0].mxu0
      %v677 = vadd.f32 0.0, %v676
      %v678 = vpop.f32.mrb[0].mxu0
      %v679 = vpop.f32.mrb[0].mxu0
      %v680 = vadd.f32 0.0, %v679
      %v681 = vpop.f32.mrb[0].mxu0
      %682 = vmatprep.mubr.bf16.mxu0 0
      %683 = vmatmul.mubr.bf16.gmra.mrb[0].mxu0 %v520
      %v684 = vpop.f32.mrb[0].mxu0
      %v685 = vadd.f32 0.0, %v684
      %v686 = vpop.f32.mrb[0].mxu0
      %v687 = vpop.f32.mrb[0].mxu0
      %v688 = vadd.f32 0.0, %v687
      %v689 = vpop.f32.mrb[0].mxu0
      %690 = vmatprep.mubr.bf16.mxu0 0
      %691 = vmatmul.mubr.bf16.gmra.mrb[0].mxu0 %v523
      %v692 = vpop.f32.mrb[0].mxu0
      %v693 = vadd.f32 0.0, %v692
      %v694 = vpop.f32.mrb[0].mxu0
      %v695 = vpop.f32.mrb[0].mxu0
      %v696 = vadd.f32 0.0, %v695
      %v697 = vpop.f32.mrb[0].mxu0
      %698 = vmatprep.mubr.bf16.mxu0 0
      %699 = vmatmul.mubr.bf16.gmra.mrb[0].mxu0 %v526
      %v700 = vpop.f32.mrb[0].mxu0
      %v701 = vadd.f32 0.0, %v700
      %v702 = vpop.f32.mrb[0].mxu0
      %v703 = vpop.f32.mrb[0].mxu0
      %v704 = vadd.f32 0.0, %v703
      %v705 = vpop.f32.mrb[0].mxu0
      %706 = vmatprep.mubr.bf16.mxu0 0
      %707 = vmatmul.mubr.bf16.gmra.mrb[0].mxu0 %v529
      %v708 = vpop.f32.mrb[0].mxu0
      %v709 = vadd.f32 0.0, %v708
      %v710 = vpop.f32.mrb[0].mxu0
      %v711 = vpop.f32.mrb[0].mxu0
      %v712 = vadd.f32 0.0, %v711
      %v713 = vpop.f32.mrb[0].mxu0
      %714 = vmatprep.mubr.bf16.mxu0 0
      %715 = vmatmul.mubr.bf16.gmra.mrb[0].mxu0 %v532
      %v716 = vpop.f32.mrb[0].mxu0
      %v717 = vadd.f32 0.0, %v716
      %v718 = vpop.f32.mrb[0].mxu0
      %v719 = vpop.f32.mrb[0].mxu0
      %v720 = vadd.f32 0.0, %v719
      %v721 = vpop.f32.mrb[0].mxu0
      %722 = vdwg.mxu0
      %v725 = vunpack.c.l.b16 %v210
      %v726 = vunpack.c.l.b16 %v211
      %v727 = vpack.c.b16 %v726, %v725
      %v728 = vsel %vm476, %v294, 0
      %v730 = vsel %vm476, %v295, 0
      %v732 = vsel %vm476, %v296, 0
      %v734 = vsel %vm476, %v297, 0
      %v736 = vsel %vm476, %v298, 0
      %v738 = vsel %vm476, %v299, 0
      %v740 = vsel %vm476, %v300, 0
      %v742 = vsel %vm476, %v301, 0
      %v744 = vsel %vm476, %v302, 0
      %v746 = vsel %vm476, %v303, 0
      %v748 = vsel %vm476, %v304, 0
      %v750 = vsel %vm476, %v305, 0
      %v752 = vsel %vm476, %v306, 0
      %v754 = vsel %vm476, %v307, 0
      %v756 = vsel %vm476, %v308, 0
      %v758 = vsel %vm476, %v309, 0
      %v760 = vsel %vm476, %v310, 0
      %v762 = vsel %vm476, %v311, 0
      %v764 = vsel %vm476, %v312, 0
      %v767 = vsel %vm534, %v727, 0
      %769 = vmatprep.subr.bf16.mxu0 0
      %770 = vmatpush1.bf16.msra.mxu0 %v767
      %771 = vmatprep.subr.bf16.mxu0 0
      %772 = vmatpush1.bf16.msra.mxu0 0
      %773 = vmatprep.subr.bf16.mxu0 0
      %774 = vmatpush1.bf16.msra.mxu0 0
      %775 = vmatprep.subr.bf16.mxu0 0
      %776 = vmatpush1.bf16.msra.mxu0 0
      %777 = vmatprep.subr.bf16.mxu0 0
      %778 = vmatpush1.bf16.msra.mxu0 0
      %779 = vmatprep.subr.bf16.mxu0 0
      %780 = vmatpush1.bf16.msra.mxu0 0
      %781 = vmatprep.subr.bf16.mxu0 0
      %782 = vmatpush1.bf16.msra.mxu0 0
      %783 = vmatprep.subr.bf16.mxu0 0
      %784 = vmatpush1.bf16.msra.mxu0 0
      %785 = vmatprep.subr.bf16.mxu0 0
      %786 = vmatpush1.bf16.msra.mxu0 0
      %787 = vmatprep.subr.bf16.mxu0 0
      %788 = vmatpush1.bf16.msra.mxu0 0
      %789 = vmatprep.subr.bf16.mxu0 0
      %790 = vmatpush1.bf16.msra.mxu0 0
      %791 = vmatprep.subr.bf16.mxu0 0
      %792 = vmatpush1.bf16.msra.mxu0 0
      %793 = vmatprep.subr.bf16.mxu0 0
      %794 = vmatpush1.bf16.msra.mxu0 0
      %795 = vmatprep.subr.bf16.mxu0 0
      %796 = vmatpush1.bf16.msra.mxu0 0
      %797 = vmatprep.subr.bf16.mxu0 0
      %798 = vmatpush1.bf16.msra.mxu0 0
      %799 = vmatprep.subr.bf16.mxu0 0
      %800 = vmatpush1.bf16.msra.mxu0 0
      %801 = vmatprep.mubr.bf16.mxu0 0
      %802 = vmatmul.mubr.bf16.gmra.mrb[0].mxu0 %v728
      %v803 = vpop.f32.mrb[0].mxu0
      %v804 = vadd.f32 %v573, %v803
      %v805 = vpop.f32.mrb[0].mxu0
      %v806 = vpop.f32.mrb[0].mxu0
      %v807 = vadd.f32 %v576, %v806
      %v808 = vpop.f32.mrb[0].mxu0
      %809 = vmatprep.mubr.bf16.mxu0 0
      %810 = vmatmul.mubr.bf16.gmra.mrb[0].mxu0 %v730
      %v811 = vpop.f32.mrb[0].mxu0
      %v812 = vadd.f32 %v581, %v811
      %v813 = vpop.f32.mrb[0].mxu0
      %v814 = vpop.f32.mrb[0].mxu0
      %v815 = vadd.f32 %v584, %v814
      %v816 = vpop.f32.mrb[0].mxu0
      %817 = vmatprep.mubr.bf16.mxu0 0
      %818 = vmatmul.mubr.bf16.gmra.mrb[0].mxu0 %v732
      %v819 = vpop.f32.mrb[0].mxu0
      %v820 = vadd.f32 %v589, %v819
      %v821 = vpop.f32.mrb[0].mxu0
      %v822 = vpop.f32.mrb[0].mxu0
      %v823 = vadd.f32 %v592, %v822
      %v824 = vpop.f32.mrb[0].mxu0
      %825 = vmatprep.mubr.bf16.mxu0 0
      %826 = vmatmul.mubr.bf16.gmra.mrb[0].mxu0 %v734
      %v827 = vpop.f32.mrb[0].mxu0
      %v828 = vadd.f32 %v597, %v827
      %v829 = vpop.f32.mrb[0].mxu0
      %v830 = vpop.f32.mrb[0].mxu0
      %v831 = vadd.f32 %v600, %v830
      %v832 = vpop.f32.mrb[0].mxu0
      %833 = vmatprep.mubr.bf16.mxu0 0
      %834 = vmatmul.mubr.bf16.gmra.mrb[0].mxu0 %v736
      %v835 = vpop.f32.mrb[0].mxu0
      %v836 = vadd.f32 %v605, %v835
      %v837 = vpop.f32.mrb[0].mxu0
      %v838 = vpop.f32.mrb[0].mxu0
      %v839 = vadd.f32 %v608, %v838
      %v840 = vpop.f32.mrb[0].mxu0
      %841 = vmatprep.mubr.bf16.mxu0 0
      %842 = vmatmul.mubr.bf16.gmra.mrb[0].mxu0 %v738
      %v843 = vpop.f32.mrb[0].mxu0
      %v844 = vadd.f32 %v613, %v843
      %v845 = vpop.f32.mrb[0].mxu0
      %v846 = vpop.f32.mrb[0].mxu0
      %v847 = vadd.f32 %v616, %v846
      %v848 = vpop.f32.mrb[0].mxu0
      %849 = vmatprep.mubr.bf16.mxu0 0
      %850 = vmatmul.mubr.bf16.gmra.mrb[0].mxu0 %v740
      %v851 = vpop.f32.mrb[0].mxu0
      %v852 = vadd.f32 %v621, %v851
      %v853 = vpop.f32.mrb[0].mxu0
      %v854 = vpop.f32.mrb[0].mxu0
      %v855 = vadd.f32 %v624, %v854
      %v856 = vpop.f32.mrb[0].mxu0
      %857 = vmatprep.mubr.bf16.mxu0 0
      %858 = vmatmul.mubr.bf16.gmra.mrb[0].mxu0 %v742
      %v859 = vpop.f32.mrb[0].mxu0
      %v860 = vadd.f32 %v629, %v859
      %v861 = vpop.f32.mrb[0].mxu0
      %v862 = vpop.f32.mrb[0].mxu0
      %v863 = vadd.f32 %v632, %v862
      %v864 = vpop.f32.mrb[0].mxu0
      %865 = vmatprep.mubr.bf16.mxu0 0
      %866 = vmatmul.mubr.bf16.gmra.mrb[0].mxu0 %v744
      %v867 = vpop.f32.mrb[0].mxu0
      %v868 = vadd.f32 %v637, %v867
      %v869 = vpop.f32.mrb[0].mxu0
      %v870 = vpop.f32.mrb[0].mxu0
      %v871 = vadd.f32 %v640, %v870
      %v872 = vpop.f32.mrb[0].mxu0
      %873 = vmatprep.mubr.bf16.mxu0 0
      %874 = vmatmul.mubr.bf16.gmra.mrb[0].mxu0 %v746
      %v875 = vpop.f32.mrb[0].mxu0
      %v876 = vadd.f32 %v645, %v875
      %v877 = vpop.f32.mrb[0].mxu0
      %v878 = vpop.f32.mrb[0].mxu0
      %v879 = vadd.f32 %v648, %v878
      %v880 = vpop.f32.mrb[0].mxu0
      %881 = vmatprep.mubr.bf16.mxu0 0
      %882 = vmatmul.mubr.bf16.gmra.mrb[0].mxu0 %v748
      %v883 = vpop.f32.mrb[0].mxu0
      %v884 = vadd.f32 %v653, %v883
      %v885 = vpop.f32.mrb[0].mxu0
      %v886 = vpop.f32.mrb[0].mxu0
      %v887 = vadd.f32 %v656, %v886
      %v888 = vpop.f32.mrb[0].mxu0
      %889 = vmatprep.mubr.bf16.mxu0 0
      %890 = vmatmul.mubr.bf16.gmra.mrb[0].mxu0 %v750
      %v891 = vpop.f32.mrb[0].mxu0
      %v892 = vadd.f32 %v661, %v891
      %v893 = vpop.f32.mrb[0].mxu0
      %v894 = vpop.f32.mrb[0].mxu0
      %v895 = vadd.f32 %v664, %v894
      %v896 = vpop.f32.mrb[0].mxu0
      %897 = vmatprep.mubr.bf16.mxu0 0
      %898 = vmatmul.mubr.bf16.gmra.mrb[0].mxu0 %v752
      %v899 = vpop.f32.mrb[0].mxu0
      %v900 = vadd.f32 %v669, %v899
      %v901 = vpop.f32.mrb[0].mxu0
      %v902 = vpop.f32.mrb[0].mxu0
      %v903 = vadd.f32 %v672, %v902
      %v904 = vpop.f32.mrb[0].mxu0
      %905 = vmatprep.mubr.bf16.mxu0 0
      %906 = vmatmul.mubr.bf16.gmra.mrb[0].mxu0 %v754
      %v907 = vpop.f32.mrb[0].mxu0
      %v908 = vadd.f32 %v677, %v907
      %v909 = vpop.f32.mrb[0].mxu0
      %v910 = vpop.f32.mrb[0].mxu0
      %v911 = vadd.f32 %v680, %v910
      %v912 = vpop.f32.mrb[0].mxu0
      %913 = vmatprep.mubr.bf16.mxu0 0
      %914 = vmatmul.mubr.bf16.gmra.mrb[0].mxu0 %v756
      %v915 = vpop.f32.mrb[0].mxu0
      %v916 = vadd.f32 %v685, %v915
      %v917 = vpop.f32.mrb[0].mxu0
      %v918 = vpop.f32.mrb[0].mxu0
      %v919 = vadd.f32 %v688, %v918
      %v920 = vpop.f32.mrb[0].mxu0
      %921 = vmatprep.mubr.bf16.mxu0 0
      %922 = vmatmul.mubr.bf16.gmra.mrb[0].mxu0 %v758
      %v923 = vpop.f32.mrb[0].mxu0
      %v924 = vadd.f32 %v693, %v923
      %v925 = vpop.f32.mrb[0].mxu0
      %v926 = vpop.f32.mrb[0].mxu0
      %v927 = vadd.f32 %v696, %v926
      %v928 = vpop.f32.mrb[0].mxu0
      %929 = vmatprep.mubr.bf16.mxu0 0
      %930 = vmatmul.mubr.bf16.gmra.mrb[0].mxu0 %v760
      %v931 = vpop.f32.mrb[0].mxu0
      %v932 = vadd.f32 %v701, %v931
      %v933 = vpop.f32.mrb[0].mxu0
      %v934 = vpop.f32.mrb[0].mxu0
      %v935 = vadd.f32 %v704, %v934
      %v936 = vpop.f32.mrb[0].mxu0
      %937 = vmatprep.mubr.bf16.mxu0 0
      %938 = vmatmul.mubr.bf16.gmra.mrb[0].mxu0 %v762
      %v939 = vpop.f32.mrb[0].mxu0
      %v940 = vadd.f32 %v709, %v939
      %v941 = vpop.f32.mrb[0].mxu0
      %v942 = vpop.f32.mrb[0].mxu0
      %v943 = vadd.f32 %v712, %v942
      %v944 = vpop.f32.mrb[0].mxu0
      %945 = vmatprep.mubr.bf16.mxu0 0
      %946 = vmatmul.mubr.bf16.gmra.mrb[0].mxu0 %v764
      %v947 = vpop.f32.mrb[0].mxu0
      %v948 = vadd.f32 %v717, %v947
      %v949 = vpop.f32.mrb[0].mxu0
      %v950 = vpop.f32.mrb[0].mxu0
      %v951 = vadd.f32 %v720, %v950
      %v952 = vpop.f32.mrb[0].mxu0
      %953 = vdwg.mxu0
      %v954 = vld [vmem:[%s165] sm:$0xe]
      %s955 = scalar_lea.vmem %s1, 16
      %v956 = vld [vmem:[%s955] sm:$0xf]
      %v957 = vld [vmem:[%s955 + $0x4] sm:$0x3]
      %v959 = vunpack.c.l.b16 %v954
      %v960 = vpack.c.b16 %v256, %v959
      %vm961 = vcmask 1046528
      %v962 = vrot.slane %v960, 1
      %v963 = vrot.slane %v295, 1
      %v964 = vsel %vm961, %v962, %v963
      %v965 = vrot.slane %v296, 1
      %v966 = vsel %vm961, %v963, %v965
      %v967 = vrot.slane %v297, 1
      %v968 = vsel %vm961, %v965, %v967
      %v969 = vrot.slane %v298, 1
      %v970 = vsel %vm961, %v967, %v969
      %v971 = vrot.slane %v299, 1
      %v972 = vsel %vm961, %v969, %v971
      %v973 = vrot.slane %v300, 1
      %v974 = vsel %vm961, %v971, %v973
      %v975 = vrot.slane %v301, 1
      %v976 = vsel %vm961, %v973, %v975
      %v977 = vrot.slane %v302, 1
      %v978 = vsel %vm961, %v975, %v977
      %v979 = vrot.slane %v303, 1
      %v980 = vsel %vm961, %v977, %v979
      %v981 = vrot.slane %v304, 1
      %v982 = vsel %vm961, %v979, %v981
      %v983 = vrot.slane %v305, 1
      %v984 = vsel %vm961, %v981, %v983
      %v985 = vrot.slane %v306, 1
      %v986 = vsel %vm961, %v983, %v985
      %v987 = vrot.slane %v307, 1
      %v988 = vsel %vm961, %v985, %v987
      %v989 = vrot.slane %v308, 1
      %v990 = vsel %vm961, %v987, %v989
      %v991 = vrot.slane %v309, 1
      %v992 = vsel %vm961, %v989, %v991
      %v993 = vrot.slane %v310, 1
      %v994 = vsel %vm961, %v991, %v993
      %v995 = vrot.slane %v311, 1
      %v996 = vsel %vm961, %v993, %v995
      %v997 = vrot.slane %v312, 1
      %v998 = vsel %vm961, %v995, %v997
      %v999 = vrot.slane %v313, 1
      %v1000 = vsel %vm961, %v997, %v999
      %v1003 = vunpack.c.l.b16 %v956
      %v1004 = vunpack.c.l.b16 %v957
      %v1005 = vpack.c.b16 %v1004, %v1003
      %v1007 = vsel %vm476, %v964, 0
      %v1010 = vsel %vm476, %v966, 0
      %v1013 = vsel %vm476, %v968, 0
      %v1016 = vsel %vm476, %v970, 0
      %v1019 = vsel %vm476, %v972, 0
      %v1022 = vsel %vm476, %v974, 0
      %v1025 = vsel %vm476, %v976, 0
      %v1028 = vsel %vm476, %v978, 0
      %v1031 = vsel %vm476, %v980, 0
      %v1034 = vsel %vm476, %v982, 0
      %v1037 = vsel %vm476, %v984, 0
      %v1040 = vsel %vm476, %v986, 0
      %v1043 = vsel %vm476, %v988, 0
      %v1046 = vsel %vm476, %v990, 0
      %v1049 = vsel %vm476, %v992, 0
      %v1052 = vsel %vm476, %v994, 0
      %v1055 = vsel %vm476, %v996, 0
      %v1058 = vsel %vm476, %v998, 0
      %v1061 = vsel %vm476, %v1000, 0
      %v1064 = vsel %vm534, %v1005, 0
      %1066 = vmatprep.subr.bf16.mxu0 0
      %1067 = vmatpush1.bf16.msra.mxu0 %v1064
      %1068 = vmatprep.subr.bf16.mxu0 0
      %1069 = vmatpush1.bf16.msra.mxu0 0
      %1070 = vmatprep.subr.bf16.mxu0 0
      %1071 = vmatpush1.bf16.msra.mxu0 0
      %1072 = vmatprep.subr.bf16.mxu0 0
      %1073 = vmatpush1.bf16.msra.mxu0 0
      %1074 = vmatprep.subr.bf16.mxu0 0
      %1075 = vmatpush1.bf16.msra.mxu0 0
      %1076 = vmatprep.subr.bf16.mxu0 0
      %1077 = vmatpush1.bf16.msra.mxu0 0
      %1078 = vmatprep.subr.bf16.mxu0 0
      %1079 = vmatpush1.bf16.msra.mxu0 0
      %1080 = vmatprep.subr.bf16.mxu0 0
      %1081 = vmatpush1.bf16.msra.mxu0 0
      %1082 = vmatprep.subr.bf16.mxu0 0
      %1083 = vmatpush1.bf16.msra.mxu0 0
      %1084 = vmatprep.subr.bf16.mxu0 0
      %1085 = vmatpush1.bf16.msra.mxu0 0
      %1086 = vmatprep.subr.bf16.mxu0 0
      %1087 = vmatpush1.bf16.msra.mxu0 0
      %1088 = vmatprep.subr.bf16.mxu0 0
      %1089 = vmatpush1.bf16.msra.mxu0 0
      %1090 = vmatprep.subr.bf16.mxu0 0
      %1091 = vmatpush1.bf16.msra.mxu0 0
      %1092 = vmatprep.subr.bf16.mxu0 0
      %1093 = vmatpush1.bf16.msra.mxu0 0
      %1094 = vmatprep.subr.bf16.mxu0 0
      %1095 = vmatpush1.bf16.msra.mxu0 0
      %1096 = vmatprep.subr.bf16.mxu0 0
      %1097 = vmatpush1.bf16.msra.mxu0 0
      %1098 = vmatprep.mubr.bf16.mxu0 0
      %1099 = vmatmul.mubr.bf16.gmra.mrb[0].mxu0 %v1007
      %v1100 = vpop.f32.mrb[0].mxu0
      %v1101 = vadd.f32 0.0, %v1100
      %v1102 = vpop.f32.mrb[0].mxu0
      %v1103 = vpop.f32.mrb[0].mxu0
      %v1104 = vadd.f32 0.0, %v1103
      %v1105 = vpop.f32.mrb[0].mxu0
      %1106 = vmatprep.mubr.bf16.mxu0 0
      %1107 = vmatmul.mubr.bf16.gmra.mrb[0].mxu0 %v1010
      %v1108 = vpop.f32.mrb[0].mxu0
      %v1109 = vadd.f32 0.0, %v1108
      %v1110 = vpop.f32.mrb[0].mxu0
      %v1111 = vpop.f32.mrb[0].mxu0
      %v1112 = vadd.f32 0.0, %v1111
      %v1113 = vpop.f32.mrb[0].mxu0
      %1114 = vmatprep.mubr.bf16.mxu0 0
      %1115 = vmatmul.mubr.bf16.gmra.mrb[0].mxu0 %v1013
      %v1116 = vpop.f32.mrb[0].mxu0
      %v1117 = vadd.f32 0.0, %v1116
      %v1118 = vpop.f32.mrb[0].mxu0
      %v1119 = vpop.f32.mrb[0].mxu0
      %v1120 = vadd.f32 0.0, %v1119
      %v1121 = vpop.f32.mrb[0].mxu0
      %1122 = vmatprep.mubr.bf16.mxu0 0
      %1123 = vmatmul.mubr.bf16.gmra.mrb[0].mxu0 %v1016
      %v1124 = vpop.f32.mrb[0].mxu0
      %v1125 = vadd.f32 0.0, %v1124
      %v1126 = vpop.f32.mrb[0].mxu0
      %v1127 = vpop.f32.mrb[0].mxu0
      %v1128 = vadd.f32 0.0, %v1127
      %v1129 = vpop.f32.mrb[0].mxu0
      %1130 = vmatprep.mubr.bf16.mxu0 0
      %1131 = vmatmul.mubr.bf16.gmra.mrb[0].mxu0 %v1019
      %v1132 = vpop.f32.mrb[0].mxu0
      %v1133 = vadd.f32 0.0, %v1132
      %v1134 = vpop.f32.mrb[0].mxu0
      %v1135 = vpop.f32.mrb[0].mxu0
      %v1136 = vadd.f32 0.0, %v1135
      %v1137 = vpop.f32.mrb[0].mxu0
      %1138 = vmatprep.mubr.bf16.mxu0 0
      %1139 = vmatmul.mubr.bf16.gmra.mrb[0].mxu0 %v1022
      %v1140 = vpop.f32.mrb[0].mxu0
      %v1141 = vadd.f32 0.0, %v1140
      %v1142 = vpop.f32.mrb[0].mxu0
      %v1143 = vpop.f32.mrb[0].mxu0
      %v1144 = vadd.f32 0.0, %v1143
      %v1145 = vpop.f32.mrb[0].mxu0
      %1146 = vmatprep.mubr.bf16.mxu0 0
      %1147 = vmatmul.mubr.bf16.gmra.mrb[0].mxu0 %v1025
      %v1148 = vpop.f32.mrb[0].mxu0
      %v1149 = vadd.f32 0.0, %v1148
      %v1150 = vpop.f32.mrb[0].mxu0
      %v1151 = vpop.f32.mrb[0].mxu0
      %v1152 = vadd.f32 0.0, %v1151
      %v1153 = vpop.f32.mrb[0].mxu0
      %1154 = vmatprep.mubr.bf16.mxu0 0
      %1155 = vmatmul.mubr.bf16.gmra.mrb[0].mxu0 %v1028
      %v1156 = vpop.f32.mrb[0].mxu0
      %v1157 = vadd.f32 0.0, %v1156
      %v1158 = vpop.f32.mrb[0].mxu0
      %v1159 = vpop.f32.mrb[0].mxu0
      %v1160 = vadd.f32 0.0, %v1159
      %v1161 = vpop.f32.mrb[0].mxu0
      %1162 = vmatprep.mubr.bf16.mxu0 0
      %1163 = vmatmul.mubr.bf16.gmra.mrb[0].mxu0 %v1031
      %v1164 = vpop.f32.mrb[0].mxu0
      %v1165 = vadd.f32 0.0, %v1164
      %v1166 = vpop.f32.mrb[0].mxu0
      %v1167 = vpop.f32.mrb[0].mxu0
      %v1168 = vadd.f32 0.0, %v1167
      %v1169 = vpop.f32.mrb[0].mxu0
      %1170 = vmatprep.mubr.bf16.mxu0 0
      %1171 = vmatmul.mubr.bf16.gmra.mrb[0].mxu0 %v1034
      %v1172 = vpop.f32.mrb[0].mxu0
      %v1173 = vadd.f32 0.0, %v1172
      %v1174 = vpop.f32.mrb[0].mxu0
      %v1175 = vpop.f32.mrb[0].mxu0
      %v1176 = vadd.f32 0.0, %v1175
      %v1177 = vpop.f32.mrb[0].mxu0
      %1178 = vmatprep.mubr.bf16.mxu0 0
      %1179 = vmatmul.mubr.bf16.gmra.mrb[0].mxu0 %v1037
      %v1180 = vpop.f32.mrb[0].mxu0
      %v1181 = vadd.f32 0.0, %v1180
      %v1182 = vpop.f32.mrb[0].mxu0
      %v1183 = vpop.f32.mrb[0].mxu0
      %v1184 = vadd.f32 0.0, %v1183
      %v1185 = vpop.f32.mrb[0].mxu0
      %1186 = vmatprep.mubr.bf16.mxu0 0
      %1187 = vmatmul.mubr.bf16.gmra.mrb[0].mxu0 %v1040
      %v1188 = vpop.f32.mrb[0].mxu0
      %v1189 = vadd.f32 0.0, %v1188
      %v1190 = vpop.f32.mrb[0].mxu0
      %v1191 = vpop.f32.mrb[0].mxu0
      %v1192 = vadd.f32 0.0, %v1191
      %v1193 = vpop.f32.mrb[0].mxu0
      %1194 = vmatprep.mubr.bf16.mxu0 0
      %1195 = vmatmul.mubr.bf16.gmra.mrb[0].mxu0 %v1043
      %v1196 = vpop.f32.mrb[0].mxu0
      %v1197 = vadd.f32 0.0, %v1196
      %v1198 = vpop.f32.mrb[0].mxu0
      %v1199 = vpop.f32.mrb[0].mxu0
      %v1200 = vadd.f32 0.0, %v1199
      %v1201 = vpop.f32.mrb[0].mxu0
      %1202 = vmatprep.mubr.bf16.mxu0 0
      %1203 = vmatmul.mubr.bf16.gmra.mrb[0].mxu0 %v1046
      %v1204 = vpop.f32.mrb[0].mxu0
      %v1205 = vadd.f32 0.0, %v1204
      %v1206 = vpop.f32.mrb[0].mxu0
      %v1207 = vpop.f32.mrb[0].mxu0
      %v1208 = vadd.f32 0.0, %v1207
      %v1209 = vpop.f32.mrb[0].mxu0
      %1210 = vmatprep.mubr.bf16.mxu0 0
      %1211 = vmatmul.mubr.bf16.gmra.mrb[0].mxu0 %v1049
      %v1212 = vpop.f32.mrb[0].mxu0
      %v1213 = vadd.f32 0.0, %v1212
      %v1214 = vpop.f32.mrb[0].mxu0
      %v1215 = vpop.f32.mrb[0].mxu0
      %v1216 = vadd.f32 0.0, %v1215
      %v1217 = vpop.f32.mrb[0].mxu0
      %1218 = vmatprep.mubr.bf16.mxu0 0
      %1219 = vmatmul.mubr.bf16.gmra.mrb[0].mxu0 %v1052
      %v1220 = vpop.f32.mrb[0].mxu0
      %v1221 = vadd.f32 0.0, %v1220
      %v1222 = vpop.f32.mrb[0].mxu0
      %v1223 = vpop.f32.mrb[0].mxu0
      %v1224 = vadd.f32 0.0, %v1223
      %v1225 = vpop.f32.mrb[0].mxu0
      %1226 = vmatprep.mubr.bf16.mxu0 0
      %1227 = vmatmul.mubr.bf16.gmra.mrb[0].mxu0 %v1055
      %v1228 = vpop.f32.mrb[0].mxu0
      %v1229 = vadd.f32 0.0, %v1228
      %v1230 = vpop.f32.mrb[0].mxu0
      %v1231 = vpop.f32.mrb[0].mxu0
      %v1232 = vadd.f32 0.0, %v1231
      %v1233 = vpop.f32.mrb[0].mxu0
      %1234 = vmatprep.mubr.bf16.mxu0 0
      %1235 = vmatmul.mubr.bf16.gmra.mrb[0].mxu0 %v1058
      %v1236 = vpop.f32.mrb[0].mxu0
      %v1237 = vadd.f32 0.0, %v1236
      %v1238 = vpop.f32.mrb[0].mxu0
      %v1239 = vpop.f32.mrb[0].mxu0
      %v1240 = vadd.f32 0.0, %v1239
      %v1241 = vpop.f32.mrb[0].mxu0
      %1242 = vmatprep.mubr.bf16.mxu0 0
      %1243 = vmatmul.mubr.bf16.gmra.mrb[0].mxu0 %v1061
      %v1244 = vpop.f32.mrb[0].mxu0
      %v1245 = vadd.f32 0.0, %v1244
      %v1246 = vpop.f32.mrb[0].mxu0
      %v1247 = vpop.f32.mrb[0].mxu0
      %v1248 = vadd.f32 0.0, %v1247
      %v1249 = vpop.f32.mrb[0].mxu0
      %1250 = vdwg.mxu0
      %v1251 = vadd.f32 %v804, %v1101
      %v1252 = vadd.f32 %v807, %v1104
      %v1253 = vadd.f32 %v812, %v1109
      %v1254 = vadd.f32 %v815, %v1112
      %v1255 = vadd.f32 %v820, %v1117
      %v1256 = vadd.f32 %v823, %v1120
      %v1257 = vadd.f32 %v828, %v1125
      %v1258 = vadd.f32 %v831, %v1128
      %v1259 = vadd.f32 %v836, %v1133
      %v1260 = vadd.f32 %v839, %v1136
      %v1261 = vadd.f32 %v844, %v1141
      %v1262 = vadd.f32 %v847, %v1144
      %v1263 = vadd.f32 %v852, %v1149
      %v1264 = vadd.f32 %v855, %v1152
      %v1265 = vadd.f32 %v860, %v1157
      %v1266 = vadd.f32 %v863, %v1160
      %v1267 = vadd.f32 %v868, %v1165
      %v1268 = vadd.f32 %v871, %v1168
      %v1269 = vadd.f32 %v876, %v1173
      %v1270 = vadd.f32 %v879, %v1176
      %v1271 = vadd.f32 %v884, %v1181
      %v1272 = vadd.f32 %v887, %v1184
      %v1273 = vadd.f32 %v892, %v1189
      %v1274 = vadd.f32 %v895, %v1192
      %v1275 = vadd.f32 %v900, %v1197
      %v1276 = vadd.f32 %v903, %v1200
      %v1277 = vadd.f32 %v908, %v1205
      %v1278 = vadd.f32 %v911, %v1208
      %v1279 = vadd.f32 %v916, %v1213
      %v1280 = vadd.f32 %v919, %v1216
      %v1281 = vadd.f32 %v924, %v1221
      %v1282 = vadd.f32 %v927, %v1224
      %v1283 = vadd.f32 %v932, %v1229
      %v1284 = vadd.f32 %v935, %v1232
      %v1285 = vadd.f32 %v940, %v1237
      %v1286 = vadd.f32 %v943, %v1240
      %v1287 = vadd.f32 %v948, %v1245
      %v1288 = vadd.f32 %v951, %v1248
      %v1289 = vld [vmem:[%s165 + $0x98] sm:$0x3]
      %s1290 = scalar_lea.vmem %s1, 24
      %v1291 = vld [vmem:[%s1290] sm:$0xf]
      %v1292 = vld [vmem:[%s1290 + $0x4] sm:$0x3]
      %v1294 = vunpack.c.l.b16 %v1289
      %v1295 = vpack.c.b16 %v1294, %v1294
      %vm1296 = vsmask.f32 6400
      %v1298 = vshrl.u32 %v960, 16
      %v1300 = vrot.slane %v1298, 1
      %v1301 = vshll.u32 %v960, 16
      %v1303 = vrot.slane %v1301, 2
      %v1304 = vor.u32 %v1300, %v1303
      %v1305 = vrot.slane %v327, 1
      %v1306 = vrot.slane %v323, 2
      %v1307 = vor.u32 %v1305, %v1306
      %v1308 = vsel %vm1296, %v1304, %v1307
      %v1309 = vrot.slane %v335, 1
      %v1310 = vrot.slane %v331, 2
      %v1311 = vor.u32 %v1309, %v1310
      %v1312 = vsel %vm1296, %v1307, %v1311
      %v1313 = vrot.slane %v343, 1
      %v1314 = vrot.slane %v339, 2
      %v1315 = vor.u32 %v1313, %v1314
      %v1316 = vsel %vm1296, %v1311, %v1315
      %v1317 = vrot.slane %v351, 1
      %v1318 = vrot.slane %v347, 2
      %v1319 = vor.u32 %v1317, %v1318
      %v1320 = vsel %vm1296, %v1315, %v1319
      %v1321 = vrot.slane %v359, 1
      %v1322 = vrot.slane %v355, 2
      %v1323 = vor.u32 %v1321, %v1322
      %v1324 = vsel %vm1296, %v1319, %v1323
      %v1325 = vrot.slane %v367, 1
      %v1326 = vrot.slane %v363, 2
      %v1327 = vor.u32 %v1325, %v1326
      %v1328 = vsel %vm1296, %v1323, %v1327
      %v1329 = vrot.slane %v375, 1
      %v1330 = vrot.slane %v371, 2
      %v1331 = vor.u32 %v1329, %v1330
      %v1332 = vsel %vm1296, %v1327, %v1331
      %v1333 = vrot.slane %v383, 1
      %v1334 = vrot.slane %v379, 2
      %v1335 = vor.u32 %v1333, %v1334
      %v1336 = vsel %vm1296, %v1331, %v1335
      %v1337 = vrot.slane %v391, 1
      %v1338 = vrot.slane %v387, 2
      %v1339 = vor.u32 %v1337, %v1338
      %v1340 = vsel %vm1296, %v1335, %v1339
      %v1341 = vrot.slane %v399, 1
      %v1342 = vrot.slane %v395, 2
      %v1343 = vor.u32 %v1341, %v1342
      %v1344 = vsel %vm1296, %v1339, %v1343
      %v1345 = vrot.slane %v407, 1
      %v1346 = vrot.slane %v403, 2
      %v1347 = vor.u32 %v1345, %v1346
      %v1348 = vsel %vm1296, %v1343, %v1347
      %v1349 = vrot.slane %v415, 1
      %v1350 = vrot.slane %v411, 2
      %v1351 = vor.u32 %v1349, %v1350
      %v1352 = vsel %vm1296, %v1347, %v1351
      %v1353 = vrot.slane %v423, 1
      %v1354 = vrot.slane %v419, 2
      %v1355 = vor.u32 %v1353, %v1354
      %v1356 = vsel %vm1296, %v1351, %v1355
      %v1357 = vrot.slane %v431, 1
      %v1358 = vrot.slane %v427, 2
      %v1359 = vor.u32 %v1357, %v1358
      %v1360 = vsel %vm1296, %v1355, %v1359
      %v1361 = vrot.slane %v439, 1
      %v1362 = vrot.slane %v435, 2
      %v1363 = vor.u32 %v1361, %v1362
      %v1364 = vsel %vm1296, %v1359, %v1363
      %v1365 = vrot.slane %v447, 1
      %v1366 = vrot.slane %v443, 2
      %v1367 = vor.u32 %v1365, %v1366
      %v1368 = vsel %vm1296, %v1363, %v1367
      %v1369 = vrot.slane %v455, 1
      %v1370 = vrot.slane %v451, 2
      %v1371 = vor.u32 %v1369, %v1370
      %v1372 = vsel %vm1296, %v1367, %v1371
      %v1373 = vrot.slane %v463, 1
      %v1374 = vrot.slane %v459, 2
      %v1375 = vor.u32 %v1373, %v1374
      %v1376 = vsel %vm1296, %v1371, %v1375
      %v1378 = vshrl.u32 %v1295, 16
      %v1380 = vrot.slane %v1378, 1
      %v1381 = vshll.u32 %v1295, 16
      %v1383 = vrot.slane %v1381, 2
      %v1384 = vor.u32 %v1380, %v1383
      %v1385 = vsel %vm1296, %v1375, %v1384
      %v1388 = vunpack.c.l.b16 %v1291
      %v1389 = vunpack.c.l.b16 %v1292
      %v1390 = vpack.c.b16 %v1389, %v1388
      %v1392 = vsel %vm476, %v1308, 0
      %v1395 = vsel %vm476, %v1312, 0
      %v1398 = vsel %vm476, %v1316, 0
      %v1401 = vsel %vm476, %v1320, 0
      %v1404 = vsel %vm476, %v1324, 0
      %v1407 = vsel %vm476, %v1328, 0
      %v1410 = vsel %vm476, %v1332, 0
      %v1413 = vsel %vm476, %v1336, 0
      %v1416 = vsel %vm476, %v1340, 0
      %v1419 = vsel %vm476, %v1344, 0
      %v1422 = vsel %vm476, %v1348, 0
      %v1425 = vsel %vm476, %v1352, 0
      %v1428 = vsel %vm476, %v1356, 0
      %v1431 = vsel %vm476, %v1360, 0
      %v1434 = vsel %vm476, %v1364, 0
      %v1437 = vsel %vm476, %v1368, 0
      %v1440 = vsel %vm476, %v1372, 0
      %v1443 = vsel %vm476, %v1376, 0
      %v1446 = vsel %vm476, %v1385, 0
      %v1449 = vsel %vm534, %v1390, 0
      %1451 = vmatprep.subr.bf16.mxu0 0
      %1452 = vmatpush1.bf16.msra.mxu0 %v1449
      %1453 = vmatprep.subr.bf16.mxu0 0
      %1454 = vmatpush1.bf16.msra.mxu0 0
      %1455 = vmatprep.subr.bf16.mxu0 0
      %1456 = vmatpush1.bf16.msra.mxu0 0
      %1457 = vmatprep.subr.bf16.mxu0 0
      %1458 = vmatpush1.bf16.msra.mxu0 0
      %1459 = vmatprep.subr.bf16.mxu0 0
      %1460 = vmatpush1.bf16.msra.mxu0 0
      %1461 = vmatprep.subr.bf16.mxu0 0
      %1462 = vmatpush1.bf16.msra.mxu0 0
      %1463 = vmatprep.subr.bf16.mxu0 0
      %1464 = vmatpush1.bf16.msra.mxu0 0
      %1465 = vmatprep.subr.bf16.mxu0 0
      %1466 = vmatpush1.bf16.msra.mxu0 0
      %1467 = vmatprep.subr.bf16.mxu0 0
      %1468 = vmatpush1.bf16.msra.mxu0 0
      %1469 = vmatprep.subr.bf16.mxu0 0
      %1470 = vmatpush1.bf16.msra.mxu0 0
      %1471 = vmatprep.subr.bf16.mxu0 0
      %1472 = vmatpush1.bf16.msra.mxu0 0
      %1473 = vmatprep.subr.bf16.mxu0 0
      %1474 = vmatpush1.bf16.msra.mxu0 0
      %1475 = vmatprep.subr.bf16.mxu0 0
      %1476 = vmatpush1.bf16.msra.mxu0 0
      %1477 = vmatprep.subr.bf16.mxu0 0
      %1478 = vmatpush1.bf16.msra.mxu0 0
      %1479 = vmatprep.subr.bf16.mxu0 0
      %1480 = vmatpush1.bf16.msra.mxu0 0
      %1481 = vmatprep.subr.bf16.mxu0 0
      %1482 = vmatpush1.bf16.msra.mxu0 0
      %1483 = vmatprep.mubr.bf16.mxu0 0
      %1484 = vmatmul.mubr.bf16.gmra.mrb[0].mxu0 %v1392
      %v1485 = vpop.f32.mrb[0].mxu0
      %v1486 = vadd.f32 0.0, %v1485
      %v1487 = vpop.f32.mrb[0].mxu0
      %v1488 = vpop.f32.mrb[0].mxu0
      %v1489 = vadd.f32 0.0, %v1488
      %v1490 = vpop.f32.mrb[0].mxu0
      %1491 = vmatprep.mubr.bf16.mxu0 0
      %1492 = vmatmul.mubr.bf16.gmra.mrb[0].mxu0 %v1395
      %v1493 = vpop.f32.mrb[0].mxu0
      %v1494 = vadd.f32 0.0, %v1493
      %v1495 = vpop.f32.mrb[0].mxu0
      %v1496 = vpop.f32.mrb[0].mxu0
      %v1497 = vadd.f32 0.0, %v1496
      %v1498 = vpop.f32.mrb[0].mxu0
      %1499 = vmatprep.mubr.bf16.mxu0 0
      %1500 = vmatmul.mubr.bf16.gmra.mrb[0].mxu0 %v1398
      %v1501 = vpop.f32.mrb[0].mxu0
      %v1502 = vadd.f32 0.0, %v1501
      %v1503 = vpop.f32.mrb[0].mxu0
      %v1504 = vpop.f32.mrb[0].mxu0
      %v1505 = vadd.f32 0.0, %v1504
      %v1506 = vpop.f32.mrb[0].mxu0
      %1507 = vmatprep.mubr.bf16.mxu0 0
      %1508 = vmatmul.mubr.bf16.gmra.mrb[0].mxu0 %v1401
      %v1509 = vpop.f32.mrb[0].mxu0
      %v1510 = vadd.f32 0.0, %v1509
      %v1511 = vpop.f32.mrb[0].mxu0
      %v1512 = vpop.f32.mrb[0].mxu0
      %v1513 = vadd.f32 0.0, %v1512
      %v1514 = vpop.f32.mrb[0].mxu0
      %1515 = vmatprep.mubr.bf16.mxu0 0
      %1516 = vmatmul.mubr.bf16.gmra.mrb[0].mxu0 %v1404
      %v1517 = vpop.f32.mrb[0].mxu0
      %v1518 = vadd.f32 0.0, %v1517
      %v1519 = vpop.f32.mrb[0].mxu0
      %v1520 = vpop.f32.mrb[0].mxu0
      %v1521 = vadd.f32 0.0, %v1520
      %v1522 = vpop.f32.mrb[0].mxu0
      %1523 = vmatprep.mubr.bf16.mxu0 0
      %1524 = vmatmul.mubr.bf16.gmra.mrb[0].mxu0 %v1407
      %v1525 = vpop.f32.mrb[0].mxu0
      %v1526 = vadd.f32 0.0, %v1525
      %v1527 = vpop.f32.mrb[0].mxu0
      %v1528 = vpop.f32.mrb[0].mxu0
      %v1529 = vadd.f32 0.0, %v1528
      %v1530 = vpop.f32.mrb[0].mxu0
      %1531 = vmatprep.mubr.bf16.mxu0 0
      %1532 = vmatmul.mubr.bf16.gmra.mrb[0].mxu0 %v1410
      %v1533 = vpop.f32.mrb[0].mxu0
      %v1534 = vadd.f32 0.0, %v1533
      %v1535 = vpop.f32.mrb[0].mxu0
      %v1536 = vpop.f32.mrb[0].mxu0
      %v1537 = vadd.f32 0.0, %v1536
      %v1538 = vpop.f32.mrb[0].mxu0
      %1539 = vmatprep.mubr.bf16.mxu0 0
      %1540 = vmatmul.mubr.bf16.gmra.mrb[0].mxu0 %v1413
      %v1541 = vpop.f32.mrb[0].mxu0
      %v1542 = vadd.f32 0.0, %v1541
      %v1543 = vpop.f32.mrb[0].mxu0
      %v1544 = vpop.f32.mrb[0].mxu0
      %v1545 = vadd.f32 0.0, %v1544
      %v1546 = vpop.f32.mrb[0].mxu0
      %1547 = vmatprep.mubr.bf16.mxu0 0
      %1548 = vmatmul.mubr.bf16.gmra.mrb[0].mxu0 %v1416
      %v1549 = vpop.f32.mrb[0].mxu0
      %v1550 = vadd.f32 0.0, %v1549
      %v1551 = vpop.f32.mrb[0].mxu0
      %v1552 = vpop.f32.mrb[0].mxu0
      %v1553 = vadd.f32 0.0, %v1552
      %v1554 = vpop.f32.mrb[0].mxu0
      %1555 = vmatprep.mubr.bf16.mxu0 0
      %1556 = vmatmul.mubr.bf16.gmra.mrb[0].mxu0 %v1419
      %v1557 = vpop.f32.mrb[0].mxu0
      %v1558 = vadd.f32 0.0, %v1557
      %v1559 = vpop.f32.mrb[0].mxu0
      %v1560 = vpop.f32.mrb[0].mxu0
      %v1561 = vadd.f32 0.0, %v1560
      %v1562 = vpop.f32.mrb[0].mxu0
      %1563 = vmatprep.mubr.bf16.mxu0 0
      %1564 = vmatmul.mubr.bf16.gmra.mrb[0].mxu0 %v1422
      %v1565 = vpop.f32.mrb[0].mxu0
      %v1566 = vadd.f32 0.0, %v1565
      %v1567 = vpop.f32.mrb[0].mxu0
      %v1568 = vpop.f32.mrb[0].mxu0
      %v1569 = vadd.f32 0.0, %v1568
      %v1570 = vpop.f32.mrb[0].mxu0
      %1571 = vmatprep.mubr.bf16.mxu0 0
      %1572 = vmatmul.mubr.bf16.gmra.mrb[0].mxu0 %v1425
      %v1573 = vpop.f32.mrb[0].mxu0
      %v1574 = vadd.f32 0.0, %v1573
      %v1575 = vpop.f32.mrb[0].mxu0
      %v1576 = vpop.f32.mrb[0].mxu0
      %v1577 = vadd.f32 0.0, %v1576
      %v1578 = vpop.f32.mrb[0].mxu0
      %1579 = vmatprep.mubr.bf16.mxu0 0
      %1580 = vmatmul.mubr.bf16.gmra.mrb[0].mxu0 %v1428
      %v1581 = vpop.f32.mrb[0].mxu0
      %v1582 = vadd.f32 0.0, %v1581
      %v1583 = vpop.f32.mrb[0].mxu0
      %v1584 = vpop.f32.mrb[0].mxu0
      %v1585 = vadd.f32 0.0, %v1584
      %v1586 = vpop.f32.mrb[0].mxu0
      %1587 = vmatprep.mubr.bf16.mxu0 0
      %1588 = vmatmul.mubr.bf16.gmra.mrb[0].mxu0 %v1431
      %v1589 = vpop.f32.mrb[0].mxu0
      %v1590 = vadd.f32 0.0, %v1589
      %v1591 = vpop.f32.mrb[0].mxu0
      %v1592 = vpop.f32.mrb[0].mxu0
      %v1593 = vadd.f32 0.0, %v1592
      %v1594 = vpop.f32.mrb[0].mxu0
      %1595 = vmatprep.mubr.bf16.mxu0 0
      %1596 = vmatmul.mubr.bf16.gmra.mrb[0].mxu0 %v1434
      %v1597 = vpop.f32.mrb[0].mxu0
      %v1598 = vadd.f32 0.0, %v1597
      %v1599 = vpop.f32.mrb[0].mxu0
      %v1600 = vpop.f32.mrb[0].mxu0
      %v1601 = vadd.f32 0.0, %v1600
      %v1602 = vpop.f32.mrb[0].mxu0
      %1603 = vmatprep.mubr.bf16.mxu0 0
      %1604 = vmatmul.mubr.bf16.gmra.mrb[0].mxu0 %v1437
      %v1605 = vpop.f32.mrb[0].mxu0
      %v1606 = vadd.f32 0.0, %v1605
      %v1607 = vpop.f32.mrb[0].mxu0
      %v1608 = vpop.f32.mrb[0].mxu0
      %v1609 = vadd.f32 0.0, %v1608
      %v1610 = vpop.f32.mrb[0].mxu0
      %1611 = vmatprep.mubr.bf16.mxu0 0
      %1612 = vmatmul.mubr.bf16.gmra.mrb[0].mxu0 %v1440
      %v1613 = vpop.f32.mrb[0].mxu0
      %v1614 = vadd.f32 0.0, %v1613
      %v1615 = vpop.f32.mrb[0].mxu0
      %v1616 = vpop.f32.mrb[0].mxu0
      %v1617 = vadd.f32 0.0, %v1616
      %v1618 = vpop.f32.mrb[0].mxu0
      %1619 = vmatprep.mubr.bf16.mxu0 0
      %1620 = vmatmul.mubr.bf16.gmra.mrb[0].mxu0 %v1443
      %v1621 = vpop.f32.mrb[0].mxu0
      %v1622 = vadd.f32 0.0, %v1621
      %v1623 = vpop.f32.mrb[0].mxu0
      %v1624 = vpop.f32.mrb[0].mxu0
      %v1625 = vadd.f32 0.0, %v1624
      %v1626 = vpop.f32.mrb[0].mxu0
      %1627 = vmatprep.mubr.bf16.mxu0 0
      %1628 = vmatmul.mubr.bf16.gmra.mrb[0].mxu0 %v1446
      %v1629 = vpop.f32.mrb[0].mxu0
      %v1630 = vadd.f32 0.0, %v1629
      %v1631 = vpop.f32.mrb[0].mxu0
      %v1632 = vpop.f32.mrb[0].mxu0
      %v1633 = vadd.f32 0.0, %v1632
      %v1634 = vpop.f32.mrb[0].mxu0
      %1635 = vdwg.mxu0
      %v1636 = vadd.f32 %v1251, %v1486
      %v1637 = vadd.f32 %v1252, %v1489
      %v1638 = vadd.f32 %v1253, %v1494
      %v1639 = vadd.f32 %v1254, %v1497
      %v1640 = vadd.f32 %v1255, %v1502
      %v1641 = vadd.f32 %v1256, %v1505
      %v1642 = vadd.f32 %v1257, %v1510
      %v1643 = vadd.f32 %v1258, %v1513
      %v1644 = vadd.f32 %v1259, %v1518
      %v1645 = vadd.f32 %v1260, %v1521
      %v1646 = vadd.f32 %v1261, %v1526
      %v1647 = vadd.f32 %v1262, %v1529
      %v1648 = vadd.f32 %v1263, %v1534
      %v1649 = vadd.f32 %v1264, %v1537
      %v1650 = vadd.f32 %v1265, %v1542
      %v1651 = vadd.f32 %v1266, %v1545
      %v1652 = vadd.f32 %v1267, %v1550
      %v1653 = vadd.f32 %v1268, %v1553
      %v1654 = vadd.f32 %v1269, %v1558
      %v1655 = vadd.f32 %v1270, %v1561
      %v1656 = vadd.f32 %v1271, %v1566
      %v1657 = vadd.f32 %v1272, %v1569
      %v1658 = vadd.f32 %v1273, %v1574
      %v1659 = vadd.f32 %v1274, %v1577
      %v1660 = vadd.f32 %v1275, %v1582
      %v1661 = vadd.f32 %v1276, %v1585
      %v1662 = vadd.f32 %v1277, %v1590
      %v1663 = vadd.f32 %v1278, %v1593
      %v1664 = vadd.f32 %v1279, %v1598
      %v1665 = vadd.f32 %v1280, %v1601
      %v1666 = vadd.f32 %v1281, %v1606
      %v1667 = vadd.f32 %v1282, %v1609
      %v1668 = vadd.f32 %v1283, %v1614
      %v1669 = vadd.f32 %v1284, %v1617
      %v1670 = vadd.f32 %v1285, %v1622
      %v1671 = vadd.f32 %v1286, %v1625
      %v1672 = vadd.f32 %v1287, %v1630
      %v1673 = vadd.f32 %v1288, %v1633
      %v1674 = vld [vmem:[%s165 + $0x8] sm:$0xe]
      %v1675 = vld [vmem:[%s165 + $0xc] sm:$0xf]
      %v1676 = vld [vmem:[%s165 + $0x10] sm:$0xf]
      %v1677 = vld [vmem:[%s165 + $0x14] sm:$0xf]
      %v1678 = vld [vmem:[%s165 + $0x18] sm:$0xf]
      %v1679 = vld [vmem:[%s165 + $0x1c] sm:$0xf]
      %v1680 = vld [vmem:[%s165 + $0x20] sm:$0xf]
      %v1681 = vld [vmem:[%s165 + $0x24] sm:$0xf]
      %v1682 = vld [vmem:[%s165 + $0x28] sm:$0xf]
      %v1683 = vld [vmem:[%s165 + $0x2c] sm:$0xf]
      %v1684 = vld [vmem:[%s165 + $0x30] sm:$0xf]
      %v1685 = vld [vmem:[%s165 + $0x34] sm:$0xf]
      %v1686 = vld [vmem:[%s165 + $0x38] sm:$0xf]
      %v1687 = vld [vmem:[%s165 + $0x3c] sm:$0xf]
      %v1688 = vld [vmem:[%s165 + $0x40] sm:$0xf]
      %v1689 = vld [vmem:[%s165 + $0x44] sm:$0xf]
      %v1690 = vld [vmem:[%s165 + $0x48] sm:$0xf]
      %v1691 = vld [vmem:[%s165 + $0x4c] sm:$0xf]
      %v1692 = vld [vmem:[%s165 + $0x50] sm:$0xf]
      %v1693 = vld [vmem:[%s165 + $0x54] sm:$0xf]
      %v1694 = vld [vmem:[%s165 + $0x58] sm:$0xf]
      %v1695 = vld [vmem:[%s165 + $0x5c] sm:$0xf]
      %v1696 = vld [vmem:[%s165 + $0x60] sm:$0xf]
      %v1697 = vld [vmem:[%s165 + $0x64] sm:$0xf]
      %v1698 = vld [vmem:[%s165 + $0x68] sm:$0xf]
      %v1699 = vld [vmem:[%s165 + $0x6c] sm:$0xf]
      %v1700 = vld [vmem:[%s165 + $0x70] sm:$0xf]
      %v1701 = vld [vmem:[%s165 + $0x74] sm:$0xf]
      %v1702 = vld [vmem:[%s165 + $0x78] sm:$0xf]
      %v1703 = vld [vmem:[%s165 + $0x7c] sm:$0xf]
      %v1704 = vld [vmem:[%s165 + $0x80] sm:$0xf]
      %v1705 = vld [vmem:[%s165 + $0x84] sm:$0xf]
      %v1706 = vld [vmem:[%s165 + $0x88] sm:$0xf]
      %v1707 = vld [vmem:[%s165 + $0x8c] sm:$0xf]
      %v1708 = vld [vmem:[%s165 + $0x90] sm:$0xf]
      %v1709 = vld [vmem:[%s165 + $0x94] sm:$0xf]
      %v1710 = vld [vmem:[%s165 + $0x98] sm:$0xf]
      %v1711 = vld [vmem:[%s165 + $0x9c] sm:$0xf]
      %v1712 = vld [vmem:[%s165 + $0xa0] sm:$0x3]
      %s1713 = scalar_lea.vmem %s1, 32
      %v1714 = vld [vmem:[%s1713] sm:$0xf]
      %v1715 = vld [vmem:[%s1713 + $0x4] sm:$0x3]
      %v1755 = vunpack.c.l.b16 %v1674
      %v1756 = vunpack.c.l.b16 %v1675
      %v1757 = vunpack.c.l.b16 %v1676
      %v1758 = vunpack.c.l.b16 %v1677
      %v1759 = vunpack.c.l.b16 %v1678
      %v1760 = vunpack.c.l.b16 %v1679
      %v1761 = vunpack.c.l.b16 %v1680
      %v1762 = vunpack.c.l.b16 %v1681
      %v1763 = vunpack.c.l.b16 %v1682
      %v1764 = vunpack.c.l.b16 %v1683
      %v1765 = vunpack.c.l.b16 %v1684
      %v1766 = vunpack.c.l.b16 %v1685
      %v1767 = vunpack.c.l.b16 %v1686
      %v1768 = vunpack.c.l.b16 %v1687
      %v1769 = vunpack.c.l.b16 %v1688
      %v1770 = vunpack.c.l.b16 %v1689
      %v1771 = vunpack.c.l.b16 %v1690
      %v1772 = vunpack.c.l.b16 %v1691
      %v1773 = vunpack.c.l.b16 %v1692
      %v1774 = vunpack.c.l.b16 %v1693
      %v1775 = vunpack.c.l.b16 %v1694
      %v1776 = vunpack.c.l.b16 %v1695
      %v1777 = vunpack.c.l.b16 %v1696
      %v1778 = vunpack.c.l.b16 %v1697
      %v1779 = vunpack.c.l.b16 %v1698
      %v1780 = vunpack.c.l.b16 %v1699
      %v1781 = vunpack.c.l.b16 %v1700
      %v1782 = vunpack.c.l.b16 %v1701
      %v1783 = vunpack.c.l.b16 %v1702
      %v1784 = vunpack.c.l.b16 %v1703
      %v1785 = vunpack.c.l.b16 %v1704
      %v1786 = vunpack.c.l.b16 %v1705
      %v1787 = vunpack.c.l.b16 %v1706
      %v1788 = vunpack.c.l.b16 %v1707
      %v1789 = vunpack.c.l.b16 %v1708
      %v1790 = vunpack.c.l.b16 %v1709
      %v1791 = vunpack.c.l.b16 %v1710
      %v1792 = vunpack.c.l.b16 %v1711
      %v1793 = vunpack.c.l.b16 %v1712
      %v1794 = vpack.c.b16 %v1756, %v1755
      %v1795 = vpack.c.b16 %v1758, %v1757
      %v1796 = vpack.c.b16 %v1760, %v1759
      %v1797 = vpack.c.b16 %v1762, %v1761
      %v1798 = vpack.c.b16 %v1764, %v1763
      %v1799 = vpack.c.b16 %v1766, %v1765
      %v1800 = vpack.c.b16 %v1768, %v1767
      %v1801 = vpack.c.b16 %v1770, %v1769
      %v1802 = vpack.c.b16 %v1772, %v1771
      %v1803 = vpack.c.b16 %v1774, %v1773
      %v1804 = vpack.c.b16 %v1776, %v1775
      %v1805 = vpack.c.b16 %v1778, %v1777
      %v1806 = vpack.c.b16 %v1780, %v1779
      %v1807 = vpack.c.b16 %v1782, %v1781
      %v1808 = vpack.c.b16 %v1784, %v1783
      %v1809 = vpack.c.b16 %v1786, %v1785
      %v1810 = vpack.c.b16 %v1788, %v1787
      %v1811 = vpack.c.b16 %v1790, %v1789
      %v1812 = vpack.c.b16 %v1792, %v1791
      %v1813 = vpack.c.b16 %v1793, %v1793
      %v1815 = vshrl.u32 %v1794, 16
      %v1817 = vrot.slane %v1815, 1
      %v1818 = vshll.u32 %v1794, 16
      %v1820 = vrot.slane %v1818, 2
      %v1821 = vor.u32 %v1817, %v1820
      %v1823 = vshrl.u32 %v1795, 16
      %v1825 = vrot.slane %v1823, 1
      %v1826 = vshll.u32 %v1795, 16
      %v1828 = vrot.slane %v1826, 2
      %v1829 = vor.u32 %v1825, %v1828
      %v1830 = vsel %vm1296, %v1821, %v1829
      %v1832 = vshrl.u32 %v1796, 16
      %v1834 = vrot.slane %v1832, 1
      %v1835 = vshll.u32 %v1796, 16
      %v1837 = vrot.slane %v1835, 2
      %v1838 = vor.u32 %v1834, %v1837
      %v1839 = vsel %vm1296, %v1829, %v1838
      %v1841 = vshrl.u32 %v1797, 16
      %v1843 = vrot.slane %v1841, 1
      %v1844 = vshll.u32 %v1797, 16
      %v1846 = vrot.slane %v1844, 2
      %v1847 = vor.u32 %v1843, %v1846
      %v1848 = vsel %vm1296, %v1838, %v1847
      %v1850 = vshrl.u32 %v1798, 16
      %v1852 = vrot.slane %v1850, 1
      %v1853 = vshll.u32 %v1798, 16
      %v1855 = vrot.slane %v1853, 2
      %v1856 = vor.u32 %v1852, %v1855
      %v1857 = vsel %vm1296, %v1847, %v1856
      %v1859 = vshrl.u32 %v1799, 16
      %v1861 = vrot.slane %v1859, 1
      %v1862 = vshll.u32 %v1799, 16
      %v1864 = vrot.slane %v1862, 2
      %v1865 = vor.u32 %v1861, %v1864
      %v1866 = vsel %vm1296, %v1856, %v1865
      %v1868 = vshrl.u32 %v1800, 16
      %v1870 = vrot.slane %v1868, 1
      %v1871 = vshll.u32 %v1800, 16
      %v1873 = vrot.slane %v1871, 2
      %v1874 = vor.u32 %v1870, %v1873
      %v1875 = vsel %vm1296, %v1865, %v1874
      %v1877 = vshrl.u32 %v1801, 16
      %v1879 = vrot.slane %v1877, 1
      %v1880 = vshll.u32 %v1801, 16
      %v1882 = vrot.slane %v1880, 2
      %v1883 = vor.u32 %v1879, %v1882
      %v1884 = vsel %vm1296, %v1874, %v1883
      %v1886 = vshrl.u32 %v1802, 16
      %v1888 = vrot.slane %v1886, 1
      %v1889 = vshll.u32 %v1802, 16
      %v1891 = vrot.slane %v1889, 2
      %v1892 = vor.u32 %v1888, %v1891
      %v1893 = vsel %vm1296, %v1883, %v1892
      %v1895 = vshrl.u32 %v1803, 16
      %v1897 = vrot.slane %v1895, 1
      %v1898 = vshll.u32 %v1803, 16
      %v1900 = vrot.slane %v1898, 2
      %v1901 = vor.u32 %v1897, %v1900
      %v1902 = vsel %vm1296, %v1892, %v1901
      %v1904 = vshrl.u32 %v1804, 16
      %v1906 = vrot.slane %v1904, 1
      %v1907 = vshll.u32 %v1804, 16
      %v1909 = vrot.slane %v1907, 2
      %v1910 = vor.u32 %v1906, %v1909
      %v1911 = vsel %vm1296, %v1901, %v1910
      %v1913 = vshrl.u32 %v1805, 16
      %v1915 = vrot.slane %v1913, 1
      %v1916 = vshll.u32 %v1805, 16
      %v1918 = vrot.slane %v1916, 2
      %v1919 = vor.u32 %v1915, %v1918
      %v1920 = vsel %vm1296, %v1910, %v1919
      %v1922 = vshrl.u32 %v1806, 16
      %v1924 = vrot.slane %v1922, 1
      %v1925 = vshll.u32 %v1806, 16
      %v1927 = vrot.slane %v1925, 2
      %v1928 = vor.u32 %v1924, %v1927
      %v1929 = vsel %vm1296, %v1919, %v1928
      %v1931 = vshrl.u32 %v1807, 16
      %v1933 = vrot.slane %v1931, 1
      %v1934 = vshll.u32 %v1807, 16
      %v1936 = vrot.slane %v1934, 2
      %v1937 = vor.u32 %v1933, %v1936
      %v1938 = vsel %vm1296, %v1928, %v1937
      %v1940 = vshrl.u32 %v1808, 16
      %v1942 = vrot.slane %v1940, 1
      %v1943 = vshll.u32 %v1808, 16
      %v1945 = vrot.slane %v1943, 2
      %v1946 = vor.u32 %v1942, %v1945
      %v1947 = vsel %vm1296, %v1937, %v1946
      %v1949 = vshrl.u32 %v1809, 16
      %v1951 = vrot.slane %v1949, 1
      %v1952 = vshll.u32 %v1809, 16
      %v1954 = vrot.slane %v1952, 2
      %v1955 = vor.u32 %v1951, %v1954
      %v1956 = vsel %vm1296, %v1946, %v1955
      %v1958 = vshrl.u32 %v1810, 16
      %v1960 = vrot.slane %v1958, 1
      %v1961 = vshll.u32 %v1810, 16
      %v1963 = vrot.slane %v1961, 2
      %v1964 = vor.u32 %v1960, %v1963
      %v1965 = vsel %vm1296, %v1955, %v1964
      %v1967 = vshrl.u32 %v1811, 16
      %v1969 = vrot.slane %v1967, 1
      %v1970 = vshll.u32 %v1811, 16
      %v1972 = vrot.slane %v1970, 2
      %v1973 = vor.u32 %v1969, %v1972
      %v1974 = vsel %vm1296, %v1964, %v1973
      %v1976 = vshrl.u32 %v1812, 16
      %v1978 = vrot.slane %v1976, 1
      %v1979 = vshll.u32 %v1812, 16
      %v1981 = vrot.slane %v1979, 2
      %v1982 = vor.u32 %v1978, %v1981
      %v1983 = vsel %vm1296, %v1973, %v1982
      %v1985 = vshrl.u32 %v1813, 16
      %v1987 = vrot.slane %v1985, 1
      %v1988 = vshll.u32 %v1813, 16
      %v1990 = vrot.slane %v1988, 2
      %v1991 = vor.u32 %v1987, %v1990
      %v1992 = vsel %vm1296, %v1982, %v1991
      %v1995 = vunpack.c.l.b16 %v1714
      %v1996 = vunpack.c.l.b16 %v1715
      %v1997 = vpack.c.b16 %v1996, %v1995
      %v1999 = vsel %vm476, %v1830, 0
      %v2002 = vsel %vm476, %v1839, 0
      %v2005 = vsel %vm476, %v1848, 0
      %v2008 = vsel %vm476, %v1857, 0
      %v2011 = vsel %vm476, %v1866, 0
      %v2014 = vsel %vm476, %v1875, 0
      %v2017 = vsel %vm476, %v1884, 0
      %v2020 = vsel %vm476, %v1893, 0
      %v2023 = vsel %vm476, %v1902, 0
      %v2026 = vsel %vm476, %v1911, 0
      %v2029 = vsel %vm476, %v1920, 0
      %v2032 = vsel %vm476, %v1929, 0
      %v2035 = vsel %vm476, %v1938, 0
      %v2038 = vsel %vm476, %v1947, 0
      %v2041 = vsel %vm476, %v1956, 0
      %v2044 = vsel %vm476, %v1965, 0
      %v2047 = vsel %vm476, %v1974, 0
      %v2050 = vsel %vm476, %v1983, 0
      %v2053 = vsel %vm476, %v1992, 0
      %v2056 = vsel %vm534, %v1997, 0
      %2058 = vmatprep.subr.bf16.mxu0 0
      %2059 = vmatpush1.bf16.msra.mxu0 %v2056
      %2060 = vmatprep.subr.bf16.mxu0 0
      %2061 = vmatpush1.bf16.msra.mxu0 0
      %2062 = vmatprep.subr.bf16.mxu0 0
      %2063 = vmatpush1.bf16.msra.mxu0 0
      %2064 = vmatprep.subr.bf16.mxu0 0
      %2065 = vmatpush1.bf16.msra.mxu0 0
      %2066 = vmatprep.subr.bf16.mxu0 0
      %2067 = vmatpush1.bf16.msra.mxu0 0
      %2068 = vmatprep.subr.bf16.mxu0 0
      %2069 = vmatpush1.bf16.msra.mxu0 0
      %2070 = vmatprep.subr.bf16.mxu0 0
      %2071 = vmatpush1.bf16.msra.mxu0 0
      %2072 = vmatprep.subr.bf16.mxu0 0
      %2073 = vmatpush1.bf16.msra.mxu0 0
      %2074 = vmatprep.subr.bf16.mxu0 0
      %2075 = vmatpush1.bf16.msra.mxu0 0
      %2076 = vmatprep.subr.bf16.mxu0 0
      %2077 = vmatpush1.bf16.msra.mxu0 0
      %2078 = vmatprep.subr.bf16.mxu0 0
      %2079 = vmatpush1.bf16.msra.mxu0 0
      %2080 = vmatprep.subr.bf16.mxu0 0
      %2081 = vmatpush1.bf16.msra.mxu0 0
      %2082 = vmatprep.subr.bf16.mxu0 0
      %2083 = vmatpush1.bf16.msra.mxu0 0
      %2084 = vmatprep.subr.bf16.mxu0 0
      %2085 = vmatpush1.bf16.msra.mxu0 0
      %2086 = vmatprep.subr.bf16.mxu0 0
      %2087 = vmatpush1.bf16.msra.mxu0 0
      %2088 = vmatprep.subr.bf16.mxu0 0
      %2089 = vmatpush1.bf16.msra.mxu0 0
      %2090 = vmatprep.mubr.bf16.mxu0 0
      %2091 = vmatmul.mubr.bf16.gmra.mrb[0].mxu0 %v1999
      %v2092 = vpop.f32.mrb[0].mxu0
      %v2093 = vadd.f32 0.0, %v2092
      %v2094 = vpop.f32.mrb[0].mxu0
      %v2095 = vpop.f32.mrb[0].mxu0
      %v2096 = vadd.f32 0.0, %v2095
      %v2097 = vpop.f32.mrb[0].mxu0
      %2098 = vmatprep.mubr.bf16.mxu0 0
      %2099 = vmatmul.mubr.bf16.gmra.mrb[0].mxu0 %v2002
      %v2100 = vpop.f32.mrb[0].mxu0
      %v2101 = vadd.f32 0.0, %v2100
      %v2102 = vpop.f32.mrb[0].mxu0
      %v2103 = vpop.f32.mrb[0].mxu0
      %v2104 = vadd.f32 0.0, %v2103
      %v2105 = vpop.f32.mrb[0].mxu0
      %2106 = vmatprep.mubr.bf16.mxu0 0
      %2107 = vmatmul.mubr.bf16.gmra.mrb[0].mxu0 %v2005
      %v2108 = vpop.f32.mrb[0].mxu0
      %v2109 = vadd.f32 0.0, %v2108
      %v2110 = vpop.f32.mrb[0].mxu0
      %v2111 = vpop.f32.mrb[0].mxu0
      %v2112 = vadd.f32 0.0, %v2111
      %v2113 = vpop.f32.mrb[0].mxu0
      %2114 = vmatprep.mubr.bf16.mxu0 0
      %2115 = vmatmul.mubr.bf16.gmra.mrb[0].mxu0 %v2008
      %v2116 = vpop.f32.mrb[0].mxu0
      %v2117 = vadd.f32 0.0, %v2116
      %v2118 = vpop.f32.mrb[0].mxu0
      %v2119 = vpop.f32.mrb[0].mxu0
      %v2120 = vadd.f32 0.0, %v2119
      %v2121 = vpop.f32.mrb[0].mxu0
      %2122 = vmatprep.mubr.bf16.mxu0 0
      %2123 = vmatmul.mubr.bf16.gmra.mrb[0].mxu0 %v2011
      %v2124 = vpop.f32.mrb[0].mxu0
      %v2125 = vadd.f32 0.0, %v2124
      %v2126 = vpop.f32.mrb[0].mxu0
      %v2127 = vpop.f32.mrb[0].mxu0
      %v2128 = vadd.f32 0.0, %v2127
      %v2129 = vpop.f32.mrb[0].mxu0
      %2130 = vmatprep.mubr.bf16.mxu0 0
      %2131 = vmatmul.mubr.bf16.gmra.mrb[0].mxu0 %v2014
      %v2132 = vpop.f32.mrb[0].mxu0
      %v2133 = vadd.f32 0.0, %v2132
      %v2134 = vpop.f32.mrb[0].mxu0
      %v2135 = vpop.f32.mrb[0].mxu0
      %v2136 = vadd.f32 0.0, %v2135
      %v2137 = vpop.f32.mrb[0].mxu0
      %2138 = vmatprep.mubr.bf16.mxu0 0
      %2139 = vmatmul.mubr.bf16.gmra.mrb[0].mxu0 %v2017
      %v2140 = vpop.f32.mrb[0].mxu0
      %v2141 = vadd.f32 0.0, %v2140
      %v2142 = vpop.f32.mrb[0].mxu0
      %v2143 = vpop.f32.mrb[0].mxu0
      %v2144 = vadd.f32 0.0, %v2143
      %v2145 = vpop.f32.mrb[0].mxu0
      %2146 = vmatprep.mubr.bf16.mxu0 0
      %2147 = vmatmul.mubr.bf16.gmra.mrb[0].mxu0 %v2020
      %v2148 = vpop.f32.mrb[0].mxu0
      %v2149 = vadd.f32 0.0, %v2148
      %v2150 = vpop.f32.mrb[0].mxu0
      %v2151 = vpop.f32.mrb[0].mxu0
      %v2152 = vadd.f32 0.0, %v2151
      %v2153 = vpop.f32.mrb[0].mxu0
      %2154 = vmatprep.mubr.bf16.mxu0 0
      %2155 = vmatmul.mubr.bf16.gmra.mrb[0].mxu0 %v2023
      %v2156 = vpop.f32.mrb[0].mxu0
      %v2157 = vadd.f32 0.0, %v2156
      %v2158 = vpop.f32.mrb[0].mxu0
      %v2159 = vpop.f32.mrb[0].mxu0
      %v2160 = vadd.f32 0.0, %v2159
      %v2161 = vpop.f32.mrb[0].mxu0
      %2162 = vmatprep.mubr.bf16.mxu0 0
      %2163 = vmatmul.mubr.bf16.gmra.mrb[0].mxu0 %v2026
      %v2164 = vpop.f32.mrb[0].mxu0
      %v2165 = vadd.f32 0.0, %v2164
      %v2166 = vpop.f32.mrb[0].mxu0
      %v2167 = vpop.f32.mrb[0].mxu0
      %v2168 = vadd.f32 0.0, %v2167
      %v2169 = vpop.f32.mrb[0].mxu0
      %2170 = vmatprep.mubr.bf16.mxu0 0
      %2171 = vmatmul.mubr.bf16.gmra.mrb[0].mxu0 %v2029
      %v2172 = vpop.f32.mrb[0].mxu0
      %v2173 = vadd.f32 0.0, %v2172
      %v2174 = vpop.f32.mrb[0].mxu0
      %v2175 = vpop.f32.mrb[0].mxu0
      %v2176 = vadd.f32 0.0, %v2175
      %v2177 = vpop.f32.mrb[0].mxu0
      %2178 = vmatprep.mubr.bf16.mxu0 0
      %2179 = vmatmul.mubr.bf16.gmra.mrb[0].mxu0 %v2032
      %v2180 = vpop.f32.mrb[0].mxu0
      %v2181 = vadd.f32 0.0, %v2180
      %v2182 = vpop.f32.mrb[0].mxu0
      %v2183 = vpop.f32.mrb[0].mxu0
      %v2184 = vadd.f32 0.0, %v2183
      %v2185 = vpop.f32.mrb[0].mxu0
      %2186 = vmatprep.mubr.bf16.mxu0 0
      %2187 = vmatmul.mubr.bf16.gmra.mrb[0].mxu0 %v2035
      %v2188 = vpop.f32.mrb[0].mxu0
      %v2189 = vadd.f32 0.0, %v2188
      %v2190 = vpop.f32.mrb[0].mxu0
      %v2191 = vpop.f32.mrb[0].mxu0
      %v2192 = vadd.f32 0.0, %v2191
      %v2193 = vpop.f32.mrb[0].mxu0
      %2194 = vmatprep.mubr.bf16.mxu0 0
      %2195 = vmatmul.mubr.bf16.gmra.mrb[0].mxu0 %v2038
      %v2196 = vpop.f32.mrb[0].mxu0
      %v2197 = vadd.f32 0.0, %v2196
      %v2198 = vpop.f32.mrb[0].mxu0
      %v2199 = vpop.f32.mrb[0].mxu0
      %v2200 = vadd.f32 0.0, %v2199
      %v2201 = vpop.f32.mrb[0].mxu0
      %2202 = vmatprep.mubr.bf16.mxu0 0
      %2203 = vmatmul.mubr.bf16.gmra.mrb[0].mxu0 %v2041
      %v2204 = vpop.f32.mrb[0].mxu0
      %v2205 = vadd.f32 0.0, %v2204
      %v2206 = vpop.f32.mrb[0].mxu0
      %v2207 = vpop.f32.mrb[0].mxu0
      %v2208 = vadd.f32 0.0, %v2207
      %v2209 = vpop.f32.mrb[0].mxu0
      %2210 = vmatprep.mubr.bf16.mxu0 0
      %2211 = vmatmul.mubr.bf16.gmra.mrb[0].mxu0 %v2044
      %v2212 = vpop.f32.mrb[0].mxu0
      %v2213 = vadd.f32 0.0, %v2212
      %v2214 = vpop.f32.mrb[0].mxu0
      %v2215 = vpop.f32.mrb[0].mxu0
      %v2216 = vadd.f32 0.0, %v2215
      %v2217 = vpop.f32.mrb[0].mxu0
      %2218 = vmatprep.mubr.bf16.mxu0 0
      %2219 = vmatmul.mubr.bf16.gmra.mrb[0].mxu0 %v2047
      %v2220 = vpop.f32.mrb[0].mxu0
      %v2221 = vadd.f32 0.0, %v2220
      %v2222 = vpop.f32.mrb[0].mxu0
      %v2223 = vpop.f32.mrb[0].mxu0
      %v2224 = vadd.f32 0.0, %v2223
      %v2225 = vpop.f32.mrb[0].mxu0
      %2226 = vmatprep.mubr.bf16.mxu0 0
      %2227 = vmatmul.mubr.bf16.gmra.mrb[0].mxu0 %v2050
      %v2228 = vpop.f32.mrb[0].mxu0
      %v2229 = vadd.f32 0.0, %v2228
      %v2230 = vpop.f32.mrb[0].mxu0
      %v2231 = vpop.f32.mrb[0].mxu0
      %v2232 = vadd.f32 0.0, %v2231
      %v2233 = vpop.f32.mrb[0].mxu0
      %2234 = vmatprep.mubr.bf16.mxu0 0
      %2235 = vmatmul.mubr.bf16.gmra.mrb[0].mxu0 %v2053
      %v2236 = vpop.f32.mrb[0].mxu0
      %v2237 = vadd.f32 0.0, %v2236
      %v2238 = vpop.f32.mrb[0].mxu0
      %v2239 = vpop.f32.mrb[0].mxu0
      %v2240 = vadd.f32 0.0, %v2239
      %v2241 = vpop.f32.mrb[0].mxu0
      %2242 = vdwg.mxu0
      %v2243 = vadd.f32 %v1636, %v2093
      %v2244 = vadd.f32 %v1637, %v2096
      %v2245 = vadd.f32 %v1638, %v2101
      %v2246 = vadd.f32 %v1639, %v2104
      %v2247 = vadd.f32 %v1640, %v2109
      %v2248 = vadd.f32 %v1641, %v2112
      %v2249 = vadd.f32 %v1642, %v2117
      %v2250 = vadd.f32 %v1643, %v2120
      %v2251 = vadd.f32 %v1644, %v2125
      %v2252 = vadd.f32 %v1645, %v2128
      %v2253 = vadd.f32 %v1646, %v2133
      %v2254 = vadd.f32 %v1647, %v2136
      %v2255 = vadd.f32 %v1648, %v2141
      %v2256 = vadd.f32 %v1649, %v2144
      %v2257 = vadd.f32 %v1650, %v2149
      %v2258 = vadd.f32 %v1651, %v2152
      %v2259 = vadd.f32 %v1652, %v2157
      %v2260 = vadd.f32 %v1653, %v2160
      %v2261 = vadd.f32 %v1654, %v2165
      %v2262 = vadd.f32 %v1655, %v2168
      %v2263 = vadd.f32 %v1656, %v2173
      %v2264 = vadd.f32 %v1657, %v2176
      %v2265 = vadd.f32 %v1658, %v2181
      %v2266 = vadd.f32 %v1659, %v2184
      %v2267 = vadd.f32 %v1660, %v2189
      %v2268 = vadd.f32 %v1661, %v2192
      %v2269 = vadd.f32 %v1662, %v2197
      %v2270 = vadd.f32 %v1663, %v2200
      %v2271 = vadd.f32 %v1664, %v2205
      %v2272 = vadd.f32 %v1665, %v2208
      %v2273 = vadd.f32 %v1666, %v2213
      %v2274 = vadd.f32 %v1667, %v2216
      %v2275 = vadd.f32 %v1668, %v2221
      %v2276 = vadd.f32 %v1669, %v2224
      %v2277 = vadd.f32 %v1670, %v2229
      %v2278 = vadd.f32 %v1671, %v2232
      %v2279 = vadd.f32 %v1672, %v2237
      %v2280 = vadd.f32 %v1673, %v2240
      %v2281 = vld [vmem:[%s165 + $0x8] sm:$0xc]
      %s2282 = scalar_lea.vmem %s1, 40
      %v2283 = vld [vmem:[%s2282] sm:$0xf]
      %v2284 = vld [vmem:[%s2282 + $0x4] sm:$0x3]
      %v2286 = vunpack.c.l.b16 %v2281
      %v2287 = vpack.c.b16 %v1756, %v2286
      %vm2288 = vcmask 1045504
      %v2289 = vrot.slane %v2287, 2
      %v2290 = vrot.slane %v1795, 2
      %v2291 = vsel %vm2288, %v2289, %v2290
      %v2292 = vrot.slane %v1796, 2
      %v2293 = vsel %vm2288, %v2290, %v2292
      %v2294 = vrot.slane %v1797, 2
      %v2295 = vsel %vm2288, %v2292, %v2294
      %v2296 = vrot.slane %v1798, 2
      %v2297 = vsel %vm2288, %v2294, %v2296
      %v2298 = vrot.slane %v1799, 2
      %v2299 = vsel %vm2288, %v2296, %v2298
      %v2300 = vrot.slane %v1800, 2
      %v2301 = vsel %vm2288, %v2298, %v2300
      %v2302 = vrot.slane %v1801, 2
      %v2303 = vsel %vm2288, %v2300, %v2302
      %v2304 = vrot.slane %v1802, 2
      %v2305 = vsel %vm2288, %v2302, %v2304
      %v2306 = vrot.slane %v1803, 2
      %v2307 = vsel %vm2288, %v2304, %v2306
      %v2308 = vrot.slane %v1804, 2
      %v2309 = vsel %vm2288, %v2306, %v2308
      %v2310 = vrot.slane %v1805, 2
      %v2311 = vsel %vm2288, %v2308, %v2310
      %v2312 = vrot.slane %v1806, 2
      %v2313 = vsel %vm2288, %v2310, %v2312
      %v2314 = vrot.slane %v1807, 2
      %v2315 = vsel %vm2288, %v2312, %v2314
      %v2316 = vrot.slane %v1808, 2
      %v2317 = vsel %vm2288, %v2314, %v2316
      %v2318 = vrot.slane %v1809, 2
      %v2319 = vsel %vm2288, %v2316, %v2318
      %v2320 = vrot.slane %v1810, 2
      %v2321 = vsel %vm2288, %v2318, %v2320
      %v2322 = vrot.slane %v1811, 2
      %v2323 = vsel %vm2288, %v2320, %v2322
      %v2324 = vrot.slane %v1812, 2
      %v2325 = vsel %vm2288, %v2322, %v2324
      %v2326 = vrot.slane %v1813, 2
      %v2327 = vsel %vm2288, %v2324, %v2326
      %v2330 = vunpack.c.l.b16 %v2283
      %v2331 = vunpack.c.l.b16 %v2284
      %v2332 = vpack.c.b16 %v2331, %v2330
      %v2334 = vsel %vm476, %v2291, 0
      %v2337 = vsel %vm476, %v2293, 0
      %v2340 = vsel %vm476, %v2295, 0
      %v2343 = vsel %vm476, %v2297, 0
      %v2346 = vsel %vm476, %v2299, 0
      %v2349 = vsel %vm476, %v2301, 0
      %v2352 = vsel %vm476, %v2303, 0
      %v2355 = vsel %vm476, %v2305, 0
      %v2358 = vsel %vm476, %v2307, 0
      %v2361 = vsel %vm476, %v2309, 0
      %v2364 = vsel %vm476, %v2311, 0
      %v2367 = vsel %vm476, %v2313, 0
      %v2370 = vsel %vm476, %v2315, 0
      %v2373 = vsel %vm476, %v2317, 0
      %v2376 = vsel %vm476, %v2319, 0
      %v2379 = vsel %vm476, %v2321, 0
      %v2382 = vsel %vm476, %v2323, 0
      %v2385 = vsel %vm476, %v2325, 0
      %v2388 = vsel %vm476, %v2327, 0
      %v2391 = vsel %vm534, %v2332, 0
      %2393 = vmatprep.subr.bf16.mxu0 0
      %2394 = vmatpush1.bf16.msra.mxu0 %v2391
      %2395 = vmatprep.subr.bf16.mxu0 0
      %2396 = vmatpush1.bf16.msra.mxu0 0
      %2397 = vmatprep.subr.bf16.mxu0 0
      %2398 = vmatpush1.bf16.msra.mxu0 0
      %2399 = vmatprep.subr.bf16.mxu0 0
      %2400 = vmatpush1.bf16.msra.mxu0 0
      %2401 = vmatprep.subr.bf16.mxu0 0
      %2402 = vmatpush1.bf16.msra.mxu0 0
      %2403 = vmatprep.subr.bf16.mxu0 0
      %2404 = vmatpush1.bf16.msra.mxu0 0
      %2405 = vmatprep.subr.bf16.mxu0 0
      %2406 = vmatpush1.bf16.msra.mxu0 0
      %2407 = vmatprep.subr.bf16.mxu0 0
      %2408 = vmatpush1.bf16.msra.mxu0 0
      %2409 = vmatprep.subr.bf16.mxu0 0
      %2410 = vmatpush1.bf16.msra.mxu0 0
      %2411 = vmatprep.subr.bf16.mxu0 0
      %2412 = vmatpush1.bf16.msra.mxu0 0
      %2413 = vmatprep.subr.bf16.mxu0 0
      %2414 = vmatpush1.bf16.msra.mxu0 0
      %2415 = vmatprep.subr.bf16.mxu0 0
      %2416 = vmatpush1.bf16.msra.mxu0 0
      %2417 = vmatprep.subr.bf16.mxu0 0
      %2418 = vmatpush1.bf16.msra.mxu0 0
      %2419 = vmatprep.subr.bf16.mxu0 0
      %2420 = vmatpush1.bf16.msra.mxu0 0
      %2421 = vmatprep.subr.bf16.mxu0 0
      %2422 = vmatpush1.bf16.msra.mxu0 0
      %2423 = vmatprep.subr.bf16.mxu0 0
      %2424 = vmatpush1.bf16.msra.mxu0 0
      %2425 = vmatprep.mubr.bf16.mxu0 0
      %2426 = vmatmul.mubr.bf16.gmra.mrb[0].mxu0 %v2334
      %v2427 = vpop.f32.mrb[0].mxu0
      %v2428 = vadd.f32 0.0, %v2427
      %v2429 = vpop.f32.mrb[0].mxu0
      %v2430 = vpop.f32.mrb[0].mxu0
      %v2431 = vadd.f32 0.0, %v2430
      %v2432 = vpop.f32.mrb[0].mxu0
      %2433 = vmatprep.mubr.bf16.mxu0 0
      %2434 = vmatmul.mubr.bf16.gmra.mrb[0].mxu0 %v2337
      %v2435 = vpop.f32.mrb[0].mxu0
      %v2436 = vadd.f32 0.0, %v2435
      %v2437 = vpop.f32.mrb[0].mxu0
      %v2438 = vpop.f32.mrb[0].mxu0
      %v2439 = vadd.f32 0.0, %v2438
      %v2440 = vpop.f32.mrb[0].mxu0
      %2441 = vmatprep.mubr.bf16.mxu0 0
      %2442 = vmatmul.mubr.bf16.gmra.mrb[0].mxu0 %v2340
      %v2443 = vpop.f32.mrb[0].mxu0
      %v2444 = vadd.f32 0.0, %v2443
      %v2445 = vpop.f32.mrb[0].mxu0
      %v2446 = vpop.f32.mrb[0].mxu0
      %v2447 = vadd.f32 0.0, %v2446
      %v2448 = vpop.f32.mrb[0].mxu0
      %2449 = vmatprep.mubr.bf16.mxu0 0
      %2450 = vmatmul.mubr.bf16.gmra.mrb[0].mxu0 %v2343
      %v2451 = vpop.f32.mrb[0].mxu0
      %v2452 = vadd.f32 0.0, %v2451
      %v2453 = vpop.f32.mrb[0].mxu0
      %v2454 = vpop.f32.mrb[0].mxu0
      %v2455 = vadd.f32 0.0, %v2454
      %v2456 = vpop.f32.mrb[0].mxu0
      %2457 = vmatprep.mubr.bf16.mxu0 0
      %2458 = vmatmul.mubr.bf16.gmra.mrb[0].mxu0 %v2346
      %v2459 = vpop.f32.mrb[0].mxu0
      %v2460 = vadd.f32 0.0, %v2459
      %v2461 = vpop.f32.mrb[0].mxu0
      %v2462 = vpop.f32.mrb[0].mxu0
      %v2463 = vadd.f32 0.0, %v2462
      %v2464 = vpop.f32.mrb[0].mxu0
      %2465 = vmatprep.mubr.bf16.mxu0 0
      %2466 = vmatmul.mubr.bf16.gmra.mrb[0].mxu0 %v2349
      %v2467 = vpop.f32.mrb[0].mxu0
      %v2468 = vadd.f32 0.0, %v2467
      %v2469 = vpop.f32.mrb[0].mxu0
      %v2470 = vpop.f32.mrb[0].mxu0
      %v2471 = vadd.f32 0.0, %v2470
      %v2472 = vpop.f32.mrb[0].mxu0
      %2473 = vmatprep.mubr.bf16.mxu0 0
      %2474 = vmatmul.mubr.bf16.gmra.mrb[0].mxu0 %v2352
      %v2475 = vpop.f32.mrb[0].mxu0
      %v2476 = vadd.f32 0.0, %v2475
      %v2477 = vpop.f32.mrb[0].mxu0
      %v2478 = vpop.f32.mrb[0].mxu0
      %v2479 = vadd.f32 0.0, %v2478
      %v2480 = vpop.f32.mrb[0].mxu0
      %2481 = vmatprep.mubr.bf16.mxu0 0
      %2482 = vmatmul.mubr.bf16.gmra.mrb[0].mxu0 %v2355
      %v2483 = vpop.f32.mrb[0].mxu0
      %v2484 = vadd.f32 0.0, %v2483
      %v2485 = vpop.f32.mrb[0].mxu0
      %v2486 = vpop.f32.mrb[0].mxu0
      %v2487 = vadd.f32 0.0, %v2486
      %v2488 = vpop.f32.mrb[0].mxu0
      %2489 = vmatprep.mubr.bf16.mxu0 0
      %2490 = vmatmul.mubr.bf16.gmra.mrb[0].mxu0 %v2358
      %v2491 = vpop.f32.mrb[0].mxu0
      %v2492 = vadd.f32 0.0, %v2491
      %v2493 = vpop.f32.mrb[0].mxu0
      %v2494 = vpop.f32.mrb[0].mxu0
      %v2495 = vadd.f32 0.0, %v2494
      %v2496 = vpop.f32.mrb[0].mxu0
      %2497 = vmatprep.mubr.bf16.mxu0 0
      %2498 = vmatmul.mubr.bf16.gmra.mrb[0].mxu0 %v2361
      %v2499 = vpop.f32.mrb[0].mxu0
      %v2500 = vadd.f32 0.0, %v2499
      %v2501 = vpop.f32.mrb[0].mxu0
      %v2502 = vpop.f32.mrb[0].mxu0
      %v2503 = vadd.f32 0.0, %v2502
      %v2504 = vpop.f32.mrb[0].mxu0
      %2505 = vmatprep.mubr.bf16.mxu0 0
      %2506 = vmatmul.mubr.bf16.gmra.mrb[0].mxu0 %v2364
      %v2507 = vpop.f32.mrb[0].mxu0
      %v2508 = vadd.f32 0.0, %v2507
      %v2509 = vpop.f32.mrb[0].mxu0
      %v2510 = vpop.f32.mrb[0].mxu0
      %v2511 = vadd.f32 0.0, %v2510
      %v2512 = vpop.f32.mrb[0].mxu0
      %2513 = vmatprep.mubr.bf16.mxu0 0
      %2514 = vmatmul.mubr.bf16.gmra.mrb[0].mxu0 %v2367
      %v2515 = vpop.f32.mrb[0].mxu0
      %v2516 = vadd.f32 0.0, %v2515
      %v2517 = vpop.f32.mrb[0].mxu0
      %v2518 = vpop.f32.mrb[0].mxu0
      %v2519 = vadd.f32 0.0, %v2518
      %v2520 = vpop.f32.mrb[0].mxu0
      %2521 = vmatprep.mubr.bf16.mxu0 0
      %2522 = vmatmul.mubr.bf16.gmra.mrb[0].mxu0 %v2370
      %v2523 = vpop.f32.mrb[0].mxu0
      %v2524 = vadd.f32 0.0, %v2523
      %v2525 = vpop.f32.mrb[0].mxu0
      %v2526 = vpop.f32.mrb[0].mxu0
      %v2527 = vadd.f32 0.0, %v2526
      %v2528 = vpop.f32.mrb[0].mxu0
      %2529 = vmatprep.mubr.bf16.mxu0 0
      %2530 = vmatmul.mubr.bf16.gmra.mrb[0].mxu0 %v2373
      %v2531 = vpop.f32.mrb[0].mxu0
      %v2532 = vadd.f32 0.0, %v2531
      %v2533 = vpop.f32.mrb[0].mxu0
      %v2534 = vpop.f32.mrb[0].mxu0
      %v2535 = vadd.f32 0.0, %v2534
      %v2536 = vpop.f32.mrb[0].mxu0
      %2537 = vmatprep.mubr.bf16.mxu0 0
      %2538 = vmatmul.mubr.bf16.gmra.mrb[0].mxu0 %v2376
      %v2539 = vpop.f32.mrb[0].mxu0
      %v2540 = vadd.f32 0.0, %v2539
      %v2541 = vpop.f32.mrb[0].mxu0
      %v2542 = vpop.f32.mrb[0].mxu0
      %v2543 = vadd.f32 0.0, %v2542
      %v2544 = vpop.f32.mrb[0].mxu0
      %2545 = vmatprep.mubr.bf16.mxu0 0
      %2546 = vmatmul.mubr.bf16.gmra.mrb[0].mxu0 %v2379
      %v2547 = vpop.f32.mrb[0].mxu0
      %v2548 = vadd.f32 0.0, %v2547
      %v2549 = vpop.f32.mrb[0].mxu0
      %v2550 = vpop.f32.mrb[0].mxu0
      %v2551 = vadd.f32 0.0, %v2550
      %v2552 = vpop.f32.mrb[0].mxu0
      %2553 = vmatprep.mubr.bf16.mxu0 0
      %2554 = vmatmul.mubr.bf16.gmra.mrb[0].mxu0 %v2382
      %v2555 = vpop.f32.mrb[0].mxu0
      %v2556 = vadd.f32 0.0, %v2555
      %v2557 = vpop.f32.mrb[0].mxu0
      %v2558 = vpop.f32.mrb[0].mxu0
      %v2559 = vadd.f32 0.0, %v2558
      %v2560 = vpop.f32.mrb[0].mxu0
      %2561 = vmatprep.mubr.bf16.mxu0 0
      %2562 = vmatmul.mubr.bf16.gmra.mrb[0].mxu0 %v2385
      %v2563 = vpop.f32.mrb[0].mxu0
      %v2564 = vadd.f32 0.0, %v2563
      %v2565 = vpop.f32.mrb[0].mxu0
      %v2566 = vpop.f32.mrb[0].mxu0
      %v2567 = vadd.f32 0.0, %v2566
      %v2568 = vpop.f32.mrb[0].mxu0
      %2569 = vmatprep.mubr.bf16.mxu0 0
      %2570 = vmatmul.mubr.bf16.gmra.mrb[0].mxu0 %v2388
      %v2571 = vpop.f32.mrb[0].mxu0
      %v2572 = vadd.f32 0.0, %v2571
      %v2573 = vpop.f32.mrb[0].mxu0
      %v2574 = vpop.f32.mrb[0].mxu0
      %v2575 = vadd.f32 0.0, %v2574
      %v2576 = vpop.f32.mrb[0].mxu0
      %2577 = vdwg.mxu0
      %v2578 = vadd.f32 %v2243, %v2428
      %v2579 = vadd.f32 %v2244, %v2431
      %v2580 = vadd.f32 %v2245, %v2436
      %v2581 = vadd.f32 %v2246, %v2439
      %v2582 = vadd.f32 %v2247, %v2444
      %v2583 = vadd.f32 %v2248, %v2447
      %v2584 = vadd.f32 %v2249, %v2452
      %v2585 = vadd.f32 %v2250, %v2455
      %v2586 = vadd.f32 %v2251, %v2460
      %v2587 = vadd.f32 %v2252, %v2463
      %v2588 = vadd.f32 %v2253, %v2468
      %v2589 = vadd.f32 %v2254, %v2471
      %v2590 = vadd.f32 %v2255, %v2476
      %v2591 = vadd.f32 %v2256, %v2479
      %v2592 = vadd.f32 %v2257, %v2484
      %v2593 = vadd.f32 %v2258, %v2487
      %v2594 = vadd.f32 %v2259, %v2492
      %v2595 = vadd.f32 %v2260, %v2495
      %v2596 = vadd.f32 %v2261, %v2500
      %v2597 = vadd.f32 %v2262, %v2503
      %v2598 = vadd.f32 %v2263, %v2508
      %v2599 = vadd.f32 %v2264, %v2511
      %v2600 = vadd.f32 %v2265, %v2516
      %v2601 = vadd.f32 %v2266, %v2519
      %v2602 = vadd.f32 %v2267, %v2524
      %v2603 = vadd.f32 %v2268, %v2527
      %v2604 = vadd.f32 %v2269, %v2532
      %v2605 = vadd.f32 %v2270, %v2535
      %v2606 = vadd.f32 %v2271, %v2540
      %v2607 = vadd.f32 %v2272, %v2543
      %v2608 = vadd.f32 %v2273, %v2548
      %v2609 = vadd.f32 %v2274, %v2551
      %v2610 = vadd.f32 %v2275, %v2556
      %v2611 = vadd.f32 %v2276, %v2559
      %v2612 = vadd.f32 %v2277, %v2564
      %v2613 = vadd.f32 %v2278, %v2567
      %v2614 = vadd.f32 %v2279, %v2572
      %v2615 = vadd.f32 %v2280, %v2575
      %v2616 = vld [vmem:[%s165 + $0xa0] sm:$0x7]
      %s2617 = scalar_lea.vmem %s1, 48
      %v2618 = vld [vmem:[%s2617] sm:$0xf]
      %v2619 = vld [vmem:[%s2617 + $0x4] sm:$0x3]
      %v2621 = vunpack.c.l.b16 %v2616
      %v2622 = vpack.c.b16 %v2621, %v2621
      %vm2623 = vsmask.f32 5376
      %v2625 = vshrl.u32 %v2287, 16
      %v2627 = vrot.slane %v2625, 2
      %v2628 = vshll.u32 %v2287, 16
      %v2630 = vrot.slane %v2628, 3
      %v2631 = vor.u32 %v2627, %v2630
      %v2632 = vrot.slane %v1823, 2
      %v2633 = vrot.slane %v1826, 3
      %v2634 = vor.u32 %v2632, %v2633
      %v2635 = vsel %vm2623, %v2631, %v2634
      %v2636 = vrot.slane %v1832, 2
      %v2637 = vrot.slane %v1835, 3
      %v2638 = vor.u32 %v2636, %v2637
      %v2639 = vsel %vm2623, %v2634, %v2638
      %v2640 = vrot.slane %v1841, 2
      %v2641 = vrot.slane %v1844, 3
      %v2642 = vor.u32 %v2640, %v2641
      %v2643 = vsel %vm2623, %v2638, %v2642
      %v2644 = vrot.slane %v1850, 2
      %v2645 = vrot.slane %v1853, 3
      %v2646 = vor.u32 %v2644, %v2645
      %v2647 = vsel %vm2623, %v2642, %v2646
      %v2648 = vrot.slane %v1859, 2
      %v2649 = vrot.slane %v1862, 3
      %v2650 = vor.u32 %v2648, %v2649
      %v2651 = vsel %vm2623, %v2646, %v2650
      %v2652 = vrot.slane %v1868, 2
      %v2653 = vrot.slane %v1871, 3
      %v2654 = vor.u32 %v2652, %v2653
      %v2655 = vsel %vm2623, %v2650, %v2654
      %v2656 = vrot.slane %v1877, 2
      %v2657 = vrot.slane %v1880, 3
      %v2658 = vor.u32 %v2656, %v2657
      %v2659 = vsel %vm2623, %v2654, %v2658
      %v2660 = vrot.slane %v1886, 2
      %v2661 = vrot.slane %v1889, 3
      %v2662 = vor.u32 %v2660, %v2661
      %v2663 = vsel %vm2623, %v2658, %v2662
      %v2664 = vrot.slane %v1895, 2
      %v2665 = vrot.slane %v1898, 3
      %v2666 = vor.u32 %v2664, %v2665
      %v2667 = vsel %vm2623, %v2662, %v2666
      %v2668 = vrot.slane %v1904, 2
      %v2669 = vrot.slane %v1907, 3
      %v2670 = vor.u32 %v2668, %v2669
      %v2671 = vsel %vm2623, %v2666, %v2670
      %v2672 = vrot.slane %v1913, 2
      %v2673 = vrot.slane %v1916, 3
      %v2674 = vor.u32 %v2672, %v2673
      %v2675 = vsel %vm2623, %v2670, %v2674
      %v2676 = vrot.slane %v1922, 2
      %v2677 = vrot.slane %v1925, 3
      %v2678 = vor.u32 %v2676, %v2677
      %v2679 = vsel %vm2623, %v2674, %v2678
      %v2680 = vrot.slane %v1931, 2
      %v2681 = vrot.slane %v1934, 3
      %v2682 = vor.u32 %v2680, %v2681
      %v2683 = vsel %vm2623, %v2678, %v2682
      %v2684 = vrot.slane %v1940, 2
      %v2685 = vrot.slane %v1943, 3
      %v2686 = vor.u32 %v2684, %v2685
      %v2687 = vsel %vm2623, %v2682, %v2686
      %v2688 = vrot.slane %v1949, 2
      %v2689 = vrot.slane %v1952, 3
      %v2690 = vor.u32 %v2688, %v2689
      %v2691 = vsel %vm2623, %v2686, %v2690
      %v2692 = vrot.slane %v1958, 2
      %v2693 = vrot.slane %v1961, 3
      %v2694 = vor.u32 %v2692, %v2693
      %v2695 = vsel %vm2623, %v2690, %v2694
      %v2696 = vrot.slane %v1967, 2
      %v2697 = vrot.slane %v1970, 3
      %v2698 = vor.u32 %v2696, %v2697
      %v2699 = vsel %vm2623, %v2694, %v2698
      %v2700 = vrot.slane %v1976, 2
      %v2701 = vrot.slane %v1979, 3
      %v2702 = vor.u32 %v2700, %v2701
      %v2703 = vsel %vm2623, %v2698, %v2702
      %v2705 = vshrl.u32 %v2622, 16
      %v2707 = vrot.slane %v2705, 2
      %v2708 = vshll.u32 %v2622, 16
      %v2710 = vrot.slane %v2708, 3
      %v2711 = vor.u32 %v2707, %v2710
      %v2712 = vsel %vm2623, %v2702, %v2711
      %v2715 = vunpack.c.l.b16 %v2618
      %v2716 = vunpack.c.l.b16 %v2619
      %v2717 = vpack.c.b16 %v2716, %v2715
      %v2719 = vsel %vm476, %v2635, 0
      %v2722 = vsel %vm476, %v2639, 0
      %v2725 = vsel %vm476, %v2643, 0
      %v2728 = vsel %vm476, %v2647, 0
      %v2731 = vsel %vm476, %v2651, 0
      %v2734 = vsel %vm476, %v2655, 0
      %v2737 = vsel %vm476, %v2659, 0
      %v2740 = vsel %vm476, %v2663, 0
      %v2743 = vsel %vm476, %v2667, 0
      %v2746 = vsel %vm476, %v2671, 0
      %v2749 = vsel %vm476, %v2675, 0
      %v2752 = vsel %vm476, %v2679, 0
      %v2755 = vsel %vm476, %v2683, 0
      %v2758 = vsel %vm476, %v2687, 0
      %v2761 = vsel %vm476, %v2691, 0
      %v2764 = vsel %vm476, %v2695, 0
      %v2767 = vsel %vm476, %v2699, 0
      %v2770 = vsel %vm476, %v2703, 0
      %v2773 = vsel %vm476, %v2712, 0
      %v2776 = vsel %vm534, %v2717, 0
      %2778 = vmatprep.subr.bf16.mxu0 0
      %2779 = vmatpush1.bf16.msra.mxu0 %v2776
      %2780 = vmatprep.subr.bf16.mxu0 0
      %2781 = vmatpush1.bf16.msra.mxu0 0
      %2782 = vmatprep.subr.bf16.mxu0 0
      %2783 = vmatpush1.bf16.msra.mxu0 0
      %2784 = vmatprep.subr.bf16.mxu0 0
      %2785 = vmatpush1.bf16.msra.mxu0 0
      %2786 = vmatprep.subr.bf16.mxu0 0
      %2787 = vmatpush1.bf16.msra.mxu0 0
      %2788 = vmatprep.subr.bf16.mxu0 0
      %2789 = vmatpush1.bf16.msra.mxu0 0
      %2790 = vmatprep.subr.bf16.mxu0 0
      %2791 = vmatpush1.bf16.msra.mxu0 0
      %2792 = vmatprep.subr.bf16.mxu0 0
      %2793 = vmatpush1.bf16.msra.mxu0 0
      %2794 = vmatprep.subr.bf16.mxu0 0
      %2795 = vmatpush1.bf16.msra.mxu0 0
      %2796 = vmatprep.subr.bf16.mxu0 0
      %2797 = vmatpush1.bf16.msra.mxu0 0
      %2798 = vmatprep.subr.bf16.mxu0 0
      %2799 = vmatpush1.bf16.msra.mxu0 0
      %2800 = vmatprep.subr.bf16.mxu0 0
      %2801 = vmatpush1.bf16.msra.mxu0 0
      %2802 = vmatprep.subr.bf16.mxu0 0
      %2803 = vmatpush1.bf16.msra.mxu0 0
      %2804 = vmatprep.subr.bf16.mxu0 0
      %2805 = vmatpush1.bf16.msra.mxu0 0
      %2806 = vmatprep.subr.bf16.mxu0 0
      %2807 = vmatpush1.bf16.msra.mxu0 0
      %2808 = vmatprep.subr.bf16.mxu0 0
      %2809 = vmatpush1.bf16.msra.mxu0 0
      %2810 = vmatprep.mubr.bf16.mxu0 0
      %2811 = vmatmul.mubr.bf16.gmra.mrb[0].mxu0 %v2719
      %v2812 = vpop.f32.mrb[0].mxu0
      %v2813 = vadd.f32 0.0, %v2812
      %v2814 = vpop.f32.mrb[0].mxu0
      %v2815 = vpop.f32.mrb[0].mxu0
      %v2816 = vadd.f32 0.0, %v2815
      %v2817 = vpop.f32.mrb[0].mxu0
      %2818 = vmatprep.mubr.bf16.mxu0 0
      %2819 = vmatmul.mubr.bf16.gmra.mrb[0].mxu0 %v2722
      %v2820 = vpop.f32.mrb[0].mxu0
      %v2821 = vadd.f32 0.0, %v2820
      %v2822 = vpop.f32.mrb[0].mxu0
      %v2823 = vpop.f32.mrb[0].mxu0
      %v2824 = vadd.f32 0.0, %v2823
      %v2825 = vpop.f32.mrb[0].mxu0
      %2826 = vmatprep.mubr.bf16.mxu0 0
      %2827 = vmatmul.mubr.bf16.gmra.mrb[0].mxu0 %v2725
      %v2828 = vpop.f32.mrb[0].mxu0
      %v2829 = vadd.f32 0.0, %v2828
      %v2830 = vpop.f32.mrb[0].mxu0
      %v2831 = vpop.f32.mrb[0].mxu0
      %v2832 = vadd.f32 0.0, %v2831
      %v2833 = vpop.f32.mrb[0].mxu0
      %2834 = vmatprep.mubr.bf16.mxu0 0
      %2835 = vmatmul.mubr.bf16.gmra.mrb[0].mxu0 %v2728
      %v2836 = vpop.f32.mrb[0].mxu0
      %v2837 = vadd.f32 0.0, %v2836
      %v2838 = vpop.f32.mrb[0].mxu0
      %v2839 = vpop.f32.mrb[0].mxu0
      %v2840 = vadd.f32 0.0, %v2839
      %v2841 = vpop.f32.mrb[0].mxu0
      %2842 = vmatprep.mubr.bf16.mxu0 0
      %2843 = vmatmul.mubr.bf16.gmra.mrb[0].mxu0 %v2731
      %v2844 = vpop.f32.mrb[0].mxu0
      %v2845 = vadd.f32 0.0, %v2844
      %v2846 = vpop.f32.mrb[0].mxu0
      %v2847 = vpop.f32.mrb[0].mxu0
      %v2848 = vadd.f32 0.0, %v2847
      %v2849 = vpop.f32.mrb[0].mxu0
      %2850 = vmatprep.mubr.bf16.mxu0 0
      %2851 = vmatmul.mubr.bf16.gmra.mrb[0].mxu0 %v2734
      %v2852 = vpop.f32.mrb[0].mxu0
      %v2853 = vadd.f32 0.0, %v2852
      %v2854 = vpop.f32.mrb[0].mxu0
      %v2855 = vpop.f32.mrb[0].mxu0
      %v2856 = vadd.f32 0.0, %v2855
      %v2857 = vpop.f32.mrb[0].mxu0
      %2858 = vmatprep.mubr.bf16.mxu0 0
      %2859 = vmatmul.mubr.bf16.gmra.mrb[0].mxu0 %v2737
      %v2860 = vpop.f32.mrb[0].mxu0
      %v2861 = vadd.f32 0.0, %v2860
      %v2862 = vpop.f32.mrb[0].mxu0
      %v2863 = vpop.f32.mrb[0].mxu0
      %v2864 = vadd.f32 0.0, %v2863
      %v2865 = vpop.f32.mrb[0].mxu0
      %2866 = vmatprep.mubr.bf16.mxu0 0
      %2867 = vmatmul.mubr.bf16.gmra.mrb[0].mxu0 %v2740
      %v2868 = vpop.f32.mrb[0].mxu0
      %v2869 = vadd.f32 0.0, %v2868
      %v2870 = vpop.f32.mrb[0].mxu0
      %v2871 = vpop.f32.mrb[0].mxu0
      %v2872 = vadd.f32 0.0, %v2871
      %v2873 = vpop.f32.mrb[0].mxu0
      %2874 = vmatprep.mubr.bf16.mxu0 0
      %2875 = vmatmul.mubr.bf16.gmra.mrb[0].mxu0 %v2743
      %v2876 = vpop.f32.mrb[0].mxu0
      %v2877 = vadd.f32 0.0, %v2876
      %v2878 = vpop.f32.mrb[0].mxu0
      %v2879 = vpop.f32.mrb[0].mxu0
      %v2880 = vadd.f32 0.0, %v2879
      %v2881 = vpop.f32.mrb[0].mxu0
      %2882 = vmatprep.mubr.bf16.mxu0 0
      %2883 = vmatmul.mubr.bf16.gmra.mrb[0].mxu0 %v2746
      %v2884 = vpop.f32.mrb[0].mxu0
      %v2885 = vadd.f32 0.0, %v2884
      %v2886 = vpop.f32.mrb[0].mxu0
      %v2887 = vpop.f32.mrb[0].mxu0
      %v2888 = vadd.f32 0.0, %v2887
      %v2889 = vpop.f32.mrb[0].mxu0
      %2890 = vmatprep.mubr.bf16.mxu0 0
      %2891 = vmatmul.mubr.bf16.gmra.mrb[0].mxu0 %v2749
      %v2892 = vpop.f32.mrb[0].mxu0
      %v2893 = vadd.f32 0.0, %v2892
      %v2894 = vpop.f32.mrb[0].mxu0
      %v2895 = vpop.f32.mrb[0].mxu0
      %v2896 = vadd.f32 0.0, %v2895
      %v2897 = vpop.f32.mrb[0].mxu0
      %2898 = vmatprep.mubr.bf16.mxu0 0
      %2899 = vmatmul.mubr.bf16.gmra.mrb[0].mxu0 %v2752
      %v2900 = vpop.f32.mrb[0].mxu0
      %v2901 = vadd.f32 0.0, %v2900
      %v2902 = vpop.f32.mrb[0].mxu0
      %v2903 = vpop.f32.mrb[0].mxu0
      %v2904 = vadd.f32 0.0, %v2903
      %v2905 = vpop.f32.mrb[0].mxu0
      %2906 = vmatprep.mubr.bf16.mxu0 0
      %2907 = vmatmul.mubr.bf16.gmra.mrb[0].mxu0 %v2755
      %v2908 = vpop.f32.mrb[0].mxu0
      %v2909 = vadd.f32 0.0, %v2908
      %v2910 = vpop.f32.mrb[0].mxu0
      %v2911 = vpop.f32.mrb[0].mxu0
      %v2912 = vadd.f32 0.0, %v2911
      %v2913 = vpop.f32.mrb[0].mxu0
      %2914 = vmatprep.mubr.bf16.mxu0 0
      %2915 = vmatmul.mubr.bf16.gmra.mrb[0].mxu0 %v2758
      %v2916 = vpop.f32.mrb[0].mxu0
      %v2917 = vadd.f32 0.0, %v2916
      %v2918 = vpop.f32.mrb[0].mxu0
      %v2919 = vpop.f32.mrb[0].mxu0
      %v2920 = vadd.f32 0.0, %v2919
      %v2921 = vpop.f32.mrb[0].mxu0
      %2922 = vmatprep.mubr.bf16.mxu0 0
      %2923 = vmatmul.mubr.bf16.gmra.mrb[0].mxu0 %v2761
      %v2924 = vpop.f32.mrb[0].mxu0
      %v2925 = vadd.f32 0.0, %v2924
      %v2926 = vpop.f32.mrb[0].mxu0
      %v2927 = vpop.f32.mrb[0].mxu0
      %v2928 = vadd.f32 0.0, %v2927
      %v2929 = vpop.f32.mrb[0].mxu0
      %2930 = vmatprep.mubr.bf16.mxu0 0
      %2931 = vmatmul.mubr.bf16.gmra.mrb[0].mxu0 %v2764
      %v2932 = vpop.f32.mrb[0].mxu0
      %v2933 = vadd.f32 0.0, %v2932
      %v2934 = vpop.f32.mrb[0].mxu0
      %v2935 = vpop.f32.mrb[0].mxu0
      %v2936 = vadd.f32 0.0, %v2935
      %v2937 = vpop.f32.mrb[0].mxu0
      %2938 = vmatprep.mubr.bf16.mxu0 0
      %2939 = vmatmul.mubr.bf16.gmra.mrb[0].mxu0 %v2767
      %v2940 = vpop.f32.mrb[0].mxu0
      %v2941 = vadd.f32 0.0, %v2940
      %v2942 = vpop.f32.mrb[0].mxu0
      %v2943 = vpop.f32.mrb[0].mxu0
      %v2944 = vadd.f32 0.0, %v2943
      %v2945 = vpop.f32.mrb[0].mxu0
      %2946 = vmatprep.mubr.bf16.mxu0 0
      %2947 = vmatmul.mubr.bf16.gmra.mrb[0].mxu0 %v2770
      %v2948 = vpop.f32.mrb[0].mxu0
      %v2949 = vadd.f32 0.0, %v2948
      %v2950 = vpop.f32.mrb[0].mxu0
      %v2951 = vpop.f32.mrb[0].mxu0
      %v2952 = vadd.f32 0.0, %v2951
      %v2953 = vpop.f32.mrb[0].mxu0
      %2954 = vmatprep.mubr.bf16.mxu0 0
      %2955 = vmatmul.mubr.bf16.gmra.mrb[0].mxu0 %v2773
      %v2956 = vpop.f32.mrb[0].mxu0
      %v2957 = vadd.f32 0.0, %v2956
      %v2958 = vpop.f32.mrb[0].mxu0
      %v2959 = vpop.f32.mrb[0].mxu0
      %v2960 = vadd.f32 0.0, %v2959
      %v2961 = vpop.f32.mrb[0].mxu0
      %2962 = vdwg.mxu0
      %v2963 = vadd.f32 %v2578, %v2813
      %v2964 = vadd.f32 %v2579, %v2816
      %v2965 = vadd.f32 %v2580, %v2821
      %v2966 = vadd.f32 %v2581, %v2824
      %v2967 = vadd.f32 %v2582, %v2829
      %v2968 = vadd.f32 %v2583, %v2832
      %v2969 = vadd.f32 %v2584, %v2837
      %v2970 = vadd.f32 %v2585, %v2840
      %v2971 = vadd.f32 %v2586, %v2845
      %v2972 = vadd.f32 %v2587, %v2848
      %v2973 = vadd.f32 %v2588, %v2853
      %v2974 = vadd.f32 %v2589, %v2856
      %v2975 = vadd.f32 %v2590, %v2861
      %v2976 = vadd.f32 %v2591, %v2864
      %v2977 = vadd.f32 %v2592, %v2869
      %v2978 = vadd.f32 %v2593, %v2872
      %v2979 = vadd.f32 %v2594, %v2877
      %v2980 = vadd.f32 %v2595, %v2880
      %v2981 = vadd.f32 %v2596, %v2885
      %v2982 = vadd.f32 %v2597, %v2888
      %v2983 = vadd.f32 %v2598, %v2893
      %v2984 = vadd.f32 %v2599, %v2896
      %v2985 = vadd.f32 %v2600, %v2901
      %v2986 = vadd.f32 %v2601, %v2904
      %v2987 = vadd.f32 %v2602, %v2909
      %v2988 = vadd.f32 %v2603, %v2912
      %v2989 = vadd.f32 %v2604, %v2917
      %v2990 = vadd.f32 %v2605, %v2920
      %v2991 = vadd.f32 %v2606, %v2925
      %v2992 = vadd.f32 %v2607, %v2928
      %v2993 = vadd.f32 %v2608, %v2933
      %v2994 = vadd.f32 %v2609, %v2936
      %v2995 = vadd.f32 %v2610, %v2941
      %v2996 = vadd.f32 %v2611, %v2944
      %v2997 = vadd.f32 %v2612, %v2949
      %v2998 = vadd.f32 %v2613, %v2952
      %v2999 = vadd.f32 %v2614, %v2957
      %v3000 = vadd.f32 %v2615, %v2960
      %v3001 = vld [vmem:[%s165 + $0x8] sm:$0x8]
      %s3002 = scalar_lea.vmem %s1, 56
      %v3003 = vld [vmem:[%s3002] sm:$0xf]
      %v3004 = vld [vmem:[%s3002 + $0x4] sm:$0x3]
      %v3006 = vunpack.c.l.b16 %v3001
      %v3007 = vpack.c.b16 %v1756, %v3006
      %vm3008 = vcmask 1044480
      %v3009 = vrot.slane %v3007, 3
      %v3010 = vrot.slane %v1795, 3
      %v3011 = vsel %vm3008, %v3009, %v3010
      %v3012 = vrot.slane %v1796, 3
      %v3013 = vsel %vm3008, %v3010, %v3012
      %v3014 = vrot.slane %v1797, 3
      %v3015 = vsel %vm3008, %v3012, %v3014
      %v3016 = vrot.slane %v1798, 3
      %v3017 = vsel %vm3008, %v3014, %v3016
      %v3018 = vrot.slane %v1799, 3
      %v3019 = vsel %vm3008, %v3016, %v3018
      %v3020 = vrot.slane %v1800, 3
      %v3021 = vsel %vm3008, %v3018, %v3020
      %v3022 = vrot.slane %v1801, 3
      %v3023 = vsel %vm3008, %v3020, %v3022
      %v3024 = vrot.slane %v1802, 3
      %v3025 = vsel %vm3008, %v3022, %v3024
      %v3026 = vrot.slane %v1803, 3
      %v3027 = vsel %vm3008, %v3024, %v3026
      %v3028 = vrot.slane %v1804, 3
      %v3029 = vsel %vm3008, %v3026, %v3028
      %v3030 = vrot.slane %v1805, 3
      %v3031 = vsel %vm3008, %v3028, %v3030
      %v3032 = vrot.slane %v1806, 3
      %v3033 = vsel %vm3008, %v3030, %v3032
      %v3034 = vrot.slane %v1807, 3
      %v3035 = vsel %vm3008, %v3032, %v3034
      %v3036 = vrot.slane %v1808, 3
      %v3037 = vsel %vm3008, %v3034, %v3036
      %v3038 = vrot.slane %v1809, 3
      %v3039 = vsel %vm3008, %v3036, %v3038
      %v3040 = vrot.slane %v1810, 3
      %v3041 = vsel %vm3008, %v3038, %v3040
      %v3042 = vrot.slane %v1811, 3
      %v3043 = vsel %vm3008, %v3040, %v3042
      %v3044 = vrot.slane %v1812, 3
      %v3045 = vsel %vm3008, %v3042, %v3044
      %v3046 = vrot.slane %v2622, 3
      %v3047 = vsel %vm3008, %v3044, %v3046
      %v3050 = vunpack.c.l.b16 %v3003
      %v3051 = vunpack.c.l.b16 %v3004
      %v3052 = vpack.c.b16 %v3051, %v3050
      %v3054 = vsel %vm476, %v3011, 0
      %v3057 = vsel %vm476, %v3013, 0
      %v3060 = vsel %vm476, %v3015, 0
      %v3063 = vsel %vm476, %v3017, 0
      %v3066 = vsel %vm476, %v3019, 0
      %v3069 = vsel %vm476, %v3021, 0
      %v3072 = vsel %vm476, %v3023, 0
      %v3075 = vsel %vm476, %v3025, 0
      %v3078 = vsel %vm476, %v3027, 0
      %v3081 = vsel %vm476, %v3029, 0
      %v3084 = vsel %vm476, %v3031, 0
      %v3087 = vsel %vm476, %v3033, 0
      %v3090 = vsel %vm476, %v3035, 0
      %v3093 = vsel %vm476, %v3037, 0
      %v3096 = vsel %vm476, %v3039, 0
      %v3099 = vsel %vm476, %v3041, 0
      %v3102 = vsel %vm476, %v3043, 0
      %v3105 = vsel %vm476, %v3045, 0
      %v3108 = vsel %vm476, %v3047, 0
      %v3111 = vsel %vm534, %v3052, 0
      %3113 = vmatprep.subr.bf16.mxu0 0
      %3114 = vmatpush1.bf16.msra.mxu0 %v3111
      %3115 = vmatprep.subr.bf16.mxu0 0
      %3116 = vmatpush1.bf16.msra.mxu0 0
      %3117 = vmatprep.subr.bf16.mxu0 0
      %3118 = vmatpush1.bf16.msra.mxu0 0
      %3119 = vmatprep.subr.bf16.mxu0 0
      %3120 = vmatpush1.bf16.msra.mxu0 0
      %3121 = vmatprep.subr.bf16.mxu0 0
      %3122 = vmatpush1.bf16.msra.mxu0 0
      %3123 = vmatprep.subr.bf16.mxu0 0
      %3124 = vmatpush1.bf16.msra.mxu0 0
      %3125 = vmatprep.subr.bf16.mxu0 0
      %3126 = vmatpush1.bf16.msra.mxu0 0
      %3127 = vmatprep.subr.bf16.mxu0 0
      %3128 = vmatpush1.bf16.msra.mxu0 0
      %3129 = vmatprep.subr.bf16.mxu0 0
      %3130 = vmatpush1.bf16.msra.mxu0 0
      %3131 = vmatprep.subr.bf16.mxu0 0
      %3132 = vmatpush1.bf16.msra.mxu0 0
      %3133 = vmatprep.subr.bf16.mxu0 0
      %3134 = vmatpush1.bf16.msra.mxu0 0
      %3135 = vmatprep.subr.bf16.mxu0 0
      %3136 = vmatpush1.bf16.msra.mxu0 0
      %3137 = vmatprep.subr.bf16.mxu0 0
      %3138 = vmatpush1.bf16.msra.mxu0 0
      %3139 = vmatprep.subr.bf16.mxu0 0
      %3140 = vmatpush1.bf16.msra.mxu0 0
      %3141 = vmatprep.subr.bf16.mxu0 0
      %3142 = vmatpush1.bf16.msra.mxu0 0
      %3143 = vmatprep.subr.bf16.mxu0 0
      %3144 = vmatpush1.bf16.msra.mxu0 0
      %3145 = vmatprep.mubr.bf16.mxu0 0
      %3146 = vmatmul.mubr.bf16.gmra.mrb[0].mxu0 %v3054
      %v3147 = vpop.f32.mrb[0].mxu0
      %v3148 = vadd.f32 0.0, %v3147
      %v3149 = vpop.f32.mrb[0].mxu0
      %v3150 = vpop.f32.mrb[0].mxu0
      %v3151 = vadd.f32 0.0, %v3150
      %v3152 = vpop.f32.mrb[0].mxu0
      %3153 = vmatprep.mubr.bf16.mxu0 0
      %3154 = vmatmul.mubr.bf16.gmra.mrb[0].mxu0 %v3057
      %v3155 = vpop.f32.mrb[0].mxu0
      %v3156 = vadd.f32 0.0, %v3155
      %v3157 = vpop.f32.mrb[0].mxu0
      %v3158 = vpop.f32.mrb[0].mxu0
      %v3159 = vadd.f32 0.0, %v3158
      %v3160 = vpop.f32.mrb[0].mxu0
      %3161 = vmatprep.mubr.bf16.mxu0 0
      %3162 = vmatmul.mubr.bf16.gmra.mrb[0].mxu0 %v3060
      %v3163 = vpop.f32.mrb[0].mxu0
      %v3164 = vadd.f32 0.0, %v3163
      %v3165 = vpop.f32.mrb[0].mxu0
      %v3166 = vpop.f32.mrb[0].mxu0
      %v3167 = vadd.f32 0.0, %v3166
      %v3168 = vpop.f32.mrb[0].mxu0
      %3169 = vmatprep.mubr.bf16.mxu0 0
      %3170 = vmatmul.mubr.bf16.gmra.mrb[0].mxu0 %v3063
      %v3171 = vpop.f32.mrb[0].mxu0
      %v3172 = vadd.f32 0.0, %v3171
      %v3173 = vpop.f32.mrb[0].mxu0
      %v3174 = vpop.f32.mrb[0].mxu0
      %v3175 = vadd.f32 0.0, %v3174
      %v3176 = vpop.f32.mrb[0].mxu0
      %3177 = vmatprep.mubr.bf16.mxu0 0
      %3178 = vmatmul.mubr.bf16.gmra.mrb[0].mxu0 %v3066
      %v3179 = vpop.f32.mrb[0].mxu0
      %v3180 = vadd.f32 0.0, %v3179
      %v3181 = vpop.f32.mrb[0].mxu0
      %v3182 = vpop.f32.mrb[0].mxu0
      %v3183 = vadd.f32 0.0, %v3182
      %v3184 = vpop.f32.mrb[0].mxu0
      %3185 = vmatprep.mubr.bf16.mxu0 0
      %3186 = vmatmul.mubr.bf16.gmra.mrb[0].mxu0 %v3069
      %v3187 = vpop.f32.mrb[0].mxu0
      %v3188 = vadd.f32 0.0, %v3187
      %v3189 = vpop.f32.mrb[0].mxu0
      %v3190 = vpop.f32.mrb[0].mxu0
      %v3191 = vadd.f32 0.0, %v3190
      %v3192 = vpop.f32.mrb[0].mxu0
      %3193 = vmatprep.mubr.bf16.mxu0 0
      %3194 = vmatmul.mubr.bf16.gmra.mrb[0].mxu0 %v3072
      %v3195 = vpop.f32.mrb[0].mxu0
      %v3196 = vadd.f32 0.0, %v3195
      %v3197 = vpop.f32.mrb[0].mxu0
      %v3198 = vpop.f32.mrb[0].mxu0
      %v3199 = vadd.f32 0.0, %v3198
      %v3200 = vpop.f32.mrb[0].mxu0
      %3201 = vmatprep.mubr.bf16.mxu0 0
      %3202 = vmatmul.mubr.bf16.gmra.mrb[0].mxu0 %v3075
      %v3203 = vpop.f32.mrb[0].mxu0
      %v3204 = vadd.f32 0.0, %v3203
      %v3205 = vpop.f32.mrb[0].mxu0
      %v3206 = vpop.f32.mrb[0].mxu0
      %v3207 = vadd.f32 0.0, %v3206
      %v3208 = vpop.f32.mrb[0].mxu0
      %3209 = vmatprep.mubr.bf16.mxu0 0
      %3210 = vmatmul.mubr.bf16.gmra.mrb[0].mxu0 %v3078
      %v3211 = vpop.f32.mrb[0].mxu0
      %v3212 = vadd.f32 0.0, %v3211
      %v3213 = vpop.f32.mrb[0].mxu0
      %v3214 = vpop.f32.mrb[0].mxu0
      %v3215 = vadd.f32 0.0, %v3214
      %v3216 = vpop.f32.mrb[0].mxu0
      %3217 = vmatprep.mubr.bf16.mxu0 0
      %3218 = vmatmul.mubr.bf16.gmra.mrb[0].mxu0 %v3081
      %v3219 = vpop.f32.mrb[0].mxu0
      %v3220 = vadd.f32 0.0, %v3219
      %v3221 = vpop.f32.mrb[0].mxu0
      %v3222 = vpop.f32.mrb[0].mxu0
      %v3223 = vadd.f32 0.0, %v3222
      %v3224 = vpop.f32.mrb[0].mxu0
      %3225 = vmatprep.mubr.bf16.mxu0 0
      %3226 = vmatmul.mubr.bf16.gmra.mrb[0].mxu0 %v3084
      %v3227 = vpop.f32.mrb[0].mxu0
      %v3228 = vadd.f32 0.0, %v3227
      %v3229 = vpop.f32.mrb[0].mxu0
      %v3230 = vpop.f32.mrb[0].mxu0
      %v3231 = vadd.f32 0.0, %v3230
      %v3232 = vpop.f32.mrb[0].mxu0
      %3233 = vmatprep.mubr.bf16.mxu0 0
      %3234 = vmatmul.mubr.bf16.gmra.mrb[0].mxu0 %v3087
      %v3235 = vpop.f32.mrb[0].mxu0
      %v3236 = vadd.f32 0.0, %v3235
      %v3237 = vpop.f32.mrb[0].mxu0
      %v3238 = vpop.f32.mrb[0].mxu0
      %v3239 = vadd.f32 0.0, %v3238
      %v3240 = vpop.f32.mrb[0].mxu0
      %3241 = vmatprep.mubr.bf16.mxu0 0
      %3242 = vmatmul.mubr.bf16.gmra.mrb[0].mxu0 %v3090
      %v3243 = vpop.f32.mrb[0].mxu0
      %v3244 = vadd.f32 0.0, %v3243
      %v3245 = vpop.f32.mrb[0].mxu0
      %v3246 = vpop.f32.mrb[0].mxu0
      %v3247 = vadd.f32 0.0, %v3246
      %v3248 = vpop.f32.mrb[0].mxu0
      %3249 = vmatprep.mubr.bf16.mxu0 0
      %3250 = vmatmul.mubr.bf16.gmra.mrb[0].mxu0 %v3093
      %v3251 = vpop.f32.mrb[0].mxu0
      %v3252 = vadd.f32 0.0, %v3251
      %v3253 = vpop.f32.mrb[0].mxu0
      %v3254 = vpop.f32.mrb[0].mxu0
      %v3255 = vadd.f32 0.0, %v3254
      %v3256 = vpop.f32.mrb[0].mxu0
      %3257 = vmatprep.mubr.bf16.mxu0 0
      %3258 = vmatmul.mubr.bf16.gmra.mrb[0].mxu0 %v3096
      %v3259 = vpop.f32.mrb[0].mxu0
      %v3260 = vadd.f32 0.0, %v3259
      %v3261 = vpop.f32.mrb[0].mxu0
      %v3262 = vpop.f32.mrb[0].mxu0
      %v3263 = vadd.f32 0.0, %v3262
      %v3264 = vpop.f32.mrb[0].mxu0
      %3265 = vmatprep.mubr.bf16.mxu0 0
      %3266 = vmatmul.mubr.bf16.gmra.mrb[0].mxu0 %v3099
      %v3267 = vpop.f32.mrb[0].mxu0
      %v3268 = vadd.f32 0.0, %v3267
      %v3269 = vpop.f32.mrb[0].mxu0
      %v3270 = vpop.f32.mrb[0].mxu0
      %v3271 = vadd.f32 0.0, %v3270
      %v3272 = vpop.f32.mrb[0].mxu0
      %3273 = vmatprep.mubr.bf16.mxu0 0
      %3274 = vmatmul.mubr.bf16.gmra.mrb[0].mxu0 %v3102
      %v3275 = vpop.f32.mrb[0].mxu0
      %v3276 = vadd.f32 0.0, %v3275
      %v3277 = vpop.f32.mrb[0].mxu0
      %v3278 = vpop.f32.mrb[0].mxu0
      %v3279 = vadd.f32 0.0, %v3278
      %v3280 = vpop.f32.mrb[0].mxu0
      %3281 = vmatprep.mubr.bf16.mxu0 0
      %3282 = vmatmul.mubr.bf16.gmra.mrb[0].mxu0 %v3105
      %v3283 = vpop.f32.mrb[0].mxu0
      %v3284 = vadd.f32 0.0, %v3283
      %v3285 = vpop.f32.mrb[0].mxu0
      %v3286 = vpop.f32.mrb[0].mxu0
      %v3287 = vadd.f32 0.0, %v3286
      %v3288 = vpop.f32.mrb[0].mxu0
      %3289 = vmatprep.mubr.bf16.mxu0 0
      %3290 = vmatmul.mubr.bf16.gmra.mrb[0].mxu0 %v3108
      %v3291 = vpop.f32.mrb[0].mxu0
      %v3292 = vadd.f32 0.0, %v3291
      %v3293 = vpop.f32.mrb[0].mxu0
      %v3294 = vpop.f32.mrb[0].mxu0
      %v3295 = vadd.f32 0.0, %v3294
      %v3296 = vpop.f32.mrb[0].mxu0
      %3297 = vdwg.mxu0
      %v3298 = vadd.f32 %v2963, %v3148
      %v3299 = vadd.f32 %v2964, %v3151
      %v3300 = vadd.f32 %v2965, %v3156
      %v3301 = vadd.f32 %v2966, %v3159
      %v3302 = vadd.f32 %v2967, %v3164
      %v3303 = vadd.f32 %v2968, %v3167
      %v3304 = vadd.f32 %v2969, %v3172
      %v3305 = vadd.f32 %v2970, %v3175
      %v3306 = vadd.f32 %v2971, %v3180
      %v3307 = vadd.f32 %v2972, %v3183
      %v3308 = vadd.f32 %v2973, %v3188
      %v3309 = vadd.f32 %v2974, %v3191
      %v3310 = vadd.f32 %v2975, %v3196
      %v3311 = vadd.f32 %v2976, %v3199
      %v3312 = vadd.f32 %v2977, %v3204
      %v3313 = vadd.f32 %v2978, %v3207
      %v3314 = vadd.f32 %v2979, %v3212
      %v3315 = vadd.f32 %v2980, %v3215
      %v3316 = vadd.f32 %v2981, %v3220
      %v3317 = vadd.f32 %v2982, %v3223
      %v3318 = vadd.f32 %v2983, %v3228
      %v3319 = vadd.f32 %v2984, %v3231
      %v3320 = vadd.f32 %v2985, %v3236
      %v3321 = vadd.f32 %v2986, %v3239
      %v3322 = vadd.f32 %v2987, %v3244
      %v3323 = vadd.f32 %v2988, %v3247
      %v3324 = vadd.f32 %v2989, %v3252
      %v3325 = vadd.f32 %v2990, %v3255
      %v3326 = vadd.f32 %v2991, %v3260
      %v3327 = vadd.f32 %v2992, %v3263
      %v3328 = vadd.f32 %v2993, %v3268
      %v3329 = vadd.f32 %v2994, %v3271
      %v3330 = vadd.f32 %v2995, %v3276
      %v3331 = vadd.f32 %v2996, %v3279
      %v3332 = vadd.f32 %v2997, %v3284
      %v3333 = vadd.f32 %v2998, %v3287
      %v3334 = vadd.f32 %v2999, %v3292
      %v3335 = vadd.f32 %v3000, %v3295
      %v3336 = vld [vmem:[%s165 + $0x10] sm:$0x8]
      %v3337 = vld [vmem:[%s165 + $0x14] sm:$0xf]
      %v3338 = vld [vmem:[%s165 + $0x18] sm:$0xf]
      %v3339 = vld [vmem:[%s165 + $0x1c] sm:$0xf]
      %v3340 = vld [vmem:[%s165 + $0x20] sm:$0xf]
      %v3341 = vld [vmem:[%s165 + $0x24] sm:$0xf]
      %v3342 = vld [vmem:[%s165 + $0x28] sm:$0xf]
      %v3343 = vld [vmem:[%s165 + $0x2c] sm:$0xf]
      %v3344 = vld [vmem:[%s165 + $0x30] sm:$0xf]
      %v3345 = vld [vmem:[%s165 + $0x34] sm:$0xf]
      %v3346 = vld [vmem:[%s165 + $0x38] sm:$0xf]
      %v3347 = vld [vmem:[%s165 + $0x3c] sm:$0xf]
      %v3348 = vld [vmem:[%s165 + $0x40] sm:$0xf]
      %v3349 = vld [vmem:[%s165 + $0x44] sm:$0xf]
      %v3350 = vld [vmem:[%s165 + $0x48] sm:$0xf]
      %v3351 = vld [vmem:[%s165 + $0x4c] sm:$0xf]
      %v3352 = vld [vmem:[%s165 + $0x50] sm:$0xf]
      %v3353 = vld [vmem:[%s165 + $0x54] sm:$0xf]
      %v3354 = vld [vmem:[%s165 + $0x58] sm:$0xf]
      %v3355 = vld [vmem:[%s165 + $0x5c] sm:$0xf]
      %v3356 = vld [vmem:[%s165 + $0x60] sm:$0xf]
      %v3357 = vld [vmem:[%s165 + $0x64] sm:$0xf]
      %v3358 = vld [vmem:[%s165 + $0x68] sm:$0xf]
      %v3359 = vld [vmem:[%s165 + $0x6c] sm:$0xf]
      %v3360 = vld [vmem:[%s165 + $0x70] sm:$0xf]
      %v3361 = vld [vmem:[%s165 + $0x74] sm:$0xf]
      %v3362 = vld [vmem:[%s165 + $0x78] sm:$0xf]
      %v3363 = vld [vmem:[%s165 + $0x7c] sm:$0xf]
      %v3364 = vld [vmem:[%s165 + $0x80] sm:$0xf]
      %v3365 = vld [vmem:[%s165 + $0x84] sm:$0xf]
      %v3366 = vld [vmem:[%s165 + $0x88] sm:$0xf]
      %v3367 = vld [vmem:[%s165 + $0x8c] sm:$0xf]
      %v3368 = vld [vmem:[%s165 + $0x90] sm:$0xf]
      %v3369 = vld [vmem:[%s165 + $0x94] sm:$0xf]
      %v3370 = vld [vmem:[%s165 + $0x98] sm:$0xf]
      %v3371 = vld [vmem:[%s165 + $0x9c] sm:$0xf]
      %v3372 = vld [vmem:[%s165 + $0xa0] sm:$0xf]
      %v3373 = vld [vmem:[%s165 + $0xa4] sm:$0xf]
      %v3374 = vld [vmem:[%s165 + $0xa8] sm:$0x7]
      %s3375 = scalar_lea.vmem %s1, 64
      %v3376 = vld [vmem:[%s3375] sm:$0xf]
      %v3377 = vld [vmem:[%s3375 + $0x4] sm:$0x3]
      %v3417 = vunpack.c.l.b16 %v3336
      %v3418 = vunpack.c.l.b16 %v3337
      %v3419 = vunpack.c.l.b16 %v3338
      %v3420 = vunpack.c.l.b16 %v3339
      %v3421 = vunpack.c.l.b16 %v3340
      %v3422 = vunpack.c.l.b16 %v3341
      %v3423 = vunpack.c.l.b16 %v3342
      %v3424 = vunpack.c.l.b16 %v3343
      %v3425 = vunpack.c.l.b16 %v3344
      %v3426 = vunpack.c.l.b16 %v3345
      %v3427 = vunpack.c.l.b16 %v3346
      %v3428 = vunpack.c.l.b16 %v3347
      %v3429 = vunpack.c.l.b16 %v3348
      %v3430 = vunpack.c.l.b16 %v3349
      %v3431 = vunpack.c.l.b16 %v3350
      %v3432 = vunpack.c.l.b16 %v3351
      %v3433 = vunpack.c.l.b16 %v3352
      %v3434 = vunpack.c.l.b16 %v3353
      %v3435 = vunpack.c.l.b16 %v3354
      %v3436 = vunpack.c.l.b16 %v3355
      %v3437 = vunpack.c.l.b16 %v3356
      %v3438 = vunpack.c.l.b16 %v3357
      %v3439 = vunpack.c.l.b16 %v3358
      %v3440 = vunpack.c.l.b16 %v3359
      %v3441 = vunpack.c.l.b16 %v3360
      %v3442 = vunpack.c.l.b16 %v3361
      %v3443 = vunpack.c.l.b16 %v3362
      %v3444 = vunpack.c.l.b16 %v3363
      %v3445 = vunpack.c.l.b16 %v3364
      %v3446 = vunpack.c.l.b16 %v3365
      %v3447 = vunpack.c.l.b16 %v3366
      %v3448 = vunpack.c.l.b16 %v3367
      %v3449 = vunpack.c.l.b16 %v3368
      %v3450 = vunpack.c.l.b16 %v3369
      %v3451 = vunpack.c.l.b16 %v3370
      %v3452 = vunpack.c.l.b16 %v3371
      %v3453 = vunpack.c.l.b16 %v3372
      %v3454 = vunpack.c.l.b16 %v3373
      %v3455 = vunpack.c.l.b16 %v3374
      %v3456 = vpack.c.b16 %v3418, %v3417
      %v3457 = vpack.c.b16 %v3420, %v3419
      %v3458 = vpack.c.b16 %v3422, %v3421
      %v3459 = vpack.c.b16 %v3424, %v3423
      %v3460 = vpack.c.b16 %v3426, %v3425
      %v3461 = vpack.c.b16 %v3428, %v3427
      %v3462 = vpack.c.b16 %v3430, %v3429
      %v3463 = vpack.c.b16 %v3432, %v3431
      %v3464 = vpack.c.b16 %v3434, %v3433
      %v3465 = vpack.c.b16 %v3436, %v3435
      %v3466 = vpack.c.b16 %v3438, %v3437
      %v3467 = vpack.c.b16 %v3440, %v3439
      %v3468 = vpack.c.b16 %v3442, %v3441
      %v3469 = vpack.c.b16 %v3444, %v3443
      %v3470 = vpack.c.b16 %v3446, %v3445
      %v3471 = vpack.c.b16 %v3448, %v3447
      %v3472 = vpack.c.b16 %v3450, %v3449
      %v3473 = vpack.c.b16 %v3452, %v3451
      %v3474 = vpack.c.b16 %v3454, %v3453
      %v3475 = vpack.c.b16 %v3455, %v3455
      %v3476 = vrot.slane %v3456, 3
      %v3477 = vrot.slane %v3457, 3
      %v3478 = vsel %vm3008, %v3476, %v3477
      %v3479 = vrot.slane %v3458, 3
      %v3480 = vsel %vm3008, %v3477, %v3479
      %v3481 = vrot.slane %v3459, 3
      %v3482 = vsel %vm3008, %v3479, %v3481
      %v3483 = vrot.slane %v3460, 3
      %v3484 = vsel %vm3008, %v3481, %v3483
      %v3485 = vrot.slane %v3461, 3
      %v3486 = vsel %vm3008, %v3483, %v3485
      %v3487 = vrot.slane %v3462, 3
      %v3488 = vsel %vm3008, %v3485, %v3487
      %v3489 = vrot.slane %v3463, 3
      %v3490 = vsel %vm3008, %v3487, %v3489
      %v3491 = vrot.slane %v3464, 3
      %v3492 = vsel %vm3008, %v3489, %v3491
      %v3493 = vrot.slane %v3465, 3
      %v3494 = vsel %vm3008, %v3491, %v3493
      %v3495 = vrot.slane %v3466, 3
      %v3496 = vsel %vm3008, %v3493, %v3495
      %v3497 = vrot.slane %v3467, 3
      %v3498 = vsel %vm3008, %v3495, %v3497
      %v3499 = vrot.slane %v3468, 3
      %v3500 = vsel %vm3008, %v3497, %v3499
      %v3501 = vrot.slane %v3469, 3
      %v3502 = vsel %vm3008, %v3499, %v3501
      %v3503 = vrot.slane %v3470, 3
      %v3504 = vsel %vm3008, %v3501, %v3503
      %v3505 = vrot.slane %v3471, 3
      %v3506 = vsel %vm3008, %v3503, %v3505
      %v3507 = vrot.slane %v3472, 3
      %v3508 = vsel %vm3008, %v3505, %v3507
      %v3509 = vrot.slane %v3473, 3
      %v3510 = vsel %vm3008, %v3507, %v3509
      %v3511 = vrot.slane %v3474, 3
      %v3512 = vsel %vm3008, %v3509, %v3511
      %v3513 = vrot.slane %v3475, 3
      %v3514 = vsel %vm3008, %v3511, %v3513
      %v3517 = vunpack.c.l.b16 %v3376
      %v3518 = vunpack.c.l.b16 %v3377
      %v3519 = vpack.c.b16 %v3518, %v3517
      %v3521 = vsel %vm476, %v3478, 0
      %v3524 = vsel %vm476, %v3480, 0
      %v3527 = vsel %vm476, %v3482, 0
      %v3530 = vsel %vm476, %v3484, 0
      %v3533 = vsel %vm476, %v3486, 0
      %v3536 = vsel %vm476, %v3488, 0
      %v3539 = vsel %vm476, %v3490, 0
      %v3542 = vsel %vm476, %v3492, 0
      %v3545 = vsel %vm476, %v3494, 0
      %v3548 = vsel %vm476, %v3496, 0
      %v3551 = vsel %vm476, %v3498, 0
      %v3554 = vsel %vm476, %v3500, 0
      %v3557 = vsel %vm476, %v3502, 0
      %v3560 = vsel %vm476, %v3504, 0
      %v3563 = vsel %vm476, %v3506, 0
      %v3566 = vsel %vm476, %v3508, 0
      %v3569 = vsel %vm476, %v3510, 0
      %v3572 = vsel %vm476, %v3512, 0
      %v3575 = vsel %vm476, %v3514, 0
      %v3578 = vsel %vm534, %v3519, 0
      %3580 = vmatprep.subr.bf16.mxu0 0
      %3581 = vmatpush1.bf16.msra.mxu0 %v3578
      %3582 = vmatprep.subr.bf16.mxu0 0
      %3583 = vmatpush1.bf16.msra.mxu0 0
      %3584 = vmatprep.subr.bf16.mxu0 0
      %3585 = vmatpush1.bf16.msra.mxu0 0
      %3586 = vmatprep.subr.bf16.mxu0 0
      %3587 = vmatpush1.bf16.msra.mxu0 0
      %3588 = vmatprep.subr.bf16.mxu0 0
      %3589 = vmatpush1.bf16.msra.mxu0 0
      %3590 = vmatprep.subr.bf16.mxu0 0
      %3591 = vmatpush1.bf16.msra.mxu0 0
      %3592 = vmatprep.subr.bf16.mxu0 0
      %3593 = vmatpush1.bf16.msra.mxu0 0
      %3594 = vmatprep.subr.bf16.mxu0 0
      %3595 = vmatpush1.bf16.msra.mxu0 0
      %3596 = vmatprep.subr.bf16.mxu0 0
      %3597 = vmatpush1.bf16.msra.mxu0 0
      %3598 = vmatprep.subr.bf16.mxu0 0
      %3599 = vmatpush1.bf16.msra.mxu0 0
      %3600 = vmatprep.subr.bf16.mxu0 0
      %3601 = vmatpush1.bf16.msra.mxu0 0
      %3602 = vmatprep.subr.bf16.mxu0 0
      %3603 = vmatpush1.bf16.msra.mxu0 0
      %3604 = vmatprep.subr.bf16.mxu0 0
      %3605 = vmatpush1.bf16.msra.mxu0 0
      %3606 = vmatprep.subr.bf16.mxu0 0
      %3607 = vmatpush1.bf16.msra.mxu0 0
      %3608 = vmatprep.subr.bf16.mxu0 0
      %3609 = vmatpush1.bf16.msra.mxu0 0
      %3610 = vmatprep.subr.bf16.mxu0 0
      %3611 = vmatpush1.bf16.msra.mxu0 0
      %3612 = vmatprep.mubr.bf16.mxu0 0
      %3613 = vmatmul.mubr.bf16.gmra.mrb[0].mxu0 %v3521
      %v3614 = vpop.f32.mrb[0].mxu0
      %v3615 = vadd.f32 0.0, %v3614
      %v3616 = vpop.f32.mrb[0].mxu0
      %v3617 = vpop.f32.mrb[0].mxu0
      %v3618 = vadd.f32 0.0, %v3617
      %v3619 = vpop.f32.mrb[0].mxu0
      %3620 = vmatprep.mubr.bf16.mxu0 0
      %3621 = vmatmul.mubr.bf16.gmra.mrb[0].mxu0 %v3524
      %v3622 = vpop.f32.mrb[0].mxu0
      %v3623 = vadd.f32 0.0, %v3622
      %v3624 = vpop.f32.mrb[0].mxu0
      %v3625 = vpop.f32.mrb[0].mxu0
      %v3626 = vadd.f32 0.0, %v3625
      %v3627 = vpop.f32.mrb[0].mxu0
      %3628 = vmatprep.mubr.bf16.mxu0 0
      %3629 = vmatmul.mubr.bf16.gmra.mrb[0].mxu0 %v3527
      %v3630 = vpop.f32.mrb[0].mxu0
      %v3631 = vadd.f32 0.0, %v3630
      %v3632 = vpop.f32.mrb[0].mxu0
      %v3633 = vpop.f32.mrb[0].mxu0
      %v3634 = vadd.f32 0.0, %v3633
      %v3635 = vpop.f32.mrb[0].mxu0
      %3636 = vmatprep.mubr.bf16.mxu0 0
      %3637 = vmatmul.mubr.bf16.gmra.mrb[0].mxu0 %v3530
      %v3638 = vpop.f32.mrb[0].mxu0
      %v3639 = vadd.f32 0.0, %v3638
      %v3640 = vpop.f32.mrb[0].mxu0
      %v3641 = vpop.f32.mrb[0].mxu0
      %v3642 = vadd.f32 0.0, %v3641
      %v3643 = vpop.f32.mrb[0].mxu0
      %3644 = vmatprep.mubr.bf16.mxu0 0
      %3645 = vmatmul.mubr.bf16.gmra.mrb[0].mxu0 %v3533
      %v3646 = vpop.f32.mrb[0].mxu0
      %v3647 = vadd.f32 0.0, %v3646
      %v3648 = vpop.f32.mrb[0].mxu0
      %v3649 = vpop.f32.mrb[0].mxu0
      %v3650 = vadd.f32 0.0, %v3649
      %v3651 = vpop.f32.mrb[0].mxu0
      %3652 = vmatprep.mubr.bf16.mxu0 0
      %3653 = vmatmul.mubr.bf16.gmra.mrb[0].mxu0 %v3536
      %v3654 = vpop.f32.mrb[0].mxu0
      %v3655 = vadd.f32 0.0, %v3654
      %v3656 = vpop.f32.mrb[0].mxu0
      %v3657 = vpop.f32.mrb[0].mxu0
      %v3658 = vadd.f32 0.0, %v3657
      %v3659 = vpop.f32.mrb[0].mxu0
      %3660 = vmatprep.mubr.bf16.mxu0 0
      %3661 = vmatmul.mubr.bf16.gmra.mrb[0].mxu0 %v3539
      %v3662 = vpop.f32.mrb[0].mxu0
      %v3663 = vadd.f32 0.0, %v3662
      %v3664 = vpop.f32.mrb[0].mxu0
      %v3665 = vpop.f32.mrb[0].mxu0
      %v3666 = vadd.f32 0.0, %v3665
      %v3667 = vpop.f32.mrb[0].mxu0
      %3668 = vmatprep.mubr.bf16.mxu0 0
      %3669 = vmatmul.mubr.bf16.gmra.mrb[0].mxu0 %v3542
      %v3670 = vpop.f32.mrb[0].mxu0
      %v3671 = vadd.f32 0.0, %v3670
      %v3672 = vpop.f32.mrb[0].mxu0
      %v3673 = vpop.f32.mrb[0].mxu0
      %v3674 = vadd.f32 0.0, %v3673
      %v3675 = vpop.f32.mrb[0].mxu0
      %3676 = vmatprep.mubr.bf16.mxu0 0
      %3677 = vmatmul.mubr.bf16.gmra.mrb[0].mxu0 %v3545
      %v3678 = vpop.f32.mrb[0].mxu0
      %v3679 = vadd.f32 0.0, %v3678
      %v3680 = vpop.f32.mrb[0].mxu0
      %v3681 = vpop.f32.mrb[0].mxu0
      %v3682 = vadd.f32 0.0, %v3681
      %v3683 = vpop.f32.mrb[0].mxu0
      %3684 = vmatprep.mubr.bf16.mxu0 0
      %3685 = vmatmul.mubr.bf16.gmra.mrb[0].mxu0 %v3548
      %v3686 = vpop.f32.mrb[0].mxu0
      %v3687 = vadd.f32 0.0, %v3686
      %v3688 = vpop.f32.mrb[0].mxu0
      %v3689 = vpop.f32.mrb[0].mxu0
      %v3690 = vadd.f32 0.0, %v3689
      %v3691 = vpop.f32.mrb[0].mxu0
      %3692 = vmatprep.mubr.bf16.mxu0 0
      %3693 = vmatmul.mubr.bf16.gmra.mrb[0].mxu0 %v3551
      %v3694 = vpop.f32.mrb[0].mxu0
      %v3695 = vadd.f32 0.0, %v3694
      %v3696 = vpop.f32.mrb[0].mxu0
      %v3697 = vpop.f32.mrb[0].mxu0
      %v3698 = vadd.f32 0.0, %v3697
      %v3699 = vpop.f32.mrb[0].mxu0
      %3700 = vmatprep.mubr.bf16.mxu0 0
      %3701 = vmatmul.mubr.bf16.gmra.mrb[0].mxu0 %v3554
      %v3702 = vpop.f32.mrb[0].mxu0
      %v3703 = vadd.f32 0.0, %v3702
      %v3704 = vpop.f32.mrb[0].mxu0
      %v3705 = vpop.f32.mrb[0].mxu0
      %v3706 = vadd.f32 0.0, %v3705
      %v3707 = vpop.f32.mrb[0].mxu0
      %3708 = vmatprep.mubr.bf16.mxu0 0
      %3709 = vmatmul.mubr.bf16.gmra.mrb[0].mxu0 %v3557
      %v3710 = vpop.f32.mrb[0].mxu0
      %v3711 = vadd.f32 0.0, %v3710
      %v3712 = vpop.f32.mrb[0].mxu0
      %v3713 = vpop.f32.mrb[0].mxu0
      %v3714 = vadd.f32 0.0, %v3713
      %v3715 = vpop.f32.mrb[0].mxu0
      %3716 = vmatprep.mubr.bf16.mxu0 0
      %3717 = vmatmul.mubr.bf16.gmra.mrb[0].mxu0 %v3560
      %v3718 = vpop.f32.mrb[0].mxu0
      %v3719 = vadd.f32 0.0, %v3718
      %v3720 = vpop.f32.mrb[0].mxu0
      %v3721 = vpop.f32.mrb[0].mxu0
      %v3722 = vadd.f32 0.0, %v3721
      %v3723 = vpop.f32.mrb[0].mxu0
      %3724 = vmatprep.mubr.bf16.mxu0 0
      %3725 = vmatmul.mubr.bf16.gmra.mrb[0].mxu0 %v3563
      %v3726 = vpop.f32.mrb[0].mxu0
      %v3727 = vadd.f32 0.0, %v3726
      %v3728 = vpop.f32.mrb[0].mxu0
      %v3729 = vpop.f32.mrb[0].mxu0
      %v3730 = vadd.f32 0.0, %v3729
      %v3731 = vpop.f32.mrb[0].mxu0
      %3732 = vmatprep.mubr.bf16.mxu0 0
      %3733 = vmatmul.mubr.bf16.gmra.mrb[0].mxu0 %v3566
      %v3734 = vpop.f32.mrb[0].mxu0
      %v3735 = vadd.f32 0.0, %v3734
      %v3736 = vpop.f32.mrb[0].mxu0
      %v3737 = vpop.f32.mrb[0].mxu0
      %v3738 = vadd.f32 0.0, %v3737
      %v3739 = vpop.f32.mrb[0].mxu0
      %3740 = vmatprep.mubr.bf16.mxu0 0
      %3741 = vmatmul.mubr.bf16.gmra.mrb[0].mxu0 %v3569
      %v3742 = vpop.f32.mrb[0].mxu0
      %v3743 = vadd.f32 0.0, %v3742
      %v3744 = vpop.f32.mrb[0].mxu0
      %v3745 = vpop.f32.mrb[0].mxu0
      %v3746 = vadd.f32 0.0, %v3745
      %v3747 = vpop.f32.mrb[0].mxu0
      %3748 = vmatprep.mubr.bf16.mxu0 0
      %3749 = vmatmul.mubr.bf16.gmra.mrb[0].mxu0 %v3572
      %v3750 = vpop.f32.mrb[0].mxu0
      %v3751 = vadd.f32 0.0, %v3750
      %v3752 = vpop.f32.mrb[0].mxu0
      %v3753 = vpop.f32.mrb[0].mxu0
      %v3754 = vadd.f32 0.0, %v3753
      %v3755 = vpop.f32.mrb[0].mxu0
      %3756 = vmatprep.mubr.bf16.mxu0 0
      %3757 = vmatmul.mubr.bf16.gmra.mrb[0].mxu0 %v3575
      %v3758 = vpop.f32.mrb[0].mxu0
      %v3759 = vadd.f32 0.0, %v3758
      %v3760 = vpop.f32.mrb[0].mxu0
      %v3761 = vpop.f32.mrb[0].mxu0
      %v3762 = vadd.f32 0.0, %v3761
      %v3763 = vpop.f32.mrb[0].mxu0
      %3764 = vdwg.mxu0
      %v3765 = vadd.f32 %v3298, %v3615
      %v3766 = vadd.f32 %v3299, %v3618
      %v3767 = vadd.f32 %v3300, %v3623
      %v3768 = vadd.f32 %v3301, %v3626
      %v3769 = vadd.f32 %v3302, %v3631
      %v3770 = vadd.f32 %v3303, %v3634
      %v3771 = vadd.f32 %v3304, %v3639
      %v3772 = vadd.f32 %v3305, %v3642
      %v3773 = vadd.f32 %v3306, %v3647
      %v3774 = vadd.f32 %v3307, %v3650
      %v3775 = vadd.f32 %v3308, %v3655
      %v3776 = vadd.f32 %v3309, %v3658
      %v3777 = vadd.f32 %v3310, %v3663
      %v3778 = vadd.f32 %v3311, %v3666
      %v3779 = vadd.f32 %v3312, %v3671
      %v3780 = vadd.f32 %v3313, %v3674
      %v3781 = vadd.f32 %v3314, %v3679
      %v3782 = vadd.f32 %v3315, %v3682
      %v3783 = vadd.f32 %v3316, %v3687
      %v3784 = vadd.f32 %v3317, %v3690
      %v3785 = vadd.f32 %v3318, %v3695
      %v3786 = vadd.f32 %v3319, %v3698
      %v3787 = vadd.f32 %v3320, %v3703
      %v3788 = vadd.f32 %v3321, %v3706
      %v3789 = vadd.f32 %v3322, %v3711
      %v3790 = vadd.f32 %v3323, %v3714
      %v3791 = vadd.f32 %v3324, %v3719
      %v3792 = vadd.f32 %v3325, %v3722
      %v3793 = vadd.f32 %v3326, %v3727
      %v3794 = vadd.f32 %v3327, %v3730
      %v3795 = vadd.f32 %v3328, %v3735
      %v3796 = vadd.f32 %v3329, %v3738
      %v3797 = vadd.f32 %v3330, %v3743
      %v3798 = vadd.f32 %v3331, %v3746
      %v3799 = vadd.f32 %v3332, %v3751
      %v3800 = vadd.f32 %v3333, %v3754
      %v3801 = vadd.f32 %v3334, %v3759
      %v3802 = vadd.f32 %v3335, %v3762
      %v3803 = vld [vmem:[%s165 + $0xa8] sm:$0xf]
      %s3804 = scalar_lea.vmem %s1, 72
      %v3805 = vld [vmem:[%s3804] sm:$0xf]
      %v3806 = vld [vmem:[%s3804 + $0x4] sm:$0x3]
      %v3808 = vunpack.c.l.b16 %v3803
      %v3809 = vpack.c.b16 %v3808, %v3808
      %vm3810 = vsmask.f32 4352
      %v3812 = vshrl.u32 %v3456, 16
      %v3814 = vrot.slane %v3812, 3
      %v3815 = vshll.u32 %v3456, 16
      %v3817 = vrot.slane %v3815, 4
      %v3818 = vor.u32 %v3814, %v3817
      %v3820 = vshrl.u32 %v3457, 16
      %v3822 = vrot.slane %v3820, 3
      %v3823 = vshll.u32 %v3457, 16
      %v3825 = vrot.slane %v3823, 4
      %v3826 = vor.u32 %v3822, %v3825
      %v3827 = vsel %vm3810, %v3818, %v3826
      %v3829 = vshrl.u32 %v3458, 16
      %v3831 = vrot.slane %v3829, 3
      %v3832 = vshll.u32 %v3458, 16
      %v3834 = vrot.slane %v3832, 4
      %v3835 = vor.u32 %v3831, %v3834
      %v3836 = vsel %vm3810, %v3826, %v3835
      %v3838 = vshrl.u32 %v3459, 16
      %v3840 = vrot.slane %v3838, 3
      %v3841 = vshll.u32 %v3459, 16
      %v3843 = vrot.slane %v3841, 4
      %v3844 = vor.u32 %v3840, %v3843
      %v3845 = vsel %vm3810, %v3835, %v3844
      %v3847 = vshrl.u32 %v3460, 16
      %v3849 = vrot.slane %v3847, 3
      %v3850 = vshll.u32 %v3460, 16
      %v3852 = vrot.slane %v3850, 4
      %v3853 = vor.u32 %v3849, %v3852
      %v3854 = vsel %vm3810, %v3844, %v3853
      %v3856 = vshrl.u32 %v3461, 16
      %v3858 = vrot.slane %v3856, 3
      %v3859 = vshll.u32 %v3461, 16
      %v3861 = vrot.slane %v3859, 4
      %v3862 = vor.u32 %v3858, %v3861
      %v3863 = vsel %vm3810, %v3853, %v3862
      %v3865 = vshrl.u32 %v3462, 16
      %v3867 = vrot.slane %v3865, 3
      %v3868 = vshll.u32 %v3462, 16
      %v3870 = vrot.slane %v3868, 4
      %v3871 = vor.u32 %v3867, %v3870
      %v3872 = vsel %vm3810, %v3862, %v3871
      %v3874 = vshrl.u32 %v3463, 16
      %v3876 = vrot.slane %v3874, 3
      %v3877 = vshll.u32 %v3463, 16
      %v3879 = vrot.slane %v3877, 4
      %v3880 = vor.u32 %v3876, %v3879
      %v3881 = vsel %vm3810, %v3871, %v3880
      %v3883 = vshrl.u32 %v3464, 16
      %v3885 = vrot.slane %v3883, 3
      %v3886 = vshll.u32 %v3464, 16
      %v3888 = vrot.slane %v3886, 4
      %v3889 = vor.u32 %v3885, %v3888
      %v3890 = vsel %vm3810, %v3880, %v3889
      %v3892 = vshrl.u32 %v3465, 16
      %v3894 = vrot.slane %v3892, 3
      %v3895 = vshll.u32 %v3465, 16
      %v3897 = vrot.slane %v3895, 4
      %v3898 = vor.u32 %v3894, %v3897
      %v3899 = vsel %vm3810, %v3889, %v3898
      %v3901 = vshrl.u32 %v3466, 16
      %v3903 = vrot.slane %v3901, 3
      %v3904 = vshll.u32 %v3466, 16
      %v3906 = vrot.slane %v3904, 4
      %v3907 = vor.u32 %v3903, %v3906
      %v3908 = vsel %vm3810, %v3898, %v3907
      %v3910 = vshrl.u32 %v3467, 16
      %v3912 = vrot.slane %v3910, 3
      %v3913 = vshll.u32 %v3467, 16
      %v3915 = vrot.slane %v3913, 4
      %v3916 = vor.u32 %v3912, %v3915
      %v3917 = vsel %vm3810, %v3907, %v3916
      %v3919 = vshrl.u32 %v3468, 16
      %v3921 = vrot.slane %v3919, 3
      %v3922 = vshll.u32 %v3468, 16
      %v3924 = vrot.slane %v3922, 4
      %v3925 = vor.u32 %v3921, %v3924
      %v3926 = vsel %vm3810, %v3916, %v3925
      %v3928 = vshrl.u32 %v3469, 16
      %v3930 = vrot.slane %v3928, 3
      %v3931 = vshll.u32 %v3469, 16
      %v3933 = vrot.slane %v3931, 4
      %v3934 = vor.u32 %v3930, %v3933
      %v3935 = vsel %vm3810, %v3925, %v3934
      %v3937 = vshrl.u32 %v3470, 16
      %v3939 = vrot.slane %v3937, 3
      %v3940 = vshll.u32 %v3470, 16
      %v3942 = vrot.slane %v3940, 4
      %v3943 = vor.u32 %v3939, %v3942
      %v3944 = vsel %vm3810, %v3934, %v3943
      %v3946 = vshrl.u32 %v3471, 16
      %v3948 = vrot.slane %v3946, 3
      %v3949 = vshll.u32 %v3471, 16
      %v3951 = vrot.slane %v3949, 4
      %v3952 = vor.u32 %v3948, %v3951
      %v3953 = vsel %vm3810, %v3943, %v3952
      %v3955 = vshrl.u32 %v3472, 16
      %v3957 = vrot.slane %v3955, 3
      %v3958 = vshll.u32 %v3472, 16
      %v3960 = vrot.slane %v3958, 4
      %v3961 = vor.u32 %v3957, %v3960
      %v3962 = vsel %vm3810, %v3952, %v3961
      %v3964 = vshrl.u32 %v3473, 16
      %v3966 = vrot.slane %v3964, 3
      %v3967 = vshll.u32 %v3473, 16
      %v3969 = vrot.slane %v3967, 4
      %v3970 = vor.u32 %v3966, %v3969
      %v3971 = vsel %vm3810, %v3961, %v3970
      %v3973 = vshrl.u32 %v3474, 16
      %v3975 = vrot.slane %v3973, 3
      %v3976 = vshll.u32 %v3474, 16
      %v3978 = vrot.slane %v3976, 4
      %v3979 = vor.u32 %v3975, %v3978
      %v3980 = vsel %vm3810, %v3970, %v3979
      %v3982 = vshrl.u32 %v3809, 16
      %v3984 = vrot.slane %v3982, 3
      %v3985 = vshll.u32 %v3809, 16
      %v3987 = vrot.slane %v3985, 4
      %v3988 = vor.u32 %v3984, %v3987
      %v3989 = vsel %vm3810, %v3979, %v3988
      %v3992 = vunpack.c.l.b16 %v3805
      %v3993 = vunpack.c.l.b16 %v3806
      %v3994 = vpack.c.b16 %v3993, %v3992
      %v3996 = vsel %vm476, %v3827, 0
      %v3999 = vsel %vm476, %v3836, 0
      %v4002 = vsel %vm476, %v3845, 0
      %v4005 = vsel %vm476, %v3854, 0
      %v4008 = vsel %vm476, %v3863, 0
      %v4011 = vsel %vm476, %v3872, 0
      %v4014 = vsel %vm476, %v3881, 0
      %v4017 = vsel %vm476, %v3890, 0
      %v4020 = vsel %vm476, %v3899, 0
      %v4023 = vsel %vm476, %v3908, 0
      %v4026 = vsel %vm476, %v3917, 0
      %v4029 = vsel %vm476, %v3926, 0
      %v4032 = vsel %vm476, %v3935, 0
      %v4035 = vsel %vm476, %v3944, 0
      %v4038 = vsel %vm476, %v3953, 0
      %v4041 = vsel %vm476, %v3962, 0
      %v4044 = vsel %vm476, %v3971, 0
      %v4047 = vsel %vm476, %v3980, 0
      %v4050 = vsel %vm476, %v3989, 0
      %v4053 = vsel %vm534, %v3994, 0
      %4055 = vmatprep.subr.bf16.mxu0 0
      %4056 = vmatpush1.bf16.msra.mxu0 %v4053
      %4057 = vmatprep.subr.bf16.mxu0 0
      %4058 = vmatpush1.bf16.msra.mxu0 0
      %4059 = vmatprep.subr.bf16.mxu0 0
      %4060 = vmatpush1.bf16.msra.mxu0 0
      %4061 = vmatprep.subr.bf16.mxu0 0
      %4062 = vmatpush1.bf16.msra.mxu0 0
      %4063 = vmatprep.subr.bf16.mxu0 0
      %4064 = vmatpush1.bf16.msra.mxu0 0
      %4065 = vmatprep.subr.bf16.mxu0 0
      %4066 = vmatpush1.bf16.msra.mxu0 0
      %4067 = vmatprep.subr.bf16.mxu0 0
      %4068 = vmatpush1.bf16.msra.mxu0 0
      %4069 = vmatprep.subr.bf16.mxu0 0
      %4070 = vmatpush1.bf16.msra.mxu0 0
      %4071 = vmatprep.subr.bf16.mxu0 0
      %4072 = vmatpush1.bf16.msra.mxu0 0
      %4073 = vmatprep.subr.bf16.mxu0 0
      %4074 = vmatpush1.bf16.msra.mxu0 0
      %4075 = vmatprep.subr.bf16.mxu0 0
      %4076 = vmatpush1.bf16.msra.mxu0 0
      %4077 = vmatprep.subr.bf16.mxu0 0
      %4078 = vmatpush1.bf16.msra.mxu0 0
      %4079 = vmatprep.subr.bf16.mxu0 0
      %4080 = vmatpush1.bf16.msra.mxu0 0
      %4081 = vmatprep.subr.bf16.mxu0 0
      %4082 = vmatpush1.bf16.msra.mxu0 0
      %4083 = vmatprep.subr.bf16.mxu0 0
      %4084 = vmatpush1.bf16.msra.mxu0 0
      %4085 = vmatprep.subr.bf16.mxu0 0
      %4086 = vmatpush1.bf16.msra.mxu0 0
      %4087 = vmatprep.mubr.bf16.mxu0 0
      %4088 = vmatmul.mubr.bf16.gmra.mrb[0].mxu0 %v3996
      %v4089 = vpop.f32.mrb[0].mxu0
      %v4090 = vadd.f32 0.0, %v4089
      %v4091 = vpop.f32.mrb[0].mxu0
      %v4092 = vpop.f32.mrb[0].mxu0
      %v4093 = vadd.f32 0.0, %v4092
      %v4094 = vpop.f32.mrb[0].mxu0
      %4095 = vmatprep.mubr.bf16.mxu0 0
      %4096 = vmatmul.mubr.bf16.gmra.mrb[0].mxu0 %v3999
      %v4097 = vpop.f32.mrb[0].mxu0
      %v4098 = vadd.f32 0.0, %v4097
      %v4099 = vpop.f32.mrb[0].mxu0
      %v4100 = vpop.f32.mrb[0].mxu0
      %v4101 = vadd.f32 0.0, %v4100
      %v4102 = vpop.f32.mrb[0].mxu0
      %4103 = vmatprep.mubr.bf16.mxu0 0
      %4104 = vmatmul.mubr.bf16.gmra.mrb[0].mxu0 %v4002
      %v4105 = vpop.f32.mrb[0].mxu0
      %v4106 = vadd.f32 0.0, %v4105
      %v4107 = vpop.f32.mrb[0].mxu0
      %v4108 = vpop.f32.mrb[0].mxu0
      %v4109 = vadd.f32 0.0, %v4108
      %v4110 = vpop.f32.mrb[0].mxu0
      %4111 = vmatprep.mubr.bf16.mxu0 0
      %4112 = vmatmul.mubr.bf16.gmra.mrb[0].mxu0 %v4005
      %v4113 = vpop.f32.mrb[0].mxu0
      %v4114 = vadd.f32 0.0, %v4113
      %v4115 = vpop.f32.mrb[0].mxu0
      %v4116 = vpop.f32.mrb[0].mxu0
      %v4117 = vadd.f32 0.0, %v4116
      %v4118 = vpop.f32.mrb[0].mxu0
      %4119 = vmatprep.mubr.bf16.mxu0 0
      %4120 = vmatmul.mubr.bf16.gmra.mrb[0].mxu0 %v4008
      %v4121 = vpop.f32.mrb[0].mxu0
      %v4122 = vadd.f32 0.0, %v4121
      %v4123 = vpop.f32.mrb[0].mxu0
      %v4124 = vpop.f32.mrb[0].mxu0
      %v4125 = vadd.f32 0.0, %v4124
      %v4126 = vpop.f32.mrb[0].mxu0
      %4127 = vmatprep.mubr.bf16.mxu0 0
      %4128 = vmatmul.mubr.bf16.gmra.mrb[0].mxu0 %v4011
      %v4129 = vpop.f32.mrb[0].mxu0
      %v4130 = vadd.f32 0.0, %v4129
      %v4131 = vpop.f32.mrb[0].mxu0
      %v4132 = vpop.f32.mrb[0].mxu0
      %v4133 = vadd.f32 0.0, %v4132
      %v4134 = vpop.f32.mrb[0].mxu0
      %4135 = vmatprep.mubr.bf16.mxu0 0
      %4136 = vmatmul.mubr.bf16.gmra.mrb[0].mxu0 %v4014
      %v4137 = vpop.f32.mrb[0].mxu0
      %v4138 = vadd.f32 0.0, %v4137
      %v4139 = vpop.f32.mrb[0].mxu0
      %v4140 = vpop.f32.mrb[0].mxu0
      %v4141 = vadd.f32 0.0, %v4140
      %v4142 = vpop.f32.mrb[0].mxu0
      %4143 = vmatprep.mubr.bf16.mxu0 0
      %4144 = vmatmul.mubr.bf16.gmra.mrb[0].mxu0 %v4017
      %v4145 = vpop.f32.mrb[0].mxu0
      %v4146 = vadd.f32 0.0, %v4145
      %v4147 = vpop.f32.mrb[0].mxu0
      %v4148 = vpop.f32.mrb[0].mxu0
      %v4149 = vadd.f32 0.0, %v4148
      %v4150 = vpop.f32.mrb[0].mxu0
      %4151 = vmatprep.mubr.bf16.mxu0 0
      %4152 = vmatmul.mubr.bf16.gmra.mrb[0].mxu0 %v4020
      %v4153 = vpop.f32.mrb[0].mxu0
      %v4154 = vadd.f32 0.0, %v4153
      %v4155 = vpop.f32.mrb[0].mxu0
      %v4156 = vpop.f32.mrb[0].mxu0
      %v4157 = vadd.f32 0.0, %v4156
      %v4158 = vpop.f32.mrb[0].mxu0
      %4159 = vmatprep.mubr.bf16.mxu0 0
      %4160 = vmatmul.mubr.bf16.gmra.mrb[0].mxu0 %v4023
      %v4161 = vpop.f32.mrb[0].mxu0
      %v4162 = vadd.f32 0.0, %v4161
      %v4163 = vpop.f32.mrb[0].mxu0
      %v4164 = vpop.f32.mrb[0].mxu0
      %v4165 = vadd.f32 0.0, %v4164
      %v4166 = vpop.f32.mrb[0].mxu0
      %4167 = vmatprep.mubr.bf16.mxu0 0
      %4168 = vmatmul.mubr.bf16.gmra.mrb[0].mxu0 %v4026
      %v4169 = vpop.f32.mrb[0].mxu0
      %v4170 = vadd.f32 0.0, %v4169
      %v4171 = vpop.f32.mrb[0].mxu0
      %v4172 = vpop.f32.mrb[0].mxu0
      %v4173 = vadd.f32 0.0, %v4172
      %v4174 = vpop.f32.mrb[0].mxu0
      %4175 = vmatprep.mubr.bf16.mxu0 0
      %4176 = vmatmul.mubr.bf16.gmra.mrb[0].mxu0 %v4029
      %v4177 = vpop.f32.mrb[0].mxu0
      %v4178 = vadd.f32 0.0, %v4177
      %v4179 = vpop.f32.mrb[0].mxu0
      %v4180 = vpop.f32.mrb[0].mxu0
      %v4181 = vadd.f32 0.0, %v4180
      %v4182 = vpop.f32.mrb[0].mxu0
      %4183 = vmatprep.mubr.bf16.mxu0 0
      %4184 = vmatmul.mubr.bf16.gmra.mrb[0].mxu0 %v4032
      %v4185 = vpop.f32.mrb[0].mxu0
      %v4186 = vadd.f32 0.0, %v4185
      %v4187 = vpop.f32.mrb[0].mxu0
      %v4188 = vpop.f32.mrb[0].mxu0
      %v4189 = vadd.f32 0.0, %v4188
      %v4190 = vpop.f32.mrb[0].mxu0
      %4191 = vmatprep.mubr.bf16.mxu0 0
      %4192 = vmatmul.mubr.bf16.gmra.mrb[0].mxu0 %v4035
      %v4193 = vpop.f32.mrb[0].mxu0
      %v4194 = vadd.f32 0.0, %v4193
      %v4195 = vpop.f32.mrb[0].mxu0
      %v4196 = vpop.f32.mrb[0].mxu0
      %v4197 = vadd.f32 0.0, %v4196
      %v4198 = vpop.f32.mrb[0].mxu0
      %4199 = vmatprep.mubr.bf16.mxu0 0
      %4200 = vmatmul.mubr.bf16.gmra.mrb[0].mxu0 %v4038
      %v4201 = vpop.f32.mrb[0].mxu0
      %v4202 = vadd.f32 0.0, %v4201
      %v4203 = vpop.f32.mrb[0].mxu0
      %v4204 = vpop.f32.mrb[0].mxu0
      %v4205 = vadd.f32 0.0, %v4204
      %v4206 = vpop.f32.mrb[0].mxu0
      %4207 = vmatprep.mubr.bf16.mxu0 0
      %4208 = vmatmul.mubr.bf16.gmra.mrb[0].mxu0 %v4041
      %v4209 = vpop.f32.mrb[0].mxu0
      %v4210 = vadd.f32 0.0, %v4209
      %v4211 = vpop.f32.mrb[0].mxu0
      %v4212 = vpop.f32.mrb[0].mxu0
      %v4213 = vadd.f32 0.0, %v4212
      %v4214 = vpop.f32.mrb[0].mxu0
      %4215 = vmatprep.mubr.bf16.mxu0 0
      %4216 = vmatmul.mubr.bf16.gmra.mrb[0].mxu0 %v4044
      %v4217 = vpop.f32.mrb[0].mxu0
      %v4218 = vadd.f32 0.0, %v4217
      %v4219 = vpop.f32.mrb[0].mxu0
      %v4220 = vpop.f32.mrb[0].mxu0
      %v4221 = vadd.f32 0.0, %v4220
      %v4222 = vpop.f32.mrb[0].mxu0
      %4223 = vmatprep.mubr.bf16.mxu0 0
      %4224 = vmatmul.mubr.bf16.gmra.mrb[0].mxu0 %v4047
      %v4225 = vpop.f32.mrb[0].mxu0
      %v4226 = vadd.f32 0.0, %v4225
      %v4227 = vpop.f32.mrb[0].mxu0
      %v4228 = vpop.f32.mrb[0].mxu0
      %v4229 = vadd.f32 0.0, %v4228
      %v4230 = vpop.f32.mrb[0].mxu0
      %4231 = vmatprep.mubr.bf16.mxu0 0
      %4232 = vmatmul.mubr.bf16.gmra.mrb[0].mxu0 %v4050
      %v4233 = vpop.f32.mrb[0].mxu0
      %v4234 = vadd.f32 0.0, %v4233
      %v4235 = vpop.f32.mrb[0].mxu0
      %v4236 = vpop.f32.mrb[0].mxu0
      %v4237 = vadd.f32 0.0, %v4236
      %v4238 = vpop.f32.mrb[0].mxu0
      %4239 = vdwg.mxu0
      %v4240 = vadd.f32 %v3765, %v4090
      %v4241 = vadd.f32 %v3766, %v4093
      %v4242 = vadd.f32 %v3767, %v4098
      %v4243 = vadd.f32 %v3768, %v4101
      %v4244 = vadd.f32 %v3769, %v4106
      %v4245 = vadd.f32 %v3770, %v4109
      %v4246 = vadd.f32 %v3771, %v4114
      %v4247 = vadd.f32 %v3772, %v4117
      %v4248 = vadd.f32 %v3773, %v4122
      %v4249 = vadd.f32 %v3774, %v4125
      %v4250 = vadd.f32 %v3775, %v4130
      %v4251 = vadd.f32 %v3776, %v4133
      %v4252 = vadd.f32 %v3777, %v4138
      %v4253 = vadd.f32 %v3778, %v4141
      %v4254 = vadd.f32 %v3779, %v4146
      %v4255 = vadd.f32 %v3780, %v4149
      %v4256 = vadd.f32 %v3781, %v4154
      %v4257 = vadd.f32 %v3782, %v4157
      %v4258 = vadd.f32 %v3783, %v4162
      %v4259 = vadd.f32 %v3784, %v4165
      %v4260 = vadd.f32 %v3785, %v4170
      %v4261 = vadd.f32 %v3786, %v4173
      %v4262 = vadd.f32 %v3787, %v4178
      %v4263 = vadd.f32 %v3788, %v4181
      %v4264 = vadd.f32 %v3789, %v4186
      %v4265 = vadd.f32 %v3790, %v4189
      %v4266 = vadd.f32 %v3791, %v4194
      %v4267 = vadd.f32 %v3792, %v4197
      %v4268 = vadd.f32 %v3793, %v4202
      %v4269 = vadd.f32 %v3794, %v4205
      %v4270 = vadd.f32 %v3795, %v4210
      %v4271 = vadd.f32 %v3796, %v4213
      %v4272 = vadd.f32 %v3797, %v4218
      %v4273 = vadd.f32 %v3798, %v4221
      %v4274 = vadd.f32 %v3799, %v4226
      %v4275 = vadd.f32 %v3800, %v4229
      %v4276 = vadd.f32 %v3801, %v4234
      %v4277 = vadd.f32 %v3802, %v4237
      %s4278 = scalar_lea.vmem %s1, 80
      %v4279 = vld [vmem:[%s4278] sm:$0xf]
      %v4280 = vld [vmem:[%s4278 + $0x4] sm:$0x3]
      %v4281 = vpack.c.b16 %v3419, %v3418
      %v4282 = vpack.c.b16 %v3421, %v3420
      %v4283 = vpack.c.b16 %v3423, %v3422
      %v4284 = vpack.c.b16 %v3425, %v3424
      %v4285 = vpack.c.b16 %v3427, %v3426
      %v4286 = vpack.c.b16 %v3429, %v3428
      %v4287 = vpack.c.b16 %v3431, %v3430
      %v4288 = vpack.c.b16 %v3433, %v3432
      %v4289 = vpack.c.b16 %v3435, %v3434
      %v4290 = vpack.c.b16 %v3437, %v3436
      %v4291 = vpack.c.b16 %v3439, %v3438
      %v4292 = vpack.c.b16 %v3441, %v3440
      %v4293 = vpack.c.b16 %v3443, %v3442
      %v4294 = vpack.c.b16 %v3445, %v3444
      %v4295 = vpack.c.b16 %v3447, %v3446
      %v4296 = vpack.c.b16 %v3449, %v3448
      %v4297 = vpack.c.b16 %v3451, %v3450
      %v4298 = vpack.c.b16 %v3453, %v3452
      %v4299 = vpack.c.b16 %v3808, %v3454
      %v4302 = vunpack.c.l.b16 %v4279
      %v4303 = vunpack.c.l.b16 %v4280
      %v4304 = vpack.c.b16 %v4303, %v4302
      %v4306 = vsel %vm476, %v4281, 0
      %v4309 = vsel %vm476, %v4282, 0
      %v4312 = vsel %vm476, %v4283, 0
      %v4315 = vsel %vm476, %v4284, 0
      %v4318 = vsel %vm476, %v4285, 0
      %v4321 = vsel %vm476, %v4286, 0
      %v4324 = vsel %vm476, %v4287, 0
      %v4327 = vsel %vm476, %v4288, 0
      %v4330 = vsel %vm476, %v4289, 0
      %v4333 = vsel %vm476, %v4290, 0
      %v4336 = vsel %vm476, %v4291, 0
      %v4339 = vsel %vm476, %v4292, 0
      %v4342 = vsel %vm476, %v4293, 0
      %v4345 = vsel %vm476, %v4294, 0
      %v4348 = vsel %vm476, %v4295, 0
      %v4351 = vsel %vm476, %v4296, 0
      %v4354 = vsel %vm476, %v4297, 0
      %v4357 = vsel %vm476, %v4298, 0
      %v4360 = vsel %vm476, %v4299, 0
      %v4363 = vsel %vm534, %v4304, 0
      %4365 = vmatprep.subr.bf16.mxu0 0
      %4366 = vmatpush1.bf16.msra.mxu0 %v4363
      %4367 = vmatprep.subr.bf16.mxu0 0
      %4368 = vmatpush1.bf16.msra.mxu0 0
      %4369 = vmatprep.subr.bf16.mxu0 0
      %4370 = vmatpush1.bf16.msra.mxu0 0
      %4371 = vmatprep.subr.bf16.mxu0 0
      %4372 = vmatpush1.bf16.msra.mxu0 0
      %4373 = vmatprep.subr.bf16.mxu0 0
      %4374 = vmatpush1.bf16.msra.mxu0 0
      %4375 = vmatprep.subr.bf16.mxu0 0
      %4376 = vmatpush1.bf16.msra.mxu0 0
      %4377 = vmatprep.subr.bf16.mxu0 0
      %4378 = vmatpush1.bf16.msra.mxu0 0
      %4379 = vmatprep.subr.bf16.mxu0 0
      %4380 = vmatpush1.bf16.msra.mxu0 0
      %4381 = vmatprep.subr.bf16.mxu0 0
      %4382 = vmatpush1.bf16.msra.mxu0 0
      %4383 = vmatprep.subr.bf16.mxu0 0
      %4384 = vmatpush1.bf16.msra.mxu0 0
      %4385 = vmatprep.subr.bf16.mxu0 0
      %4386 = vmatpush1.bf16.msra.mxu0 0
      %4387 = vmatprep.subr.bf16.mxu0 0
      %4388 = vmatpush1.bf16.msra.mxu0 0
      %4389 = vmatprep.subr.bf16.mxu0 0
      %4390 = vmatpush1.bf16.msra.mxu0 0
      %4391 = vmatprep.subr.bf16.mxu0 0
      %4392 = vmatpush1.bf16.msra.mxu0 0
      %4393 = vmatprep.subr.bf16.mxu0 0
      %4394 = vmatpush1.bf16.msra.mxu0 0
      %4395 = vmatprep.subr.bf16.mxu0 0
      %4396 = vmatpush1.bf16.msra.mxu0 0
      %4397 = vmatprep.mubr.bf16.mxu0 0
      %4398 = vmatmul.mubr.bf16.gmra.mrb[0].mxu0 %v4306
      %v4399 = vpop.f32.mrb[0].mxu0
      %v4400 = vadd.f32 0.0, %v4399
      %v4401 = vpop.f32.mrb[0].mxu0
      %v4402 = vpop.f32.mrb[0].mxu0
      %v4403 = vadd.f32 0.0, %v4402
      %v4404 = vpop.f32.mrb[0].mxu0
      %4405 = vmatprep.mubr.bf16.mxu0 0
      %4406 = vmatmul.mubr.bf16.gmra.mrb[0].mxu0 %v4309
      %v4407 = vpop.f32.mrb[0].mxu0
      %v4408 = vadd.f32 0.0, %v4407
      %v4409 = vpop.f32.mrb[0].mxu0
      %v4410 = vpop.f32.mrb[0].mxu0
      %v4411 = vadd.f32 0.0, %v4410
      %v4412 = vpop.f32.mrb[0].mxu0
      %4413 = vmatprep.mubr.bf16.mxu0 0
      %4414 = vmatmul.mubr.bf16.gmra.mrb[0].mxu0 %v4312
      %v4415 = vpop.f32.mrb[0].mxu0
      %v4416 = vadd.f32 0.0, %v4415
      %v4417 = vpop.f32.mrb[0].mxu0
      %v4418 = vpop.f32.mrb[0].mxu0
      %v4419 = vadd.f32 0.0, %v4418
      %v4420 = vpop.f32.mrb[0].mxu0
      %4421 = vmatprep.mubr.bf16.mxu0 0
      %4422 = vmatmul.mubr.bf16.gmra.mrb[0].mxu0 %v4315
      %v4423 = vpop.f32.mrb[0].mxu0
      %v4424 = vadd.f32 0.0, %v4423
      %v4425 = vpop.f32.mrb[0].mxu0
      %v4426 = vpop.f32.mrb[0].mxu0
      %v4427 = vadd.f32 0.0, %v4426
      %v4428 = vpop.f32.mrb[0].mxu0
      %4429 = vmatprep.mubr.bf16.mxu0 0
      %4430 = vmatmul.mubr.bf16.gmra.mrb[0].mxu0 %v4318
      %v4431 = vpop.f32.mrb[0].mxu0
      %v4432 = vadd.f32 0.0, %v4431
      %v4433 = vpop.f32.mrb[0].mxu0
      %v4434 = vpop.f32.mrb[0].mxu0
      %v4435 = vadd.f32 0.0, %v4434
      %v4436 = vpop.f32.mrb[0].mxu0
      %4437 = vmatprep.mubr.bf16.mxu0 0
      %4438 = vmatmul.mubr.bf16.gmra.mrb[0].mxu0 %v4321
      %v4439 = vpop.f32.mrb[0].mxu0
      %v4440 = vadd.f32 0.0, %v4439
      %v4441 = vpop.f32.mrb[0].mxu0
      %v4442 = vpop.f32.mrb[0].mxu0
      %v4443 = vadd.f32 0.0, %v4442
      %v4444 = vpop.f32.mrb[0].mxu0
      %4445 = vmatprep.mubr.bf16.mxu0 0
      %4446 = vmatmul.mubr.bf16.gmra.mrb[0].mxu0 %v4324
      %v4447 = vpop.f32.mrb[0].mxu0
      %v4448 = vadd.f32 0.0, %v4447
      %v4449 = vpop.f32.mrb[0].mxu0
      %v4450 = vpop.f32.mrb[0].mxu0
      %v4451 = vadd.f32 0.0, %v4450
      %v4452 = vpop.f32.mrb[0].mxu0
      %4453 = vmatprep.mubr.bf16.mxu0 0
      %4454 = vmatmul.mubr.bf16.gmra.mrb[0].mxu0 %v4327
      %v4455 = vpop.f32.mrb[0].mxu0
      %v4456 = vadd.f32 0.0, %v4455
      %v4457 = vpop.f32.mrb[0].mxu0
      %v4458 = vpop.f32.mrb[0].mxu0
      %v4459 = vadd.f32 0.0, %v4458
      %v4460 = vpop.f32.mrb[0].mxu0
      %4461 = vmatprep.mubr.bf16.mxu0 0
      %4462 = vmatmul.mubr.bf16.gmra.mrb[0].mxu0 %v4330
      %v4463 = vpop.f32.mrb[0].mxu0
      %v4464 = vadd.f32 0.0, %v4463
      %v4465 = vpop.f32.mrb[0].mxu0
      %v4466 = vpop.f32.mrb[0].mxu0
      %v4467 = vadd.f32 0.0, %v4466
      %v4468 = vpop.f32.mrb[0].mxu0
      %4469 = vmatprep.mubr.bf16.mxu0 0
      %4470 = vmatmul.mubr.bf16.gmra.mrb[0].mxu0 %v4333
      %v4471 = vpop.f32.mrb[0].mxu0
      %v4472 = vadd.f32 0.0, %v4471
      %v4473 = vpop.f32.mrb[0].mxu0
      %v4474 = vpop.f32.mrb[0].mxu0
      %v4475 = vadd.f32 0.0, %v4474
      %v4476 = vpop.f32.mrb[0].mxu0
      %4477 = vmatprep.mubr.bf16.mxu0 0
      %4478 = vmatmul.mubr.bf16.gmra.mrb[0].mxu0 %v4336
      %v4479 = vpop.f32.mrb[0].mxu0
      %v4480 = vadd.f32 0.0, %v4479
      %v4481 = vpop.f32.mrb[0].mxu0
      %v4482 = vpop.f32.mrb[0].mxu0
      %v4483 = vadd.f32 0.0, %v4482
      %v4484 = vpop.f32.mrb[0].mxu0
      %4485 = vmatprep.mubr.bf16.mxu0 0
      %4486 = vmatmul.mubr.bf16.gmra.mrb[0].mxu0 %v4339
      %v4487 = vpop.f32.mrb[0].mxu0
      %v4488 = vadd.f32 0.0, %v4487
      %v4489 = vpop.f32.mrb[0].mxu0
      %v4490 = vpop.f32.mrb[0].mxu0
      %v4491 = vadd.f32 0.0, %v4490
      %v4492 = vpop.f32.mrb[0].mxu0
      %4493 = vmatprep.mubr.bf16.mxu0 0
      %4494 = vmatmul.mubr.bf16.gmra.mrb[0].mxu0 %v4342
      %v4495 = vpop.f32.mrb[0].mxu0
      %v4496 = vadd.f32 0.0, %v4495
      %v4497 = vpop.f32.mrb[0].mxu0
      %v4498 = vpop.f32.mrb[0].mxu0
      %v4499 = vadd.f32 0.0, %v4498
      %v4500 = vpop.f32.mrb[0].mxu0
      %4501 = vmatprep.mubr.bf16.mxu0 0
      %4502 = vmatmul.mubr.bf16.gmra.mrb[0].mxu0 %v4345
      %v4503 = vpop.f32.mrb[0].mxu0
      %v4504 = vadd.f32 0.0, %v4503
      %v4505 = vpop.f32.mrb[0].mxu0
      %v4506 = vpop.f32.mrb[0].mxu0
      %v4507 = vadd.f32 0.0, %v4506
      %v4508 = vpop.f32.mrb[0].mxu0
      %4509 = vmatprep.mubr.bf16.mxu0 0
      %4510 = vmatmul.mubr.bf16.gmra.mrb[0].mxu0 %v4348
      %v4511 = vpop.f32.mrb[0].mxu0
      %v4512 = vadd.f32 0.0, %v4511
      %v4513 = vpop.f32.mrb[0].mxu0
      %v4514 = vpop.f32.mrb[0].mxu0
      %v4515 = vadd.f32 0.0, %v4514
      %v4516 = vpop.f32.mrb[0].mxu0
      %4517 = vmatprep.mubr.bf16.mxu0 0
      %4518 = vmatmul.mubr.bf16.gmra.mrb[0].mxu0 %v4351
      %v4519 = vpop.f32.mrb[0].mxu0
      %v4520 = vadd.f32 0.0, %v4519
      %v4521 = vpop.f32.mrb[0].mxu0
      %v4522 = vpop.f32.mrb[0].mxu0
      %v4523 = vadd.f32 0.0, %v4522
      %v4524 = vpop.f32.mrb[0].mxu0
      %4525 = vmatprep.mubr.bf16.mxu0 0
      %4526 = vmatmul.mubr.bf16.gmra.mrb[0].mxu0 %v4354
      %v4527 = vpop.f32.mrb[0].mxu0
      %v4528 = vadd.f32 0.0, %v4527
      %v4529 = vpop.f32.mrb[0].mxu0
      %v4530 = vpop.f32.mrb[0].mxu0
      %v4531 = vadd.f32 0.0, %v4530
      %v4532 = vpop.f32.mrb[0].mxu0
      %4533 = vmatprep.mubr.bf16.mxu0 0
      %4534 = vmatmul.mubr.bf16.gmra.mrb[0].mxu0 %v4357
      %v4535 = vpop.f32.mrb[0].mxu0
      %v4536 = vadd.f32 0.0, %v4535
      %v4537 = vpop.f32.mrb[0].mxu0
      %v4538 = vpop.f32.mrb[0].mxu0
      %v4539 = vadd.f32 0.0, %v4538
      %v4540 = vpop.f32.mrb[0].mxu0
      %4541 = vmatprep.mubr.bf16.mxu0 0
      %4542 = vmatmul.mubr.bf16.gmra.mrb[0].mxu0 %v4360
      %v4543 = vpop.f32.mrb[0].mxu0
      %v4544 = vadd.f32 0.0, %v4543
      %v4545 = vpop.f32.mrb[0].mxu0
      %v4546 = vpop.f32.mrb[0].mxu0
      %v4547 = vadd.f32 0.0, %v4546
      %v4548 = vpop.f32.mrb[0].mxu0
      %4549 = vdwg.mxu0
      %v4550 = vadd.f32 %v4240, %v4400
      %v4551 = vadd.f32 %v4241, %v4403
      %v4552 = vadd.f32 %v4242, %v4408
      %v4553 = vadd.f32 %v4243, %v4411
      %v4554 = vadd.f32 %v4244, %v4416
      %v4555 = vadd.f32 %v4245, %v4419
      %v4556 = vadd.f32 %v4246, %v4424
      %v4557 = vadd.f32 %v4247, %v4427
      %v4558 = vadd.f32 %v4248, %v4432
      %v4559 = vadd.f32 %v4249, %v4435
      %v4560 = vadd.f32 %v4250, %v4440
      %v4561 = vadd.f32 %v4251, %v4443
      %v4562 = vadd.f32 %v4252, %v4448
      %v4563 = vadd.f32 %v4253, %v4451
      %v4564 = vadd.f32 %v4254, %v4456
      %v4565 = vadd.f32 %v4255, %v4459
      %v4566 = vadd.f32 %v4256, %v4464
      %v4567 = vadd.f32 %v4257, %v4467
      %v4568 = vadd.f32 %v4258, %v4472
      %v4569 = vadd.f32 %v4259, %v4475
      %v4570 = vadd.f32 %v4260, %v4480
      %v4571 = vadd.f32 %v4261, %v4483
      %v4572 = vadd.f32 %v4262, %v4488
      %v4573 = vadd.f32 %v4263, %v4491
      %v4574 = vadd.f32 %v4264, %v4496
      %v4575 = vadd.f32 %v4265, %v4499
      %v4576 = vadd.f32 %v4266, %v4504
      %v4577 = vadd.f32 %v4267, %v4507
      %v4578 = vadd.f32 %v4268, %v4512
      %v4579 = vadd.f32 %v4269, %v4515
      %v4580 = vadd.f32 %v4270, %v4520
      %v4581 = vadd.f32 %v4271, %v4523
      %v4582 = vadd.f32 %v4272, %v4528
      %v4583 = vadd.f32 %v4273, %v4531
      %v4584 = vadd.f32 %v4274, %v4536
      %v4585 = vadd.f32 %v4275, %v4539
      %v4586 = vadd.f32 %v4276, %v4544
      %v4587 = vadd.f32 %v4277, %v4547
      %v4588 = vld [vmem:[%s165 + $0x14] sm:$0xf]
      %v4589 = vld [vmem:[%s165 + $0x18] sm:$0xf]
      %v4590 = vld [vmem:[%s165 + $0x1c] sm:$0xf]
      %v4591 = vld [vmem:[%s165 + $0x20] sm:$0xf]
      %v4592 = vld [vmem:[%s165 + $0x24] sm:$0xf]
      %v4593 = vld [vmem:[%s165 + $0x28] sm:$0xf]
      %v4594 = vld [vmem:[%s165 + $0x2c] sm:$0xf]
      %v4595 = vld [vmem:[%s165 + $0x30] sm:$0xf]
      %v4596 = vld [vmem:[%s165 + $0x34] sm:$0xf]
      %v4597 = vld [vmem:[%s165 + $0x38] sm:$0xf]
      %v4598 = vld [vmem:[%s165 + $0x3c] sm:$0xf]
      %v4599 = vld [vmem:[%s165 + $0x40] sm:$0xf]
      %v4600 = vld [vmem:[%s165 + $0x44] sm:$0xf]
      %v4601 = vld [vmem:[%s165 + $0x48] sm:$0xf]
      %v4602 = vld [vmem:[%s165 + $0x4c] sm:$0xf]
      %v4603 = vld [vmem:[%s165 + $0x50] sm:$0xf]
      %v4604 = vld [vmem:[%s165 + $0x54] sm:$0xf]
      %v4605 = vld [vmem:[%s165 + $0x58] sm:$0xf]
      %v4606 = vld [vmem:[%s165 + $0x5c] sm:$0xf]
      %v4607 = vld [vmem:[%s165 + $0x60] sm:$0xf]
      %v4608 = vld [vmem:[%s165 + $0x64] sm:$0xf]
      %v4609 = vld [vmem:[%s165 + $0x68] sm:$0xf]
      %v4610 = vld [vmem:[%s165 + $0x6c] sm:$0xf]
      %v4611 = vld [vmem:[%s165 + $0x70] sm:$0xf]
      %v4612 = vld [vmem:[%s165 + $0x74] sm:$0xf]
      %v4613 = vld [vmem:[%s165 + $0x78] sm:$0xf]
      %v4614 = vld [vmem:[%s165 + $0x7c] sm:$0xf]
      %v4615 = vld [vmem:[%s165 + $0x80] sm:$0xf]
      %v4616 = vld [vmem:[%s165 + $0x84] sm:$0xf]
      %v4617 = vld [vmem:[%s165 + $0x88] sm:$0xf]
      %v4618 = vld [vmem:[%s165 + $0x8c] sm:$0xf]
      %v4619 = vld [vmem:[%s165 + $0x90] sm:$0xf]
      %v4620 = vld [vmem:[%s165 + $0x94] sm:$0xf]
      %v4621 = vld [vmem:[%s165 + $0x98] sm:$0xf]
      %v4622 = vld [vmem:[%s165 + $0x9c] sm:$0xf]
      %v4623 = vld [vmem:[%s165 + $0xa0] sm:$0xf]
      %v4624 = vld [vmem:[%s165 + $0xa4] sm:$0xf]
      %v4625 = vld [vmem:[%s165 + $0xa8] sm:$0xf]
      %v4626 = vld [vmem:[%s165 + $0xac] sm:$0x1]
      %s4627 = scalar_lea.vmem %s1, 88
      %v4628 = vld [vmem:[%s4627] sm:$0xf]
      %v4629 = vld [vmem:[%s4627 + $0x4] sm:$0x3]
      %v4669 = vunpack.c.l.b16 %v4588
      %v4670 = vunpack.c.l.b16 %v4589
      %v4671 = vunpack.c.l.b16 %v4590
      %v4672 = vunpack.c.l.b16 %v4591
      %v4673 = vunpack.c.l.b16 %v4592
      %v4674 = vunpack.c.l.b16 %v4593
      %v4675 = vunpack.c.l.b16 %v4594
      %v4676 = vunpack.c.l.b16 %v4595
      %v4677 = vunpack.c.l.b16 %v4596
      %v4678 = vunpack.c.l.b16 %v4597
      %v4679 = vunpack.c.l.b16 %v4598
      %v4680 = vunpack.c.l.b16 %v4599
      %v4681 = vunpack.c.l.b16 %v4600
      %v4682 = vunpack.c.l.b16 %v4601
      %v4683 = vunpack.c.l.b16 %v4602
      %v4684 = vunpack.c.l.b16 %v4603
      %v4685 = vunpack.c.l.b16 %v4604
      %v4686 = vunpack.c.l.b16 %v4605
      %v4687 = vunpack.c.l.b16 %v4606
      %v4688 = vunpack.c.l.b16 %v4607
      %v4689 = vunpack.c.l.b16 %v4608
      %v4690 = vunpack.c.l.b16 %v4609
      %v4691 = vunpack.c.l.b16 %v4610
      %v4692 = vunpack.c.l.b16 %v4611
      %v4693 = vunpack.c.l.b16 %v4612
      %v4694 = vunpack.c.l.b16 %v4613
      %v4695 = vunpack.c.l.b16 %v4614
      %v4696 = vunpack.c.l.b16 %v4615
      %v4697 = vunpack.c.l.b16 %v4616
      %v4698 = vunpack.c.l.b16 %v4617
      %v4699 = vunpack.c.l.b16 %v4618
      %v4700 = vunpack.c.l.b16 %v4619
      %v4701 = vunpack.c.l.b16 %v4620
      %v4702 = vunpack.c.l.b16 %v4621
      %v4703 = vunpack.c.l.b16 %v4622
      %v4704 = vunpack.c.l.b16 %v4623
      %v4705 = vunpack.c.l.b16 %v4624
      %v4706 = vunpack.c.l.b16 %v4625
      %v4707 = vunpack.c.l.b16 %v4626
      %v4708 = vpack.c.b16 %v4670, %v4669
      %v4709 = vpack.c.b16 %v4672, %v4671
      %v4710 = vpack.c.b16 %v4674, %v4673
      %v4711 = vpack.c.b16 %v4676, %v4675
      %v4712 = vpack.c.b16 %v4678, %v4677
      %v4713 = vpack.c.b16 %v4680, %v4679
      %v4714 = vpack.c.b16 %v4682, %v4681
      %v4715 = vpack.c.b16 %v4684, %v4683
      %v4716 = vpack.c.b16 %v4686, %v4685
      %v4717 = vpack.c.b16 %v4688, %v4687
      %v4718 = vpack.c.b16 %v4690, %v4689
      %v4719 = vpack.c.b16 %v4692, %v4691
      %v4720 = vpack.c.b16 %v4694, %v4693
      %v4721 = vpack.c.b16 %v4696, %v4695
      %v4722 = vpack.c.b16 %v4698, %v4697
      %v4723 = vpack.c.b16 %v4700, %v4699
      %v4724 = vpack.c.b16 %v4702, %v4701
      %v4725 = vpack.c.b16 %v4704, %v4703
      %v4726 = vpack.c.b16 %v4706, %v4705
      %v4727 = vpack.c.b16 %v4707, %v4707
      %v4729 = vshrl.u32 %v4708, 16
      %v4731 = vshll.u32 %v4708, 16
      %v4733 = vrot.slane %v4731, 1
      %v4734 = vor.u32 %v4729, %v4733
      %v4736 = vshll.u32 %v4709, 16
      %v4738 = vrot.slane %v4736, 1
      %v4739 = vsel %vm314, %v4734, %v4738
      %v4740 = vshrl.u32 %v4709, 16
      %v4742 = vor.u32 %v4740, %v4738
      %v4744 = vshll.u32 %v4710, 16
      %v4746 = vrot.slane %v4744, 1
      %v4747 = vsel %vm314, %v4742, %v4746
      %v4748 = vshrl.u32 %v4710, 16
      %v4750 = vor.u32 %v4748, %v4746
      %v4752 = vshll.u32 %v4711, 16
      %v4754 = vrot.slane %v4752, 1
      %v4755 = vsel %vm314, %v4750, %v4754
      %v4756 = vshrl.u32 %v4711, 16
      %v4758 = vor.u32 %v4756, %v4754
      %v4760 = vshll.u32 %v4712, 16
      %v4762 = vrot.slane %v4760, 1
      %v4763 = vsel %vm314, %v4758, %v4762
      %v4764 = vshrl.u32 %v4712, 16
      %v4766 = vor.u32 %v4764, %v4762
      %v4768 = vshll.u32 %v4713, 16
      %v4770 = vrot.slane %v4768, 1
      %v4771 = vsel %vm314, %v4766, %v4770
      %v4772 = vshrl.u32 %v4713, 16
      %v4774 = vor.u32 %v4772, %v4770
      %v4776 = vshll.u32 %v4714, 16
      %v4778 = vrot.slane %v4776, 1
      %v4779 = vsel %vm314, %v4774, %v4778
      %v4780 = vshrl.u32 %v4714, 16
      %v4782 = vor.u32 %v4780, %v4778
      %v4784 = vshll.u32 %v4715, 16
      %v4786 = vrot.slane %v4784, 1
      %v4787 = vsel %vm314, %v4782, %v4786
      %v4788 = vshrl.u32 %v4715, 16
      %v4790 = vor.u32 %v4788, %v4786
      %v4792 = vshll.u32 %v4716, 16
      %v4794 = vrot.slane %v4792, 1
      %v4795 = vsel %vm314, %v4790, %v4794
      %v4796 = vshrl.u32 %v4716, 16
      %v4798 = vor.u32 %v4796, %v4794
      %v4800 = vshll.u32 %v4717, 16
      %v4802 = vrot.slane %v4800, 1
      %v4803 = vsel %vm314, %v4798, %v4802
      %v4804 = vshrl.u32 %v4717, 16
      %v4806 = vor.u32 %v4804, %v4802
      %v4808 = vshll.u32 %v4718, 16
      %v4810 = vrot.slane %v4808, 1
      %v4811 = vsel %vm314, %v4806, %v4810
      %v4812 = vshrl.u32 %v4718, 16
      %v4814 = vor.u32 %v4812, %v4810
      %v4816 = vshll.u32 %v4719, 16
      %v4818 = vrot.slane %v4816, 1
      %v4819 = vsel %vm314, %v4814, %v4818
      %v4820 = vshrl.u32 %v4719, 16
      %v4822 = vor.u32 %v4820, %v4818
      %v4824 = vshll.u32 %v4720, 16
      %v4826 = vrot.slane %v4824, 1
      %v4827 = vsel %vm314, %v4822, %v4826
      %v4828 = vshrl.u32 %v4720, 16
      %v4830 = vor.u32 %v4828, %v4826
      %v4832 = vshll.u32 %v4721, 16
      %v4834 = vrot.slane %v4832, 1
      %v4835 = vsel %vm314, %v4830, %v4834
      %v4836 = vshrl.u32 %v4721, 16
      %v4838 = vor.u32 %v4836, %v4834
      %v4840 = vshll.u32 %v4722, 16
      %v4842 = vrot.slane %v4840, 1
      %v4843 = vsel %vm314, %v4838, %v4842
      %v4844 = vshrl.u32 %v4722, 16
      %v4846 = vor.u32 %v4844, %v4842
      %v4848 = vshll.u32 %v4723, 16
      %v4850 = vrot.slane %v4848, 1
      %v4851 = vsel %vm314, %v4846, %v4850
      %v4852 = vshrl.u32 %v4723, 16
      %v4854 = vor.u32 %v4852, %v4850
      %v4856 = vshll.u32 %v4724, 16
      %v4858 = vrot.slane %v4856, 1
      %v4859 = vsel %vm314, %v4854, %v4858
      %v4860 = vshrl.u32 %v4724, 16
      %v4862 = vor.u32 %v4860, %v4858
      %v4864 = vshll.u32 %v4725, 16
      %v4866 = vrot.slane %v4864, 1
      %v4867 = vsel %vm314, %v4862, %v4866
      %v4868 = vshrl.u32 %v4725, 16
      %v4870 = vor.u32 %v4868, %v4866
      %v4872 = vshll.u32 %v4726, 16
      %v4874 = vrot.slane %v4872, 1
      %v4875 = vsel %vm314, %v4870, %v4874
      %v4876 = vshrl.u32 %v4726, 16
      %v4878 = vor.u32 %v4876, %v4874
      %v4880 = vshll.u32 %v4727, 16
      %v4882 = vrot.slane %v4880, 1
      %v4883 = vsel %vm314, %v4878, %v4882
      %v4886 = vunpack.c.l.b16 %v4628
      %v4887 = vunpack.c.l.b16 %v4629
      %v4888 = vpack.c.b16 %v4887, %v4886
      %v4890 = vsel %vm476, %v4739, 0
      %v4893 = vsel %vm476, %v4747, 0
      %v4896 = vsel %vm476, %v4755, 0
      %v4899 = vsel %vm476, %v4763, 0
      %v4902 = vsel %vm476, %v4771, 0
      %v4905 = vsel %vm476, %v4779, 0
      %v4908 = vsel %vm476, %v4787, 0
      %v4911 = vsel %vm476, %v4795, 0
      %v4914 = vsel %vm476, %v4803, 0
      %v4917 = vsel %vm476, %v4811, 0
      %v4920 = vsel %vm476, %v4819, 0
      %v4923 = vsel %vm476, %v4827, 0
      %v4926 = vsel %vm476, %v4835, 0
      %v4929 = vsel %vm476, %v4843, 0
      %v4932 = vsel %vm476, %v4851, 0
      %v4935 = vsel %vm476, %v4859, 0
      %v4938 = vsel %vm476, %v4867, 0
      %v4941 = vsel %vm476, %v4875, 0
      %v4944 = vsel %vm476, %v4883, 0
      %v4947 = vsel %vm534, %v4888, 0
      %4949 = vmatprep.subr.bf16.mxu0 0
      %4950 = vmatpush1.bf16.msra.mxu0 %v4947
      %4951 = vmatprep.subr.bf16.mxu0 0
      %4952 = vmatpush1.bf16.msra.mxu0 0
      %4953 = vmatprep.subr.bf16.mxu0 0
      %4954 = vmatpush1.bf16.msra.mxu0 0
      %4955 = vmatprep.subr.bf16.mxu0 0
      %4956 = vmatpush1.bf16.msra.mxu0 0
      %4957 = vmatprep.subr.bf16.mxu0 0
      %4958 = vmatpush1.bf16.msra.mxu0 0
      %4959 = vmatprep.subr.bf16.mxu0 0
      %4960 = vmatpush1.bf16.msra.mxu0 0
      %4961 = vmatprep.subr.bf16.mxu0 0
      %4962 = vmatpush1.bf16.msra.mxu0 0
      %4963 = vmatprep.subr.bf16.mxu0 0
      %4964 = vmatpush1.bf16.msra.mxu0 0
      %4965 = vmatprep.subr.bf16.mxu0 0
      %4966 = vmatpush1.bf16.msra.mxu0 0
      %4967 = vmatprep.subr.bf16.mxu0 0
      %4968 = vmatpush1.bf16.msra.mxu0 0
      %4969 = vmatprep.subr.bf16.mxu0 0
      %4970 = vmatpush1.bf16.msra.mxu0 0
      %4971 = vmatprep.subr.bf16.mxu0 0
      %4972 = vmatpush1.bf16.msra.mxu0 0
      %4973 = vmatprep.subr.bf16.mxu0 0
      %4974 = vmatpush1.bf16.msra.mxu0 0
      %4975 = vmatprep.subr.bf16.mxu0 0
      %4976 = vmatpush1.bf16.msra.mxu0 0
      %4977 = vmatprep.subr.bf16.mxu0 0
      %4978 = vmatpush1.bf16.msra.mxu0 0
      %4979 = vmatprep.subr.bf16.mxu0 0
      %4980 = vmatpush1.bf16.msra.mxu0 0
      %4981 = vmatprep.mubr.bf16.mxu0 0
      %4982 = vmatmul.mubr.bf16.gmra.mrb[0].mxu0 %v4890
      %v4983 = vpop.f32.mrb[0].mxu0
      %v4984 = vadd.f32 0.0, %v4983
      %v4985 = vpop.f32.mrb[0].mxu0
      %v4986 = vpop.f32.mrb[0].mxu0
      %v4987 = vadd.f32 0.0, %v4986
      %v4988 = vpop.f32.mrb[0].mxu0
      %4989 = vmatprep.mubr.bf16.mxu0 0
      %4990 = vmatmul.mubr.bf16.gmra.mrb[0].mxu0 %v4893
      %v4991 = vpop.f32.mrb[0].mxu0
      %v4992 = vadd.f32 0.0, %v4991
      %v4993 = vpop.f32.mrb[0].mxu0
      %v4994 = vpop.f32.mrb[0].mxu0
      %v4995 = vadd.f32 0.0, %v4994
      %v4996 = vpop.f32.mrb[0].mxu0
      %4997 = vmatprep.mubr.bf16.mxu0 0
      %4998 = vmatmul.mubr.bf16.gmra.mrb[0].mxu0 %v4896
      %v4999 = vpop.f32.mrb[0].mxu0
      %v5000 = vadd.f32 0.0, %v4999
      %v5001 = vpop.f32.mrb[0].mxu0
      %v5002 = vpop.f32.mrb[0].mxu0
      %v5003 = vadd.f32 0.0, %v5002
      %v5004 = vpop.f32.mrb[0].mxu0
      %5005 = vmatprep.mubr.bf16.mxu0 0
      %5006 = vmatmul.mubr.bf16.gmra.mrb[0].mxu0 %v4899
      %v5007 = vpop.f32.mrb[0].mxu0
      %v5008 = vadd.f32 0.0, %v5007
      %v5009 = vpop.f32.mrb[0].mxu0
      %v5010 = vpop.f32.mrb[0].mxu0
      %v5011 = vadd.f32 0.0, %v5010
      %v5012 = vpop.f32.mrb[0].mxu0
      %5013 = vmatprep.mubr.bf16.mxu0 0
      %5014 = vmatmul.mubr.bf16.gmra.mrb[0].mxu0 %v4902
      %v5015 = vpop.f32.mrb[0].mxu0
      %v5016 = vadd.f32 0.0, %v5015
      %v5017 = vpop.f32.mrb[0].mxu0
      %v5018 = vpop.f32.mrb[0].mxu0
      %v5019 = vadd.f32 0.0, %v5018
      %v5020 = vpop.f32.mrb[0].mxu0
      %5021 = vmatprep.mubr.bf16.mxu0 0
      %5022 = vmatmul.mubr.bf16.gmra.mrb[0].mxu0 %v4905
      %v5023 = vpop.f32.mrb[0].mxu0
      %v5024 = vadd.f32 0.0, %v5023
      %v5025 = vpop.f32.mrb[0].mxu0
      %v5026 = vpop.f32.mrb[0].mxu0
      %v5027 = vadd.f32 0.0, %v5026
      %v5028 = vpop.f32.mrb[0].mxu0
      %5029 = vmatprep.mubr.bf16.mxu0 0
      %5030 = vmatmul.mubr.bf16.gmra.mrb[0].mxu0 %v4908
      %v5031 = vpop.f32.mrb[0].mxu0
      %v5032 = vadd.f32 0.0, %v5031
      %v5033 = vpop.f32.mrb[0].mxu0
      %v5034 = vpop.f32.mrb[0].mxu0
      %v5035 = vadd.f32 0.0, %v5034
      %v5036 = vpop.f32.mrb[0].mxu0
      %5037 = vmatprep.mubr.bf16.mxu0 0
      %5038 = vmatmul.mubr.bf16.gmra.mrb[0].mxu0 %v4911
      %v5039 = vpop.f32.mrb[0].mxu0
      %v5040 = vadd.f32 0.0, %v5039
      %v5041 = vpop.f32.mrb[0].mxu0
      %v5042 = vpop.f32.mrb[0].mxu0
      %v5043 = vadd.f32 0.0, %v5042
      %v5044 = vpop.f32.mrb[0].mxu0
      %5045 = vmatprep.mubr.bf16.mxu0 0
      %5046 = vmatmul.mubr.bf16.gmra.mrb[0].mxu0 %v4914
      %v5047 = vpop.f32.mrb[0].mxu0
      %v5048 = vadd.f32 0.0, %v5047
      %v5049 = vpop.f32.mrb[0].mxu0
      %v5050 = vpop.f32.mrb[0].mxu0
      %v5051 = vadd.f32 0.0, %v5050
      %v5052 = vpop.f32.mrb[0].mxu0
      %5053 = vmatprep.mubr.bf16.mxu0 0
      %5054 = vmatmul.mubr.bf16.gmra.mrb[0].mxu0 %v4917
      %v5055 = vpop.f32.mrb[0].mxu0
      %v5056 = vadd.f32 0.0, %v5055
      %v5057 = vpop.f32.mrb[0].mxu0
      %v5058 = vpop.f32.mrb[0].mxu0
      %v5059 = vadd.f32 0.0, %v5058
      %v5060 = vpop.f32.mrb[0].mxu0
      %5061 = vmatprep.mubr.bf16.mxu0 0
      %5062 = vmatmul.mubr.bf16.gmra.mrb[0].mxu0 %v4920
      %v5063 = vpop.f32.mrb[0].mxu0
      %v5064 = vadd.f32 0.0, %v5063
      %v5065 = vpop.f32.mrb[0].mxu0
      %v5066 = vpop.f32.mrb[0].mxu0
      %v5067 = vadd.f32 0.0, %v5066
      %v5068 = vpop.f32.mrb[0].mxu0
      %5069 = vmatprep.mubr.bf16.mxu0 0
      %5070 = vmatmul.mubr.bf16.gmra.mrb[0].mxu0 %v4923
      %v5071 = vpop.f32.mrb[0].mxu0
      %v5072 = vadd.f32 0.0, %v5071
      %v5073 = vpop.f32.mrb[0].mxu0
      %v5074 = vpop.f32.mrb[0].mxu0
      %v5075 = vadd.f32 0.0, %v5074
      %v5076 = vpop.f32.mrb[0].mxu0
      %5077 = vmatprep.mubr.bf16.mxu0 0
      %5078 = vmatmul.mubr.bf16.gmra.mrb[0].mxu0 %v4926
      %v5079 = vpop.f32.mrb[0].mxu0
      %v5080 = vadd.f32 0.0, %v5079
      %v5081 = vpop.f32.mrb[0].mxu0
      %v5082 = vpop.f32.mrb[0].mxu0
      %v5083 = vadd.f32 0.0, %v5082
      %v5084 = vpop.f32.mrb[0].mxu0
      %5085 = vmatprep.mubr.bf16.mxu0 0
      %5086 = vmatmul.mubr.bf16.gmra.mrb[0].mxu0 %v4929
      %v5087 = vpop.f32.mrb[0].mxu0
      %v5088 = vadd.f32 0.0, %v5087
      %v5089 = vpop.f32.mrb[0].mxu0
      %v5090 = vpop.f32.mrb[0].mxu0
      %v5091 = vadd.f32 0.0, %v5090
      %v5092 = vpop.f32.mrb[0].mxu0
      %5093 = vmatprep.mubr.bf16.mxu0 0
      %5094 = vmatmul.mubr.bf16.gmra.mrb[0].mxu0 %v4932
      %v5095 = vpop.f32.mrb[0].mxu0
      %v5096 = vadd.f32 0.0, %v5095
      %v5097 = vpop.f32.mrb[0].mxu0
      %v5098 = vpop.f32.mrb[0].mxu0
      %v5099 = vadd.f32 0.0, %v5098
      %v5100 = vpop.f32.mrb[0].mxu0
      %5101 = vmatprep.mubr.bf16.mxu0 0
      %5102 = vmatmul.mubr.bf16.gmra.mrb[0].mxu0 %v4935
      %v5103 = vpop.f32.mrb[0].mxu0
      %v5104 = vadd.f32 0.0, %v5103
      %v5105 = vpop.f32.mrb[0].mxu0
      %v5106 = vpop.f32.mrb[0].mxu0
      %v5107 = vadd.f32 0.0, %v5106
      %v5108 = vpop.f32.mrb[0].mxu0
      %5109 = vmatprep.mubr.bf16.mxu0 0
      %5110 = vmatmul.mubr.bf16.gmra.mrb[0].mxu0 %v4938
      %v5111 = vpop.f32.mrb[0].mxu0
      %v5112 = vadd.f32 0.0, %v5111
      %v5113 = vpop.f32.mrb[0].mxu0
      %v5114 = vpop.f32.mrb[0].mxu0
      %v5115 = vadd.f32 0.0, %v5114
      %v5116 = vpop.f32.mrb[0].mxu0
      %5117 = vmatprep.mubr.bf16.mxu0 0
      %5118 = vmatmul.mubr.bf16.gmra.mrb[0].mxu0 %v4941
      %v5119 = vpop.f32.mrb[0].mxu0
      %v5120 = vadd.f32 0.0, %v5119
      %v5121 = vpop.f32.mrb[0].mxu0
      %v5122 = vpop.f32.mrb[0].mxu0
      %v5123 = vadd.f32 0.0, %v5122
      %v5124 = vpop.f32.mrb[0].mxu0
      %5125 = vmatprep.mubr.bf16.mxu0 0
      %5126 = vmatmul.mubr.bf16.gmra.mrb[0].mxu0 %v4944
      %v5127 = vpop.f32.mrb[0].mxu0
      %v5128 = vadd.f32 0.0, %v5127
      %v5129 = vpop.f32.mrb[0].mxu0
      %v5130 = vpop.f32.mrb[0].mxu0
      %v5131 = vadd.f32 0.0, %v5130
      %v5132 = vpop.f32.mrb[0].mxu0
      %5133 = vdwg.mxu0
      %v5134 = vadd.f32 %v4550, %v4984
      %v5135 = vadd.f32 %v4551, %v4987
      %v5136 = vadd.f32 %v4552, %v4992
      %v5137 = vadd.f32 %v4553, %v4995
      %v5138 = vadd.f32 %v4554, %v5000
      %v5139 = vadd.f32 %v4555, %v5003
      %v5140 = vadd.f32 %v4556, %v5008
      %v5141 = vadd.f32 %v4557, %v5011
      %v5142 = vadd.f32 %v4558, %v5016
      %v5143 = vadd.f32 %v4559, %v5019
      %v5144 = vadd.f32 %v4560, %v5024
      %v5145 = vadd.f32 %v4561, %v5027
      %v5146 = vadd.f32 %v4562, %v5032
      %v5147 = vadd.f32 %v4563, %v5035
      %v5148 = vadd.f32 %v4564, %v5040
      %v5149 = vadd.f32 %v4565, %v5043
      %v5150 = vadd.f32 %v4566, %v5048
      %v5151 = vadd.f32 %v4567, %v5051
      %v5152 = vadd.f32 %v4568, %v5056
      %v5153 = vadd.f32 %v4569, %v5059
      %v5154 = vadd.f32 %v4570, %v5064
      %v5155 = vadd.f32 %v4571, %v5067
      %v5156 = vadd.f32 %v4572, %v5072
      %v5157 = vadd.f32 %v4573, %v5075
      %v5158 = vadd.f32 %v4574, %v5080
      %v5159 = vadd.f32 %v4575, %v5083
      %v5160 = vadd.f32 %v4576, %v5088
      %v5161 = vadd.f32 %v4577, %v5091
      %v5162 = vadd.f32 %v4578, %v5096
      %v5163 = vadd.f32 %v4579, %v5099
      %v5164 = vadd.f32 %v4580, %v5104
      %v5165 = vadd.f32 %v4581, %v5107
      %v5166 = vadd.f32 %v4582, %v5112
      %v5167 = vadd.f32 %v4583, %v5115
      %v5168 = vadd.f32 %v4584, %v5120
      %v5169 = vadd.f32 %v4585, %v5123
      %v5170 = vadd.f32 %v4586, %v5128
      %v5171 = vadd.f32 %v4587, %v5131
      %v5172 = vld [vmem:[%s165 + $0x1c] sm:$0xf]
      %v5173 = vld [vmem:[%s165 + $0x20] sm:$0xf]
      %v5174 = vld [vmem:[%s165 + $0x24] sm:$0xf]
      %v5175 = vld [vmem:[%s165 + $0x28] sm:$0xf]
      %v5176 = vld [vmem:[%s165 + $0x2c] sm:$0xf]
      %v5177 = vld [vmem:[%s165 + $0x30] sm:$0xf]
      %v5178 = vld [vmem:[%s165 + $0x34] sm:$0xf]
      %v5179 = vld [vmem:[%s165 + $0x38] sm:$0xf]
      %v5180 = vld [vmem:[%s165 + $0x3c] sm:$0xf]
      %v5181 = vld [vmem:[%s165 + $0x40] sm:$0xf]
      %v5182 = vld [vmem:[%s165 + $0x44] sm:$0xf]
      %v5183 = vld [vmem:[%s165 + $0x48] sm:$0xf]
      %v5184 = vld [vmem:[%s165 + $0x4c] sm:$0xf]
      %v5185 = vld [vmem:[%s165 + $0x50] sm:$0xf]
      %v5186 = vld [vmem:[%s165 + $0x54] sm:$0xf]
      %v5187 = vld [vmem:[%s165 + $0x58] sm:$0xf]
      %v5188 = vld [vmem:[%s165 + $0x5c] sm:$0xf]
      %v5189 = vld [vmem:[%s165 + $0x60] sm:$0xf]
      %v5190 = vld [vmem:[%s165 + $0x64] sm:$0xf]
      %v5191 = vld [vmem:[%s165 + $0x68] sm:$0xf]
      %v5192 = vld [vmem:[%s165 + $0x6c] sm:$0xf]
      %v5193 = vld [vmem:[%s165 + $0x70] sm:$0xf]
      %v5194 = vld [vmem:[%s165 + $0x74] sm:$0xf]
      %v5195 = vld [vmem:[%s165 + $0x78] sm:$0xf]
      %v5196 = vld [vmem:[%s165 + $0x7c] sm:$0xf]
      %v5197 = vld [vmem:[%s165 + $0x80] sm:$0xf]
      %v5198 = vld [vmem:[%s165 + $0x84] sm:$0xf]
      %v5199 = vld [vmem:[%s165 + $0x88] sm:$0xf]
      %v5200 = vld [vmem:[%s165 + $0x8c] sm:$0xf]
      %v5201 = vld [vmem:[%s165 + $0x90] sm:$0xf]
      %v5202 = vld [vmem:[%s165 + $0x94] sm:$0xf]
      %v5203 = vld [vmem:[%s165 + $0x98] sm:$0xf]
      %v5204 = vld [vmem:[%s165 + $0x9c] sm:$0xf]
      %v5205 = vld [vmem:[%s165 + $0xa0] sm:$0xf]
      %v5206 = vld [vmem:[%s165 + $0xa4] sm:$0xf]
      %v5207 = vld [vmem:[%s165 + $0xa8] sm:$0xf]
      %v5208 = vld [vmem:[%s165 + $0xac] sm:$0xf]
      %v5209 = vld [vmem:[%s165 + $0xb0] sm:$0xf]
      %v5210 = vld [vmem:[%s165 + $0xb4] sm:$0x1]
      %s5211 = scalar_lea.vmem %s1, 96
      %v5212 = vld [vmem:[%s5211] sm:$0xf]
      %v5213 = vld [vmem:[%s5211 + $0x4] sm:$0x3]
      %v5253 = vunpack.c.l.b16 %v5172
      %v5254 = vunpack.c.l.b16 %v5173
      %v5255 = vunpack.c.l.b16 %v5174
      %v5256 = vunpack.c.l.b16 %v5175
      %v5257 = vunpack.c.l.b16 %v5176
      %v5258 = vunpack.c.l.b16 %v5177
      %v5259 = vunpack.c.l.b16 %v5178
      %v5260 = vunpack.c.l.b16 %v5179
      %v5261 = vunpack.c.l.b16 %v5180
      %v5262 = vunpack.c.l.b16 %v5181
      %v5263 = vunpack.c.l.b16 %v5182
      %v5264 = vunpack.c.l.b16 %v5183
      %v5265 = vunpack.c.l.b16 %v5184
      %v5266 = vunpack.c.l.b16 %v5185
      %v5267 = vunpack.c.l.b16 %v5186
      %v5268 = vunpack.c.l.b16 %v5187
      %v5269 = vunpack.c.l.b16 %v5188
      %v5270 = vunpack.c.l.b16 %v5189
      %v5271 = vunpack.c.l.b16 %v5190
      %v5272 = vunpack.c.l.b16 %v5191
      %v5273 = vunpack.c.l.b16 %v5192
      %v5274 = vunpack.c.l.b16 %v5193
      %v5275 = vunpack.c.l.b16 %v5194
      %v5276 = vunpack.c.l.b16 %v5195
      %v5277 = vunpack.c.l.b16 %v5196
      %v5278 = vunpack.c.l.b16 %v5197
      %v5279 = vunpack.c.l.b16 %v5198
      %v5280 = vunpack.c.l.b16 %v5199
      %v5281 = vunpack.c.l.b16 %v5200
      %v5282 = vunpack.c.l.b16 %v5201
      %v5283 = vunpack.c.l.b16 %v5202
      %v5284 = vunpack.c.l.b16 %v5203
      %v5285 = vunpack.c.l.b16 %v5204
      %v5286 = vunpack.c.l.b16 %v5205
      %v5287 = vunpack.c.l.b16 %v5206
      %v5288 = vunpack.c.l.b16 %v5207
      %v5289 = vunpack.c.l.b16 %v5208
      %v5290 = vunpack.c.l.b16 %v5209
      %v5291 = vunpack.c.l.b16 %v5210
      %v5292 = vpack.c.b16 %v5254, %v5253
      %v5293 = vpack.c.b16 %v5256, %v5255
      %v5294 = vpack.c.b16 %v5258, %v5257
      %v5295 = vpack.c.b16 %v5260, %v5259
      %v5296 = vpack.c.b16 %v5262, %v5261
      %v5297 = vpack.c.b16 %v5264, %v5263
      %v5298 = vpack.c.b16 %v5266, %v5265
      %v5299 = vpack.c.b16 %v5268, %v5267
      %v5300 = vpack.c.b16 %v5270, %v5269
      %v5301 = vpack.c.b16 %v5272, %v5271
      %v5302 = vpack.c.b16 %v5274, %v5273
      %v5303 = vpack.c.b16 %v5276, %v5275
      %v5304 = vpack.c.b16 %v5278, %v5277
      %v5305 = vpack.c.b16 %v5280, %v5279
      %v5306 = vpack.c.b16 %v5282, %v5281
      %v5307 = vpack.c.b16 %v5284, %v5283
      %v5308 = vpack.c.b16 %v5286, %v5285
      %v5309 = vpack.c.b16 %v5288, %v5287
      %v5310 = vpack.c.b16 %v5290, %v5289
      %v5311 = vpack.c.b16 %v5291, %v5291
      %v5313 = vshrl.u32 %v5292, 16
      %v5315 = vshll.u32 %v5292, 16
      %v5317 = vrot.slane %v5315, 1
      %v5318 = vor.u32 %v5313, %v5317
      %v5320 = vshll.u32 %v5293, 16
      %v5322 = vrot.slane %v5320, 1
      %v5323 = vsel %vm314, %v5318, %v5322
      %v5324 = vshrl.u32 %v5293, 16
      %v5326 = vor.u32 %v5324, %v5322
      %v5328 = vshll.u32 %v5294, 16
      %v5330 = vrot.slane %v5328, 1
      %v5331 = vsel %vm314, %v5326, %v5330
      %v5332 = vshrl.u32 %v5294, 16
      %v5334 = vor.u32 %v5332, %v5330
      %v5336 = vshll.u32 %v5295, 16
      %v5338 = vrot.slane %v5336, 1
      %v5339 = vsel %vm314, %v5334, %v5338
      %v5340 = vshrl.u32 %v5295, 16
      %v5342 = vor.u32 %v5340, %v5338
      %v5344 = vshll.u32 %v5296, 16
      %v5346 = vrot.slane %v5344, 1
      %v5347 = vsel %vm314, %v5342, %v5346
      %v5348 = vshrl.u32 %v5296, 16
      %v5350 = vor.u32 %v5348, %v5346
      %v5352 = vshll.u32 %v5297, 16
      %v5354 = vrot.slane %v5352, 1
      %v5355 = vsel %vm314, %v5350, %v5354
      %v5356 = vshrl.u32 %v5297, 16
      %v5358 = vor.u32 %v5356, %v5354
      %v5360 = vshll.u32 %v5298, 16
      %v5362 = vrot.slane %v5360, 1
      %v5363 = vsel %vm314, %v5358, %v5362
      %v5364 = vshrl.u32 %v5298, 16
      %v5366 = vor.u32 %v5364, %v5362
      %v5368 = vshll.u32 %v5299, 16
      %v5370 = vrot.slane %v5368, 1
      %v5371 = vsel %vm314, %v5366, %v5370
      %v5372 = vshrl.u32 %v5299, 16
      %v5374 = vor.u32 %v5372, %v5370
      %v5376 = vshll.u32 %v5300, 16
      %v5378 = vrot.slane %v5376, 1
      %v5379 = vsel %vm314, %v5374, %v5378
      %v5380 = vshrl.u32 %v5300, 16
      %v5382 = vor.u32 %v5380, %v5378
      %v5384 = vshll.u32 %v5301, 16
      %v5386 = vrot.slane %v5384, 1
      %v5387 = vsel %vm314, %v5382, %v5386
      %v5388 = vshrl.u32 %v5301, 16
      %v5390 = vor.u32 %v5388, %v5386
      %v5392 = vshll.u32 %v5302, 16
      %v5394 = vrot.slane %v5392, 1
      %v5395 = vsel %vm314, %v5390, %v5394
      %v5396 = vshrl.u32 %v5302, 16
      %v5398 = vor.u32 %v5396, %v5394
      %v5400 = vshll.u32 %v5303, 16
      %v5402 = vrot.slane %v5400, 1
      %v5403 = vsel %vm314, %v5398, %v5402
      %v5404 = vshrl.u32 %v5303, 16
      %v5406 = vor.u32 %v5404, %v5402
      %v5408 = vshll.u32 %v5304, 16
      %v5410 = vrot.slane %v5408, 1
      %v5411 = vsel %vm314, %v5406, %v5410
      %v5412 = vshrl.u32 %v5304, 16
      %v5414 = vor.u32 %v5412, %v5410
      %v5416 = vshll.u32 %v5305, 16
      %v5418 = vrot.slane %v5416, 1
      %v5419 = vsel %vm314, %v5414, %v5418
      %v5420 = vshrl.u32 %v5305, 16
      %v5422 = vor.u32 %v5420, %v5418
      %v5424 = vshll.u32 %v5306, 16
      %v5426 = vrot.slane %v5424, 1
      %v5427 = vsel %vm314, %v5422, %v5426
      %v5428 = vshrl.u32 %v5306, 16
      %v5430 = vor.u32 %v5428, %v5426
      %v5432 = vshll.u32 %v5307, 16
      %v5434 = vrot.slane %v5432, 1
      %v5435 = vsel %vm314, %v5430, %v5434
      %v5436 = vshrl.u32 %v5307, 16
      %v5438 = vor.u32 %v5436, %v5434
      %v5440 = vshll.u32 %v5308, 16
      %v5442 = vrot.slane %v5440, 1
      %v5443 = vsel %vm314, %v5438, %v5442
      %v5444 = vshrl.u32 %v5308, 16
      %v5446 = vor.u32 %v5444, %v5442
      %v5448 = vshll.u32 %v5309, 16
      %v5450 = vrot.slane %v5448, 1
      %v5451 = vsel %vm314, %v5446, %v5450
      %v5452 = vshrl.u32 %v5309, 16
      %v5454 = vor.u32 %v5452, %v5450
      %v5456 = vshll.u32 %v5310, 16
      %v5458 = vrot.slane %v5456, 1
      %v5459 = vsel %vm314, %v5454, %v5458
      %v5460 = vshrl.u32 %v5310, 16
      %v5462 = vor.u32 %v5460, %v5458
      %v5464 = vshll.u32 %v5311, 16
      %v5466 = vrot.slane %v5464, 1
      %v5467 = vsel %vm314, %v5462, %v5466
      %v5470 = vunpack.c.l.b16 %v5212
      %v5471 = vunpack.c.l.b16 %v5213
      %v5472 = vpack.c.b16 %v5471, %v5470
      %v5474 = vsel %vm476, %v5323, 0
      %v5477 = vsel %vm476, %v5331, 0
      %v5480 = vsel %vm476, %v5339, 0
      %v5483 = vsel %vm476, %v5347, 0
      %v5486 = vsel %vm476, %v5355, 0
      %v5489 = vsel %vm476, %v5363, 0
      %v5492 = vsel %vm476, %v5371, 0
      %v5495 = vsel %vm476, %v5379, 0
      %v5498 = vsel %vm476, %v5387, 0
      %v5501 = vsel %vm476, %v5395, 0
      %v5504 = vsel %vm476, %v5403, 0
      %v5507 = vsel %vm476, %v5411, 0
      %v5510 = vsel %vm476, %v5419, 0
      %v5513 = vsel %vm476, %v5427, 0
      %v5516 = vsel %vm476, %v5435, 0
      %v5519 = vsel %vm476, %v5443, 0
      %v5522 = vsel %vm476, %v5451, 0
      %v5525 = vsel %vm476, %v5459, 0
      %v5528 = vsel %vm476, %v5467, 0
      %v5531 = vsel %vm534, %v5472, 0
      %5533 = vmatprep.subr.bf16.mxu0 0
      %5534 = vmatpush1.bf16.msra.mxu0 %v5531
      %5535 = vmatprep.subr.bf16.mxu0 0
      %5536 = vmatpush1.bf16.msra.mxu0 0
      %5537 = vmatprep.subr.bf16.mxu0 0
      %5538 = vmatpush1.bf16.msra.mxu0 0
      %5539 = vmatprep.subr.bf16.mxu0 0
      %5540 = vmatpush1.bf16.msra.mxu0 0
      %5541 = vmatprep.subr.bf16.mxu0 0
      %5542 = vmatpush1.bf16.msra.mxu0 0
      %5543 = vmatprep.subr.bf16.mxu0 0
      %5544 = vmatpush1.bf16.msra.mxu0 0
      %5545 = vmatprep.subr.bf16.mxu0 0
      %5546 = vmatpush1.bf16.msra.mxu0 0
      %5547 = vmatprep.subr.bf16.mxu0 0
      %5548 = vmatpush1.bf16.msra.mxu0 0
      %5549 = vmatprep.subr.bf16.mxu0 0
      %5550 = vmatpush1.bf16.msra.mxu0 0
      %5551 = vmatprep.subr.bf16.mxu0 0
      %5552 = vmatpush1.bf16.msra.mxu0 0
      %5553 = vmatprep.subr.bf16.mxu0 0
      %5554 = vmatpush1.bf16.msra.mxu0 0
      %5555 = vmatprep.subr.bf16.mxu0 0
      %5556 = vmatpush1.bf16.msra.mxu0 0
      %5557 = vmatprep.subr.bf16.mxu0 0
      %5558 = vmatpush1.bf16.msra.mxu0 0
      %5559 = vmatprep.subr.bf16.mxu0 0
      %5560 = vmatpush1.bf16.msra.mxu0 0
      %5561 = vmatprep.subr.bf16.mxu0 0
      %5562 = vmatpush1.bf16.msra.mxu0 0
      %5563 = vmatprep.subr.bf16.mxu0 0
      %5564 = vmatpush1.bf16.msra.mxu0 0
      %5565 = vmatprep.mubr.bf16.mxu0 0
      %5566 = vmatmul.mubr.bf16.gmra.mrb[0].mxu0 %v5474
      %v5567 = vpop.f32.mrb[0].mxu0
      %v5568 = vadd.f32 0.0, %v5567
      %v5569 = vpop.f32.mrb[0].mxu0
      %v5570 = vpop.f32.mrb[0].mxu0
      %v5571 = vadd.f32 0.0, %v5570
      %v5572 = vpop.f32.mrb[0].mxu0
      %5573 = vmatprep.mubr.bf16.mxu0 0
      %5574 = vmatmul.mubr.bf16.gmra.mrb[0].mxu0 %v5477
      %v5575 = vpop.f32.mrb[0].mxu0
      %v5576 = vadd.f32 0.0, %v5575
      %v5577 = vpop.f32.mrb[0].mxu0
      %v5578 = vpop.f32.mrb[0].mxu0
      %v5579 = vadd.f32 0.0, %v5578
      %v5580 = vpop.f32.mrb[0].mxu0
      %5581 = vmatprep.mubr.bf16.mxu0 0
      %5582 = vmatmul.mubr.bf16.gmra.mrb[0].mxu0 %v5480
      %v5583 = vpop.f32.mrb[0].mxu0
      %v5584 = vadd.f32 0.0, %v5583
      %v5585 = vpop.f32.mrb[0].mxu0
      %v5586 = vpop.f32.mrb[0].mxu0
      %v5587 = vadd.f32 0.0, %v5586
      %v5588 = vpop.f32.mrb[0].mxu0
      %5589 = vmatprep.mubr.bf16.mxu0 0
      %5590 = vmatmul.mubr.bf16.gmra.mrb[0].mxu0 %v5483
      %v5591 = vpop.f32.mrb[0].mxu0
      %v5592 = vadd.f32 0.0, %v5591
      %v5593 = vpop.f32.mrb[0].mxu0
      %v5594 = vpop.f32.mrb[0].mxu0
      %v5595 = vadd.f32 0.0, %v5594
      %v5596 = vpop.f32.mrb[0].mxu0
      %5597 = vmatprep.mubr.bf16.mxu0 0
      %5598 = vmatmul.mubr.bf16.gmra.mrb[0].mxu0 %v5486
      %v5599 = vpop.f32.mrb[0].mxu0
      %v5600 = vadd.f32 0.0, %v5599
      %v5601 = vpop.f32.mrb[0].mxu0
      %v5602 = vpop.f32.mrb[0].mxu0
      %v5603 = vadd.f32 0.0, %v5602
      %v5604 = vpop.f32.mrb[0].mxu0
      %5605 = vmatprep.mubr.bf16.mxu0 0
      %5606 = vmatmul.mubr.bf16.gmra.mrb[0].mxu0 %v5489
      %v5607 = vpop.f32.mrb[0].mxu0
      %v5608 = vadd.f32 0.0, %v5607
      %v5609 = vpop.f32.mrb[0].mxu0
      %v5610 = vpop.f32.mrb[0].mxu0
      %v5611 = vadd.f32 0.0, %v5610
      %v5612 = vpop.f32.mrb[0].mxu0
      %5613 = vmatprep.mubr.bf16.mxu0 0
      %5614 = vmatmul.mubr.bf16.gmra.mrb[0].mxu0 %v5492
      %v5615 = vpop.f32.mrb[0].mxu0
      %v5616 = vadd.f32 0.0, %v5615
      %v5617 = vpop.f32.mrb[0].mxu0
      %v5618 = vpop.f32.mrb[0].mxu0
      %v5619 = vadd.f32 0.0, %v5618
      %v5620 = vpop.f32.mrb[0].mxu0
      %5621 = vmatprep.mubr.bf16.mxu0 0
      %5622 = vmatmul.mubr.bf16.gmra.mrb[0].mxu0 %v5495
      %v5623 = vpop.f32.mrb[0].mxu0
      %v5624 = vadd.f32 0.0, %v5623
      %v5625 = vpop.f32.mrb[0].mxu0
      %v5626 = vpop.f32.mrb[0].mxu0
      %v5627 = vadd.f32 0.0, %v5626
      %v5628 = vpop.f32.mrb[0].mxu0
      %5629 = vmatprep.mubr.bf16.mxu0 0
      %5630 = vmatmul.mubr.bf16.gmra.mrb[0].mxu0 %v5498
      %v5631 = vpop.f32.mrb[0].mxu0
      %v5632 = vadd.f32 0.0, %v5631
      %v5633 = vpop.f32.mrb[0].mxu0
      %v5634 = vpop.f32.mrb[0].mxu0
      %v5635 = vadd.f32 0.0, %v5634
      %v5636 = vpop.f32.mrb[0].mxu0
      %5637 = vmatprep.mubr.bf16.mxu0 0
      %5638 = vmatmul.mubr.bf16.gmra.mrb[0].mxu0 %v5501
      %v5639 = vpop.f32.mrb[0].mxu0
      %v5640 = vadd.f32 0.0, %v5639
      %v5641 = vpop.f32.mrb[0].mxu0
      %v5642 = vpop.f32.mrb[0].mxu0
      %v5643 = vadd.f32 0.0, %v5642
      %v5644 = vpop.f32.mrb[0].mxu0
      %5645 = vmatprep.mubr.bf16.mxu0 0
      %5646 = vmatmul.mubr.bf16.gmra.mrb[0].mxu0 %v5504
      %v5647 = vpop.f32.mrb[0].mxu0
      %v5648 = vadd.f32 0.0, %v5647
      %v5649 = vpop.f32.mrb[0].mxu0
      %v5650 = vpop.f32.mrb[0].mxu0
      %v5651 = vadd.f32 0.0, %v5650
      %v5652 = vpop.f32.mrb[0].mxu0
      %5653 = vmatprep.mubr.bf16.mxu0 0
      %5654 = vmatmul.mubr.bf16.gmra.mrb[0].mxu0 %v5507
      %v5655 = vpop.f32.mrb[0].mxu0
      %v5656 = vadd.f32 0.0, %v5655
      %v5657 = vpop.f32.mrb[0].mxu0
      %v5658 = vpop.f32.mrb[0].mxu0
      %v5659 = vadd.f32 0.0, %v5658
      %v5660 = vpop.f32.mrb[0].mxu0
      %5661 = vmatprep.mubr.bf16.mxu0 0
      %5662 = vmatmul.mubr.bf16.gmra.mrb[0].mxu0 %v5510
      %v5663 = vpop.f32.mrb[0].mxu0
      %v5664 = vadd.f32 0.0, %v5663
      %v5665 = vpop.f32.mrb[0].mxu0
      %v5666 = vpop.f32.mrb[0].mxu0
      %v5667 = vadd.f32 0.0, %v5666
      %v5668 = vpop.f32.mrb[0].mxu0
      %5669 = vmatprep.mubr.bf16.mxu0 0
      %5670 = vmatmul.mubr.bf16.gmra.mrb[0].mxu0 %v5513
      %v5671 = vpop.f32.mrb[0].mxu0
      %v5672 = vadd.f32 0.0, %v5671
      %v5673 = vpop.f32.mrb[0].mxu0
      %v5674 = vpop.f32.mrb[0].mxu0
      %v5675 = vadd.f32 0.0, %v5674
      %v5676 = vpop.f32.mrb[0].mxu0
      %5677 = vmatprep.mubr.bf16.mxu0 0
      %5678 = vmatmul.mubr.bf16.gmra.mrb[0].mxu0 %v5516
      %v5679 = vpop.f32.mrb[0].mxu0
      %v5680 = vadd.f32 0.0, %v5679
      %v5681 = vpop.f32.mrb[0].mxu0
      %v5682 = vpop.f32.mrb[0].mxu0
      %v5683 = vadd.f32 0.0, %v5682
      %v5684 = vpop.f32.mrb[0].mxu0
      %5685 = vmatprep.mubr.bf16.mxu0 0
      %5686 = vmatmul.mubr.bf16.gmra.mrb[0].mxu0 %v5519
      %v5687 = vpop.f32.mrb[0].mxu0
      %v5688 = vadd.f32 0.0, %v5687
      %v5689 = vpop.f32.mrb[0].mxu0
      %v5690 = vpop.f32.mrb[0].mxu0
      %v5691 = vadd.f32 0.0, %v5690
      %v5692 = vpop.f32.mrb[0].mxu0
      %5693 = vmatprep.mubr.bf16.mxu0 0
      %5694 = vmatmul.mubr.bf16.gmra.mrb[0].mxu0 %v5522
      %v5695 = vpop.f32.mrb[0].mxu0
      %v5696 = vadd.f32 0.0, %v5695
      %v5697 = vpop.f32.mrb[0].mxu0
      %v5698 = vpop.f32.mrb[0].mxu0
      %v5699 = vadd.f32 0.0, %v5698
      %v5700 = vpop.f32.mrb[0].mxu0
      %5701 = vmatprep.mubr.bf16.mxu0 0
      %5702 = vmatmul.mubr.bf16.gmra.mrb[0].mxu0 %v5525
      %v5703 = vpop.f32.mrb[0].mxu0
      %v5704 = vadd.f32 0.0, %v5703
      %v5705 = vpop.f32.mrb[0].mxu0
      %v5706 = vpop.f32.mrb[0].mxu0
      %v5707 = vadd.f32 0.0, %v5706
      %v5708 = vpop.f32.mrb[0].mxu0
      %5709 = vmatprep.mubr.bf16.mxu0 0
      %5710 = vmatmul.mubr.bf16.gmra.mrb[0].mxu0 %v5528
      %v5711 = vpop.f32.mrb[0].mxu0
      %v5712 = vadd.f32 0.0, %v5711
      %v5713 = vpop.f32.mrb[0].mxu0
      %v5714 = vpop.f32.mrb[0].mxu0
      %v5715 = vadd.f32 0.0, %v5714
      %v5716 = vpop.f32.mrb[0].mxu0
      %5717 = vdwg.mxu0
      %v5718 = vadd.f32 %v5134, %v5568
      %v5719 = vadd.f32 %v5135, %v5571
      %v5720 = vadd.f32 %v5136, %v5576
      %v5721 = vadd.f32 %v5137, %v5579
      %v5722 = vadd.f32 %v5138, %v5584
      %v5723 = vadd.f32 %v5139, %v5587
      %v5724 = vadd.f32 %v5140, %v5592
      %v5725 = vadd.f32 %v5141, %v5595
      %v5726 = vadd.f32 %v5142, %v5600
      %v5727 = vadd.f32 %v5143, %v5603
      %v5728 = vadd.f32 %v5144, %v5608
      %v5729 = vadd.f32 %v5145, %v5611
      %v5730 = vadd.f32 %v5146, %v5616
      %v5731 = vadd.f32 %v5147, %v5619
      %v5732 = vadd.f32 %v5148, %v5624
      %v5733 = vadd.f32 %v5149, %v5627
      %v5734 = vadd.f32 %v5150, %v5632
      %v5735 = vadd.f32 %v5151, %v5635
      %v5736 = vadd.f32 %v5152, %v5640
      %v5737 = vadd.f32 %v5153, %v5643
      %v5738 = vadd.f32 %v5154, %v5648
      %v5739 = vadd.f32 %v5155, %v5651
      %v5740 = vadd.f32 %v5156, %v5656
      %v5741 = vadd.f32 %v5157, %v5659
      %v5742 = vadd.f32 %v5158, %v5664
      %v5743 = vadd.f32 %v5159, %v5667
      %v5744 = vadd.f32 %v5160, %v5672
      %v5745 = vadd.f32 %v5161, %v5675
      %v5746 = vadd.f32 %v5162, %v5680
      %v5747 = vadd.f32 %v5163, %v5683
      %v5748 = vadd.f32 %v5164, %v5688
      %v5749 = vadd.f32 %v5165, %v5691
      %v5750 = vadd.f32 %v5166, %v5696
      %v5751 = vadd.f32 %v5167, %v5699
      %v5752 = vadd.f32 %v5168, %v5704
      %v5753 = vadd.f32 %v5169, %v5707
      %v5754 = vadd.f32 %v5170, %v5712
      %v5755 = vadd.f32 %v5171, %v5715
      %v5756 = vld [vmem:[%s165 + $0x1c] sm:$0xe]
      %s5757 = scalar_lea.vmem %s1, 104
      %v5758 = vld [vmem:[%s5757] sm:$0xf]
      %v5759 = vld [vmem:[%s5757 + $0x4] sm:$0x3]
      %v5761 = vunpack.c.l.b16 %v5756
      %v5762 = vpack.c.b16 %v5254, %v5761
      %v5763 = vrot.slane %v5762, 1
      %v5764 = vrot.slane %v5293, 1
      %v5765 = vsel %vm961, %v5763, %v5764
      %v5766 = vrot.slane %v5294, 1
      %v5767 = vsel %vm961, %v5764, %v5766
      %v5768 = vrot.slane %v5295, 1
      %v5769 = vsel %vm961, %v5766, %v5768
      %v5770 = vrot.slane %v5296, 1
      %v5771 = vsel %vm961, %v5768, %v5770
      %v5772 = vrot.slane %v5297, 1
      %v5773 = vsel %vm961, %v5770, %v5772
      %v5774 = vrot.slane %v5298, 1
      %v5775 = vsel %vm961, %v5772, %v5774
      %v5776 = vrot.slane %v5299, 1
      %v5777 = vsel %vm961, %v5774, %v5776
      %v5778 = vrot.slane %v5300, 1
      %v5779 = vsel %vm961, %v5776, %v5778
      %v5780 = vrot.slane %v5301, 1
      %v5781 = vsel %vm961, %v5778, %v5780
      %v5782 = vrot.slane %v5302, 1
      %v5783 = vsel %vm961, %v5780, %v5782
      %v5784 = vrot.slane %v5303, 1
      %v5785 = vsel %vm961, %v5782, %v5784
      %v5786 = vrot.slane %v5304, 1
      %v5787 = vsel %vm961, %v5784, %v5786
      %v5788 = vrot.slane %v5305, 1
      %v5789 = vsel %vm961, %v5786, %v5788
      %v5790 = vrot.slane %v5306, 1
      %v5791 = vsel %vm961, %v5788, %v5790
      %v5792 = vrot.slane %v5307, 1
      %v5793 = vsel %vm961, %v5790, %v5792
      %v5794 = vrot.slane %v5308, 1
      %v5795 = vsel %vm961, %v5792, %v5794
      %v5796 = vrot.slane %v5309, 1
      %v5797 = vsel %vm961, %v5794, %v5796
      %v5798 = vrot.slane %v5310, 1
      %v5799 = vsel %vm961, %v5796, %v5798
      %v5800 = vrot.slane %v5311, 1
      %v5801 = vsel %vm961, %v5798, %v5800
      %v5804 = vunpack.c.l.b16 %v5758
      %v5805 = vunpack.c.l.b16 %v5759
      %v5806 = vpack.c.b16 %v5805, %v5804
      %v5808 = vsel %vm476, %v5765, 0
      %v5811 = vsel %vm476, %v5767, 0
      %v5814 = vsel %vm476, %v5769, 0
      %v5817 = vsel %vm476, %v5771, 0
      %v5820 = vsel %vm476, %v5773, 0
      %v5823 = vsel %vm476, %v5775, 0
      %v5826 = vsel %vm476, %v5777, 0
      %v5829 = vsel %vm476, %v5779, 0
      %v5832 = vsel %vm476, %v5781, 0
      %v5835 = vsel %vm476, %v5783, 0
      %v5838 = vsel %vm476, %v5785, 0
      %v5841 = vsel %vm476, %v5787, 0
      %v5844 = vsel %vm476, %v5789, 0
      %v5847 = vsel %vm476, %v5791, 0
      %v5850 = vsel %vm476, %v5793, 0
      %v5853 = vsel %vm476, %v5795, 0
      %v5856 = vsel %vm476, %v5797, 0
      %v5859 = vsel %vm476, %v5799, 0
      %v5862 = vsel %vm476, %v5801, 0
      %v5865 = vsel %vm534, %v5806, 0
      %5867 = vmatprep.subr.bf16.mxu0 0
      %5868 = vmatpush1.bf16.msra.mxu0 %v5865
      %5869 = vmatprep.subr.bf16.mxu0 0
      %5870 = vmatpush1.bf16.msra.mxu0 0
      %5871 = vmatprep.subr.bf16.mxu0 0
      %5872 = vmatpush1.bf16.msra.mxu0 0
      %5873 = vmatprep.subr.bf16.mxu0 0
      %5874 = vmatpush1.bf16.msra.mxu0 0
      %5875 = vmatprep.subr.bf16.mxu0 0
      %5876 = vmatpush1.bf16.msra.mxu0 0
      %5877 = vmatprep.subr.bf16.mxu0 0
      %5878 = vmatpush1.bf16.msra.mxu0 0
      %5879 = vmatprep.subr.bf16.mxu0 0
      %5880 = vmatpush1.bf16.msra.mxu0 0
      %5881 = vmatprep.subr.bf16.mxu0 0
      %5882 = vmatpush1.bf16.msra.mxu0 0
      %5883 = vmatprep.subr.bf16.mxu0 0
      %5884 = vmatpush1.bf16.msra.mxu0 0
      %5885 = vmatprep.subr.bf16.mxu0 0
      %5886 = vmatpush1.bf16.msra.mxu0 0
      %5887 = vmatprep.subr.bf16.mxu0 0
      %5888 = vmatpush1.bf16.msra.mxu0 0
      %5889 = vmatprep.subr.bf16.mxu0 0
      %5890 = vmatpush1.bf16.msra.mxu0 0
      %5891 = vmatprep.subr.bf16.mxu0 0
      %5892 = vmatpush1.bf16.msra.mxu0 0
      %5893 = vmatprep.subr.bf16.mxu0 0
      %5894 = vmatpush1.bf16.msra.mxu0 0
      %5895 = vmatprep.subr.bf16.mxu0 0
      %5896 = vmatpush1.bf16.msra.mxu0 0
      %5897 = vmatprep.subr.bf16.mxu0 0
      %5898 = vmatpush1.bf16.msra.mxu0 0
      %5899 = vmatprep.mubr.bf16.mxu0 0
      %5900 = vmatmul.mubr.bf16.gmra.mrb[0].mxu0 %v5808
      %v5901 = vpop.f32.mrb[0].mxu0
      %v5902 = vadd.f32 0.0, %v5901
      %v5903 = vpop.f32.mrb[0].mxu0
      %v5904 = vpop.f32.mrb[0].mxu0
      %v5905 = vadd.f32 0.0, %v5904
      %v5906 = vpop.f32.mrb[0].mxu0
      %5907 = vmatprep.mubr.bf16.mxu0 0
      %5908 = vmatmul.mubr.bf16.gmra.mrb[0].mxu0 %v5811
      %v5909 = vpop.f32.mrb[0].mxu0
      %v5910 = vadd.f32 0.0, %v5909
      %v5911 = vpop.f32.mrb[0].mxu0
      %v5912 = vpop.f32.mrb[0].mxu0
      %v5913 = vadd.f32 0.0, %v5912
      %v5914 = vpop.f32.mrb[0].mxu0
      %5915 = vmatprep.mubr.bf16.mxu0 0
      %5916 = vmatmul.mubr.bf16.gmra.mrb[0].mxu0 %v5814
      %v5917 = vpop.f32.mrb[0].mxu0
      %v5918 = vadd.f32 0.0, %v5917
      %v5919 = vpop.f32.mrb[0].mxu0
      %v5920 = vpop.f32.mrb[0].mxu0
      %v5921 = vadd.f32 0.0, %v5920
      %v5922 = vpop.f32.mrb[0].mxu0
      %5923 = vmatprep.mubr.bf16.mxu0 0
      %5924 = vmatmul.mubr.bf16.gmra.mrb[0].mxu0 %v5817
      %v5925 = vpop.f32.mrb[0].mxu0
      %v5926 = vadd.f32 0.0, %v5925
      %v5927 = vpop.f32.mrb[0].mxu0
      %v5928 = vpop.f32.mrb[0].mxu0
      %v5929 = vadd.f32 0.0, %v5928
      %v5930 = vpop.f32.mrb[0].mxu0
      %5931 = vmatprep.mubr.bf16.mxu0 0
      %5932 = vmatmul.mubr.bf16.gmra.mrb[0].mxu0 %v5820
      %v5933 = vpop.f32.mrb[0].mxu0
      %v5934 = vadd.f32 0.0, %v5933
      %v5935 = vpop.f32.mrb[0].mxu0
      %v5936 = vpop.f32.mrb[0].mxu0
      %v5937 = vadd.f32 0.0, %v5936
      %v5938 = vpop.f32.mrb[0].mxu0
      %5939 = vmatprep.mubr.bf16.mxu0 0
      %5940 = vmatmul.mubr.bf16.gmra.mrb[0].mxu0 %v5823
      %v5941 = vpop.f32.mrb[0].mxu0
      %v5942 = vadd.f32 0.0, %v5941
      %v5943 = vpop.f32.mrb[0].mxu0
      %v5944 = vpop.f32.mrb[0].mxu0
      %v5945 = vadd.f32 0.0, %v5944
      %v5946 = vpop.f32.mrb[0].mxu0
      %5947 = vmatprep.mubr.bf16.mxu0 0
      %5948 = vmatmul.mubr.bf16.gmra.mrb[0].mxu0 %v5826
      %v5949 = vpop.f32.mrb[0].mxu0
      %v5950 = vadd.f32 0.0, %v5949
      %v5951 = vpop.f32.mrb[0].mxu0
      %v5952 = vpop.f32.mrb[0].mxu0
      %v5953 = vadd.f32 0.0, %v5952
      %v5954 = vpop.f32.mrb[0].mxu0
      %5955 = vmatprep.mubr.bf16.mxu0 0
      %5956 = vmatmul.mubr.bf16.gmra.mrb[0].mxu0 %v5829
      %v5957 = vpop.f32.mrb[0].mxu0
      %v5958 = vadd.f32 0.0, %v5957
      %v5959 = vpop.f32.mrb[0].mxu0
      %v5960 = vpop.f32.mrb[0].mxu0
      %v5961 = vadd.f32 0.0, %v5960
      %v5962 = vpop.f32.mrb[0].mxu0
      %5963 = vmatprep.mubr.bf16.mxu0 0
      %5964 = vmatmul.mubr.bf16.gmra.mrb[0].mxu0 %v5832
      %v5965 = vpop.f32.mrb[0].mxu0
      %v5966 = vadd.f32 0.0, %v5965
      %v5967 = vpop.f32.mrb[0].mxu0
      %v5968 = vpop.f32.mrb[0].mxu0
      %v5969 = vadd.f32 0.0, %v5968
      %v5970 = vpop.f32.mrb[0].mxu0
      %5971 = vmatprep.mubr.bf16.mxu0 0
      %5972 = vmatmul.mubr.bf16.gmra.mrb[0].mxu0 %v5835
      %v5973 = vpop.f32.mrb[0].mxu0
      %v5974 = vadd.f32 0.0, %v5973
      %v5975 = vpop.f32.mrb[0].mxu0
      %v5976 = vpop.f32.mrb[0].mxu0
      %v5977 = vadd.f32 0.0, %v5976
      %v5978 = vpop.f32.mrb[0].mxu0
      %5979 = vmatprep.mubr.bf16.mxu0 0
      %5980 = vmatmul.mubr.bf16.gmra.mrb[0].mxu0 %v5838
      %v5981 = vpop.f32.mrb[0].mxu0
      %v5982 = vadd.f32 0.0, %v5981
      %v5983 = vpop.f32.mrb[0].mxu0
      %v5984 = vpop.f32.mrb[0].mxu0
      %v5985 = vadd.f32 0.0, %v5984
      %v5986 = vpop.f32.mrb[0].mxu0
      %5987 = vmatprep.mubr.bf16.mxu0 0
      %5988 = vmatmul.mubr.bf16.gmra.mrb[0].mxu0 %v5841
      %v5989 = vpop.f32.mrb[0].mxu0
      %v5990 = vadd.f32 0.0, %v5989
      %v5991 = vpop.f32.mrb[0].mxu0
      %v5992 = vpop.f32.mrb[0].mxu0
      %v5993 = vadd.f32 0.0, %v5992
      %v5994 = vpop.f32.mrb[0].mxu0
      %5995 = vmatprep.mubr.bf16.mxu0 0
      %5996 = vmatmul.mubr.bf16.gmra.mrb[0].mxu0 %v5844
      %v5997 = vpop.f32.mrb[0].mxu0
      %v5998 = vadd.f32 0.0, %v5997
      %v5999 = vpop.f32.mrb[0].mxu0
      %v6000 = vpop.f32.mrb[0].mxu0
      %v6001 = vadd.f32 0.0, %v6000
      %v6002 = vpop.f32.mrb[0].mxu0
      %6003 = vmatprep.mubr.bf16.mxu0 0
      %6004 = vmatmul.mubr.bf16.gmra.mrb[0].mxu0 %v5847
      %v6005 = vpop.f32.mrb[0].mxu0
      %v6006 = vadd.f32 0.0, %v6005
      %v6007 = vpop.f32.mrb[0].mxu0
      %v6008 = vpop.f32.mrb[0].mxu0
      %v6009 = vadd.f32 0.0, %v6008
      %v6010 = vpop.f32.mrb[0].mxu0
      %6011 = vmatprep.mubr.bf16.mxu0 0
      %6012 = vmatmul.mubr.bf16.gmra.mrb[0].mxu0 %v5850
      %v6013 = vpop.f32.mrb[0].mxu0
      %v6014 = vadd.f32 0.0, %v6013
      %v6015 = vpop.f32.mrb[0].mxu0
      %v6016 = vpop.f32.mrb[0].mxu0
      %v6017 = vadd.f32 0.0, %v6016
      %v6018 = vpop.f32.mrb[0].mxu0
      %6019 = vmatprep.mubr.bf16.mxu0 0
      %6020 = vmatmul.mubr.bf16.gmra.mrb[0].mxu0 %v5853
      %v6021 = vpop.f32.mrb[0].mxu0
      %v6022 = vadd.f32 0.0, %v6021
      %v6023 = vpop.f32.mrb[0].mxu0
      %v6024 = vpop.f32.mrb[0].mxu0
      %v6025 = vadd.f32 0.0, %v6024
      %v6026 = vpop.f32.mrb[0].mxu0
      %6027 = vmatprep.mubr.bf16.mxu0 0
      %6028 = vmatmul.mubr.bf16.gmra.mrb[0].mxu0 %v5856
      %v6029 = vpop.f32.mrb[0].mxu0
      %v6030 = vadd.f32 0.0, %v6029
      %v6031 = vpop.f32.mrb[0].mxu0
      %v6032 = vpop.f32.mrb[0].mxu0
      %v6033 = vadd.f32 0.0, %v6032
      %v6034 = vpop.f32.mrb[0].mxu0
      %6035 = vmatprep.mubr.bf16.mxu0 0
      %6036 = vmatmul.mubr.bf16.gmra.mrb[0].mxu0 %v5859
      %v6037 = vpop.f32.mrb[0].mxu0
      %v6038 = vadd.f32 0.0, %v6037
      %v6039 = vpop.f32.mrb[0].mxu0
      %v6040 = vpop.f32.mrb[0].mxu0
      %v6041 = vadd.f32 0.0, %v6040
      %v6042 = vpop.f32.mrb[0].mxu0
      %6043 = vmatprep.mubr.bf16.mxu0 0
      %6044 = vmatmul.mubr.bf16.gmra.mrb[0].mxu0 %v5862
      %v6045 = vpop.f32.mrb[0].mxu0
      %v6046 = vadd.f32 0.0, %v6045
      %v6047 = vpop.f32.mrb[0].mxu0
      %v6048 = vpop.f32.mrb[0].mxu0
      %v6049 = vadd.f32 0.0, %v6048
      %v6050 = vpop.f32.mrb[0].mxu0
      %6051 = vdwg.mxu0
      %v6052 = vadd.f32 %v5718, %v5902
      %v6053 = vadd.f32 %v5719, %v5905
      %v6054 = vadd.f32 %v5720, %v5910
      %v6055 = vadd.f32 %v5721, %v5913
      %v6056 = vadd.f32 %v5722, %v5918
      %v6057 = vadd.f32 %v5723, %v5921
      %v6058 = vadd.f32 %v5724, %v5926
      %v6059 = vadd.f32 %v5725, %v5929
      %v6060 = vadd.f32 %v5726, %v5934
      %v6061 = vadd.f32 %v5727, %v5937
      %v6062 = vadd.f32 %v5728, %v5942
      %v6063 = vadd.f32 %v5729, %v5945
      %v6064 = vadd.f32 %v5730, %v5950
      %v6065 = vadd.f32 %v5731, %v5953
      %v6066 = vadd.f32 %v5732, %v5958
      %v6067 = vadd.f32 %v5733, %v5961
      %v6068 = vadd.f32 %v5734, %v5966
      %v6069 = vadd.f32 %v5735, %v5969
      %v6070 = vadd.f32 %v5736, %v5974
      %v6071 = vadd.f32 %v5737, %v5977
      %v6072 = vadd.f32 %v5738, %v5982
      %v6073 = vadd.f32 %v5739, %v5985
      %v6074 = vadd.f32 %v5740, %v5990
      %v6075 = vadd.f32 %v5741, %v5993
      %v6076 = vadd.f32 %v5742, %v5998
      %v6077 = vadd.f32 %v5743, %v6001
      %v6078 = vadd.f32 %v5744, %v6006
      %v6079 = vadd.f32 %v5745, %v6009
      %v6080 = vadd.f32 %v5746, %v6014
      %v6081 = vadd.f32 %v5747, %v6017
      %v6082 = vadd.f32 %v5748, %v6022
      %v6083 = vadd.f32 %v5749, %v6025
      %v6084 = vadd.f32 %v5750, %v6030
      %v6085 = vadd.f32 %v5751, %v6033
      %v6086 = vadd.f32 %v5752, %v6038
      %v6087 = vadd.f32 %v5753, %v6041
      %v6088 = vadd.f32 %v5754, %v6046
      %v6089 = vadd.f32 %v5755, %v6049
      %v6090 = vld [vmem:[%s165 + $0xb4] sm:$0x3]
      %s6091 = scalar_lea.vmem %s1, 112
      %v6092 = vld [vmem:[%s6091] sm:$0xf]
      %v6093 = vld [vmem:[%s6091 + $0x4] sm:$0x3]
      %v6095 = vunpack.c.l.b16 %v6090
      %v6096 = vpack.c.b16 %v6095, %v6095
      %v6098 = vshrl.u32 %v5762, 16
      %v6100 = vrot.slane %v6098, 1
      %v6101 = vshll.u32 %v5762, 16
      %v6103 = vrot.slane %v6101, 2
      %v6104 = vor.u32 %v6100, %v6103
      %v6105 = vrot.slane %v5324, 1
      %v6106 = vrot.slane %v5320, 2
      %v6107 = vor.u32 %v6105, %v6106
      %v6108 = vsel %vm1296, %v6104, %v6107
      %v6109 = vrot.slane %v5332, 1
      %v6110 = vrot.slane %v5328, 2
      %v6111 = vor.u32 %v6109, %v6110
      %v6112 = vsel %vm1296, %v6107, %v6111
      %v6113 = vrot.slane %v5340, 1
      %v6114 = vrot.slane %v5336, 2
      %v6115 = vor.u32 %v6113, %v6114
      %v6116 = vsel %vm1296, %v6111, %v6115
      %v6117 = vrot.slane %v5348, 1
      %v6118 = vrot.slane %v5344, 2
      %v6119 = vor.u32 %v6117, %v6118
      %v6120 = vsel %vm1296, %v6115, %v6119
      %v6121 = vrot.slane %v5356, 1
      %v6122 = vrot.slane %v5352, 2
      %v6123 = vor.u32 %v6121, %v6122
      %v6124 = vsel %vm1296, %v6119, %v6123
      %v6125 = vrot.slane %v5364, 1
      %v6126 = vrot.slane %v5360, 2
      %v6127 = vor.u32 %v6125, %v6126
      %v6128 = vsel %vm1296, %v6123, %v6127
      %v6129 = vrot.slane %v5372, 1
      %v6130 = vrot.slane %v5368, 2
      %v6131 = vor.u32 %v6129, %v6130
      %v6132 = vsel %vm1296, %v6127, %v6131
      %v6133 = vrot.slane %v5380, 1
      %v6134 = vrot.slane %v5376, 2
      %v6135 = vor.u32 %v6133, %v6134
      %v6136 = vsel %vm1296, %v6131, %v6135
      %v6137 = vrot.slane %v5388, 1
      %v6138 = vrot.slane %v5384, 2
      %v6139 = vor.u32 %v6137, %v6138
      %v6140 = vsel %vm1296, %v6135, %v6139
      %v6141 = vrot.slane %v5396, 1
      %v6142 = vrot.slane %v5392, 2
      %v6143 = vor.u32 %v6141, %v6142
      %v6144 = vsel %vm1296, %v6139, %v6143
      %v6145 = vrot.slane %v5404, 1
      %v6146 = vrot.slane %v5400, 2
      %v6147 = vor.u32 %v6145, %v6146
      %v6148 = vsel %vm1296, %v6143, %v6147
      %v6149 = vrot.slane %v5412, 1
      %v6150 = vrot.slane %v5408, 2
      %v6151 = vor.u32 %v6149, %v6150
      %v6152 = vsel %vm1296, %v6147, %v6151
      %v6153 = vrot.slane %v5420, 1
      %v6154 = vrot.slane %v5416, 2
      %v6155 = vor.u32 %v6153, %v6154
      %v6156 = vsel %vm1296, %v6151, %v6155
      %v6157 = vrot.slane %v5428, 1
      %v6158 = vrot.slane %v5424, 2
      %v6159 = vor.u32 %v6157, %v6158
      %v6160 = vsel %vm1296, %v6155, %v6159
      %v6161 = vrot.slane %v5436, 1
      %v6162 = vrot.slane %v5432, 2
      %v6163 = vor.u32 %v6161, %v6162
      %v6164 = vsel %vm1296, %v6159, %v6163
      %v6165 = vrot.slane %v5444, 1
      %v6166 = vrot.slane %v5440, 2
      %v6167 = vor.u32 %v6165, %v6166
      %v6168 = vsel %vm1296, %v6163, %v6167
      %v6169 = vrot.slane %v5452, 1
      %v6170 = vrot.slane %v5448, 2
      %v6171 = vor.u32 %v6169, %v6170
      %v6172 = vsel %vm1296, %v6167, %v6171
      %v6173 = vrot.slane %v5460, 1
      %v6174 = vrot.slane %v5456, 2
      %v6175 = vor.u32 %v6173, %v6174
      %v6176 = vsel %vm1296, %v6171, %v6175
      %v6178 = vshrl.u32 %v6096, 16
      %v6180 = vrot.slane %v6178, 1
      %v6181 = vshll.u32 %v6096, 16
      %v6183 = vrot.slane %v6181, 2
      %v6184 = vor.u32 %v6180, %v6183
      %v6185 = vsel %vm1296, %v6175, %v6184
      %v6188 = vunpack.c.l.b16 %v6092
      %v6189 = vunpack.c.l.b16 %v6093
      %v6190 = vpack.c.b16 %v6189, %v6188
      %v6192 = vsel %vm476, %v6108, 0
      %v6195 = vsel %vm476, %v6112, 0
      %v6198 = vsel %vm476, %v6116, 0
      %v6201 = vsel %vm476, %v6120, 0
      %v6204 = vsel %vm476, %v6124, 0
      %v6207 = vsel %vm476, %v6128, 0
      %v6210 = vsel %vm476, %v6132, 0
      %v6213 = vsel %vm476, %v6136, 0
      %v6216 = vsel %vm476, %v6140, 0
      %v6219 = vsel %vm476, %v6144, 0
      %v6222 = vsel %vm476, %v6148, 0
      %v6225 = vsel %vm476, %v6152, 0
      %v6228 = vsel %vm476, %v6156, 0
      %v6231 = vsel %vm476, %v6160, 0
      %v6234 = vsel %vm476, %v6164, 0
      %v6237 = vsel %vm476, %v6168, 0
      %v6240 = vsel %vm476, %v6172, 0
      %v6243 = vsel %vm476, %v6176, 0
      %v6246 = vsel %vm476, %v6185, 0
      %v6249 = vsel %vm534, %v6190, 0
      %6251 = vmatprep.subr.bf16.mxu0 0
      %6252 = vmatpush1.bf16.msra.mxu0 %v6249
      %6253 = vmatprep.subr.bf16.mxu0 0
      %6254 = vmatpush1.bf16.msra.mxu0 0
      %6255 = vmatprep.subr.bf16.mxu0 0
      %6256 = vmatpush1.bf16.msra.mxu0 0
      %6257 = vmatprep.subr.bf16.mxu0 0
      %6258 = vmatpush1.bf16.msra.mxu0 0
      %6259 = vmatprep.subr.bf16.mxu0 0
      %6260 = vmatpush1.bf16.msra.mxu0 0
      %6261 = vmatprep.subr.bf16.mxu0 0
      %6262 = vmatpush1.bf16.msra.mxu0 0
      %6263 = vmatprep.subr.bf16.mxu0 0
      %6264 = vmatpush1.bf16.msra.mxu0 0
      %6265 = vmatprep.subr.bf16.mxu0 0
      %6266 = vmatpush1.bf16.msra.mxu0 0
      %6267 = vmatprep.subr.bf16.mxu0 0
      %6268 = vmatpush1.bf16.msra.mxu0 0
      %6269 = vmatprep.subr.bf16.mxu0 0
      %6270 = vmatpush1.bf16.msra.mxu0 0
      %6271 = vmatprep.subr.bf16.mxu0 0
      %6272 = vmatpush1.bf16.msra.mxu0 0
      %6273 = vmatprep.subr.bf16.mxu0 0
      %6274 = vmatpush1.bf16.msra.mxu0 0
      %6275 = vmatprep.subr.bf16.mxu0 0
      %6276 = vmatpush1.bf16.msra.mxu0 0
      %6277 = vmatprep.subr.bf16.mxu0 0
      %6278 = vmatpush1.bf16.msra.mxu0 0
      %6279 = vmatprep.subr.bf16.mxu0 0
      %6280 = vmatpush1.bf16.msra.mxu0 0
      %6281 = vmatprep.subr.bf16.mxu0 0
      %6282 = vmatpush1.bf16.msra.mxu0 0
      %6283 = vmatprep.mubr.bf16.mxu0 0
      %6284 = vmatmul.mubr.bf16.gmra.mrb[0].mxu0 %v6192
      %v6285 = vpop.f32.mrb[0].mxu0
      %v6286 = vadd.f32 0.0, %v6285
      %v6287 = vpop.f32.mrb[0].mxu0
      %v6288 = vpop.f32.mrb[0].mxu0
      %v6289 = vadd.f32 0.0, %v6288
      %v6290 = vpop.f32.mrb[0].mxu0
      %6291 = vmatprep.mubr.bf16.mxu0 0
      %6292 = vmatmul.mubr.bf16.gmra.mrb[0].mxu0 %v6195
      %v6293 = vpop.f32.mrb[0].mxu0
      %v6294 = vadd.f32 0.0, %v6293
      %v6295 = vpop.f32.mrb[0].mxu0
      %v6296 = vpop.f32.mrb[0].mxu0
      %v6297 = vadd.f32 0.0, %v6296
      %v6298 = vpop.f32.mrb[0].mxu0
      %6299 = vmatprep.mubr.bf16.mxu0 0
      %6300 = vmatmul.mubr.bf16.gmra.mrb[0].mxu0 %v6198
      %v6301 = vpop.f32.mrb[0].mxu0
      %v6302 = vadd.f32 0.0, %v6301
      %v6303 = vpop.f32.mrb[0].mxu0
      %v6304 = vpop.f32.mrb[0].mxu0
      %v6305 = vadd.f32 0.0, %v6304
      %v6306 = vpop.f32.mrb[0].mxu0
      %6307 = vmatprep.mubr.bf16.mxu0 0
      %6308 = vmatmul.mubr.bf16.gmra.mrb[0].mxu0 %v6201
      %v6309 = vpop.f32.mrb[0].mxu0
      %v6310 = vadd.f32 0.0, %v6309
      %v6311 = vpop.f32.mrb[0].mxu0
      %v6312 = vpop.f32.mrb[0].mxu0
      %v6313 = vadd.f32 0.0, %v6312
      %v6314 = vpop.f32.mrb[0].mxu0
      %6315 = vmatprep.mubr.bf16.mxu0 0
      %6316 = vmatmul.mubr.bf16.gmra.mrb[0].mxu0 %v6204
      %v6317 = vpop.f32.mrb[0].mxu0
      %v6318 = vadd.f32 0.0, %v6317
      %v6319 = vpop.f32.mrb[0].mxu0
      %v6320 = vpop.f32.mrb[0].mxu0
      %v6321 = vadd.f32 0.0, %v6320
      %v6322 = vpop.f32.mrb[0].mxu0
      %6323 = vmatprep.mubr.bf16.mxu0 0
      %6324 = vmatmul.mubr.bf16.gmra.mrb[0].mxu0 %v6207
      %v6325 = vpop.f32.mrb[0].mxu0
      %v6326 = vadd.f32 0.0, %v6325
      %v6327 = vpop.f32.mrb[0].mxu0
      %v6328 = vpop.f32.mrb[0].mxu0
      %v6329 = vadd.f32 0.0, %v6328
      %v6330 = vpop.f32.mrb[0].mxu0
      %6331 = vmatprep.mubr.bf16.mxu0 0
      %6332 = vmatmul.mubr.bf16.gmra.mrb[0].mxu0 %v6210
      %v6333 = vpop.f32.mrb[0].mxu0
      %v6334 = vadd.f32 0.0, %v6333
      %v6335 = vpop.f32.mrb[0].mxu0
      %v6336 = vpop.f32.mrb[0].mxu0
      %v6337 = vadd.f32 0.0, %v6336
      %v6338 = vpop.f32.mrb[0].mxu0
      %6339 = vmatprep.mubr.bf16.mxu0 0
      %6340 = vmatmul.mubr.bf16.gmra.mrb[0].mxu0 %v6213
      %v6341 = vpop.f32.mrb[0].mxu0
      %v6342 = vadd.f32 0.0, %v6341
      %v6343 = vpop.f32.mrb[0].mxu0
      %v6344 = vpop.f32.mrb[0].mxu0
      %v6345 = vadd.f32 0.0, %v6344
      %v6346 = vpop.f32.mrb[0].mxu0
      %6347 = vmatprep.mubr.bf16.mxu0 0
      %6348 = vmatmul.mubr.bf16.gmra.mrb[0].mxu0 %v6216
      %v6349 = vpop.f32.mrb[0].mxu0
      %v6350 = vadd.f32 0.0, %v6349
      %v6351 = vpop.f32.mrb[0].mxu0
      %v6352 = vpop.f32.mrb[0].mxu0
      %v6353 = vadd.f32 0.0, %v6352
      %v6354 = vpop.f32.mrb[0].mxu0
      %6355 = vmatprep.mubr.bf16.mxu0 0
      %6356 = vmatmul.mubr.bf16.gmra.mrb[0].mxu0 %v6219
      %v6357 = vpop.f32.mrb[0].mxu0
      %v6358 = vadd.f32 0.0, %v6357
      %v6359 = vpop.f32.mrb[0].mxu0
      %v6360 = vpop.f32.mrb[0].mxu0
      %v6361 = vadd.f32 0.0, %v6360
      %v6362 = vpop.f32.mrb[0].mxu0
      %6363 = vmatprep.mubr.bf16.mxu0 0
      %6364 = vmatmul.mubr.bf16.gmra.mrb[0].mxu0 %v6222
      %v6365 = vpop.f32.mrb[0].mxu0
      %v6366 = vadd.f32 0.0, %v6365
      %v6367 = vpop.f32.mrb[0].mxu0
      %v6368 = vpop.f32.mrb[0].mxu0
      %v6369 = vadd.f32 0.0, %v6368
      %v6370 = vpop.f32.mrb[0].mxu0
      %6371 = vmatprep.mubr.bf16.mxu0 0
      %6372 = vmatmul.mubr.bf16.gmra.mrb[0].mxu0 %v6225
      %v6373 = vpop.f32.mrb[0].mxu0
      %v6374 = vadd.f32 0.0, %v6373
      %v6375 = vpop.f32.mrb[0].mxu0
      %v6376 = vpop.f32.mrb[0].mxu0
      %v6377 = vadd.f32 0.0, %v6376
      %v6378 = vpop.f32.mrb[0].mxu0
      %6379 = vmatprep.mubr.bf16.mxu0 0
      %6380 = vmatmul.mubr.bf16.gmra.mrb[0].mxu0 %v6228
      %v6381 = vpop.f32.mrb[0].mxu0
      %v6382 = vadd.f32 0.0, %v6381
      %v6383 = vpop.f32.mrb[0].mxu0
      %v6384 = vpop.f32.mrb[0].mxu0
      %v6385 = vadd.f32 0.0, %v6384
      %v6386 = vpop.f32.mrb[0].mxu0
      %6387 = vmatprep.mubr.bf16.mxu0 0
      %6388 = vmatmul.mubr.bf16.gmra.mrb[0].mxu0 %v6231
      %v6389 = vpop.f32.mrb[0].mxu0
      %v6390 = vadd.f32 0.0, %v6389
      %v6391 = vpop.f32.mrb[0].mxu0
      %v6392 = vpop.f32.mrb[0].mxu0
      %v6393 = vadd.f32 0.0, %v6392
      %v6394 = vpop.f32.mrb[0].mxu0
      %6395 = vmatprep.mubr.bf16.mxu0 0
      %6396 = vmatmul.mubr.bf16.gmra.mrb[0].mxu0 %v6234
      %v6397 = vpop.f32.mrb[0].mxu0
      %v6398 = vadd.f32 0.0, %v6397
      %v6399 = vpop.f32.mrb[0].mxu0
      %v6400 = vpop.f32.mrb[0].mxu0
      %v6401 = vadd.f32 0.0, %v6400
      %v6402 = vpop.f32.mrb[0].mxu0
      %6403 = vmatprep.mubr.bf16.mxu0 0
      %6404 = vmatmul.mubr.bf16.gmra.mrb[0].mxu0 %v6237
      %v6405 = vpop.f32.mrb[0].mxu0
      %v6406 = vadd.f32 0.0, %v6405
      %v6407 = vpop.f32.mrb[0].mxu0
      %v6408 = vpop.f32.mrb[0].mxu0
      %v6409 = vadd.f32 0.0, %v6408
      %v6410 = vpop.f32.mrb[0].mxu0
      %6411 = vmatprep.mubr.bf16.mxu0 0
      %6412 = vmatmul.mubr.bf16.gmra.mrb[0].mxu0 %v6240
      %v6413 = vpop.f32.mrb[0].mxu0
      %v6414 = vadd.f32 0.0, %v6413
      %v6415 = vpop.f32.mrb[0].mxu0
      %v6416 = vpop.f32.mrb[0].mxu0
      %v6417 = vadd.f32 0.0, %v6416
      %v6418 = vpop.f32.mrb[0].mxu0
      %6419 = vmatprep.mubr.bf16.mxu0 0
      %6420 = vmatmul.mubr.bf16.gmra.mrb[0].mxu0 %v6243
      %v6421 = vpop.f32.mrb[0].mxu0
      %v6422 = vadd.f32 0.0, %v6421
      %v6423 = vpop.f32.mrb[0].mxu0
      %v6424 = vpop.f32.mrb[0].mxu0
      %v6425 = vadd.f32 0.0, %v6424
      %v6426 = vpop.f32.mrb[0].mxu0
      %6427 = vmatprep.mubr.bf16.mxu0 0
      %6428 = vmatmul.mubr.bf16.gmra.mrb[0].mxu0 %v6246
      %v6429 = vpop.f32.mrb[0].mxu0
      %v6430 = vadd.f32 0.0, %v6429
      %v6431 = vpop.f32.mrb[0].mxu0
      %v6432 = vpop.f32.mrb[0].mxu0
      %v6433 = vadd.f32 0.0, %v6432
      %v6434 = vpop.f32.mrb[0].mxu0
      %6435 = vdwg.mxu0
      %v6436 = vadd.f32 %v6052, %v6286
      %v6437 = vadd.f32 %v6053, %v6289
      %v6438 = vadd.f32 %v6054, %v6294
      %v6439 = vadd.f32 %v6055, %v6297
      %v6440 = vadd.f32 %v6056, %v6302
      %v6441 = vadd.f32 %v6057, %v6305
      %v6442 = vadd.f32 %v6058, %v6310
      %v6443 = vadd.f32 %v6059, %v6313
      %v6444 = vadd.f32 %v6060, %v6318
      %v6445 = vadd.f32 %v6061, %v6321
      %v6446 = vadd.f32 %v6062, %v6326
      %v6447 = vadd.f32 %v6063, %v6329
      %v6448 = vadd.f32 %v6064, %v6334
      %v6449 = vadd.f32 %v6065, %v6337
      %v6450 = vadd.f32 %v6066, %v6342
      %v6451 = vadd.f32 %v6067, %v6345
      %v6452 = vadd.f32 %v6068, %v6350
      %v6453 = vadd.f32 %v6069, %v6353
      %v6454 = vadd.f32 %v6070, %v6358
      %v6455 = vadd.f32 %v6071, %v6361
      %v6456 = vadd.f32 %v6072, %v6366
      %v6457 = vadd.f32 %v6073, %v6369
      %v6458 = vadd.f32 %v6074, %v6374
      %v6459 = vadd.f32 %v6075, %v6377
      %v6460 = vadd.f32 %v6076, %v6382
      %v6461 = vadd.f32 %v6077, %v6385
      %v6462 = vadd.f32 %v6078, %v6390
      %v6463 = vadd.f32 %v6079, %v6393
      %v6464 = vadd.f32 %v6080, %v6398
      %v6465 = vadd.f32 %v6081, %v6401
      %v6466 = vadd.f32 %v6082, %v6406
      %v6467 = vadd.f32 %v6083, %v6409
      %v6468 = vadd.f32 %v6084, %v6414
      %v6469 = vadd.f32 %v6085, %v6417
      %v6470 = vadd.f32 %v6086, %v6422
      %v6471 = vadd.f32 %v6087, %v6425
      %v6472 = vadd.f32 %v6088, %v6430
      %v6473 = vadd.f32 %v6089, %v6433
      %v6474 = vld [vmem:[%s165 + $0x1c] sm:$0xc]
      %s6475 = scalar_lea.vmem %s1, 120
      %v6476 = vld [vmem:[%s6475] sm:$0xf]
      %v6477 = vld [vmem:[%s6475 + $0x4] sm:$0x3]
      %v6479 = vunpack.c.l.b16 %v6474
      %v6480 = vpack.c.b16 %v5254, %v6479
      %v6481 = vrot.slane %v6480, 2
      %v6482 = vrot.slane %v5293, 2
      %v6483 = vsel %vm2288, %v6481, %v6482
      %v6484 = vrot.slane %v5294, 2
      %v6485 = vsel %vm2288, %v6482, %v6484
      %v6486 = vrot.slane %v5295, 2
      %v6487 = vsel %vm2288, %v6484, %v6486
      %v6488 = vrot.slane %v5296, 2
      %v6489 = vsel %vm2288, %v6486, %v6488
      %v6490 = vrot.slane %v5297, 2
      %v6491 = vsel %vm2288, %v6488, %v6490
      %v6492 = vrot.slane %v5298, 2
      %v6493 = vsel %vm2288, %v6490, %v6492
      %v6494 = vrot.slane %v5299, 2
      %v6495 = vsel %vm2288, %v6492, %v6494
      %v6496 = vrot.slane %v5300, 2
      %v6497 = vsel %vm2288, %v6494, %v6496
      %v6498 = vrot.slane %v5301, 2
      %v6499 = vsel %vm2288, %v6496, %v6498
      %v6500 = vrot.slane %v5302, 2
      %v6501 = vsel %vm2288, %v6498, %v6500
      %v6502 = vrot.slane %v5303, 2
      %v6503 = vsel %vm2288, %v6500, %v6502
      %v6504 = vrot.slane %v5304, 2
      %v6505 = vsel %vm2288, %v6502, %v6504
      %v6506 = vrot.slane %v5305, 2
      %v6507 = vsel %vm2288, %v6504, %v6506
      %v6508 = vrot.slane %v5306, 2
      %v6509 = vsel %vm2288, %v6506, %v6508
      %v6510 = vrot.slane %v5307, 2
      %v6511 = vsel %vm2288, %v6508, %v6510
      %v6512 = vrot.slane %v5308, 2
      %v6513 = vsel %vm2288, %v6510, %v6512
      %v6514 = vrot.slane %v5309, 2
      %v6515 = vsel %vm2288, %v6512, %v6514
      %v6516 = vrot.slane %v5310, 2
      %v6517 = vsel %vm2288, %v6514, %v6516
      %v6518 = vrot.slane %v6096, 2
      %v6519 = vsel %vm2288, %v6516, %v6518
      %v6522 = vunpack.c.l.b16 %v6476
      %v6523 = vunpack.c.l.b16 %v6477
      %v6524 = vpack.c.b16 %v6523, %v6522
      %v6526 = vsel %vm476, %v6483, 0
      %v6529 = vsel %vm476, %v6485, 0
      %v6532 = vsel %vm476, %v6487, 0
      %v6535 = vsel %vm476, %v6489, 0
      %v6538 = vsel %vm476, %v6491, 0
      %v6541 = vsel %vm476, %v6493, 0
      %v6544 = vsel %vm476, %v6495, 0
      %v6547 = vsel %vm476, %v6497, 0
      %v6550 = vsel %vm476, %v6499, 0
      %v6553 = vsel %vm476, %v6501, 0
      %v6556 = vsel %vm476, %v6503, 0
      %v6559 = vsel %vm476, %v6505, 0
      %v6562 = vsel %vm476, %v6507, 0
      %v6565 = vsel %vm476, %v6509, 0
      %v6568 = vsel %vm476, %v6511, 0
      %v6571 = vsel %vm476, %v6513, 0
      %v6574 = vsel %vm476, %v6515, 0
      %v6577 = vsel %vm476, %v6517, 0
      %v6580 = vsel %vm476, %v6519, 0
      %v6583 = vsel %vm534, %v6524, 0
      %6585 = vmatprep.subr.bf16.mxu0 0
      %6586 = vmatpush1.bf16.msra.mxu0 %v6583
      %6587 = vmatprep.subr.bf16.mxu0 0
      %6588 = vmatpush1.bf16.msra.mxu0 0
      %6589 = vmatprep.subr.bf16.mxu0 0
      %6590 = vmatpush1.bf16.msra.mxu0 0
      %6591 = vmatprep.subr.bf16.mxu0 0
      %6592 = vmatpush1.bf16.msra.mxu0 0
      %6593 = vmatprep.subr.bf16.mxu0 0
      %6594 = vmatpush1.bf16.msra.mxu0 0
      %6595 = vmatprep.subr.bf16.mxu0 0
      %6596 = vmatpush1.bf16.msra.mxu0 0
      %6597 = vmatprep.subr.bf16.mxu0 0
      %6598 = vmatpush1.bf16.msra.mxu0 0
      %6599 = vmatprep.subr.bf16.mxu0 0
      %6600 = vmatpush1.bf16.msra.mxu0 0
      %6601 = vmatprep.subr.bf16.mxu0 0
      %6602 = vmatpush1.bf16.msra.mxu0 0
      %6603 = vmatprep.subr.bf16.mxu0 0
      %6604 = vmatpush1.bf16.msra.mxu0 0
      %6605 = vmatprep.subr.bf16.mxu0 0
      %6606 = vmatpush1.bf16.msra.mxu0 0
      %6607 = vmatprep.subr.bf16.mxu0 0
      %6608 = vmatpush1.bf16.msra.mxu0 0
      %6609 = vmatprep.subr.bf16.mxu0 0
      %6610 = vmatpush1.bf16.msra.mxu0 0
      %6611 = vmatprep.subr.bf16.mxu0 0
      %6612 = vmatpush1.bf16.msra.mxu0 0
      %6613 = vmatprep.subr.bf16.mxu0 0
      %6614 = vmatpush1.bf16.msra.mxu0 0
      %6615 = vmatprep.subr.bf16.mxu0 0
      %6616 = vmatpush1.bf16.msra.mxu0 0
      %6617 = vmatprep.mubr.bf16.mxu0 0
      %6618 = vmatmul.mubr.bf16.gmra.mrb[0].mxu0 %v6526
      %v6619 = vpop.f32.mrb[0].mxu0
      %v6620 = vadd.f32 0.0, %v6619
      %v6621 = vpop.f32.mrb[0].mxu0
      %v6622 = vpop.f32.mrb[0].mxu0
      %v6623 = vadd.f32 0.0, %v6622
      %v6624 = vpop.f32.mrb[0].mxu0
      %6625 = vmatprep.mubr.bf16.mxu0 0
      %6626 = vmatmul.mubr.bf16.gmra.mrb[0].mxu0 %v6529
      %v6627 = vpop.f32.mrb[0].mxu0
      %v6628 = vadd.f32 0.0, %v6627
      %v6629 = vpop.f32.mrb[0].mxu0
      %v6630 = vpop.f32.mrb[0].mxu0
      %v6631 = vadd.f32 0.0, %v6630
      %v6632 = vpop.f32.mrb[0].mxu0
      %6633 = vmatprep.mubr.bf16.mxu0 0
      %6634 = vmatmul.mubr.bf16.gmra.mrb[0].mxu0 %v6532
      %v6635 = vpop.f32.mrb[0].mxu0
      %v6636 = vadd.f32 0.0, %v6635
      %v6637 = vpop.f32.mrb[0].mxu0
      %v6638 = vpop.f32.mrb[0].mxu0
      %v6639 = vadd.f32 0.0, %v6638
      %v6640 = vpop.f32.mrb[0].mxu0
      %6641 = vmatprep.mubr.bf16.mxu0 0
      %6642 = vmatmul.mubr.bf16.gmra.mrb[0].mxu0 %v6535
      %v6643 = vpop.f32.mrb[0].mxu0
      %v6644 = vadd.f32 0.0, %v6643
      %v6645 = vpop.f32.mrb[0].mxu0
      %v6646 = vpop.f32.mrb[0].mxu0
      %v6647 = vadd.f32 0.0, %v6646
      %v6648 = vpop.f32.mrb[0].mxu0
      %6649 = vmatprep.mubr.bf16.mxu0 0
      %6650 = vmatmul.mubr.bf16.gmra.mrb[0].mxu0 %v6538
      %v6651 = vpop.f32.mrb[0].mxu0
      %v6652 = vadd.f32 0.0, %v6651
      %v6653 = vpop.f32.mrb[0].mxu0
      %v6654 = vpop.f32.mrb[0].mxu0
      %v6655 = vadd.f32 0.0, %v6654
      %v6656 = vpop.f32.mrb[0].mxu0
      %6657 = vmatprep.mubr.bf16.mxu0 0
      %6658 = vmatmul.mubr.bf16.gmra.mrb[0].mxu0 %v6541
      %v6659 = vpop.f32.mrb[0].mxu0
      %v6660 = vadd.f32 0.0, %v6659
      %v6661 = vpop.f32.mrb[0].mxu0
      %v6662 = vpop.f32.mrb[0].mxu0
      %v6663 = vadd.f32 0.0, %v6662
      %v6664 = vpop.f32.mrb[0].mxu0
      %6665 = vmatprep.mubr.bf16.mxu0 0
      %6666 = vmatmul.mubr.bf16.gmra.mrb[0].mxu0 %v6544
      %v6667 = vpop.f32.mrb[0].mxu0
      %v6668 = vadd.f32 0.0, %v6667
      %v6669 = vpop.f32.mrb[0].mxu0
      %v6670 = vpop.f32.mrb[0].mxu0
      %v6671 = vadd.f32 0.0, %v6670
      %v6672 = vpop.f32.mrb[0].mxu0
      %6673 = vmatprep.mubr.bf16.mxu0 0
      %6674 = vmatmul.mubr.bf16.gmra.mrb[0].mxu0 %v6547
      %v6675 = vpop.f32.mrb[0].mxu0
      %v6676 = vadd.f32 0.0, %v6675
      %v6677 = vpop.f32.mrb[0].mxu0
      %v6678 = vpop.f32.mrb[0].mxu0
      %v6679 = vadd.f32 0.0, %v6678
      %v6680 = vpop.f32.mrb[0].mxu0
      %6681 = vmatprep.mubr.bf16.mxu0 0
      %6682 = vmatmul.mubr.bf16.gmra.mrb[0].mxu0 %v6550
      %v6683 = vpop.f32.mrb[0].mxu0
      %v6684 = vadd.f32 0.0, %v6683
      %v6685 = vpop.f32.mrb[0].mxu0
      %v6686 = vpop.f32.mrb[0].mxu0
      %v6687 = vadd.f32 0.0, %v6686
      %v6688 = vpop.f32.mrb[0].mxu0
      %6689 = vmatprep.mubr.bf16.mxu0 0
      %6690 = vmatmul.mubr.bf16.gmra.mrb[0].mxu0 %v6553
      %v6691 = vpop.f32.mrb[0].mxu0
      %v6692 = vadd.f32 0.0, %v6691
      %v6693 = vpop.f32.mrb[0].mxu0
      %v6694 = vpop.f32.mrb[0].mxu0
      %v6695 = vadd.f32 0.0, %v6694
      %v6696 = vpop.f32.mrb[0].mxu0
      %6697 = vmatprep.mubr.bf16.mxu0 0
      %6698 = vmatmul.mubr.bf16.gmra.mrb[0].mxu0 %v6556
      %v6699 = vpop.f32.mrb[0].mxu0
      %v6700 = vadd.f32 0.0, %v6699
      %v6701 = vpop.f32.mrb[0].mxu0
      %v6702 = vpop.f32.mrb[0].mxu0
      %v6703 = vadd.f32 0.0, %v6702
      %v6704 = vpop.f32.mrb[0].mxu0
      %6705 = vmatprep.mubr.bf16.mxu0 0
      %6706 = vmatmul.mubr.bf16.gmra.mrb[0].mxu0 %v6559
      %v6707 = vpop.f32.mrb[0].mxu0
      %v6708 = vadd.f32 0.0, %v6707
      %v6709 = vpop.f32.mrb[0].mxu0
      %v6710 = vpop.f32.mrb[0].mxu0
      %v6711 = vadd.f32 0.0, %v6710
      %v6712 = vpop.f32.mrb[0].mxu0
      %6713 = vmatprep.mubr.bf16.mxu0 0
      %6714 = vmatmul.mubr.bf16.gmra.mrb[0].mxu0 %v6562
      %v6715 = vpop.f32.mrb[0].mxu0
      %v6716 = vadd.f32 0.0, %v6715
      %v6717 = vpop.f32.mrb[0].mxu0
      %v6718 = vpop.f32.mrb[0].mxu0
      %v6719 = vadd.f32 0.0, %v6718
      %v6720 = vpop.f32.mrb[0].mxu0
      %6721 = vmatprep.mubr.bf16.mxu0 0
      %6722 = vmatmul.mubr.bf16.gmra.mrb[0].mxu0 %v6565
      %v6723 = vpop.f32.mrb[0].mxu0
      %v6724 = vadd.f32 0.0, %v6723
      %v6725 = vpop.f32.mrb[0].mxu0
      %v6726 = vpop.f32.mrb[0].mxu0
      %v6727 = vadd.f32 0.0, %v6726
      %v6728 = vpop.f32.mrb[0].mxu0
      %6729 = vmatprep.mubr.bf16.mxu0 0
      %6730 = vmatmul.mubr.bf16.gmra.mrb[0].mxu0 %v6568
      %v6731 = vpop.f32.mrb[0].mxu0
      %v6732 = vadd.f32 0.0, %v6731
      %v6733 = vpop.f32.mrb[0].mxu0
      %v6734 = vpop.f32.mrb[0].mxu0
      %v6735 = vadd.f32 0.0, %v6734
      %v6736 = vpop.f32.mrb[0].mxu0
      %6737 = vmatprep.mubr.bf16.mxu0 0
      %6738 = vmatmul.mubr.bf16.gmra.mrb[0].mxu0 %v6571
      %v6739 = vpop.f32.mrb[0].mxu0
      %v6740 = vadd.f32 0.0, %v6739
      %v6741 = vpop.f32.mrb[0].mxu0
      %v6742 = vpop.f32.mrb[0].mxu0
      %v6743 = vadd.f32 0.0, %v6742
      %v6744 = vpop.f32.mrb[0].mxu0
      %6745 = vmatprep.mubr.bf16.mxu0 0
      %6746 = vmatmul.mubr.bf16.gmra.mrb[0].mxu0 %v6574
      %v6747 = vpop.f32.mrb[0].mxu0
      %v6748 = vadd.f32 0.0, %v6747
      %v6749 = vpop.f32.mrb[0].mxu0
      %v6750 = vpop.f32.mrb[0].mxu0
      %v6751 = vadd.f32 0.0, %v6750
      %v6752 = vpop.f32.mrb[0].mxu0
      %6753 = vmatprep.mubr.bf16.mxu0 0
      %6754 = vmatmul.mubr.bf16.gmra.mrb[0].mxu0 %v6577
      %v6755 = vpop.f32.mrb[0].mxu0
      %v6756 = vadd.f32 0.0, %v6755
      %v6757 = vpop.f32.mrb[0].mxu0
      %v6758 = vpop.f32.mrb[0].mxu0
      %v6759 = vadd.f32 0.0, %v6758
      %v6760 = vpop.f32.mrb[0].mxu0
      %6761 = vmatprep.mubr.bf16.mxu0 0
      %6762 = vmatmul.mubr.bf16.gmra.mrb[0].mxu0 %v6580
      %v6763 = vpop.f32.mrb[0].mxu0
      %v6764 = vadd.f32 0.0, %v6763
      %v6765 = vpop.f32.mrb[0].mxu0
      %v6766 = vpop.f32.mrb[0].mxu0
      %v6767 = vadd.f32 0.0, %v6766
      %v6768 = vpop.f32.mrb[0].mxu0
      %6769 = vdwg.mxu0
      %v6770 = vadd.f32 %v6436, %v6620
      %v6771 = vadd.f32 %v6437, %v6623
      %v6772 = vadd.f32 %v6438, %v6628
      %v6773 = vadd.f32 %v6439, %v6631
      %v6774 = vadd.f32 %v6440, %v6636
      %v6775 = vadd.f32 %v6441, %v6639
      %v6776 = vadd.f32 %v6442, %v6644
      %v6777 = vadd.f32 %v6443, %v6647
      %v6778 = vadd.f32 %v6444, %v6652
      %v6779 = vadd.f32 %v6445, %v6655
      %v6780 = vadd.f32 %v6446, %v6660
      %v6781 = vadd.f32 %v6447, %v6663
      %v6782 = vadd.f32 %v6448, %v6668
      %v6783 = vadd.f32 %v6449, %v6671
      %v6784 = vadd.f32 %v6450, %v6676
      %v6785 = vadd.f32 %v6451, %v6679
      %v6786 = vadd.f32 %v6452, %v6684
      %v6787 = vadd.f32 %v6453, %v6687
      %v6788 = vadd.f32 %v6454, %v6692
      %v6789 = vadd.f32 %v6455, %v6695
      %v6790 = vadd.f32 %v6456, %v6700
      %v6791 = vadd.f32 %v6457, %v6703
      %v6792 = vadd.f32 %v6458, %v6708
      %v6793 = vadd.f32 %v6459, %v6711
      %v6794 = vadd.f32 %v6460, %v6716
      %v6795 = vadd.f32 %v6461, %v6719
      %v6796 = vadd.f32 %v6462, %v6724
      %v6797 = vadd.f32 %v6463, %v6727
      %v6798 = vadd.f32 %v6464, %v6732
      %v6799 = vadd.f32 %v6465, %v6735
      %v6800 = vadd.f32 %v6466, %v6740
      %v6801 = vadd.f32 %v6467, %v6743
      %v6802 = vadd.f32 %v6468, %v6748
      %v6803 = vadd.f32 %v6469, %v6751
      %v6804 = vadd.f32 %v6470, %v6756
      %v6805 = vadd.f32 %v6471, %v6759
      %v6806 = vadd.f32 %v6472, %v6764
      %v6807 = vadd.f32 %v6473, %v6767
      %v6808 = vld [vmem:[%s2] sm:$0x1]
      %v6809 = vlaneseq
      %v6810 = vshrl.u32 %v6809, 7
      %v6811 = vsub.s32 0, %v6810
      %v6812 = vrot.slane %v6808, %v6811
      %v6813 = vadd.f32 %v6770, %v6812
      %v6814 = vadd.f32 %v6771, %v6812
      %v6815 = vadd.f32 %v6772, %v6812
      %v6816 = vadd.f32 %v6773, %v6812
      %v6817 = vadd.f32 %v6774, %v6812
      %v6818 = vadd.f32 %v6775, %v6812
      %v6819 = vadd.f32 %v6776, %v6812
      %v6820 = vadd.f32 %v6777, %v6812
      %v6821 = vadd.f32 %v6778, %v6812
      %v6822 = vadd.f32 %v6779, %v6812
      %v6823 = vadd.f32 %v6780, %v6812
      %v6824 = vadd.f32 %v6781, %v6812
      %v6825 = vadd.f32 %v6782, %v6812
      %v6826 = vadd.f32 %v6783, %v6812
      %v6827 = vadd.f32 %v6784, %v6812
      %v6828 = vadd.f32 %v6785, %v6812
      %v6829 = vadd.f32 %v6786, %v6812
      %v6830 = vadd.f32 %v6787, %v6812
      %v6831 = vadd.f32 %v6788, %v6812
      %v6832 = vadd.f32 %v6789, %v6812
      %v6833 = vadd.f32 %v6790, %v6812
      %v6834 = vadd.f32 %v6791, %v6812
      %v6835 = vadd.f32 %v6792, %v6812
      %v6836 = vadd.f32 %v6793, %v6812
      %v6837 = vadd.f32 %v6794, %v6812
      %v6838 = vadd.f32 %v6795, %v6812
      %v6839 = vadd.f32 %v6796, %v6812
      %v6840 = vadd.f32 %v6797, %v6812
      %v6841 = vadd.f32 %v6798, %v6812
      %v6842 = vadd.f32 %v6799, %v6812
      %v6843 = vadd.f32 %v6800, %v6812
      %v6844 = vadd.f32 %v6801, %v6812
      %v6845 = vadd.f32 %v6802, %v6812
      %v6846 = vadd.f32 %v6803, %v6812
      %v6847 = vadd.f32 %v6804, %v6812
      %v6848 = vadd.f32 %v6805, %v6812
      %v6849 = vadd.f32 %v6806, %v6812
      %v6850 = vadd.f32 %v6807, %v6812
      %vm6851 = vcmp.ge.f32.partialorder %v6813, 0.0
      %vm6852 = vcmp.ge.f32.partialorder %v6814, 0.0
      %vm6853 = vcmp.ge.f32.partialorder %v6815, 0.0
      %vm6854 = vcmp.ge.f32.partialorder %v6816, 0.0
      %vm6855 = vcmp.ge.f32.partialorder %v6817, 0.0
      %vm6856 = vcmp.ge.f32.partialorder %v6818, 0.0
      %vm6857 = vcmp.ge.f32.partialorder %v6819, 0.0
      %vm6858 = vcmp.ge.f32.partialorder %v6820, 0.0
      %vm6859 = vcmp.ge.f32.partialorder %v6821, 0.0
      %vm6860 = vcmp.ge.f32.partialorder %v6822, 0.0
      %vm6861 = vcmp.ge.f32.partialorder %v6823, 0.0
      %vm6862 = vcmp.ge.f32.partialorder %v6824, 0.0
      %vm6863 = vcmp.ge.f32.partialorder %v6825, 0.0
      %vm6864 = vcmp.ge.f32.partialorder %v6826, 0.0
      %vm6865 = vcmp.ge.f32.partialorder %v6827, 0.0
      %vm6866 = vcmp.ge.f32.partialorder %v6828, 0.0
      %vm6867 = vcmp.ge.f32.partialorder %v6829, 0.0
      %vm6868 = vcmp.ge.f32.partialorder %v6830, 0.0
      %vm6869 = vcmp.ge.f32.partialorder %v6831, 0.0
      %vm6870 = vcmp.ge.f32.partialorder %v6832, 0.0
      %vm6871 = vcmp.ge.f32.partialorder %v6833, 0.0
      %vm6872 = vcmp.ge.f32.partialorder %v6834, 0.0
      %vm6873 = vcmp.ge.f32.partialorder %v6835, 0.0
      %vm6874 = vcmp.ge.f32.partialorder %v6836, 0.0
      %vm6875 = vcmp.ge.f32.partialorder %v6837, 0.0
      %vm6876 = vcmp.ge.f32.partialorder %v6838, 0.0
      %vm6877 = vcmp.ge.f32.partialorder %v6839, 0.0
      %vm6878 = vcmp.ge.f32.partialorder %v6840, 0.0
      %vm6879 = vcmp.ge.f32.partialorder %v6841, 0.0
      %vm6880 = vcmp.ge.f32.partialorder %v6842, 0.0
      %vm6881 = vcmp.ge.f32.partialorder %v6843, 0.0
      %vm6882 = vcmp.ge.f32.partialorder %v6844, 0.0
      %vm6883 = vcmp.ge.f32.partialorder %v6845, 0.0
      %vm6884 = vcmp.ge.f32.partialorder %v6846, 0.0
      %vm6885 = vcmp.ge.f32.partialorder %v6847, 0.0
      %vm6886 = vcmp.ge.f32.partialorder %v6848, 0.0
      %vm6887 = vcmp.ge.f32.partialorder %v6849, 0.0
      %vm6888 = vcmp.ge.f32.partialorder %v6850, 0.0
      %v6889 = vmul.f32 %v6813, 0.3
      %v6890 = vmul.f32 %v6814, 0.3
      %v6891 = vmul.f32 %v6815, 0.3
      %v6892 = vmul.f32 %v6816, 0.3
      %v6893 = vmul.f32 %v6817, 0.3
      %v6894 = vmul.f32 %v6818, 0.3
      %v6895 = vmul.f32 %v6819, 0.3
      %v6896 = vmul.f32 %v6820, 0.3
      %v6897 = vmul.f32 %v6821, 0.3
      %v6898 = vmul.f32 %v6822, 0.3
      %v6899 = vmul.f32 %v6823, 0.3
      %v6900 = vmul.f32 %v6824, 0.3
      %v6901 = vmul.f32 %v6825, 0.3
      %v6902 = vmul.f32 %v6826, 0.3
      %v6903 = vmul.f32 %v6827, 0.3
      %v6904 = vmul.f32 %v6828, 0.3
      %v6905 = vmul.f32 %v6829, 0.3
      %v6906 = vmul.f32 %v6830, 0.3
      %v6907 = vmul.f32 %v6831, 0.3
      %v6908 = vmul.f32 %v6832, 0.3
      %v6909 = vmul.f32 %v6833, 0.3
      %v6910 = vmul.f32 %v6834, 0.3
      %v6911 = vmul.f32 %v6835, 0.3
      %v6912 = vmul.f32 %v6836, 0.3
      %v6913 = vmul.f32 %v6837, 0.3
      %v6914 = vmul.f32 %v6838, 0.3
      %v6915 = vmul.f32 %v6839, 0.3
      %v6916 = vmul.f32 %v6840, 0.3
      %v6917 = vmul.f32 %v6841, 0.3
      %v6918 = vmul.f32 %v6842, 0.3
      %v6919 = vmul.f32 %v6843, 0.3
      %v6920 = vmul.f32 %v6844, 0.3
      %v6921 = vmul.f32 %v6845, 0.3
      %v6922 = vmul.f32 %v6846, 0.3
      %v6923 = vmul.f32 %v6847, 0.3
      %v6924 = vmul.f32 %v6848, 0.3
      %v6925 = vmul.f32 %v6849, 0.3
      %v6926 = vmul.f32 %v6850, 0.3
      %v6927 = vsel %vm6851, %v6813, %v6889
      %v6928 = vsel %vm6852, %v6814, %v6890
      %v6929 = vsel %vm6853, %v6815, %v6891
      %v6930 = vsel %vm6854, %v6816, %v6892
      %v6931 = vsel %vm6855, %v6817, %v6893
      %v6932 = vsel %vm6856, %v6818, %v6894
      %v6933 = vsel %vm6857, %v6819, %v6895
      %v6934 = vsel %vm6858, %v6820, %v6896
      %v6935 = vsel %vm6859, %v6821, %v6897
      %v6936 = vsel %vm6860, %v6822, %v6898
      %v6937 = vsel %vm6861, %v6823, %v6899
      %v6938 = vsel %vm6862, %v6824, %v6900
      %v6939 = vsel %vm6863, %v6825, %v6901
      %v6940 = vsel %vm6864, %v6826, %v6902
      %v6941 = vsel %vm6865, %v6827, %v6903
      %v6942 = vsel %vm6866, %v6828, %v6904
      %v6943 = vsel %vm6867, %v6829, %v6905
      %v6944 = vsel %vm6868, %v6830, %v6906
      %v6945 = vsel %vm6869, %v6831, %v6907
      %v6946 = vsel %vm6870, %v6832, %v6908
      %v6947 = vsel %vm6871, %v6833, %v6909
      %v6948 = vsel %vm6872, %v6834, %v6910
      %v6949 = vsel %vm6873, %v6835, %v6911
      %v6950 = vsel %vm6874, %v6836, %v6912
      %v6951 = vsel %vm6875, %v6837, %v6913
      %v6952 = vsel %vm6876, %v6838, %v6914
      %v6953 = vsel %vm6877, %v6839, %v6915
      %v6954 = vsel %vm6878, %v6840, %v6916
      %v6955 = vsel %vm6879, %v6841, %v6917
      %v6956 = vsel %vm6880, %v6842, %v6918
      %v6957 = vsel %vm6881, %v6843, %v6919
      %v6958 = vsel %vm6882, %v6844, %v6920
      %v6959 = vsel %vm6883, %v6845, %v6921
      %v6960 = vsel %vm6884, %v6846, %v6922
      %v6961 = vsel %vm6885, %v6847, %v6923
      %v6962 = vsel %vm6886, %v6848, %v6924
      %v6963 = vsel %vm6887, %v6849, %v6925
      %v6964 = vsel %vm6888, %v6850, %v6926
      %v6965 = vld [vmem:[%s2 + $0x1] sm:$0x1]
      %v6966 = vlaneseq
      %v6967 = vshrl.u32 %v6966, 7
      %v6968 = vsub.s32 0, %v6967
      %v6969 = vrot.slane %v6965, %v6968
      %v6970 = vmul.f32 %v6927, %v6969
      %v6971 = vmul.f32 %v6928, %v6969
      %v6972 = vmul.f32 %v6929, %v6969
      %v6973 = vmul.f32 %v6930, %v6969
      %v6974 = vmul.f32 %v6931, %v6969
      %v6975 = vmul.f32 %v6932, %v6969
      %v6976 = vmul.f32 %v6933, %v6969
      %v6977 = vmul.f32 %v6934, %v6969
      %v6978 = vmul.f32 %v6935, %v6969
      %v6979 = vmul.f32 %v6936, %v6969
      %v6980 = vmul.f32 %v6937, %v6969
      %v6981 = vmul.f32 %v6938, %v6969
      %v6982 = vmul.f32 %v6939, %v6969
      %v6983 = vmul.f32 %v6940, %v6969
      %v6984 = vmul.f32 %v6941, %v6969
      %v6985 = vmul.f32 %v6942, %v6969
      %v6986 = vmul.f32 %v6943, %v6969
      %v6987 = vmul.f32 %v6944, %v6969
      %v6988 = vmul.f32 %v6945, %v6969
      %v6989 = vmul.f32 %v6946, %v6969
      %v6990 = vmul.f32 %v6947, %v6969
      %v6991 = vmul.f32 %v6948, %v6969
      %v6992 = vmul.f32 %v6949, %v6969
      %v6993 = vmul.f32 %v6950, %v6969
      %v6994 = vmul.f32 %v6951, %v6969
      %v6995 = vmul.f32 %v6952, %v6969
      %v6996 = vmul.f32 %v6953, %v6969
      %v6997 = vmul.f32 %v6954, %v6969
      %v6998 = vmul.f32 %v6955, %v6969
      %v6999 = vmul.f32 %v6956, %v6969
      %v7000 = vmul.f32 %v6957, %v6969
      %v7001 = vmul.f32 %v6958, %v6969
      %v7002 = vmul.f32 %v6959, %v6969
      %v7003 = vmul.f32 %v6960, %v6969
      %v7004 = vmul.f32 %v6961, %v6969
      %v7005 = vmul.f32 %v6962, %v6969
      %v7006 = vmul.f32 %v6963, %v6969
      %v7007 = vmul.f32 %v6964, %v6969
      %v7008 = vld [vmem:[%s2 + $0x2] sm:$0x1]
      %v7009 = vlaneseq
      %v7010 = vshrl.u32 %v7009, 7
      %v7011 = vsub.s32 0, %v7010
      %v7012 = vrot.slane %v7008, %v7011
      %v7013 = vadd.f32 %v6970, %v7012
      %v7014 = vadd.f32 %v6971, %v7012
      %v7015 = vadd.f32 %v6972, %v7012
      %v7016 = vadd.f32 %v6973, %v7012
      %v7017 = vadd.f32 %v6974, %v7012
      %v7018 = vadd.f32 %v6975, %v7012
      %v7019 = vadd.f32 %v6976, %v7012
      %v7020 = vadd.f32 %v6977, %v7012
      %v7021 = vadd.f32 %v6978, %v7012
      %v7022 = vadd.f32 %v6979, %v7012
      %v7023 = vadd.f32 %v6980, %v7012
      %v7024 = vadd.f32 %v6981, %v7012
      %v7025 = vadd.f32 %v6982, %v7012
      %v7026 = vadd.f32 %v6983, %v7012
      %v7027 = vadd.f32 %v6984, %v7012
      %v7028 = vadd.f32 %v6985, %v7012
      %v7029 = vadd.f32 %v6986, %v7012
      %v7030 = vadd.f32 %v6987, %v7012
      %v7031 = vadd.f32 %v6988, %v7012
      %v7032 = vadd.f32 %v6989, %v7012
      %v7033 = vadd.f32 %v6990, %v7012
      %v7034 = vadd.f32 %v6991, %v7012
      %v7035 = vadd.f32 %v6992, %v7012
      %v7036 = vadd.f32 %v6993, %v7012
      %v7037 = vadd.f32 %v6994, %v7012
      %v7038 = vadd.f32 %v6995, %v7012
      %v7039 = vadd.f32 %v6996, %v7012
      %v7040 = vadd.f32 %v6997, %v7012
      %v7041 = vadd.f32 %v6998, %v7012
      %v7042 = vadd.f32 %v6999, %v7012
      %v7043 = vadd.f32 %v7000, %v7012
      %v7044 = vadd.f32 %v7001, %v7012
      %v7045 = vadd.f32 %v7002, %v7012
      %v7046 = vadd.f32 %v7003, %v7012
      %v7047 = vadd.f32 %v7004, %v7012
      %v7048 = vadd.f32 %v7005, %v7012
      %v7049 = vadd.f32 %v7006, %v7012
      %v7050 = vadd.f32 %v7007, %v7012
      %v7051 = vpack.c.bf16 %v7014, %v7013
      %v7052 = vpack.c.bf16 %v7016, %v7015
      %v7053 = vpack.c.bf16 %v7018, %v7017
      %v7054 = vpack.c.bf16 %v7020, %v7019
      %v7055 = vpack.c.bf16 %v7022, %v7021
      %v7056 = vpack.c.bf16 %v7024, %v7023
      %v7057 = vpack.c.bf16 %v7026, %v7025
      %v7058 = vpack.c.bf16 %v7028, %v7027
      %v7059 = vpack.c.bf16 %v7030, %v7029
      %v7060 = vpack.c.bf16 %v7032, %v7031
      %v7061 = vpack.c.bf16 %v7034, %v7033
      %v7062 = vpack.c.bf16 %v7036, %v7035
      %v7063 = vpack.c.bf16 %v7038, %v7037
      %v7064 = vpack.c.bf16 %v7040, %v7039
      %v7065 = vpack.c.bf16 %v7042, %v7041
      %v7066 = vpack.c.bf16 %v7044, %v7043
      %v7067 = vpack.c.bf16 %v7046, %v7045
      %v7068 = vpack.c.bf16 %v7048, %v7047
      %v7069 = vpack.c.bf16 %v7050, %v7049
      %v7089 = vunpack.c.l.b16 %v7051
      %v7090 = vunpack.c.h.b16 %v7051
      %v7091 = vunpack.c.l.b16 %v7052
      %v7092 = vunpack.c.h.b16 %v7052
      %v7093 = vunpack.c.l.b16 %v7053
      %v7094 = vunpack.c.h.b16 %v7053
      %v7095 = vunpack.c.l.b16 %v7054
      %v7096 = vunpack.c.h.b16 %v7054
      %v7097 = vunpack.c.l.b16 %v7055
      %v7098 = vunpack.c.h.b16 %v7055
      %v7099 = vunpack.c.l.b16 %v7056
      %v7100 = vunpack.c.h.b16 %v7056
      %v7101 = vunpack.c.l.b16 %v7057
      %v7102 = vunpack.c.h.b16 %v7057
      %v7103 = vunpack.c.l.b16 %v7058
      %v7104 = vunpack.c.h.b16 %v7058
      %v7105 = vunpack.c.l.b16 %v7059
      %v7106 = vunpack.c.h.b16 %v7059
      %v7107 = vunpack.c.l.b16 %v7060
      %v7108 = vunpack.c.h.b16 %v7060
      %v7109 = vunpack.c.l.b16 %v7061
      %v7110 = vunpack.c.h.b16 %v7061
      %v7111 = vunpack.c.l.b16 %v7062
      %v7112 = vunpack.c.h.b16 %v7062
      %v7113 = vunpack.c.l.b16 %v7063
      %v7114 = vunpack.c.h.b16 %v7063
      %v7115 = vunpack.c.l.b16 %v7064
      %v7116 = vunpack.c.h.b16 %v7064
      %v7117 = vunpack.c.l.b16 %v7065
      %v7118 = vunpack.c.h.b16 %v7065
      %v7119 = vunpack.c.l.b16 %v7066
      %v7120 = vunpack.c.h.b16 %v7066
      %v7121 = vunpack.c.l.b16 %v7067
      %v7122 = vunpack.c.h.b16 %v7067
      %v7123 = vunpack.c.l.b16 %v7068
      %v7124 = vunpack.c.h.b16 %v7068
      %v7125 = vunpack.c.l.b16 %v7069
      %v7126 = vunpack.c.h.b16 %v7069
      %v7127 = vpack.c.b16 %v7089, %v7089
      %v7128 = vpack.c.b16 %v7090, %v7090
      %v7129 = vpack.c.b16 %v7091, %v7091
      %v7130 = vpack.c.b16 %v7092, %v7092
      %v7131 = vpack.c.b16 %v7093, %v7093
      %v7132 = vpack.c.b16 %v7094, %v7094
      %v7133 = vpack.c.b16 %v7095, %v7095
      %v7134 = vpack.c.b16 %v7096, %v7096
      %v7135 = vpack.c.b16 %v7097, %v7097
      %v7136 = vpack.c.b16 %v7098, %v7098
      %v7137 = vpack.c.b16 %v7099, %v7099
      %v7138 = vpack.c.b16 %v7100, %v7100
      %v7139 = vpack.c.b16 %v7101, %v7101
      %v7140 = vpack.c.b16 %v7102, %v7102
      %v7141 = vpack.c.b16 %v7103, %v7103
      %v7142 = vpack.c.b16 %v7104, %v7104
      %v7143 = vpack.c.b16 %v7105, %v7105
      %v7144 = vpack.c.b16 %v7106, %v7106
      %v7145 = vpack.c.b16 %v7107, %v7107
      %v7146 = vpack.c.b16 %v7108, %v7108
      %v7147 = vpack.c.b16 %v7109, %v7109
      %v7148 = vpack.c.b16 %v7110, %v7110
      %v7149 = vpack.c.b16 %v7111, %v7111
      %v7150 = vpack.c.b16 %v7112, %v7112
      %v7151 = vpack.c.b16 %v7113, %v7113
      %v7152 = vpack.c.b16 %v7114, %v7114
      %v7153 = vpack.c.b16 %v7115, %v7115
      %v7154 = vpack.c.b16 %v7116, %v7116
      %v7155 = vpack.c.b16 %v7117, %v7117
      %v7156 = vpack.c.b16 %v7118, %v7118
      %v7157 = vpack.c.b16 %v7119, %v7119
      %v7158 = vpack.c.b16 %v7120, %v7120
      %v7159 = vpack.c.b16 %v7121, %v7121
      %v7160 = vpack.c.b16 %v7122, %v7122
      %v7161 = vpack.c.b16 %v7123, %v7123
      %v7162 = vpack.c.b16 %v7124, %v7124
      %v7163 = vpack.c.b16 %v7125, %v7125
      %v7164 = vpack.c.b16 %v7126, %v7126
      %vm7203 = vcmask 60416
      %7204 = vst.msk [vmem:[%s170] sm:$0xf] %vm7203, %v7127
      %7205 = vst.msk [vmem:[%s170 + $0x4] sm:$0xf] %vm7203, %v7128
      %7206 = vst.msk [vmem:[%s170 + $0x8] sm:$0xf] %vm7203, %v7129
      %7207 = vst.msk [vmem:[%s170 + $0xc] sm:$0xf] %vm7203, %v7130
      %7208 = vst.msk [vmem:[%s170 + $0x10] sm:$0xf] %vm7203, %v7131
      %7209 = vst.msk [vmem:[%s170 + $0x14] sm:$0xf] %vm7203, %v7132
      %7210 = vst.msk [vmem:[%s170 + $0x18] sm:$0xf] %vm7203, %v7133
      %7211 = vst.msk [vmem:[%s170 + $0x1c] sm:$0xf] %vm7203, %v7134
      %7212 = vst.msk [vmem:[%s170 + $0x20] sm:$0xf] %vm7203, %v7135
      %7213 = vst.msk [vmem:[%s170 + $0x24] sm:$0xf] %vm7203, %v7136
      %7214 = vst.msk [vmem:[%s170 + $0x28] sm:$0xf] %vm7203, %v7137
      %7215 = vst.msk [vmem:[%s170 + $0x2c] sm:$0xf] %vm7203, %v7138
      %7216 = vst.msk [vmem:[%s170 + $0x30] sm:$0xf] %vm7203, %v7139
      %7217 = vst.msk [vmem:[%s170 + $0x34] sm:$0xf] %vm7203, %v7140
      %7218 = vst.msk [vmem:[%s170 + $0x38] sm:$0xf] %vm7203, %v7141
      %7219 = vst.msk [vmem:[%s170 + $0x3c] sm:$0xf] %vm7203, %v7142
      %7220 = vst.msk [vmem:[%s170 + $0x40] sm:$0xf] %vm7203, %v7143
      %7221 = vst.msk [vmem:[%s170 + $0x44] sm:$0xf] %vm7203, %v7144
      %7222 = vst.msk [vmem:[%s170 + $0x48] sm:$0xf] %vm7203, %v7145
      %7223 = vst.msk [vmem:[%s170 + $0x4c] sm:$0xf] %vm7203, %v7146
      %7224 = vst.msk [vmem:[%s170 + $0x50] sm:$0xf] %vm7203, %v7147
      %7225 = vst.msk [vmem:[%s170 + $0x54] sm:$0xf] %vm7203, %v7148
      %7226 = vst.msk [vmem:[%s170 + $0x58] sm:$0xf] %vm7203, %v7149
      %7227 = vst.msk [vmem:[%s170 + $0x5c] sm:$0xf] %vm7203, %v7150
      %7228 = vst.msk [vmem:[%s170 + $0x60] sm:$0xf] %vm7203, %v7151
      %7229 = vst.msk [vmem:[%s170 + $0x64] sm:$0xf] %vm7203, %v7152
      %7230 = vst.msk [vmem:[%s170 + $0x68] sm:$0xf] %vm7203, %v7153
      %7231 = vst.msk [vmem:[%s170 + $0x6c] sm:$0xf] %vm7203, %v7154
      %7232 = vst.msk [vmem:[%s170 + $0x70] sm:$0xf] %vm7203, %v7155
      %7233 = vst.msk [vmem:[%s170 + $0x74] sm:$0xf] %vm7203, %v7156
      %7234 = vst.msk [vmem:[%s170 + $0x78] sm:$0xf] %vm7203, %v7157
      %7235 = vst.msk [vmem:[%s170 + $0x7c] sm:$0xf] %vm7203, %v7158
      %7236 = vst.msk [vmem:[%s170 + $0x80] sm:$0xf] %vm7203, %v7159
      %7237 = vst.msk [vmem:[%s170 + $0x84] sm:$0xf] %vm7203, %v7160
      %7238 = vst.msk [vmem:[%s170 + $0x88] sm:$0xf] %vm7203, %v7161
      %7239 = vst.msk [vmem:[%s170 + $0x8c] sm:$0xf] %vm7203, %v7162
      %7240 = vst.msk [vmem:[%s170 + $0x90] sm:$0xf] %vm7203, %v7163
      %7241 = vst.msk [vmem:[%s170 + $0x94] sm:$0xf] %vm7203, %v7164
      %p7242 = scmp.lt.s32.totalorder %s14, 1
      %s7243 = scalar_select %p7242, %s14, 1
      %s7244 = smul.addr %s7243, 38
      %s7245 = smul.addr %s7244, 4
      %s7246 = scalar_lea.vmem %s3, %s7245
      // Predicated region
      $region33: #{encoder_forward.4} parent=31 // pred_check
        %p7247 = pneg %p100
      $region34: #{encoder_forward.4} parent=31 // pred_check_branch
        %7249 = sbr.rel (%p7247) target = $region36
      $region35: #{encoder_forward.4} parent=31 // pred_region
        _
      $region36: #{encoder_forward.4} parent=31 // pred_fallthru
        _
    $region32: #{encoder_forward.4} parent=5 // pred_fallthru
      _
    %p7250 = scmp.le.s32.totalorder 2, %s9
    // Predicated region
    $region37: #{encoder_forward.4} parent=5 // pred_check
      %p7251 = pneg %p7250
    $region38: #{encoder_forward.4} parent=5 // pred_check_branch
      %7253 = sbr.rel (%p7251) target = $region40
    $region39: #{encoder_forward.4} parent=5 // pred_region
      %s7254 = ssub.s32 %s9, 2
      // Predicated region
      $region41: #{encoder_forward.4} parent=39 // pred_check
        %p7255 = pneg %p106
      $region42: #{encoder_forward.4} parent=39 // pred_check_branch
        %7257 = sbr.rel (%p7255) target = $region44
      $region43: #{encoder_forward.4} parent=39 // pred_region
        %p7258 = scmp.lt.s32.totalorder %s15, 1
        %s7259 = scalar_select %p7258, %s15, 1
        %s7260 = smul.addr %s7259, 38
        %s7261 = smul.addr %s7260, 4
        %s7262 = scalar_lea.vmem %s3, %s7261
      $region44: #{encoder_forward.4} parent=39 // pred_fallthru
        _
    $region40: #{encoder_forward.4} parent=5 // pred_fallthru
      _
  $region6: #{encoder_forward.4} parent=0 // loop_footer
    %s13 = sadd.s32 1, %s9
  $region7: #{encoder_forward.4} parent=0 // loop_footer_branch
    %8 = sbr.rel target = $region3
  $region8: #{encoder_forward.4} parent=0 // loop_exit
    _

// kernel: encoder_forward.5
$region0: #{encoder_forward.5}
  #allocation0 [shape = 'u32[]', space=smem, size = 0x4, offset = 0x4, fixed_abs, tag = 'smem constant byte address 0x4 - core index']
  #allocation1 [shape = 'u32[144,128]{1,0:T(1,128)}', space=vmem, size = 0x12000, scoped, tag = 'internal scratch']
  %s0 = inlined_call_operand.vmem [shape: bf16[2,90,32], index: 0, kind: input, shape index: {}]
  %s1 = inlined_call_operand.vmem [shape: bf16[4,32,16], index: 1, kind: input, shape index: {}]
  %s2 = inlined_call_operand.vmem [shape: f32[3,16], index: 2, kind: input, shape index: {}]
  %s3 = inlined_call_operand.vmem [shape: bf16[2,72,16], index: 3, kind: output, shape index: {}]
  %s4 = sld [smem:[#allocation0]]
  $region45: #{encoder_forward.5} parent=0
    _
  %s6 = ssub.s32 1, %s4
  %s7 = scalar_select 0, %s6, %s4
  loop: start=0, step=1, limit=4
  $region2: #{encoder_forward.5} parent=0 // loop_pre_header
    _
  $region3: #{encoder_forward.5} parent=0 // loop_header
    %s9 = sphi 0, %s13
    %p10 = scmp.ge.s32.totalorder %s9, 4
    %s19 = sphi 0, %s21
    %s22 = sphi 0, %s19
    %s23 = sphi 0, %s22
    %s39 = sphi 0, %s23
    %s43 = sphi 0, %s43
    %s45 = sphi 0, %s43
    %s46 = sphi 0, %s45
    %s60 = sphi 0, %s46
    %s64 = sphi 0, %s64
    %s66 = sphi 0, %s64
    %s67 = sphi 0, %s66
    %s81 = sphi 0, %s67
    %s87 = sphi 0, %s89
    %s90 = sphi 0, %s87
    %s91 = sphi 0, %s90
    %s107 = sphi 0, %s91
  $region4: #{encoder_forward.5} parent=0 // loop_header_branch
    %12 = sbr.rel (%p10) target = $region8
  $region5: #{encoder_forward.5} parent=0 // loop_body
    %s14 = ssub.s32 %s9, 1
    %s15 = ssub.s32 %s9, 2
    %s16 = sadd.s32 %s9, 1
    %s17 = ssub.s32 %s9, %s16
    %p18 = scmp.eq.s32.totalorder %s17, 0
    %s20 = sadd.s32 %s19, 1
    %s21 = scalar_select %p18, %s19, %s20
    %p24 = pneg %p18
    %p25 = scmp.eq.s32.totalorder %s9, 1
    %p26 = por %p24, %p25
    %p27 = scmp.ne.s32.totalorder %s19, %s22
    %p28 = scmp.eq.s32.totalorder %s9, 0
    %p29 = por %p27, %p28
    %p30 = scmp.ne.s32.totalorder %s19, %s22
    %p31 = scmp.eq.s32.totalorder %s14, 1
    %p32 = por %p30, %p31
    %p33 = scmp.ne.s32.totalorder %s22, %s23
    %p34 = scmp.eq.s32.totalorder %s14, 0
    %p35 = por %p33, %p34
    %p36 = scmp.ne.s32.totalorder %s22, %s23
    %p37 = scmp.eq.s32.totalorder %s15, 1
    %p38 = por %p36, %p37
    %p40 = scmp.ne.s32.totalorder %s23, %s39
    %p41 = scmp.eq.s32.totalorder %s15, 0
    %p42 = por %p40, %p41
    %s44 = sadd.s32 %s43, 1
    %p47 = scmp.eq.s32.totalorder %s9, 1
    %p48 = scmp.ne.s32.totalorder %s43, %s45
    %p49 = scmp.eq.s32.totalorder %s9, 0
    %p50 = por %p48, %p49
    %p51 = scmp.ne.s32.totalorder %s43, %s45
    %p52 = scmp.eq.s32.totalorder %s14, 1
    %p53 = por %p51, %p52
    %p54 = scmp.ne.s32.totalorder %s45, %s46
    %p55 = scmp.eq.s32.totalorder %s14, 0
    %p56 = por %p54, %p55
    %p57 = scmp.ne.s32.totalorder %s45, %s46
    %p58 = scmp.eq.s32.totalorder %s15, 1
    %p59 = por %p57, %p58
    %p61 = scmp.ne.s32.totalorder %s46, %s60
    %p62 = scmp.eq.s32.totalorder %s15, 0
    %p63 = por %p61, %p62
    %s65 = sadd.s32 %s64, 1
    %p68 = scmp.eq.s32.totalorder %s9, 1
    %p69 = scmp.ne.s32.totalorder %s64, %s66
    %p70 = scmp.eq.s32.totalorder %s9, 0
    %p71 = por %p69, %p70
    %p72 = scmp.ne.s32.totalorder %s64, %s66
    %p73 = scmp.eq.s32.totalorder %s14, 1
    %p74 = por %p72, %p73
    %p75 = scmp.ne.s32.totalorder %s66, %s67
    %p76 = scmp.eq.s32.totalorder %s14, 0
    %p77 = por %p75, %p76
    %p78 = scmp.ne.s32.totalorder %s66, %s67
    %p79 = scmp.eq.s32.totalorder %s15, 1
    %p80 = por %p78, %p79
    %p82 = scmp.ne.s32.totalorder %s67, %s81
    %p83 = scmp.eq.s32.totalorder %s15, 0
    %p84 = por %p82, %p83
    %s85 = ssub.s32 %s9, %s16
    %p86 = scmp.eq.s32.totalorder %s85, 0
    %s88 = sadd.s32 %s87, 1
    %s89 = scalar_select %p86, %s87, %s88
    %p92 = pneg %p86
    %p93 = scmp.eq.s32.totalorder %s9, 1
    %p94 = por %p92, %p93
    %p95 = scmp.ne.s32.totalorder %s87, %s90
    %p96 = scmp.eq.s32.totalorder %s9, 0
    %p97 = por %p95, %p96
    %p98 = scmp.ne.s32.totalorder %s87, %s90
    %p99 = scmp.eq.s32.totalorder %s14, 1
    %p100 = por %p98, %p99
    %p101 = scmp.ne.s32.totalorder %s90, %s91
    %p102 = scmp.eq.s32.totalorder %s14, 0
    %p103 = por %p101, %p102
    %p104 = scmp.ne.s32.totalorder %s90, %s91
    %p105 = scmp.eq.s32.totalorder %s15, 1
    %p106 = por %p104, %p105
    %p108 = scmp.ne.s32.totalorder %s91, %s107
    %p109 = scmp.eq.s32.totalorder %s15, 0
    %p110 = por %p108, %p109
    %p111 = scmp.le.s32.totalorder 1, %s9
    %p112 = scmp.lt.s32.totalorder %s9, 3
    %p113 = pnand %p111, %p112
    %p114 = pneg %p113
    // Predicated region
    $region9: #{encoder_forward.5} parent=5 // pred_check
      _
    $region10: #{encoder_forward.5} parent=5 // pred_check_branch
      %116 = sbr.rel (%p113) target = $region12
    $region11: #{encoder_forward.5} parent=5 // pred_region
      %s117 = ssub.s32 %s9, 1
      // Predicated region
      $region13: #{encoder_forward.5} parent=11 // pred_check
        %p118 = pneg %p56
      $region14: #{encoder_forward.5} parent=11 // pred_check_branch
        %120 = sbr.rel (%p118) target = $region16
      $region15: #{encoder_forward.5} parent=11 // pred_region
        _
      $region16: #{encoder_forward.5} parent=11 // pred_fallthru
        _
      // Predicated region
      $region17: #{encoder_forward.5} parent=11 // pred_check
        %p121 = pneg %p77
      $region18: #{encoder_forward.5} parent=11 // pred_check_branch
        %123 = sbr.rel (%p121) target = $region20
      $region19: #{encoder_forward.5} parent=11 // pred_region
        _
      $region20: #{encoder_forward.5} parent=11 // pred_fallthru
        _
    $region12: #{encoder_forward.5} parent=5 // pred_fallthru
      _
    %p124 = scmp.lt.s32.totalorder %s9, 2
    // Predicated region
    $region21: #{encoder_forward.5} parent=5 // pred_check
      %p125 = pneg %p124
    $region22: #{encoder_forward.5} parent=5 // pred_check_branch
      %127 = sbr.rel (%p125) target = $region24
    $region23: #{encoder_forward.5} parent=5 // pred_region
      // Predicated region
      $region25: #{encoder_forward.5} parent=23 // pred_check
        %p128 = pneg %p29
      $region26: #{encoder_forward.5} parent=23 // pred_check_branch
        %130 = sbr.rel (%p128) target = $region28
      $region27: #{encoder_forward.5} parent=23 // pred_region
        %p131 = scmp.lt.s32.totalorder %s9, 1
        %s132 = scalar_select %p131, %s9, 1
        %s133 = smul.addr %s132, 12
        %s134 = smul.addr %s133, 4
        %s135 = scalar_lea.vmem %s0, %s134
      $region28: #{encoder_forward.5} parent=23 // pred_fallthru
        _
    $region24: #{encoder_forward.5} parent=5 // pred_fallthru
      _
    %p136 = scmp.le.s32.totalorder 1, %s9
    %p137 = scmp.lt.s32.totalorder %s9, 3
    %p138 = pnand %p136, %p137
    %p139 = pneg %p138
    // Predicated region
    $region29: #{encoder_forward.5} parent=5 // pred_check
      _
    $region30: #{encoder_forward.5} parent=5 // pred_check_branch
      %141 = sbr.rel (%p138) target = $region32
    $region31: #{encoder_forward.5} parent=5 // pred_region
      %s142 = ssub.s32 %s9, 1
      %p143 = scmp.lt.s32.totalorder %s14, 1
      %s144 = scalar_select %p143, %s14, 1
      %s145 = smul.addr %s144, 12
      %s146 = smul.addr %s145, 4
      %s147 = scalar_lea.vmem %s0, %s146
      %p148 = pneg %p35
      %p149 = pneg %p32
      %p150 = pneg %p56
      %p151 = pneg %p53
      %p152 = pneg %p77
      %p153 = pneg %p74
      %p154 = pneg %p103
      %p155 = pneg %p100
      %p156 = scmp.lt.s32.totalorder %s14, 1
      %s157 = scalar_select %p156, %s14, 1
      %s158 = smul.addr %s157, 9
      %s159 = smul.addr %s158, 4
      %s160 = scalar_lea.vmem %s3, %s159
      %p161 = scmp.lt.s32.totalorder %s14, 1
      %s162 = scalar_select %p161, %s14, 1
      %s163 = smul.addr %s162, 12
      %s164 = smul.addr %s163, 4
      %s165 = scalar_lea.vmem %s0, %s164
      %p166 = scmp.lt.s32.totalorder %s14, 1
      %s167 = scalar_select %p166, %s14, 1
      %s168 = smul.addr %s167, 9
      %s169 = smul.addr %s168, 4
      %s170 = scalar_lea.vmem %s3, %s169
      %v172 = vld [vmem:[%s165] sm:$0xf]
      %v173 = vld [vmem:[%s165 + $0x4] sm:$0xf]
      %v174 = vld [vmem:[%s165 + $0x8] sm:$0xf]
      %v175 = vld [vmem:[%s165 + $0xc] sm:$0xf]
      %v176 = vld [vmem:[%s165 + $0x10] sm:$0xf]
      %v177 = vld [vmem:[%s165 + $0x14] sm:$0xf]
      %v178 = vld [vmem:[%s165 + $0x18] sm:$0xf]
      %v179 = vld [vmem:[%s165 + $0x1c] sm:$0xf]
      %v180 = vld [vmem:[%s165 + $0x20] sm:$0xf]
      %v181 = vld [vmem:[%s1] sm:$0xf]
      %v182 = vld [vmem:[%s1 + $0x4] sm:$0xf]
      %v183 = vld [vmem:[%s1 + $0x8] sm:$0xf]
      %v184 = vld [vmem:[%s1 + $0xc] sm:$0xf]
      %v185 = vld [vmem:[%s165 + $0x24] sm:$0x1]
      %s186 = scalar_lea.vmem %s1, 16
      %v187 = vld [vmem:[%s186] sm:$0xf]
      %v188 = vld [vmem:[%s186 + $0x4] sm:$0xf]
      %v189 = vld [vmem:[%s186 + $0x8] sm:$0xf]
      %v190 = vld [vmem:[%s186 + $0xc] sm:$0xf]
      %v201 = vunpack.c.l.b16 %v172
      %v202 = vunpack.c.l.b16 %v173
      %v203 = vunpack.c.l.b16 %v174
      %v204 = vunpack.c.l.b16 %v175
      %v205 = vunpack.c.l.b16 %v176
      %v206 = vunpack.c.l.b16 %v177
      %v207 = vunpack.c.l.b16 %v178
      %v208 = vunpack.c.l.b16 %v179
      %v209 = vunpack.c.l.b16 %v180
      %v210 = vunpack.c.l.b16 %v185
      %v211 = vpack.c.b16 %v202, %v201
      %v212 = vpack.c.b16 %v204, %v203
      %v213 = vpack.c.b16 %v206, %v205
      %v214 = vpack.c.b16 %v208, %v207
      %v215 = vpack.c.b16 %v210, %v209
      %vm216 = vsmask.f32 7424
      %v218 = vshrl.u32 %v211, 16
      %v220 = vshll.u32 %v211, 16
      %v222 = vrot.slane %v220, 1
      %v223 = vor.u32 %v218, %v222
      %v225 = vshll.u32 %v212, 16
      %v227 = vrot.slane %v225, 1
      %v228 = vsel %vm216, %v223, %v227
      %v229 = vshrl.u32 %v212, 16
      %v231 = vor.u32 %v229, %v227
      %v233 = vshll.u32 %v213, 16
      %v235 = vrot.slane %v233, 1
      %v236 = vsel %vm216, %v231, %v235
      %v237 = vshrl.u32 %v213, 16
      %v239 = vor.u32 %v237, %v235
      %v241 = vshll.u32 %v214, 16
      %v243 = vrot.slane %v241, 1
      %v244 = vsel %vm216, %v239, %v243
      %v245 = vshrl.u32 %v214, 16
      %v247 = vor.u32 %v245, %v243
      %v249 = vshll.u32 %v215, 16
      %v251 = vrot.slane %v249, 1
      %v252 = vsel %vm216, %v247, %v251
      %v253 = vshrl.u32 %v215, 16
      %v255 = vor.u32 %v253, %v251
      %v260 = vunpack.c.l.b16 %v187
      %v261 = vunpack.c.l.b16 %v188
      %v262 = vunpack.c.l.b16 %v189
      %v263 = vunpack.c.l.b16 %v190
      %v264 = vpack.c.b16 %v261, %v260
      %v265 = vpack.c.b16 %v263, %v262
      %vm268 = vcmask 261120
      %v270 = vsel %vm268, %v228, 0
      %v273 = vsel %vm268, %v236, 0
      %v276 = vsel %vm268, %v244, 0
      %v279 = vsel %vm268, %v252, 0
      %v282 = vsel %vm268, %v255, 0
      %284 = vmatprep.subr.bf16.mxu0 0
      %285 = vmatpush1.bf16.msra.mxu0 %v264
      %286 = vmatprep.subr.bf16.mxu0 0
      %287 = vmatpush1.bf16.msra.mxu0 %v265
      %288 = vmatprep.subr.bf16.mxu0 0
      %289 = vmatpush1.bf16.msra.mxu0 0
      %290 = vmatprep.subr.bf16.mxu0 0
      %291 = vmatpush1.bf16.msra.mxu0 0
      %292 = vmatprep.subr.bf16.mxu0 0
      %293 = vmatpush1.bf16.msra.mxu0 0
      %294 = vmatprep.subr.bf16.mxu0 0
      %295 = vmatpush1.bf16.msra.mxu0 0
      %296 = vmatprep.subr.bf16.mxu0 0
      %297 = vmatpush1.bf16.msra.mxu0 0
      %298 = vmatprep.subr.bf16.mxu0 0
      %299 = vmatpush1.bf16.msra.mxu0 0
      %300 = vmatprep.subr.bf16.mxu0 0
      %301 = vmatpush1.bf16.msra.mxu0 0
      %302 = vmatprep.subr.bf16.mxu0 0
      %303 = vmatpush1.bf16.msra.mxu0 0
      %304 = vmatprep.subr.bf16.mxu0 0
      %305 = vmatpush1.bf16.msra.mxu0 0
      %306 = vmatprep.subr.bf16.mxu0 0
      %307 = vmatpush1.bf16.msra.mxu0 0
      %308 = vmatprep.subr.bf16.mxu0 0
      %309 = vmatpush1.bf16.msra.mxu0 0
      %310 = vmatprep.subr.bf16.mxu0 0
      %311 = vmatpush1.bf16.msra.mxu0 0
      %312 = vmatprep.subr.bf16.mxu0 0
      %313 = vmatpush1.bf16.msra.mxu0 0
      %314 = vmatprep.subr.bf16.mxu0 0
      %315 = vmatpush1.bf16.msra.mxu0 0
      %316 = vmatprep.mubr.bf16.mxu0 0
      %317 = vmatmul.mubr.bf16.gmra.mrb[0].mxu0 %v270
      %v318 = vpop.f32.mrb[0].mxu0
      %v319 = vadd.f32 0.0, %v318
      %v320 = vpop.f32.mrb[0].mxu0
      %v321 = vpop.f32.mrb[0].mxu0
      %v322 = vadd.f32 0.0, %v321
      %v323 = vpop.f32.mrb[0].mxu0
      %324 = vmatprep.mubr.bf16.mxu0 0
      %325 = vmatmul.mubr.bf16.gmra.mrb[0].mxu0 %v273
      %v326 = vpop.f32.mrb[0].mxu0
      %v327 = vadd.f32 0.0, %v326
      %v328 = vpop.f32.mrb[0].mxu0
      %v329 = vpop.f32.mrb[0].mxu0
      %v330 = vadd.f32 0.0, %v329
      %v331 = vpop.f32.mrb[0].mxu0
      %332 = vmatprep.mubr.bf16.mxu0 0
      %333 = vmatmul.mubr.bf16.gmra.mrb[0].mxu0 %v276
      %v334 = vpop.f32.mrb[0].mxu0
      %v335 = vadd.f32 0.0, %v334
      %v336 = vpop.f32.mrb[0].mxu0
      %v337 = vpop.f32.mrb[0].mxu0
      %v338 = vadd.f32 0.0, %v337
      %v339 = vpop.f32.mrb[0].mxu0
      %340 = vmatprep.mubr.bf16.mxu0 0
      %341 = vmatmul.mubr.bf16.gmra.mrb[0].mxu0 %v279
      %v342 = vpop.f32.mrb[0].mxu0
      %v343 = vadd.f32 0.0, %v342
      %v344 = vpop.f32.mrb[0].mxu0
      %v345 = vpop.f32.mrb[0].mxu0
      %v346 = vadd.f32 0.0, %v345
      %v347 = vpop.f32.mrb[0].mxu0
      %348 = vmatprep.mubr.bf16.mxu0 0
      %349 = vmatmul.mubr.bf16.gmra.mrb[0].mxu0 %v282
      %v350 = vpop.f32.mrb[0].mxu0
      %v351 = vadd.f32 0.0, %v350
      %v352 = vpop.f32.mrb[0].mxu0
      %v353 = vpop.f32.mrb[0].mxu0
      %v354 = vpop.f32.mrb[0].mxu0
      %355 = vdwg.mxu0
      %v356 = vpack.c.b16 %v209, %v209
      %v361 = vunpack.c.l.b16 %v181
      %v362 = vunpack.c.l.b16 %v182
      %v363 = vunpack.c.l.b16 %v183
      %v364 = vunpack.c.l.b16 %v184
      %v365 = vpack.c.b16 %v362, %v361
      %v366 = vpack.c.b16 %v364, %v363
      %v369 = vsel %vm268, %v211, 0
      %v371 = vsel %vm268, %v212, 0
      %v373 = vsel %vm268, %v213, 0
      %v375 = vsel %vm268, %v214, 0
      %v378 = vsel %vm268, %v356, 0
      %380 = vmatprep.subr.bf16.mxu0 0
      %381 = vmatpush1.bf16.msra.mxu0 %v365
      %382 = vmatprep.subr.bf16.mxu0 0
      %383 = vmatpush1.bf16.msra.mxu0 %v366
      %384 = vmatprep.subr.bf16.mxu0 0
      %385 = vmatpush1.bf16.msra.mxu0 0
      %386 = vmatprep.subr.bf16.mxu0 0
      %387 = vmatpush1.bf16.msra.mxu0 0
      %388 = vmatprep.subr.bf16.mxu0 0
      %389 = vmatpush1.bf16.msra.mxu0 0
      %390 = vmatprep.subr.bf16.mxu0 0
      %391 = vmatpush1.bf16.msra.mxu0 0
      %392 = vmatprep.subr.bf16.mxu0 0
      %393 = vmatpush1.bf16.msra.mxu0 0
      %394 = vmatprep.subr.bf16.mxu0 0
      %395 = vmatpush1.bf16.msra.mxu0 0
      %396 = vmatprep.subr.bf16.mxu0 0
      %397 = vmatpush1.bf16.msra.mxu0 0
      %398 = vmatprep.subr.bf16.mxu0 0
      %399 = vmatpush1.bf16.msra.mxu0 0
      %400 = vmatprep.subr.bf16.mxu0 0
      %401 = vmatpush1.bf16.msra.mxu0 0
      %402 = vmatprep.subr.bf16.mxu0 0
      %403 = vmatpush1.bf16.msra.mxu0 0
      %404 = vmatprep.subr.bf16.mxu0 0
      %405 = vmatpush1.bf16.msra.mxu0 0
      %406 = vmatprep.subr.bf16.mxu0 0
      %407 = vmatpush1.bf16.msra.mxu0 0
      %408 = vmatprep.subr.bf16.mxu0 0
      %409 = vmatpush1.bf16.msra.mxu0 0
      %410 = vmatprep.subr.bf16.mxu0 0
      %411 = vmatpush1.bf16.msra.mxu0 0
      %412 = vmatprep.mubr.bf16.mxu0 0
      %413 = vmatmul.mubr.bf16.gmra.mrb[0].mxu0 %v369
      %v414 = vpop.f32.mrb[0].mxu0
      %v415 = vadd.f32 %v319, %v414
      %v416 = vpop.f32.mrb[0].mxu0
      %v417 = vpop.f32.mrb[0].mxu0
      %v418 = vadd.f32 %v322, %v417
      %v419 = vpop.f32.mrb[0].mxu0
      %420 = vmatprep.mubr.bf16.mxu0 0
      %421 = vmatmul.mubr.bf16.gmra.mrb[0].mxu0 %v371
      %v422 = vpop.f32.mrb[0].mxu0
      %v423 = vadd.f32 %v327, %v422
      %v424 = vpop.f32.mrb[0].mxu0
      %v425 = vpop.f32.mrb[0].mxu0
      %v426 = vadd.f32 %v330, %v425
      %v427 = vpop.f32.mrb[0].mxu0
      %428 = vmatprep.mubr.bf16.mxu0 0
      %429 = vmatmul.mubr.bf16.gmra.mrb[0].mxu0 %v373
      %v430 = vpop.f32.mrb[0].mxu0
      %v431 = vadd.f32 %v335, %v430
      %v432 = vpop.f32.mrb[0].mxu0
      %v433 = vpop.f32.mrb[0].mxu0
      %v434 = vadd.f32 %v338, %v433
      %v435 = vpop.f32.mrb[0].mxu0
      %436 = vmatprep.mubr.bf16.mxu0 0
      %437 = vmatmul.mubr.bf16.gmra.mrb[0].mxu0 %v375
      %v438 = vpop.f32.mrb[0].mxu0
      %v439 = vadd.f32 %v343, %v438
      %v440 = vpop.f32.mrb[0].mxu0
      %v441 = vpop.f32.mrb[0].mxu0
      %v442 = vadd.f32 %v346, %v441
      %v443 = vpop.f32.mrb[0].mxu0
      %444 = vmatprep.mubr.bf16.mxu0 0
      %445 = vmatmul.mubr.bf16.gmra.mrb[0].mxu0 %v378
      %v446 = vpop.f32.mrb[0].mxu0
      %v447 = vadd.f32 %v351, %v446
      %v448 = vpop.f32.mrb[0].mxu0
      %v449 = vpop.f32.mrb[0].mxu0
      %v450 = vpop.f32.mrb[0].mxu0
      %451 = vdwg.mxu0
      %v452 = vld [vmem:[%s165 + $0x4] sm:$0xf]
      %v453 = vld [vmem:[%s165 + $0x8] sm:$0xf]
      %v454 = vld [vmem:[%s165 + $0xc] sm:$0xf]
      %v455 = vld [vmem:[%s165 + $0x10] sm:$0xf]
      %v456 = vld [vmem:[%s165 + $0x14] sm:$0xf]
      %v457 = vld [vmem:[%s165 + $0x18] sm:$0xf]
      %v458 = vld [vmem:[%s165 + $0x1c] sm:$0xf]
      %v459 = vld [vmem:[%s165 + $0x20] sm:$0xf]
      %v460 = vld [vmem:[%s165 + $0x24] sm:$0xf]
      %v461 = vld [vmem:[%s165 + $0x28] sm:$0x1]
      %s462 = scalar_lea.vmem %s1, 32
      %v463 = vld [vmem:[%s462] sm:$0xf]
      %v464 = vld [vmem:[%s462 + $0x4] sm:$0xf]
      %v465 = vld [vmem:[%s462 + $0x8] sm:$0xf]
      %v466 = vld [vmem:[%s462 + $0xc] sm:$0xf]
      %v477 = vunpack.c.l.b16 %v452
      %v478 = vunpack.c.l.b16 %v453
      %v479 = vunpack.c.l.b16 %v454
      %v480 = vunpack.c.l.b16 %v455
      %v481 = vunpack.c.l.b16 %v456
      %v482 = vunpack.c.l.b16 %v457
      %v483 = vunpack.c.l.b16 %v458
      %v484 = vunpack.c.l.b16 %v459
      %v485 = vunpack.c.l.b16 %v460
      %v486 = vunpack.c.l.b16 %v461
      %v487 = vpack.c.b16 %v478, %v477
      %v488 = vpack.c.b16 %v480, %v479
      %v489 = vpack.c.b16 %v482, %v481
      %v490 = vpack.c.b16 %v484, %v483
      %v491 = vpack.c.b16 %v486, %v485
      %v493 = vshrl.u32 %v487, 16
      %v495 = vshll.u32 %v487, 16
      %v497 = vrot.slane %v495, 1
      %v498 = vor.u32 %v493, %v497
      %v500 = vshll.u32 %v488, 16
      %v502 = vrot.slane %v500, 1
      %v503 = vsel %vm216, %v498, %v502
      %v504 = vshrl.u32 %v488, 16
      %v506 = vor.u32 %v504, %v502
      %v508 = vshll.u32 %v489, 16
      %v510 = vrot.slane %v508, 1
      %v511 = vsel %vm216, %v506, %v510
      %v512 = vshrl.u32 %v489, 16
      %v514 = vor.u32 %v512, %v510
      %v516 = vshll.u32 %v490, 16
      %v518 = vrot.slane %v516, 1
      %v519 = vsel %vm216, %v514, %v518
      %v520 = vshrl.u32 %v490, 16
      %v522 = vor.u32 %v520, %v518
      %v524 = vshll.u32 %v491, 16
      %v526 = vrot.slane %v524, 1
      %v527 = vsel %vm216, %v522, %v526
      %v528 = vshrl.u32 %v491, 16
      %v530 = vor.u32 %v528, %v526
      %v535 = vunpack.c.l.b16 %v463
      %v536 = vunpack.c.l.b16 %v464
      %v537 = vunpack.c.l.b16 %v465
      %v538 = vunpack.c.l.b16 %v466
      %v539 = vpack.c.b16 %v536, %v535
      %v540 = vpack.c.b16 %v538, %v537
      %v544 = vsel %vm268, %v503, 0
      %v547 = vsel %vm268, %v511, 0
      %v550 = vsel %vm268, %v519, 0
      %v553 = vsel %vm268, %v527, 0
      %v556 = vsel %vm268, %v530, 0
      %558 = vmatprep.subr.bf16.mxu0 0
      %559 = vmatpush1.bf16.msra.mxu0 %v539
      %560 = vmatprep.subr.bf16.mxu0 0
      %561 = vmatpush1.bf16.msra.mxu0 %v540
      %562 = vmatprep.subr.bf16.mxu0 0
      %563 = vmatpush1.bf16.msra.mxu0 0
      %564 = vmatprep.subr.bf16.mxu0 0
      %565 = vmatpush1.bf16.msra.mxu0 0
      %566 = vmatprep.subr.bf16.mxu0 0
      %567 = vmatpush1.bf16.msra.mxu0 0
      %568 = vmatprep.subr.bf16.mxu0 0
      %569 = vmatpush1.bf16.msra.mxu0 0
      %570 = vmatprep.subr.bf16.mxu0 0
      %571 = vmatpush1.bf16.msra.mxu0 0
      %572 = vmatprep.subr.bf16.mxu0 0
      %573 = vmatpush1.bf16.msra.mxu0 0
      %574 = vmatprep.subr.bf16.mxu0 0
      %575 = vmatpush1.bf16.msra.mxu0 0
      %576 = vmatprep.subr.bf16.mxu0 0
      %577 = vmatpush1.bf16.msra.mxu0 0
      %578 = vmatprep.subr.bf16.mxu0 0
      %579 = vmatpush1.bf16.msra.mxu0 0
      %580 = vmatprep.subr.bf16.mxu0 0
      %581 = vmatpush1.bf16.msra.mxu0 0
      %582 = vmatprep.subr.bf16.mxu0 0
      %583 = vmatpush1.bf16.msra.mxu0 0
      %584 = vmatprep.subr.bf16.mxu0 0
      %585 = vmatpush1.bf16.msra.mxu0 0
      %586 = vmatprep.subr.bf16.mxu0 0
      %587 = vmatpush1.bf16.msra.mxu0 0
      %588 = vmatprep.subr.bf16.mxu0 0
      %589 = vmatpush1.bf16.msra.mxu0 0
      %590 = vmatprep.mubr.bf16.mxu0 0
      %591 = vmatmul.mubr.bf16.gmra.mrb[0].mxu0 %v544
      %v592 = vpop.f32.mrb[0].mxu0
      %v593 = vadd.f32 0.0, %v592
      %v594 = vpop.f32.mrb[0].mxu0
      %v595 = vpop.f32.mrb[0].mxu0
      %v596 = vadd.f32 0.0, %v595
      %v597 = vpop.f32.mrb[0].mxu0
      %598 = vmatprep.mubr.bf16.mxu0 0
      %599 = vmatmul.mubr.bf16.gmra.mrb[0].mxu0 %v547
      %v600 = vpop.f32.mrb[0].mxu0
      %v601 = vadd.f32 0.0, %v600
      %v602 = vpop.f32.mrb[0].mxu0
      %v603 = vpop.f32.mrb[0].mxu0
      %v604 = vadd.f32 0.0, %v603
      %v605 = vpop.f32.mrb[0].mxu0
      %606 = vmatprep.mubr.bf16.mxu0 0
      %607 = vmatmul.mubr.bf16.gmra.mrb[0].mxu0 %v550
      %v608 = vpop.f32.mrb[0].mxu0
      %v609 = vadd.f32 0.0, %v608
      %v610 = vpop.f32.mrb[0].mxu0
      %v611 = vpop.f32.mrb[0].mxu0
      %v612 = vadd.f32 0.0, %v611
      %v613 = vpop.f32.mrb[0].mxu0
      %614 = vmatprep.mubr.bf16.mxu0 0
      %615 = vmatmul.mubr.bf16.gmra.mrb[0].mxu0 %v553
      %v616 = vpop.f32.mrb[0].mxu0
      %v617 = vadd.f32 0.0, %v616
      %v618 = vpop.f32.mrb[0].mxu0
      %v619 = vpop.f32.mrb[0].mxu0
      %v620 = vadd.f32 0.0, %v619
      %v621 = vpop.f32.mrb[0].mxu0
      %622 = vmatprep.mubr.bf16.mxu0 0
      %623 = vmatmul.mubr.bf16.gmra.mrb[0].mxu0 %v556
      %v624 = vpop.f32.mrb[0].mxu0
      %v625 = vadd.f32 0.0, %v624
      %v626 = vpop.f32.mrb[0].mxu0
      %v627 = vpop.f32.mrb[0].mxu0
      %v628 = vpop.f32.mrb[0].mxu0
      %629 = vdwg.mxu0
      %v630 = vadd.f32 %v415, %v593
      %v631 = vadd.f32 %v418, %v596
      %v632 = vadd.f32 %v423, %v601
      %v633 = vadd.f32 %v426, %v604
      %v634 = vadd.f32 %v431, %v609
      %v635 = vadd.f32 %v434, %v612
      %v636 = vadd.f32 %v439, %v617
      %v637 = vadd.f32 %v442, %v620
      %v638 = vadd.f32 %v447, %v625
      %v639 = vld [vmem:[%s165 + $0x4] sm:$0xe]
      %s640 = scalar_lea.vmem %s1, 48
      %v641 = vld [vmem:[%s640] sm:$0xf]
      %v642 = vld [vmem:[%s640 + $0x4] sm:$0xf]
      %v643 = vld [vmem:[%s640 + $0x8] sm:$0xf]
      %v644 = vld [vmem:[%s640 + $0xc] sm:$0xf]
      %v646 = vunpack.c.l.b16 %v639
      %v647 = vpack.c.b16 %v478, %v646
      %vm648 = vcmask 1046528
      %v649 = vrot.slane %v647, 1
      %v650 = vrot.slane %v488, 1
      %v651 = vsel %vm648, %v649, %v650
      %v652 = vrot.slane %v489, 1
      %v653 = vsel %vm648, %v650, %v652
      %v654 = vrot.slane %v490, 1
      %v655 = vsel %vm648, %v652, %v654
      %v656 = vrot.slane %v491, 1
      %v657 = vsel %vm648, %v654, %v656
      %v662 = vunpack.c.l.b16 %v641
      %v663 = vunpack.c.l.b16 %v642
      %v664 = vunpack.c.l.b16 %v643
      %v665 = vunpack.c.l.b16 %v644
      %v666 = vpack.c.b16 %v663, %v662
      %v667 = vpack.c.b16 %v665, %v664
      %v671 = vsel %vm268, %v651, 0
      %v674 = vsel %vm268, %v653, 0
      %v677 = vsel %vm268, %v655, 0
      %v680 = vsel %vm268, %v657, 0
      %v683 = vsel %vm268, %v656, 0
      %685 = vmatprep.subr.bf16.mxu0 0
      %686 = vmatpush1.bf16.msra.mxu0 %v666
      %687 = vmatprep.subr.bf16.mxu0 0
      %688 = vmatpush1.bf16.msra.mxu0 %v667
      %689 = vmatprep.subr.bf16.mxu0 0
      %690 = vmatpush1.bf16.msra.mxu0 0
      %691 = vmatprep.subr.bf16.mxu0 0
      %692 = vmatpush1.bf16.msra.mxu0 0
      %693 = vmatprep.subr.bf16.mxu0 0
      %694 = vmatpush1.bf16.msra.mxu0 0
      %695 = vmatprep.subr.bf16.mxu0 0
      %696 = vmatpush1.bf16.msra.mxu0 0
      %697 = vmatprep.subr.bf16.mxu0 0
      %698 = vmatpush1.bf16.msra.mxu0 0
      %699 = vmatprep.subr.bf16.mxu0 0
      %700 = vmatpush1.bf16.msra.mxu0 0
      %701 = vmatprep.subr.bf16.mxu0 0
      %702 = vmatpush1.bf16.msra.mxu0 0
      %703 = vmatprep.subr.bf16.mxu0 0
      %704 = vmatpush1.bf16.msra.mxu0 0
      %705 = vmatprep.subr.bf16.mxu0 0
      %706 = vmatpush1.bf16.msra.mxu0 0
      %707 = vmatprep.subr.bf16.mxu0 0
      %708 = vmatpush1.bf16.msra.mxu0 0
      %709 = vmatprep.subr.bf16.mxu0 0
      %710 = vmatpush1.bf16.msra.mxu0 0
      %711 = vmatprep.subr.bf16.mxu0 0
      %712 = vmatpush1.bf16.msra.mxu0 0
      %713 = vmatprep.subr.bf16.mxu0 0
      %714 = vmatpush1.bf16.msra.mxu0 0
      %715 = vmatprep.subr.bf16.mxu0 0
      %716 = vmatpush1.bf16.msra.mxu0 0
      %717 = vmatprep.mubr.bf16.mxu0 0
      %718 = vmatmul.mubr.bf16.gmra.mrb[0].mxu0 %v671
      %v719 = vpop.f32.mrb[0].mxu0
      %v720 = vadd.f32 0.0, %v719
      %v721 = vpop.f32.mrb[0].mxu0
      %v722 = vpop.f32.mrb[0].mxu0
      %v723 = vadd.f32 0.0, %v722
      %v724 = vpop.f32.mrb[0].mxu0
      %725 = vmatprep.mubr.bf16.mxu0 0
      %726 = vmatmul.mubr.bf16.gmra.mrb[0].mxu0 %v674
      %v727 = vpop.f32.mrb[0].mxu0
      %v728 = vadd.f32 0.0, %v727
      %v729 = vpop.f32.mrb[0].mxu0
      %v730 = vpop.f32.mrb[0].mxu0
      %v731 = vadd.f32 0.0, %v730
      %v732 = vpop.f32.mrb[0].mxu0
      %733 = vmatprep.mubr.bf16.mxu0 0
      %734 = vmatmul.mubr.bf16.gmra.mrb[0].mxu0 %v677
      %v735 = vpop.f32.mrb[0].mxu0
      %v736 = vadd.f32 0.0, %v735
      %v737 = vpop.f32.mrb[0].mxu0
      %v738 = vpop.f32.mrb[0].mxu0
      %v739 = vadd.f32 0.0, %v738
      %v740 = vpop.f32.mrb[0].mxu0
      %741 = vmatprep.mubr.bf16.mxu0 0
      %742 = vmatmul.mubr.bf16.gmra.mrb[0].mxu0 %v680
      %v743 = vpop.f32.mrb[0].mxu0
      %v744 = vadd.f32 0.0, %v743
      %v745 = vpop.f32.mrb[0].mxu0
      %v746 = vpop.f32.mrb[0].mxu0
      %v747 = vadd.f32 0.0, %v746
      %v748 = vpop.f32.mrb[0].mxu0
      %749 = vmatprep.mubr.bf16.mxu0 0
      %750 = vmatmul.mubr.bf16.gmra.mrb[0].mxu0 %v683
      %v751 = vpop.f32.mrb[0].mxu0
      %v752 = vadd.f32 0.0, %v751
      %v753 = vpop.f32.mrb[0].mxu0
      %v754 = vpop.f32.mrb[0].mxu0
      %v755 = vpop.f32.mrb[0].mxu0
      %756 = vdwg.mxu0
      %v757 = vadd.f32 %v630, %v720
      %v758 = vadd.f32 %v631, %v723
      %v759 = vadd.f32 %v632, %v728
      %v760 = vadd.f32 %v633, %v731
      %v761 = vadd.f32 %v634, %v736
      %v762 = vadd.f32 %v635, %v739
      %v763 = vadd.f32 %v636, %v744
      %v764 = vadd.f32 %v637, %v747
      %v765 = vadd.f32 %v638, %v752
      %v766 = vld [vmem:[%s2] sm:$0x1]
      %v767 = vlaneseq
      %v768 = vshrl.u32 %v767, 7
      %v769 = vsub.s32 0, %v768
      %v770 = vrot.slane %v766, %v769
      %v771 = vadd.f32 %v757, %v770
      %v772 = vadd.f32 %v758, %v770
      %v773 = vadd.f32 %v759, %v770
      %v774 = vadd.f32 %v760, %v770
      %v775 = vadd.f32 %v761, %v770
      %v776 = vadd.f32 %v762, %v770
      %v777 = vadd.f32 %v763, %v770
      %v778 = vadd.f32 %v764, %v770
      %v779 = vadd.f32 %v765, %v770
      %vm780 = vcmp.ge.f32.partialorder %v771, 0.0
      %vm781 = vcmp.ge.f32.partialorder %v772, 0.0
      %vm782 = vcmp.ge.f32.partialorder %v773, 0.0
      %vm783 = vcmp.ge.f32.partialorder %v774, 0.0
      %vm784 = vcmp.ge.f32.partialorder %v775, 0.0
      %vm785 = vcmp.ge.f32.partialorder %v776, 0.0
      %vm786 = vcmp.ge.f32.partialorder %v777, 0.0
      %vm787 = vcmp.ge.f32.partialorder %v778, 0.0
      %vm788 = vcmp.ge.f32.partialorder %v779, 0.0
      %v789 = vmul.f32 %v771, 0.3
      %v790 = vmul.f32 %v772, 0.3
      %v791 = vmul.f32 %v773, 0.3
      %v792 = vmul.f32 %v774, 0.3
      %v793 = vmul.f32 %v775, 0.3
      %v794 = vmul.f32 %v776, 0.3
      %v795 = vmul.f32 %v777, 0.3
      %v796 = vmul.f32 %v778, 0.3
      %v797 = vmul.f32 %v779, 0.3
      %v798 = vsel %vm780, %v771, %v789
      %v799 = vsel %vm781, %v772, %v790
      %v800 = vsel %vm782, %v773, %v791
      %v801 = vsel %vm783, %v774, %v792
      %v802 = vsel %vm784, %v775, %v793
      %v803 = vsel %vm785, %v776, %v794
      %v804 = vsel %vm786, %v777, %v795
      %v805 = vsel %vm787, %v778, %v796
      %v806 = vsel %vm788, %v779, %v797
      %v807 = vld [vmem:[%s2 + $0x1] sm:$0x1]
      %v808 = vlaneseq
      %v809 = vshrl.u32 %v808, 7
      %v810 = vsub.s32 0, %v809
      %v811 = vrot.slane %v807, %v810
      %v812 = vmul.f32 %v798, %v811
      %v813 = vmul.f32 %v799, %v811
      %v814 = vmul.f32 %v800, %v811
      %v815 = vmul.f32 %v801, %v811
      %v816 = vmul.f32 %v802, %v811
      %v817 = vmul.f32 %v803, %v811
      %v818 = vmul.f32 %v804, %v811
      %v819 = vmul.f32 %v805, %v811
      %v820 = vmul.f32 %v806, %v811
      %v821 = vld [vmem:[%s2 + $0x2] sm:$0x1]
      %v822 = vlaneseq
      %v823 = vshrl.u32 %v822, 7
      %v824 = vsub.s32 0, %v823
      %v825 = vrot.slane %v821, %v824
      %v826 = vadd.f32 %v812, %v825
      %v827 = vadd.f32 %v813, %v825
      %v828 = vadd.f32 %v814, %v825
      %v829 = vadd.f32 %v815, %v825
      %v830 = vadd.f32 %v816, %v825
      %v831 = vadd.f32 %v817, %v825
      %v832 = vadd.f32 %v818, %v825
      %v833 = vadd.f32 %v819, %v825
      %v834 = vadd.f32 %v820, %v825
      %v835 = vpack.c.bf16 %v827, %v826
      %v836 = vpack.c.bf16 %v829, %v828
      %v837 = vpack.c.bf16 %v831, %v830
      %v838 = vpack.c.bf16 %v833, %v832
      %v839 = vpack.c.bf16 %v834, %v834
      %v845 = vunpack.c.l.b16 %v835
      %v846 = vunpack.c.h.b16 %v835
      %v847 = vunpack.c.l.b16 %v836
      %v848 = vunpack.c.h.b16 %v836
      %v849 = vunpack.c.l.b16 %v837
      %v850 = vunpack.c.h.b16 %v837
      %v851 = vunpack.c.l.b16 %v838
      %v852 = vunpack.c.h.b16 %v838
      %v853 = vunpack.c.l.b16 %v839
      %v854 = vpack.c.b16 %v845, %v845
      %v855 = vpack.c.b16 %v846, %v846
      %v856 = vpack.c.b16 %v847, %v847
      %v857 = vpack.c.b16 %v848, %v848
      %v858 = vpack.c.b16 %v849, %v849
      %v859 = vpack.c.b16 %v850, %v850
      %v860 = vpack.c.b16 %v851, %v851
      %v861 = vpack.c.b16 %v852, %v852
      %v862 = vpack.c.b16 %v853, %v853
      %vm872 = vcmask 125952
      %873 = vst.msk [vmem:[%s170] sm:$0xf] %vm872, %v854
      %874 = vst.msk [vmem:[%s170 + $0x4] sm:$0xf] %vm872, %v855
      %875 = vst.msk [vmem:[%s170 + $0x8] sm:$0xf] %vm872, %v856
      %876 = vst.msk [vmem:[%s170 + $0xc] sm:$0xf] %vm872, %v857
      %877 = vst.msk [vmem:[%s170 + $0x10] sm:$0xf] %vm872, %v858
      %878 = vst.msk [vmem:[%s170 + $0x14] sm:$0xf] %vm872, %v859
      %879 = vst.msk [vmem:[%s170 + $0x18] sm:$0xf] %vm872, %v860
      %880 = vst.msk [vmem:[%s170 + $0x1c] sm:$0xf] %vm872, %v861
      %881 = vst.msk [vmem:[%s170 + $0x20] sm:$0xf] %vm872, %v862
      %p882 = scmp.lt.s32.totalorder %s14, 1
      %s883 = scalar_select %p882, %s14, 1
      %s884 = smul.addr %s883, 9
      %s885 = smul.addr %s884, 4
      %s886 = scalar_lea.vmem %s3, %s885
      // Predicated region
      $region33: #{encoder_forward.5} parent=31 // pred_check
        %p887 = pneg %p100
      $region34: #{encoder_forward.5} parent=31 // pred_check_branch
        %889 = sbr.rel (%p887) target = $region36
      $region35: #{encoder_forward.5} parent=31 // pred_region
        _
      $region36: #{encoder_forward.5} parent=31 // pred_fallthru
        _
    $region32: #{encoder_forward.5} parent=5 // pred_fallthru
      _
    %p890 = scmp.le.s32.totalorder 2, %s9
    // Predicated region
    $region37: #{encoder_forward.5} parent=5 // pred_check
      %p891 = pneg %p890
    $region38: #{encoder_forward.5} parent=5 // pred_check_branch
      %893 = sbr.rel (%p891) target = $region40
    $region39: #{encoder_forward.5} parent=5 // pred_region
      %s894 = ssub.s32 %s9, 2
      // Predicated region
      $region41: #{encoder_forward.5} parent=39 // pred_check
        %p895 = pneg %p106
      $region42: #{encoder_forward.5} parent=39 // pred_check_branch
        %897 = sbr.rel (%p895) target = $region44
      $region43: #{encoder_forward.5} parent=39 // pred_region
        %p898 = scmp.lt.s32.totalorder %s15, 1
        %s899 = scalar_select %p898, %s15, 1
        %s900 = smul.addr %s899, 9
        %s901 = smul.addr %s900, 4
        %s902 = scalar_lea.vmem %s3, %s901
      $region44: #{encoder_forward.5} parent=39 // pred_fallthru
        _
    $region40: #{encoder_forward.5} parent=5 // pred_fallthru
      _
  $region6: #{encoder_forward.5} parent=0 // loop_footer
    %s13 = sadd.s32 1, %s9
  $region7: #{encoder_forward.5} parent=0 // loop_footer_branch
    %8 = sbr.rel target = $region3
  $region8: #{encoder_forward.5} parent=0 // loop_exit
    _

// kernel: encoder_forward.6
$region0: #{encoder_forward.6}
  #allocation0 [shape = 'u32[]', space=smem, size = 0x4, offset = 0x4, fixed_abs, tag = 'smem constant byte address 0x4 - core index']
  #allocation1 [shape = 'u32[144,128]{1,0:T(1,128)}', space=vmem, size = 0x12000, scoped, tag = 'internal scratch']
  %s0 = inlined_call_operand.vmem [shape: bf16[2,30,64], index: 0, kind: input, shape index: {}]
  %s1 = inlined_call_operand.vmem [shape: bf16[4,64,32], index: 1, kind: input, shape index: {}]
  %s2 = inlined_call_operand.vmem [shape: f32[3,32], index: 2, kind: input, shape index: {}]
  %s3 = inlined_call_operand.vmem [shape: bf16[2,20,32], index: 3, kind: output, shape index: {}]
  %s4 = sld [smem:[#allocation0]]
  $region45: #{encoder_forward.6} parent=0
    _
  %s6 = ssub.s32 1, %s4
  %s7 = scalar_select 0, %s6, %s4
  loop: start=0, step=1, limit=4
  $region2: #{encoder_forward.6} parent=0 // loop_pre_header
    _
  $region3: #{encoder_forward.6} parent=0 // loop_header
    %s9 = sphi 0, %s13
    %p10 = scmp.ge.s32.totalorder %s9, 4
    %s19 = sphi 0, %s21
    %s22 = sphi 0, %s19
    %s23 = sphi 0, %s22
    %s39 = sphi 0, %s23
    %s43 = sphi 0, %s43
    %s45 = sphi 0, %s43
    %s46 = sphi 0, %s45
    %s60 = sphi 0, %s46
    %s64 = sphi 0, %s64
    %s66 = sphi 0, %s64
    %s67 = sphi 0, %s66
    %s81 = sphi 0, %s67
    %s87 = sphi 0, %s89
    %s90 = sphi 0, %s87
    %s91 = sphi 0, %s90
    %s107 = sphi 0, %s91
  $region4: #{encoder_forward.6} parent=0 // loop_header_branch
    %12 = sbr.rel (%p10) target = $region8
  $region5: #{encoder_forward.6} parent=0 // loop_body
    %s14 = ssub.s32 %s9, 1
    %s15 = ssub.s32 %s9, 2
    %s16 = sadd.s32 %s9, 1
    %s17 = ssub.s32 %s9, %s16
    %p18 = scmp.eq.s32.totalorder %s17, 0
    %s20 = sadd.s32 %s19, 1
    %s21 = scalar_select %p18, %s19, %s20
    %p24 = pneg %p18
    %p25 = scmp.eq.s32.totalorder %s9, 1
    %p26 = por %p24, %p25
    %p27 = scmp.ne.s32.totalorder %s19, %s22
    %p28 = scmp.eq.s32.totalorder %s9, 0
    %p29 = por %p27, %p28
    %p30 = scmp.ne.s32.totalorder %s19, %s22
    %p31 = scmp.eq.s32.totalorder %s14, 1
    %p32 = por %p30, %p31
    %p33 = scmp.ne.s32.totalorder %s22, %s23
    %p34 = scmp.eq.s32.totalorder %s14, 0
    %p35 = por %p33, %p34
    %p36 = scmp.ne.s32.totalorder %s22, %s23
    %p37 = scmp.eq.s32.totalorder %s15, 1
    %p38 = por %p36, %p37
    %p40 = scmp.ne.s32.totalorder %s23, %s39
    %p41 = scmp.eq.s32.totalorder %s15, 0
    %p42 = por %p40, %p41
    %s44 = sadd.s32 %s43, 1
    %p47 = scmp.eq.s32.totalorder %s9, 1
    %p48 = scmp.ne.s32.totalorder %s43, %s45
    %p49 = scmp.eq.s32.totalorder %s9, 0
    %p50 = por %p48, %p49
    %p51 = scmp.ne.s32.totalorder %s43, %s45
    %p52 = scmp.eq.s32.totalorder %s14, 1
    %p53 = por %p51, %p52
    %p54 = scmp.ne.s32.totalorder %s45, %s46
    %p55 = scmp.eq.s32.totalorder %s14, 0
    %p56 = por %p54, %p55
    %p57 = scmp.ne.s32.totalorder %s45, %s46
    %p58 = scmp.eq.s32.totalorder %s15, 1
    %p59 = por %p57, %p58
    %p61 = scmp.ne.s32.totalorder %s46, %s60
    %p62 = scmp.eq.s32.totalorder %s15, 0
    %p63 = por %p61, %p62
    %s65 = sadd.s32 %s64, 1
    %p68 = scmp.eq.s32.totalorder %s9, 1
    %p69 = scmp.ne.s32.totalorder %s64, %s66
    %p70 = scmp.eq.s32.totalorder %s9, 0
    %p71 = por %p69, %p70
    %p72 = scmp.ne.s32.totalorder %s64, %s66
    %p73 = scmp.eq.s32.totalorder %s14, 1
    %p74 = por %p72, %p73
    %p75 = scmp.ne.s32.totalorder %s66, %s67
    %p76 = scmp.eq.s32.totalorder %s14, 0
    %p77 = por %p75, %p76
    %p78 = scmp.ne.s32.totalorder %s66, %s67
    %p79 = scmp.eq.s32.totalorder %s15, 1
    %p80 = por %p78, %p79
    %p82 = scmp.ne.s32.totalorder %s67, %s81
    %p83 = scmp.eq.s32.totalorder %s15, 0
    %p84 = por %p82, %p83
    %s85 = ssub.s32 %s9, %s16
    %p86 = scmp.eq.s32.totalorder %s85, 0
    %s88 = sadd.s32 %s87, 1
    %s89 = scalar_select %p86, %s87, %s88
    %p92 = pneg %p86
    %p93 = scmp.eq.s32.totalorder %s9, 1
    %p94 = por %p92, %p93
    %p95 = scmp.ne.s32.totalorder %s87, %s90
    %p96 = scmp.eq.s32.totalorder %s9, 0
    %p97 = por %p95, %p96
    %p98 = scmp.ne.s32.totalorder %s87, %s90
    %p99 = scmp.eq.s32.totalorder %s14, 1
    %p100 = por %p98, %p99
    %p101 = scmp.ne.s32.totalorder %s90, %s91
    %p102 = scmp.eq.s32.totalorder %s14, 0
    %p103 = por %p101, %p102
    %p104 = scmp.ne.s32.totalorder %s90, %s91
    %p105 = scmp.eq.s32.totalorder %s15, 1
    %p106 = por %p104, %p105
    %p108 = scmp.ne.s32.totalorder %s91, %s107
    %p109 = scmp.eq.s32.totalorder %s15, 0
    %p110 = por %p108, %p109
    %p111 = scmp.le.s32.totalorder 1, %s9
    %p112 = scmp.lt.s32.totalorder %s9, 3
    %p113 = pnand %p111, %p112
    %p114 = pneg %p113
    // Predicated region
    $region9: #{encoder_forward.6} parent=5 // pred_check
      _
    $region10: #{encoder_forward.6} parent=5 // pred_check_branch
      %116 = sbr.rel (%p113) target = $region12
    $region11: #{encoder_forward.6} parent=5 // pred_region
      %s117 = ssub.s32 %s9, 1
      // Predicated region
      $region13: #{encoder_forward.6} parent=11 // pred_check
        %p118 = pneg %p56
      $region14: #{encoder_forward.6} parent=11 // pred_check_branch
        %120 = sbr.rel (%p118) target = $region16
      $region15: #{encoder_forward.6} parent=11 // pred_region
        _
      $region16: #{encoder_forward.6} parent=11 // pred_fallthru
        _
      // Predicated region
      $region17: #{encoder_forward.6} parent=11 // pred_check
        %p121 = pneg %p77
      $region18: #{encoder_forward.6} parent=11 // pred_check_branch
        %123 = sbr.rel (%p121) target = $region20
      $region19: #{encoder_forward.6} parent=11 // pred_region
        _
      $region20: #{encoder_forward.6} parent=11 // pred_fallthru
        _
    $region12: #{encoder_forward.6} parent=5 // pred_fallthru
      _
    %p124 = scmp.lt.s32.totalorder %s9, 2
    // Predicated region
    $region21: #{encoder_forward.6} parent=5 // pred_check
      %p125 = pneg %p124
    $region22: #{encoder_forward.6} parent=5 // pred_check_branch
      %127 = sbr.rel (%p125) target = $region24
    $region23: #{encoder_forward.6} parent=5 // pred_region
      // Predicated region
      $region25: #{encoder_forward.6} parent=23 // pred_check
        %p128 = pneg %p29
      $region26: #{encoder_forward.6} parent=23 // pred_check_branch
        %130 = sbr.rel (%p128) target = $region28
      $region27: #{encoder_forward.6} parent=23 // pred_region
        %p131 = scmp.lt.s32.totalorder %s9, 1
        %s132 = scalar_select %p131, %s9, 1
        %s133 = smul.addr %s132, 4
        %s134 = smul.addr %s133, 4
        %s135 = scalar_lea.vmem %s0, %s134
      $region28: #{encoder_forward.6} parent=23 // pred_fallthru
        _
    $region24: #{encoder_forward.6} parent=5 // pred_fallthru
      _
    %p136 = scmp.le.s32.totalorder 1, %s9
    %p137 = scmp.lt.s32.totalorder %s9, 3
    %p138 = pnand %p136, %p137
    %p139 = pneg %p138
    // Predicated region
    $region29: #{encoder_forward.6} parent=5 // pred_check
      _
    $region30: #{encoder_forward.6} parent=5 // pred_check_branch
      %141 = sbr.rel (%p138) target = $region32
    $region31: #{encoder_forward.6} parent=5 // pred_region
      %s142 = ssub.s32 %s9, 1
      %p143 = scmp.lt.s32.totalorder %s14, 1
      %s144 = scalar_select %p143, %s14, 1
      %s145 = smul.addr %s144, 4
      %s146 = smul.addr %s145, 4
      %s147 = scalar_lea.vmem %s0, %s146
      %p148 = pneg %p35
      %p149 = pneg %p32
      %p150 = pneg %p56
      %p151 = pneg %p53
      %p152 = pneg %p77
      %p153 = pneg %p74
      %p154 = pneg %p103
      %p155 = pneg %p100
      %p156 = scmp.lt.s32.totalorder %s14, 1
      %s157 = scalar_select %p156, %s14, 1
      %s158 = smul.addr %s157, 3
      %s159 = smul.addr %s158, 4
      %s160 = scalar_lea.vmem %s3, %s159
      %p161 = scmp.lt.s32.totalorder %s14, 1
      %s162 = scalar_select %p161, %s14, 1
      %s163 = smul.addr %s162, 4
      %s164 = smul.addr %s163, 4
      %s165 = scalar_lea.vmem %s0, %s164
      %p166 = scmp.lt.s32.totalorder %s14, 1
      %s167 = scalar_select %p166, %s14, 1
      %s168 = smul.addr %s167, 3
      %s169 = smul.addr %s168, 4
      %s170 = scalar_lea.vmem %s3, %s169
      %v172 = vld [vmem:[%s165] sm:$0xf]
      %v173 = vld [vmem:[%s165 + $0x4] sm:$0xf]
      %v174 = vld [vmem:[%s165 + $0x8] sm:$0x3]
      %v175 = vld [vmem:[%s1] sm:$0xf]
      %v176 = vld [vmem:[%s1 + $0x4] sm:$0xf]
      %v177 = vld [vmem:[%s1 + $0x8] sm:$0xf]
      %v178 = vld [vmem:[%s1 + $0xc] sm:$0xf]
      %v179 = vld [vmem:[%s1 + $0x10] sm:$0xf]
      %v180 = vld [vmem:[%s1 + $0x14] sm:$0xf]
      %v181 = vld [vmem:[%s1 + $0x18] sm:$0xf]
      %v182 = vld [vmem:[%s1 + $0x1c] sm:$0xf]
      %v183 = vld [vmem:[%s165 + $0x8] sm:$0x7]
      %s184 = scalar_lea.vmem %s1, 32
      %v185 = vld [vmem:[%s184] sm:$0xf]
      %v186 = vld [vmem:[%s184 + $0x4] sm:$0xf]
      %v187 = vld [vmem:[%s184 + $0x8] sm:$0xf]
      %v188 = vld [vmem:[%s184 + $0xc] sm:$0xf]
      %v189 = vld [vmem:[%s184 + $0x10] sm:$0xf]
      %v190 = vld [vmem:[%s184 + $0x14] sm:$0xf]
      %v191 = vld [vmem:[%s184 + $0x18] sm:$0xf]
      %v192 = vld [vmem:[%s184 + $0x1c] sm:$0xf]
      %v196 = vunpack.c.l.b16 %v172
      %v197 = vunpack.c.l.b16 %v173
      %v198 = vunpack.c.l.b16 %v183
      %v199 = vpack.c.b16 %v197, %v196
      %v200 = vpack.c.b16 %v198, %v198
      %vm201 = vsmask.f32 7424
      %v203 = vshrl.u32 %v199, 16
      %v205 = vshll.u32 %v199, 16
      %v207 = vrot.slane %v205, 1
      %v208 = vor.u32 %v203, %v207
      %v210 = vshll.u32 %v200, 16
      %v212 = vrot.slane %v210, 1
      %v213 = vsel %vm201, %v208, %v212
      %v214 = vshrl.u32 %v200, 16
      %v216 = vor.u32 %v214, %v212
      %v225 = vunpack.c.l.b16 %v185
      %v226 = vunpack.c.l.b16 %v186
      %v227 = vunpack.c.l.b16 %v187
      %v228 = vunpack.c.l.b16 %v188
      %v229 = vunpack.c.l.b16 %v189
      %v230 = vunpack.c.l.b16 %v190
      %v231 = vunpack.c.l.b16 %v191
      %v232 = vunpack.c.l.b16 %v192
      %v233 = vpack.c.b16 %v226, %v225
      %v234 = vpack.c.b16 %v228, %v227
      %v235 = vpack.c.b16 %v230, %v229
      %v236 = vpack.c.b16 %v232, %v231
      %vm241 = vcmask 523264
      %v243 = vsel %vm241, %v213, 0
      %v246 = vsel %vm241, %v216, 0
      %248 = vmatprep.subr.bf16.mxu0 0
      %249 = vmatpush1.bf16.msra.mxu0 %v233
      %250 = vmatprep.subr.bf16.mxu0 0
      %251 = vmatpush1.bf16.msra.mxu0 %v234
      %252 = vmatprep.subr.bf16.mxu0 0
      %253 = vmatpush1.bf16.msra.mxu0 %v235
      %254 = vmatprep.subr.bf16.mxu0 0
      %255 = vmatpush1.bf16.msra.mxu0 %v236
      %256 = vmatprep.subr.bf16.mxu0 0
      %257 = vmatpush1.bf16.msra.mxu0 0
      %258 = vmatprep.subr.bf16.mxu0 0
      %259 = vmatpush1.bf16.msra.mxu0 0
      %260 = vmatprep.subr.bf16.mxu0 0
      %261 = vmatpush1.bf16.msra.mxu0 0
      %262 = vmatprep.subr.bf16.mxu0 0
      %263 = vmatpush1.bf16.msra.mxu0 0
      %264 = vmatprep.subr.bf16.mxu0 0
      %265 = vmatpush1.bf16.msra.mxu0 0
      %266 = vmatprep.subr.bf16.mxu0 0
      %267 = vmatpush1.bf16.msra.mxu0 0
      %268 = vmatprep.subr.bf16.mxu0 0
      %269 = vmatpush1.bf16.msra.mxu0 0
      %270 = vmatprep.subr.bf16.mxu0 0
      %271 = vmatpush1.bf16.msra.mxu0 0
      %272 = vmatprep.subr.bf16.mxu0 0
      %273 = vmatpush1.bf16.msra.mxu0 0
      %274 = vmatprep.subr.bf16.mxu0 0
      %275 = vmatpush1.bf16.msra.mxu0 0
      %276 = vmatprep.subr.bf16.mxu0 0
      %277 = vmatpush1.bf16.msra.mxu0 0
      %278 = vmatprep.subr.bf16.mxu0 0
      %279 = vmatpush1.bf16.msra.mxu0 0
      %280 = vmatprep.mubr.bf16.mxu0 0
      %281 = vmatmul.mubr.bf16.gmra.mrb[0].mxu0 %v243
      %v282 = vpop.f32.mrb[0].mxu0
      %v283 = vadd.f32 0.0, %v282
      %v284 = vpop.f32.mrb[0].mxu0
      %v285 = vpop.f32.mrb[0].mxu0
      %v286 = vadd.f32 0.0, %v285
      %v287 = vpop.f32.mrb[0].mxu0
      %288 = vmatprep.mubr.bf16.mxu0 0
      %289 = vmatmul.mubr.bf16.gmra.mrb[0].mxu0 %v246
      %v290 = vpop.f32.mrb[0].mxu0
      %v291 = vadd.f32 0.0, %v290
      %v292 = vpop.f32.mrb[0].mxu0
      %v293 = vpop.f32.mrb[0].mxu0
      %v294 = vpop.f32.mrb[0].mxu0
      %295 = vdwg.mxu0
      %v297 = vunpack.c.l.b16 %v174
      %v298 = vpack.c.b16 %v297, %v297
      %v307 = vunpack.c.l.b16 %v175
      %v308 = vunpack.c.l.b16 %v176
      %v309 = vunpack.c.l.b16 %v177
      %v310 = vunpack.c.l.b16 %v178
      %v311 = vunpack.c.l.b16 %v179
      %v312 = vunpack.c.l.b16 %v180
      %v313 = vunpack.c.l.b16 %v181
      %v314 = vunpack.c.l.b16 %v182
      %v315 = vpack.c.b16 %v308, %v307
      %v316 = vpack.c.b16 %v310, %v309
      %v317 = vpack.c.b16 %v312, %v311
      %v318 = vpack.c.b16 %v314, %v313
      %v323 = vsel %vm241, %v199, 0
      %v326 = vsel %vm241, %v298, 0
      %328 = vmatprep.subr.bf16.mxu0 0
      %329 = vmatpush1.bf16.msra.mxu0 %v315
      %330 = vmatprep.subr.bf16.mxu0 0
      %331 = vmatpush1.bf16.msra.mxu0 %v316
      %332 = vmatprep.subr.bf16.mxu0 0
      %333 = vmatpush1.bf16.msra.mxu0 %v317
      %334 = vmatprep.subr.bf16.mxu0 0
      %335 = vmatpush1.bf16.msra.mxu0 %v318
      %336 = vmatprep.subr.bf16.mxu0 0
      %337 = vmatpush1.bf16.msra.mxu0 0
      %338 = vmatprep.subr.bf16.mxu0 0
      %339 = vmatpush1.bf16.msra.mxu0 0
      %340 = vmatprep.subr.bf16.mxu0 0
      %341 = vmatpush1.bf16.msra.mxu0 0
      %342 = vmatprep.subr.bf16.mxu0 0
      %343 = vmatpush1.bf16.msra.mxu0 0
      %344 = vmatprep.subr.bf16.mxu0 0
      %345 = vmatpush1.bf16.msra.mxu0 0
      %346 = vmatprep.subr.bf16.mxu0 0
      %347 = vmatpush1.bf16.msra.mxu0 0
      %348 = vmatprep.subr.bf16.mxu0 0
      %349 = vmatpush1.bf16.msra.mxu0 0
      %350 = vmatprep.subr.bf16.mxu0 0
      %351 = vmatpush1.bf16.msra.mxu0 0
      %352 = vmatprep.subr.bf16.mxu0 0
      %353 = vmatpush1.bf16.msra.mxu0 0
      %354 = vmatprep.subr.bf16.mxu0 0
      %355 = vmatpush1.bf16.msra.mxu0 0
      %356 = vmatprep.subr.bf16.mxu0 0
      %357 = vmatpush1.bf16.msra.mxu0 0
      %358 = vmatprep.subr.bf16.mxu0 0
      %359 = vmatpush1.bf16.msra.mxu0 0
      %360 = vmatprep.mubr.bf16.mxu0 0
      %361 = vmatmul.mubr.bf16.gmra.mrb[0].mxu0 %v323
      %v362 = vpop.f32.mrb[0].mxu0
      %v363 = vadd.f32 %v283, %v362
      %v364 = vpop.f32.mrb[0].mxu0
      %v365 = vpop.f32.mrb[0].mxu0
      %v366 = vadd.f32 %v286, %v365
      %v367 = vpop.f32.mrb[0].mxu0
      %368 = vmatprep.mubr.bf16.mxu0 0
      %369 = vmatmul.mubr.bf16.gmra.mrb[0].mxu0 %v326
      %v370 = vpop.f32.mrb[0].mxu0
      %v371 = vadd.f32 %v291, %v370
      %v372 = vpop.f32.mrb[0].mxu0
      %v373 = vpop.f32.mrb[0].mxu0
      %v374 = vpop.f32.mrb[0].mxu0
      %375 = vdwg.mxu0
      %v376 = vld [vmem:[%s165] sm:$0xc]
      %v377 = vld [vmem:[%s165 + $0x4] sm:$0xf]
      %v378 = vld [vmem:[%s165 + $0x8] sm:$0xf]
      %v379 = vld [vmem:[%s165 + $0xc] sm:$0x1]
      %s380 = scalar_lea.vmem %s1, 64
      %v381 = vld [vmem:[%s380] sm:$0xf]
      %v382 = vld [vmem:[%s380 + $0x4] sm:$0xf]
      %v383 = vld [vmem:[%s380 + $0x8] sm:$0xf]
      %v384 = vld [vmem:[%s380 + $0xc] sm:$0xf]
      %v385 = vld [vmem:[%s380 + $0x10] sm:$0xf]
      %v386 = vld [vmem:[%s380 + $0x14] sm:$0xf]
      %v387 = vld [vmem:[%s380 + $0x18] sm:$0xf]
      %v388 = vld [vmem:[%s380 + $0x1c] sm:$0xf]
      %v393 = vunpack.c.l.b16 %v376
      %v394 = vunpack.c.l.b16 %v377
      %v395 = vunpack.c.l.b16 %v378
      %v396 = vunpack.c.l.b16 %v379
      %v397 = vpack.c.b16 %v394, %v393
      %v398 = vpack.c.b16 %v396, %v395
      %vm399 = vsmask.f32 5376
      %v401 = vshrl.u32 %v397, 16
      %v403 = vrot.slane %v401, 2
      %v404 = vshll.u32 %v397, 16
      %v406 = vrot.slane %v404, 3
      %v407 = vor.u32 %v403, %v406
      %v409 = vshrl.u32 %v398, 16
      %v411 = vrot.slane %v409, 2
      %v412 = vshll.u32 %v398, 16
      %v414 = vrot.slane %v412, 3
      %v415 = vor.u32 %v411, %v414
      %v416 = vsel %vm399, %v407, %v415
      %v425 = vunpack.c.l.b16 %v381
      %v426 = vunpack.c.l.b16 %v382
      %v427 = vunpack.c.l.b16 %v383
      %v428 = vunpack.c.l.b16 %v384
      %v429 = vunpack.c.l.b16 %v385
      %v430 = vunpack.c.l.b16 %v386
      %v431 = vunpack.c.l.b16 %v387
      %v432 = vunpack.c.l.b16 %v388
      %v433 = vpack.c.b16 %v426, %v425
      %v434 = vpack.c.b16 %v428, %v427
      %v435 = vpack.c.b16 %v430, %v429
      %v436 = vpack.c.b16 %v432, %v431
      %v442 = vsel %vm241, %v416, 0
      %v445 = vsel %vm241, %v415, 0
      %447 = vmatprep.subr.bf16.mxu0 0
      %448 = vmatpush1.bf16.msra.mxu0 %v433
      %449 = vmatprep.subr.bf16.mxu0 0
      %450 = vmatpush1.bf16.msra.mxu0 %v434
      %451 = vmatprep.subr.bf16.mxu0 0
      %452 = vmatpush1.bf16.msra.mxu0 %v435
      %453 = vmatprep.subr.bf16.mxu0 0
      %454 = vmatpush1.bf16.msra.mxu0 %v436
      %455 = vmatprep.subr.bf16.mxu0 0
      %456 = vmatpush1.bf16.msra.mxu0 0
      %457 = vmatprep.subr.bf16.mxu0 0
      %458 = vmatpush1.bf16.msra.mxu0 0
      %459 = vmatprep.subr.bf16.mxu0 0
      %460 = vmatpush1.bf16.msra.mxu0 0
      %461 = vmatprep.subr.bf16.mxu0 0
      %462 = vmatpush1.bf16.msra.mxu0 0
      %463 = vmatprep.subr.bf16.mxu0 0
      %464 = vmatpush1.bf16.msra.mxu0 0
      %465 = vmatprep.subr.bf16.mxu0 0
      %466 = vmatpush1.bf16.msra.mxu0 0
      %467 = vmatprep.subr.bf16.mxu0 0
      %468 = vmatpush1.bf16.msra.mxu0 0
      %469 = vmatprep.subr.bf16.mxu0 0
      %470 = vmatpush1.bf16.msra.mxu0 0
      %471 = vmatprep.subr.bf16.mxu0 0
      %472 = vmatpush1.bf16.msra.mxu0 0
      %473 = vmatprep.subr.bf16.mxu0 0
      %474 = vmatpush1.bf16.msra.mxu0 0
      %475 = vmatprep.subr.bf16.mxu0 0
      %476 = vmatpush1.bf16.msra.mxu0 0
      %477 = vmatprep.subr.bf16.mxu0 0
      %478 = vmatpush1.bf16.msra.mxu0 0
      %479 = vmatprep.mubr.bf16.mxu0 0
      %480 = vmatmul.mubr.bf16.gmra.mrb[0].mxu0 %v442
      %v481 = vpop.f32.mrb[0].mxu0
      %v482 = vadd.f32 0.0, %v481
      %v483 = vpop.f32.mrb[0].mxu0
      %v484 = vpop.f32.mrb[0].mxu0
      %v485 = vadd.f32 0.0, %v484
      %v486 = vpop.f32.mrb[0].mxu0
      %487 = vmatprep.mubr.bf16.mxu0 0
      %488 = vmatmul.mubr.bf16.gmra.mrb[0].mxu0 %v445
      %v489 = vpop.f32.mrb[0].mxu0
      %v490 = vadd.f32 0.0, %v489
      %v491 = vpop.f32.mrb[0].mxu0
      %v492 = vpop.f32.mrb[0].mxu0
      %v493 = vpop.f32.mrb[0].mxu0
      %494 = vdwg.mxu0
      %v495 = vadd.f32 %v363, %v482
      %v496 = vadd.f32 %v366, %v485
      %v497 = vadd.f32 %v371, %v490
      %v498 = vld [vmem:[%s165] sm:$0x8]
      %s499 = scalar_lea.vmem %s1, 96
      %v500 = vld [vmem:[%s499] sm:$0xf]
      %v501 = vld [vmem:[%s499 + $0x4] sm:$0xf]
      %v502 = vld [vmem:[%s499 + $0x8] sm:$0xf]
      %v503 = vld [vmem:[%s499 + $0xc] sm:$0xf]
      %v504 = vld [vmem:[%s499 + $0x10] sm:$0xf]
      %v505 = vld [vmem:[%s499 + $0x14] sm:$0xf]
      %v506 = vld [vmem:[%s499 + $0x18] sm:$0xf]
      %v507 = vld [vmem:[%s499 + $0x1c] sm:$0xf]
      %v509 = vunpack.c.l.b16 %v498
      %v510 = vpack.c.b16 %v394, %v509
      %vm511 = vcmask 1044480
      %v512 = vrot.slane %v510, 3
      %v513 = vrot.slane %v398, 3
      %v514 = vsel %vm511, %v512, %v513
      %v523 = vunpack.c.l.b16 %v500
      %v524 = vunpack.c.l.b16 %v501
      %v525 = vunpack.c.l.b16 %v502
      %v526 = vunpack.c.l.b16 %v503
      %v527 = vunpack.c.l.b16 %v504
      %v528 = vunpack.c.l.b16 %v505
      %v529 = vunpack.c.l.b16 %v506
      %v530 = vunpack.c.l.b16 %v507
      %v531 = vpack.c.b16 %v524, %v523
      %v532 = vpack.c.b16 %v526, %v525
      %v533 = vpack.c.b16 %v528, %v527
      %v534 = vpack.c.b16 %v530, %v529
      %v540 = vsel %vm241, %v514, 0
      %v543 = vsel %vm241, %v513, 0
      %545 = vmatprep.subr.bf16.mxu0 0
      %546 = vmatpush1.bf16.msra.mxu0 %v531
      %547 = vmatprep.subr.bf16.mxu0 0
      %548 = vmatpush1.bf16.msra.mxu0 %v532
      %549 = vmatprep.subr.bf16.mxu0 0
      %550 = vmatpush1.bf16.msra.mxu0 %v533
      %551 = vmatprep.subr.bf16.mxu0 0
      %552 = vmatpush1.bf16.msra.mxu0 %v534
      %553 = vmatprep.subr.bf16.mxu0 0
      %554 = vmatpush1.bf16.msra.mxu0 0
      %555 = vmatprep.subr.bf16.mxu0 0
      %556 = vmatpush1.bf16.msra.mxu0 0
      %557 = vmatprep.subr.bf16.mxu0 0
      %558 = vmatpush1.bf16.msra.mxu0 0
      %559 = vmatprep.subr.bf16.mxu0 0
      %560 = vmatpush1.bf16.msra.mxu0 0
      %561 = vmatprep.subr.bf16.mxu0 0
      %562 = vmatpush1.bf16.msra.mxu0 0
      %563 = vmatprep.subr.bf16.mxu0 0
      %564 = vmatpush1.bf16.msra.mxu0 0
      %565 = vmatprep.subr.bf16.mxu0 0
      %566 = vmatpush1.bf16.msra.mxu0 0
      %567 = vmatprep.subr.bf16.mxu0 0
      %568 = vmatpush1.bf16.msra.mxu0 0
      %569 = vmatprep.subr.bf16.mxu0 0
      %570 = vmatpush1.bf16.msra.mxu0 0
      %571 = vmatprep.subr.bf16.mxu0 0
      %572 = vmatpush1.bf16.msra.mxu0 0
      %573 = vmatprep.subr.bf16.mxu0 0
      %574 = vmatpush1.bf16.msra.mxu0 0
      %575 = vmatprep.subr.bf16.mxu0 0
      %576 = vmatpush1.bf16.msra.mxu0 0
      %577 = vmatprep.mubr.bf16.mxu0 0
      %578 = vmatmul.mubr.bf16.gmra.mrb[0].mxu0 %v540
      %v579 = vpop.f32.mrb[0].mxu0
      %v580 = vadd.f32 0.0, %v579
      %v581 = vpop.f32.mrb[0].mxu0
      %v582 = vpop.f32.mrb[0].mxu0
      %v583 = vadd.f32 0.0, %v582
      %v584 = vpop.f32.mrb[0].mxu0
      %585 = vmatprep.mubr.bf16.mxu0 0
      %586 = vmatmul.mubr.bf16.gmra.mrb[0].mxu0 %v543
      %v587 = vpop.f32.mrb[0].mxu0
      %v588 = vadd.f32 0.0, %v587
      %v589 = vpop.f32.mrb[0].mxu0
      %v590 = vpop.f32.mrb[0].mxu0
      %v591 = vpop.f32.mrb[0].mxu0
      %592 = vdwg.mxu0
      %v593 = vadd.f32 %v495, %v580
      %v594 = vadd.f32 %v496, %v583
      %v595 = vadd.f32 %v497, %v588
      %v596 = vld [vmem:[%s2] sm:$0x1]
      %v597 = vlaneseq
      %v598 = vshrl.u32 %v597, 7
      %v599 = vsub.s32 0, %v598
      %v600 = vrot.slane %v596, %v599
      %v601 = vadd.f32 %v593, %v600
      %v602 = vadd.f32 %v594, %v600
      %v603 = vadd.f32 %v595, %v600
      %vm604 = vcmp.ge.f32.partialorder %v601, 0.0
      %vm605 = vcmp.ge.f32.partialorder %v602, 0.0
      %vm606 = vcmp.ge.f32.partialorder %v603, 0.0
      %v607 = vmul.f32 %v601, 0.3
      %v608 = vmul.f32 %v602, 0.3
      %v609 = vmul.f32 %v603, 0.3
      %v610 = vsel %vm604, %v601, %v607
      %v611 = vsel %vm605, %v602, %v608
      %v612 = vsel %vm606, %v603, %v609
      %v613 = vld [vmem:[%s2 + $0x1] sm:$0x1]
      %v614 = vlaneseq
      %v615 = vshrl.u32 %v614, 7
      %v616 = vsub.s32 0, %v615
      %v617 = vrot.slane %v613, %v616
      %v618 = vmul.f32 %v610, %v617
      %v619 = vmul.f32 %v611, %v617
      %v620 = vmul.f32 %v612, %v617
      %v621 = vld [vmem:[%s2 + $0x2] sm:$0x1]
      %v622 = vlaneseq
      %v623 = vshrl.u32 %v622, 7
      %v624 = vsub.s32 0, %v623
      %v625 = vrot.slane %v621, %v624
      %v626 = vadd.f32 %v618, %v625
      %v627 = vadd.f32 %v619, %v625
      %v628 = vadd.f32 %v620, %v625
      %v629 = vpack.c.bf16 %v627, %v626
      %v630 = vpack.c.bf16 %v628, %v628
      %v633 = vunpack.c.l.b16 %v629
      %v634 = vunpack.c.h.b16 %v629
      %v635 = vunpack.c.l.b16 %v630
      %v636 = vpack.c.b16 %v633, %v633
      %v637 = vpack.c.b16 %v634, %v634
      %v638 = vpack.c.b16 %v635, %v635
      %vm642 = vcmask 257024
      %643 = vst.msk [vmem:[%s170] sm:$0xf] %vm642, %v636
      %644 = vst.msk [vmem:[%s170 + $0x4] sm:$0xf] %vm642, %v637
      %vm645 = vcmask 254976
      %646 = vst.msk [vmem:[%s170 + $0x8] sm:$0x3] %vm645, %v638
      %p647 = scmp.lt.s32.totalorder %s14, 1
      %s648 = scalar_select %p647, %s14, 1
      %s649 = smul.addr %s648, 3
      %s650 = smul.addr %s649, 4
      %s651 = scalar_lea.vmem %s3, %s650
      // Predicated region
      $region33: #{encoder_forward.6} parent=31 // pred_check
        %p652 = pneg %p100
      $region34: #{encoder_forward.6} parent=31 // pred_check_branch
        %654 = sbr.rel (%p652) target = $region36
      $region35: #{encoder_forward.6} parent=31 // pred_region
        _
      $region36: #{encoder_forward.6} parent=31 // pred_fallthru
        _
    $region32: #{encoder_forward.6} parent=5 // pred_fallthru
      _
    %p655 = scmp.le.s32.totalorder 2, %s9
    // Predicated region
    $region37: #{encoder_forward.6} parent=5 // pred_check
      %p656 = pneg %p655
    $region38: #{encoder_forward.6} parent=5 // pred_check_branch
      %658 = sbr.rel (%p656) target = $region40
    $region39: #{encoder_forward.6} parent=5 // pred_region
      %s659 = ssub.s32 %s9, 2
      // Predicated region
      $region41: #{encoder_forward.6} parent=39 // pred_check
        %p660 = pneg %p106
      $region42: #{encoder_forward.6} parent=39 // pred_check_branch
        %662 = sbr.rel (%p660) target = $region44
      $region43: #{encoder_forward.6} parent=39 // pred_region
        %p663 = scmp.lt.s32.totalorder %s15, 1
        %s664 = scalar_select %p663, %s15, 1
        %s665 = smul.addr %s664, 3
        %s666 = smul.addr %s665, 4
        %s667 = scalar_lea.vmem %s3, %s666
      $region44: #{encoder_forward.6} parent=39 // pred_fallthru
        _
    $region40: #{encoder_forward.6} parent=5 // pred_fallthru
      _
  $region6: #{encoder_forward.6} parent=0 // loop_footer
    %s13 = sadd.s32 1, %s9
  $region7: #{encoder_forward.6} parent=0 // loop_footer_branch
    %8 = sbr.rel target = $region3
  $region8: #{encoder_forward.6} parent=0 // loop_exit
    _

// kernel: encoder_forward.7
$region0: #{encoder_forward.7}
  #allocation0 [shape = 'u32[]', space=smem, size = 0x4, offset = 0x4, fixed_abs, tag = 'smem constant byte address 0x4 - core index']
  #allocation1 [shape = 'u32[144,128]{1,0:T(1,128)}', space=vmem, size = 0x12000, scoped, tag = 'internal scratch']
  %s0 = inlined_call_operand.vmem [shape: bf16[2,12,128], index: 0, kind: input, shape index: {}]
  %s1 = inlined_call_operand.vmem [shape: bf16[4,128,64], index: 1, kind: input, shape index: {}]
  %s2 = inlined_call_operand.vmem [shape: f32[3,64], index: 2, kind: input, shape index: {}]
  %s3 = inlined_call_operand.vmem [shape: f32[2,6,64], index: 3, kind: output, shape index: {}]
  %s4 = sld [smem:[#allocation0]]
  $region45: #{encoder_forward.7} parent=0
    _
  %s6 = ssub.s32 1, %s4
  %s7 = scalar_select 0, %s6, %s4
  loop: start=0, step=1, limit=4
  $region2: #{encoder_forward.7} parent=0 // loop_pre_header
    _
  $region3: #{encoder_forward.7} parent=0 // loop_header
    %s9 = sphi 0, %s13
    %p10 = scmp.ge.s32.totalorder %s9, 4
    %s19 = sphi 0, %s21
    %s22 = sphi 0, %s19
    %s23 = sphi 0, %s22
    %s39 = sphi 0, %s23
    %s43 = sphi 0, %s43
    %s45 = sphi 0, %s43
    %s46 = sphi 0, %s45
    %s60 = sphi 0, %s46
    %s64 = sphi 0, %s64
    %s66 = sphi 0, %s64
    %s67 = sphi 0, %s66
    %s81 = sphi 0, %s67
    %s87 = sphi 0, %s89
    %s90 = sphi 0, %s87
    %s91 = sphi 0, %s90
    %s107 = sphi 0, %s91
  $region4: #{encoder_forward.7} parent=0 // loop_header_branch
    %12 = sbr.rel (%p10) target = $region8
  $region5: #{encoder_forward.7} parent=0 // loop_body
    %s14 = ssub.s32 %s9, 1
    %s15 = ssub.s32 %s9, 2
    %s16 = sadd.s32 %s9, 1
    %s17 = ssub.s32 %s9, %s16
    %p18 = scmp.eq.s32.totalorder %s17, 0
    %s20 = sadd.s32 %s19, 1
    %s21 = scalar_select %p18, %s19, %s20
    %p24 = pneg %p18
    %p25 = scmp.eq.s32.totalorder %s9, 1
    %p26 = por %p24, %p25
    %p27 = scmp.ne.s32.totalorder %s19, %s22
    %p28 = scmp.eq.s32.totalorder %s9, 0
    %p29 = por %p27, %p28
    %p30 = scmp.ne.s32.totalorder %s19, %s22
    %p31 = scmp.eq.s32.totalorder %s14, 1
    %p32 = por %p30, %p31
    %p33 = scmp.ne.s32.totalorder %s22, %s23
    %p34 = scmp.eq.s32.totalorder %s14, 0
    %p35 = por %p33, %p34
    %p36 = scmp.ne.s32.totalorder %s22, %s23
    %p37 = scmp.eq.s32.totalorder %s15, 1
    %p38 = por %p36, %p37
    %p40 = scmp.ne.s32.totalorder %s23, %s39
    %p41 = scmp.eq.s32.totalorder %s15, 0
    %p42 = por %p40, %p41
    %s44 = sadd.s32 %s43, 1
    %p47 = scmp.eq.s32.totalorder %s9, 1
    %p48 = scmp.ne.s32.totalorder %s43, %s45
    %p49 = scmp.eq.s32.totalorder %s9, 0
    %p50 = por %p48, %p49
    %p51 = scmp.ne.s32.totalorder %s43, %s45
    %p52 = scmp.eq.s32.totalorder %s14, 1
    %p53 = por %p51, %p52
    %p54 = scmp.ne.s32.totalorder %s45, %s46
    %p55 = scmp.eq.s32.totalorder %s14, 0
    %p56 = por %p54, %p55
    %p57 = scmp.ne.s32.totalorder %s45, %s46
    %p58 = scmp.eq.s32.totalorder %s15, 1
    %p59 = por %p57, %p58
    %p61 = scmp.ne.s32.totalorder %s46, %s60
    %p62 = scmp.eq.s32.totalorder %s15, 0
    %p63 = por %p61, %p62
    %s65 = sadd.s32 %s64, 1
    %p68 = scmp.eq.s32.totalorder %s9, 1
    %p69 = scmp.ne.s32.totalorder %s64, %s66
    %p70 = scmp.eq.s32.totalorder %s9, 0
    %p71 = por %p69, %p70
    %p72 = scmp.ne.s32.totalorder %s64, %s66
    %p73 = scmp.eq.s32.totalorder %s14, 1
    %p74 = por %p72, %p73
    %p75 = scmp.ne.s32.totalorder %s66, %s67
    %p76 = scmp.eq.s32.totalorder %s14, 0
    %p77 = por %p75, %p76
    %p78 = scmp.ne.s32.totalorder %s66, %s67
    %p79 = scmp.eq.s32.totalorder %s15, 1
    %p80 = por %p78, %p79
    %p82 = scmp.ne.s32.totalorder %s67, %s81
    %p83 = scmp.eq.s32.totalorder %s15, 0
    %p84 = por %p82, %p83
    %s85 = ssub.s32 %s9, %s16
    %p86 = scmp.eq.s32.totalorder %s85, 0
    %s88 = sadd.s32 %s87, 1
    %s89 = scalar_select %p86, %s87, %s88
    %p92 = pneg %p86
    %p93 = scmp.eq.s32.totalorder %s9, 1
    %p94 = por %p92, %p93
    %p95 = scmp.ne.s32.totalorder %s87, %s90
    %p96 = scmp.eq.s32.totalorder %s9, 0
    %p97 = por %p95, %p96
    %p98 = scmp.ne.s32.totalorder %s87, %s90
    %p99 = scmp.eq.s32.totalorder %s14, 1
    %p100 = por %p98, %p99
    %p101 = scmp.ne.s32.totalorder %s90, %s91
    %p102 = scmp.eq.s32.totalorder %s14, 0
    %p103 = por %p101, %p102
    %p104 = scmp.ne.s32.totalorder %s90, %s91
    %p105 = scmp.eq.s32.totalorder %s15, 1
    %p106 = por %p104, %p105
    %p108 = scmp.ne.s32.totalorder %s91, %s107
    %p109 = scmp.eq.s32.totalorder %s15, 0
    %p110 = por %p108, %p109
    %p111 = scmp.le.s32.totalorder 1, %s9
    %p112 = scmp.lt.s32.totalorder %s9, 3
    %p113 = pnand %p111, %p112
    %p114 = pneg %p113
    // Predicated region
    $region9: #{encoder_forward.7} parent=5 // pred_check
      _
    $region10: #{encoder_forward.7} parent=5 // pred_check_branch
      %116 = sbr.rel (%p113) target = $region12
    $region11: #{encoder_forward.7} parent=5 // pred_region
      %s117 = ssub.s32 %s9, 1
      // Predicated region
      $region13: #{encoder_forward.7} parent=11 // pred_check
        %p118 = pneg %p56
      $region14: #{encoder_forward.7} parent=11 // pred_check_branch
        %120 = sbr.rel (%p118) target = $region16
      $region15: #{encoder_forward.7} parent=11 // pred_region
        _
      $region16: #{encoder_forward.7} parent=11 // pred_fallthru
        _
      // Predicated region
      $region17: #{encoder_forward.7} parent=11 // pred_check
        %p121 = pneg %p77
      $region18: #{encoder_forward.7} parent=11 // pred_check_branch
        %123 = sbr.rel (%p121) target = $region20
      $region19: #{encoder_forward.7} parent=11 // pred_region
        _
      $region20: #{encoder_forward.7} parent=11 // pred_fallthru
        _
    $region12: #{encoder_forward.7} parent=5 // pred_fallthru
      _
    %p124 = scmp.lt.s32.totalorder %s9, 2
    // Predicated region
    $region21: #{encoder_forward.7} parent=5 // pred_check
      %p125 = pneg %p124
    $region22: #{encoder_forward.7} parent=5 // pred_check_branch
      %127 = sbr.rel (%p125) target = $region24
    $region23: #{encoder_forward.7} parent=5 // pred_region
      // Predicated region
      $region25: #{encoder_forward.7} parent=23 // pred_check
        %p128 = pneg %p29
      $region26: #{encoder_forward.7} parent=23 // pred_check_branch
        %130 = sbr.rel (%p128) target = $region28
      $region27: #{encoder_forward.7} parent=23 // pred_region
        %p131 = scmp.lt.s32.totalorder %s9, 1
        %s132 = scalar_select %p131, %s9, 1
        %s133 = smul.addr %s132, 2
        %s134 = smul.addr %s133, 4
        %s135 = scalar_lea.vmem %s0, %s134
      $region28: #{encoder_forward.7} parent=23 // pred_fallthru
        _
    $region24: #{encoder_forward.7} parent=5 // pred_fallthru
      _
    %p136 = scmp.le.s32.totalorder 1, %s9
    %p137 = scmp.lt.s32.totalorder %s9, 3
    %p138 = pnand %p136, %p137
    %p139 = pneg %p138
    // Predicated region
    $region29: #{encoder_forward.7} parent=5 // pred_check
      _
    $region30: #{encoder_forward.7} parent=5 // pred_check_branch
      %141 = sbr.rel (%p138) target = $region32
    $region31: #{encoder_forward.7} parent=5 // pred_region
      %s142 = ssub.s32 %s9, 1
      %p143 = scmp.lt.s32.totalorder %s14, 1
      %s144 = scalar_select %p143, %s14, 1
      %s145 = smul.addr %s144, 2
      %s146 = smul.addr %s145, 4
      %s147 = scalar_lea.vmem %s0, %s146
      %p148 = pneg %p35
      %p149 = pneg %p32
      %p150 = pneg %p56
      %p151 = pneg %p53
      %p152 = pneg %p77
      %p153 = pneg %p74
      %p154 = pneg %p103
      %p155 = pneg %p100
      %p156 = scmp.lt.s32.totalorder %s14, 1
      %s157 = scalar_select %p156, %s14, 1
      %s158 = smul.addr %s157, 8
      %s159 = scalar_lea.vmem %s3, %s158
      %p160 = scmp.lt.s32.totalorder %s14, 1
      %s161 = scalar_select %p160, %s14, 1
      %s162 = smul.addr %s161, 2
      %s163 = smul.addr %s162, 4
      %s164 = scalar_lea.vmem %s0, %s163
      %p165 = scmp.lt.s32.totalorder %s14, 1
      %s166 = scalar_select %p165, %s14, 1
      %s167 = smul.addr %s166, 8
      %s168 = scalar_lea.vmem %s3, %s167
      %v170 = vld [vmem:[%s164] sm:$0x7]
      %v171 = vld [vmem:[%s1] sm:$0xf]
      %v172 = vld [vmem:[%s1 + $0x4] sm:$0xf]
      %v173 = vld [vmem:[%s1 + $0x8] sm:$0xf]
      %v174 = vld [vmem:[%s1 + $0xc] sm:$0xf]
      %v175 = vld [vmem:[%s1 + $0x10] sm:$0xf]
      %v176 = vld [vmem:[%s1 + $0x14] sm:$0xf]
      %v177 = vld [vmem:[%s1 + $0x18] sm:$0xf]
      %v178 = vld [vmem:[%s1 + $0x1c] sm:$0xf]
      %v179 = vld [vmem:[%s1 + $0x20] sm:$0xf]
      %v180 = vld [vmem:[%s1 + $0x24] sm:$0xf]
      %v181 = vld [vmem:[%s1 + $0x28] sm:$0xf]
      %v182 = vld [vmem:[%s1 + $0x2c] sm:$0xf]
      %v183 = vld [vmem:[%s1 + $0x30] sm:$0xf]
      %v184 = vld [vmem:[%s1 + $0x34] sm:$0xf]
      %v185 = vld [vmem:[%s1 + $0x38] sm:$0xf]
      %v186 = vld [vmem:[%s1 + $0x3c] sm:$0xf]
      %v187 = vld [vmem:[%s164] sm:$0xf]
      %s188 = scalar_lea.vmem %s1, 64
      %v189 = vld [vmem:[%s188] sm:$0xf]
      %v190 = vld [vmem:[%s188 + $0x4] sm:$0xf]
      %v191 = vld [vmem:[%s188 + $0x8] sm:$0xf]
      %v192 = vld [vmem:[%s188 + $0xc] sm:$0xf]
      %v193 = vld [vmem:[%s188 + $0x10] sm:$0xf]
      %v194 = vld [vmem:[%s188 + $0x14] sm:$0xf]
      %v195 = vld [vmem:[%s188 + $0x18] sm:$0xf]
      %v196 = vld [vmem:[%s188 + $0x1c] sm:$0xf]
      %v197 = vld [vmem:[%s188 + $0x20] sm:$0xf]
      %v198 = vld [vmem:[%s188 + $0x24] sm:$0xf]
      %v199 = vld [vmem:[%s188 + $0x28] sm:$0xf]
      %v200 = vld [vmem:[%s188 + $0x2c] sm:$0xf]
      %v201 = vld [vmem:[%s188 + $0x30] sm:$0xf]
      %v202 = vld [vmem:[%s188 + $0x34] sm:$0xf]
      %v203 = vld [vmem:[%s188 + $0x38] sm:$0xf]
      %v204 = vld [vmem:[%s188 + $0x3c] sm:$0xf]
      %v206 = vunpack.c.l.b16 %v187
      %v207 = vpack.c.b16 %v206, %v206
      %v209 = vshrl.u32 %v207, 16
      %v211 = vshll.u32 %v207, 16
      %v213 = vrot.slane %v211, 1
      %v214 = vor.u32 %v209, %v213
      %v232 = vunpack.c.l.b16 %v189
      %v233 = vunpack.c.l.b16 %v190
      %v234 = vunpack.c.l.b16 %v191
      %v235 = vunpack.c.l.b16 %v192
      %v236 = vunpack.c.l.b16 %v193
      %v237 = vunpack.c.l.b16 %v194
      %v238 = vunpack.c.l.b16 %v195
      %v239 = vunpack.c.l.b16 %v196
      %v240 = vunpack.c.l.b16 %v197
      %v241 = vunpack.c.l.b16 %v198
      %v242 = vunpack.c.l.b16 %v199
      %v243 = vunpack.c.l.b16 %v200
      %v244 = vunpack.c.l.b16 %v201
      %v245 = vunpack.c.l.b16 %v202
      %v246 = vunpack.c.l.b16 %v203
      %v247 = vunpack.c.l.b16 %v204
      %v248 = vpack.c.b16 %v233, %v232
      %v249 = vpack.c.b16 %v235, %v234
      %v250 = vpack.c.b16 %v237, %v236
      %v251 = vpack.c.b16 %v239, %v238
      %v252 = vpack.c.b16 %v241, %v240
      %v253 = vpack.c.b16 %v243, %v242
      %v254 = vpack.c.b16 %v245, %v244
      %v255 = vpack.c.b16 %v247, %v246
      %264 = vmatprep.subr.bf16.mxu0 0
      %265 = vmatpush1.bf16.msra.mxu0 %v248
      %266 = vmatprep.subr.bf16.mxu0 0
      %267 = vmatpush1.bf16.msra.mxu0 %v249
      %268 = vmatprep.subr.bf16.mxu0 0
      %269 = vmatpush1.bf16.msra.mxu0 %v250
      %270 = vmatprep.subr.bf16.mxu0 0
      %271 = vmatpush1.bf16.msra.mxu0 %v251
      %272 = vmatprep.subr.bf16.mxu0 0
      %273 = vmatpush1.bf16.msra.mxu0 %v252
      %274 = vmatprep.subr.bf16.mxu0 0
      %275 = vmatpush1.bf16.msra.mxu0 %v253
      %276 = vmatprep.subr.bf16.mxu0 0
      %277 = vmatpush1.bf16.msra.mxu0 %v254
      %278 = vmatprep.subr.bf16.mxu0 0
      %279 = vmatpush1.bf16.msra.mxu0 %v255
      %280 = vmatprep.subr.bf16.mxu0 0
      %281 = vmatpush1.bf16.msra.mxu0 0
      %282 = vmatprep.subr.bf16.mxu0 0
      %283 = vmatpush1.bf16.msra.mxu0 0
      %284 = vmatprep.subr.bf16.mxu0 0
      %285 = vmatpush1.bf16.msra.mxu0 0
      %286 = vmatprep.subr.bf16.mxu0 0
      %287 = vmatpush1.bf16.msra.mxu0 0
      %288 = vmatprep.subr.bf16.mxu0 0
      %289 = vmatpush1.bf16.msra.mxu0 0
      %290 = vmatprep.subr.bf16.mxu0 0
      %291 = vmatpush1.bf16.msra.mxu0 0
      %292 = vmatprep.subr.bf16.mxu0 0
      %293 = vmatpush1.bf16.msra.mxu0 0
      %294 = vmatprep.subr.bf16.mxu0 0
      %295 = vmatpush1.bf16.msra.mxu0 0
      %296 = vmatprep.mubr.bf16.mxu0 0
      %297 = vmatmul.mubr.bf16.gmra.mrb[0].mxu0 %v214
      %v298 = vpop.f32.mrb[0].mxu0
      %v299 = vadd.f32 0.0, %v298
      %v300 = vpop.f32.mrb[0].mxu0
      %v301 = vpop.f32.mrb[0].mxu0
      %v302 = vpop.f32.mrb[0].mxu0
      %303 = vdwg.mxu0
      %v320 = vunpack.c.l.b16 %v171
      %v321 = vunpack.c.l.b16 %v172
      %v322 = vunpack.c.l.b16 %v173
      %v323 = vunpack.c.l.b16 %v174
      %v324 = vunpack.c.l.b16 %v175
      %v325 = vunpack.c.l.b16 %v176
      %v326 = vunpack.c.l.b16 %v177
      %v327 = vunpack.c.l.b16 %v178
      %v328 = vunpack.c.l.b16 %v179
      %v329 = vunpack.c.l.b16 %v180
      %v330 = vunpack.c.l.b16 %v181
      %v331 = vunpack.c.l.b16 %v182
      %v332 = vunpack.c.l.b16 %v183
      %v333 = vunpack.c.l.b16 %v184
      %v334 = vunpack.c.l.b16 %v185
      %v335 = vunpack.c.l.b16 %v186
      %v336 = vpack.c.b16 %v321, %v320
      %v337 = vpack.c.b16 %v323, %v322
      %v338 = vpack.c.b16 %v325, %v324
      %v339 = vpack.c.b16 %v327, %v326
      %v340 = vpack.c.b16 %v329, %v328
      %v341 = vpack.c.b16 %v331, %v330
      %v342 = vpack.c.b16 %v333, %v332
      %v343 = vpack.c.b16 %v335, %v334
      %352 = vmatprep.subr.bf16.mxu0 0
      %353 = vmatpush1.bf16.msra.mxu0 %v336
      %354 = vmatprep.subr.bf16.mxu0 0
      %355 = vmatpush1.bf16.msra.mxu0 %v337
      %356 = vmatprep.subr.bf16.mxu0 0
      %357 = vmatpush1.bf16.msra.mxu0 %v338
      %358 = vmatprep.subr.bf16.mxu0 0
      %359 = vmatpush1.bf16.msra.mxu0 %v339
      %360 = vmatprep.subr.bf16.mxu0 0
      %361 = vmatpush1.bf16.msra.mxu0 %v340
      %362 = vmatprep.subr.bf16.mxu0 0
      %363 = vmatpush1.bf16.msra.mxu0 %v341
      %364 = vmatprep.subr.bf16.mxu0 0
      %365 = vmatpush1.bf16.msra.mxu0 %v342
      %366 = vmatprep.subr.bf16.mxu0 0
      %367 = vmatpush1.bf16.msra.mxu0 %v343
      %368 = vmatprep.subr.bf16.mxu0 0
      %369 = vmatpush1.bf16.msra.mxu0 0
      %370 = vmatprep.subr.bf16.mxu0 0
      %371 = vmatpush1.bf16.msra.mxu0 0
      %372 = vmatprep.subr.bf16.mxu0 0
      %373 = vmatpush1.bf16.msra.mxu0 0
      %374 = vmatprep.subr.bf16.mxu0 0
      %375 = vmatpush1.bf16.msra.mxu0 0
      %376 = vmatprep.subr.bf16.mxu0 0
      %377 = vmatpush1.bf16.msra.mxu0 0
      %378 = vmatprep.subr.bf16.mxu0 0
      %379 = vmatpush1.bf16.msra.mxu0 0
      %380 = vmatprep.subr.bf16.mxu0 0
      %381 = vmatpush1.bf16.msra.mxu0 0
      %382 = vmatprep.subr.bf16.mxu0 0
      %383 = vmatpush1.bf16.msra.mxu0 0
      %384 = vmatprep.mubr.bf16.mxu0 0
      %385 = vmatmul.mubr.bf16.gmra.mrb[0].mxu0 %v170
      %v386 = vpop.f32.mrb[0].mxu0
      %v387 = vadd.f32 %v299, %v386
      %v388 = vpop.f32.mrb[0].mxu0
      %v389 = vpop.f32.mrb[0].mxu0
      %v390 = vpop.f32.mrb[0].mxu0
      %391 = vdwg.mxu0
      %v392 = vld [vmem:[%s164] sm:$0xe]
      %v393 = vld [vmem:[%s164 + $0x4] sm:$0x1]
      %s394 = scalar_lea.vmem %s1, 128
      %v395 = vld [vmem:[%s394] sm:$0xf]
      %v396 = vld [vmem:[%s394 + $0x4] sm:$0xf]
      %v397 = vld [vmem:[%s394 + $0x8] sm:$0xf]
      %v398 = vld [vmem:[%s394 + $0xc] sm:$0xf]
      %v399 = vld [vmem:[%s394 + $0x10] sm:$0xf]
      %v400 = vld [vmem:[%s394 + $0x14] sm:$0xf]
      %v401 = vld [vmem:[%s394 + $0x18] sm:$0xf]
      %v402 = vld [vmem:[%s394 + $0x1c] sm:$0xf]
      %v403 = vld [vmem:[%s394 + $0x20] sm:$0xf]
      %v404 = vld [vmem:[%s394 + $0x24] sm:$0xf]
      %v405 = vld [vmem:[%s394 + $0x28] sm:$0xf]
      %v406 = vld [vmem:[%s394 + $0x2c] sm:$0xf]
      %v407 = vld [vmem:[%s394 + $0x30] sm:$0xf]
      %v408 = vld [vmem:[%s394 + $0x34] sm:$0xf]
      %v409 = vld [vmem:[%s394 + $0x38] sm:$0xf]
      %v410 = vld [vmem:[%s394 + $0x3c] sm:$0xf]
      %v413 = vunpack.c.l.b16 %v392
      %v414 = vunpack.c.l.b16 %v393
      %v415 = vpack.c.b16 %v414, %v413
      %v417 = vshrl.u32 %v415, 16
      %v419 = vrot.slane %v417, 1
      %v420 = vshll.u32 %v415, 16
      %v422 = vrot.slane %v420, 2
      %v423 = vor.u32 %v419, %v422
      %v441 = vunpack.c.l.b16 %v395
      %v442 = vunpack.c.l.b16 %v396
      %v443 = vunpack.c.l.b16 %v397
      %v444 = vunpack.c.l.b16 %v398
      %v445 = vunpack.c.l.b16 %v399
      %v446 = vunpack.c.l.b16 %v400
      %v447 = vunpack.c.l.b16 %v401
      %v448 = vunpack.c.l.b16 %v402
      %v449 = vunpack.c.l.b16 %v403
      %v450 = vunpack.c.l.b16 %v404
      %v451 = vunpack.c.l.b16 %v405
      %v452 = vunpack.c.l.b16 %v406
      %v453 = vunpack.c.l.b16 %v407
      %v454 = vunpack.c.l.b16 %v408
      %v455 = vunpack.c.l.b16 %v409
      %v456 = vunpack.c.l.b16 %v410
      %v457 = vpack.c.b16 %v442, %v441
      %v458 = vpack.c.b16 %v444, %v443
      %v459 = vpack.c.b16 %v446, %v445
      %v460 = vpack.c.b16 %v448, %v447
      %v461 = vpack.c.b16 %v450, %v449
      %v462 = vpack.c.b16 %v452, %v451
      %v463 = vpack.c.b16 %v454, %v453
      %v464 = vpack.c.b16 %v456, %v455
      %473 = vmatprep.subr.bf16.mxu0 0
      %474 = vmatpush1.bf16.msra.mxu0 %v457
      %475 = vmatprep.subr.bf16.mxu0 0
      %476 = vmatpush1.bf16.msra.mxu0 %v458
      %477 = vmatprep.subr.bf16.mxu0 0
      %478 = vmatpush1.bf16.msra.mxu0 %v459
      %479 = vmatprep.subr.bf16.mxu0 0
      %480 = vmatpush1.bf16.msra.mxu0 %v460
      %481 = vmatprep.subr.bf16.mxu0 0
      %482 = vmatpush1.bf16.msra.mxu0 %v461
      %483 = vmatprep.subr.bf16.mxu0 0
      %484 = vmatpush1.bf16.msra.mxu0 %v462
      %485 = vmatprep.subr.bf16.mxu0 0
      %486 = vmatpush1.bf16.msra.mxu0 %v463
      %487 = vmatprep.subr.bf16.mxu0 0
      %488 = vmatpush1.bf16.msra.mxu0 %v464
      %489 = vmatprep.subr.bf16.mxu0 0
      %490 = vmatpush1.bf16.msra.mxu0 0
      %491 = vmatprep.subr.bf16.mxu0 0
      %492 = vmatpush1.bf16.msra.mxu0 0
      %493 = vmatprep.subr.bf16.mxu0 0
      %494 = vmatpush1.bf16.msra.mxu0 0
      %495 = vmatprep.subr.bf16.mxu0 0
      %496 = vmatpush1.bf16.msra.mxu0 0
      %497 = vmatprep.subr.bf16.mxu0 0
      %498 = vmatpush1.bf16.msra.mxu0 0
      %499 = vmatprep.subr.bf16.mxu0 0
      %500 = vmatpush1.bf16.msra.mxu0 0
      %501 = vmatprep.subr.bf16.mxu0 0
      %502 = vmatpush1.bf16.msra.mxu0 0
      %503 = vmatprep.subr.bf16.mxu0 0
      %504 = vmatpush1.bf16.msra.mxu0 0
      %505 = vmatprep.mubr.bf16.mxu0 0
      %506 = vmatmul.mubr.bf16.gmra.mrb[0].mxu0 %v423
      %v507 = vpop.f32.mrb[0].mxu0
      %v508 = vadd.f32 0.0, %v507
      %v509 = vpop.f32.mrb[0].mxu0
      %v510 = vpop.f32.mrb[0].mxu0
      %v511 = vpop.f32.mrb[0].mxu0
      %512 = vdwg.mxu0
      %v513 = vadd.f32 %v387, %v508
      %v514 = vld [vmem:[%s164] sm:$0xc]
      %s515 = scalar_lea.vmem %s1, 192
      %v516 = vld [vmem:[%s515] sm:$0xf]
      %v517 = vld [vmem:[%s515 + $0x4] sm:$0xf]
      %v518 = vld [vmem:[%s515 + $0x8] sm:$0xf]
      %v519 = vld [vmem:[%s515 + $0xc] sm:$0xf]
      %v520 = vld [vmem:[%s515 + $0x10] sm:$0xf]
      %v521 = vld [vmem:[%s515 + $0x14] sm:$0xf]
      %v522 = vld [vmem:[%s515 + $0x18] sm:$0xf]
      %v523 = vld [vmem:[%s515 + $0x1c] sm:$0xf]
      %v524 = vld [vmem:[%s515 + $0x20] sm:$0xf]
      %v525 = vld [vmem:[%s515 + $0x24] sm:$0xf]
      %v526 = vld [vmem:[%s515 + $0x28] sm:$0xf]
      %v527 = vld [vmem:[%s515 + $0x2c] sm:$0xf]
      %v528 = vld [vmem:[%s515 + $0x30] sm:$0xf]
      %v529 = vld [vmem:[%s515 + $0x34] sm:$0xf]
      %v530 = vld [vmem:[%s515 + $0x38] sm:$0xf]
      %v531 = vld [vmem:[%s515 + $0x3c] sm:$0xf]
      %v533 = vunpack.c.l.b16 %v514
      %v534 = vpack.c.b16 %v414, %v533
      %v535 = vrot.slane %v534, 2
      %v553 = vunpack.c.l.b16 %v516
      %v554 = vunpack.c.l.b16 %v517
      %v555 = vunpack.c.l.b16 %v518
      %v556 = vunpack.c.l.b16 %v519
      %v557 = vunpack.c.l.b16 %v520
      %v558 = vunpack.c.l.b16 %v521
      %v559 = vunpack.c.l.b16 %v522
      %v560 = vunpack.c.l.b16 %v523
      %v561 = vunpack.c.l.b16 %v524
      %v562 = vunpack.c.l.b16 %v525
      %v563 = vunpack.c.l.b16 %v526
      %v564 = vunpack.c.l.b16 %v527
      %v565 = vunpack.c.l.b16 %v528
      %v566 = vunpack.c.l.b16 %v529
      %v567 = vunpack.c.l.b16 %v530
      %v568 = vunpack.c.l.b16 %v531
      %v569 = vpack.c.b16 %v554, %v553
      %v570 = vpack.c.b16 %v556, %v555
      %v571 = vpack.c.b16 %v558, %v557
      %v572 = vpack.c.b16 %v560, %v559
      %v573 = vpack.c.b16 %v562, %v561
      %v574 = vpack.c.b16 %v564, %v563
      %v575 = vpack.c.b16 %v566, %v565
      %v576 = vpack.c.b16 %v568, %v567
      %585 = vmatprep.subr.bf16.mxu0 0
      %586 = vmatpush1.bf16.msra.mxu0 %v569
      %587 = vmatprep.subr.bf16.mxu0 0
      %588 = vmatpush1.bf16.msra.mxu0 %v570
      %589 = vmatprep.subr.bf16.mxu0 0
      %590 = vmatpush1.bf16.msra.mxu0 %v571
      %591 = vmatprep.subr.bf16.mxu0 0
      %592 = vmatpush1.bf16.msra.mxu0 %v572
      %593 = vmatprep.subr.bf16.mxu0 0
      %594 = vmatpush1.bf16.msra.mxu0 %v573
      %595 = vmatprep.subr.bf16.mxu0 0
      %596 = vmatpush1.bf16.msra.mxu0 %v574
      %597 = vmatprep.subr.bf16.mxu0 0
      %598 = vmatpush1.bf16.msra.mxu0 %v575
      %599 = vmatprep.subr.bf16.mxu0 0
      %600 = vmatpush1.bf16.msra.mxu0 %v576
      %601 = vmatprep.subr.bf16.mxu0 0
      %602 = vmatpush1.bf16.msra.mxu0 0
      %603 = vmatprep.subr.bf16.mxu0 0
      %604 = vmatpush1.bf16.msra.mxu0 0
      %605 = vmatprep.subr.bf16.mxu0 0
      %606 = vmatpush1.bf16.msra.mxu0 0
      %607 = vmatprep.subr.bf16.mxu0 0
      %608 = vmatpush1.bf16.msra.mxu0 0
      %609 = vmatprep.subr.bf16.mxu0 0
      %610 = vmatpush1.bf16.msra.mxu0 0
      %611 = vmatprep.subr.bf16.mxu0 0
      %612 = vmatpush1.bf16.msra.mxu0 0
      %613 = vmatprep.subr.bf16.mxu0 0
      %614 = vmatpush1.bf16.msra.mxu0 0
      %615 = vmatprep.subr.bf16.mxu0 0
      %616 = vmatpush1.bf16.msra.mxu0 0
      %617 = vmatprep.mubr.bf16.mxu0 0
      %618 = vmatmul.mubr.bf16.gmra.mrb[0].mxu0 %v535
      %v619 = vpop.f32.mrb[0].mxu0
      %v620 = vadd.f32 0.0, %v619
      %v621 = vpop.f32.mrb[0].mxu0
      %v622 = vpop.f32.mrb[0].mxu0
      %v623 = vpop.f32.mrb[0].mxu0
      %624 = vdwg.mxu0
      %v625 = vadd.f32 %v513, %v620
      %v626 = vld [vmem:[%s2] sm:$0x1]
      %v627 = vlaneseq
      %v628 = vshrl.u32 %v627, 7
      %v629 = vsub.s32 0, %v628
      %v630 = vrot.slane %v626, %v629
      %v631 = vadd.f32 %v625, %v630
      %vm632 = vcmp.ge.f32.partialorder %v631, 0.0
      %v633 = vmul.f32 %v631, 0.3
      %v634 = vsel %vm632, %v631, %v633
      %v635 = vld [vmem:[%s2 + $0x1] sm:$0x1]
      %v636 = vlaneseq
      %v637 = vshrl.u32 %v636, 7
      %v638 = vsub.s32 0, %v637
      %v639 = vrot.slane %v635, %v638
      %v640 = vmul.f32 %v634, %v639
      %v641 = vld [vmem:[%s2 + $0x2] sm:$0x1]
      %v642 = vlaneseq
      %v643 = vshrl.u32 %v642, 7
      %v644 = vsub.s32 0, %v643
      %v645 = vrot.slane %v641, %v644
      %v646 = vadd.f32 %v640, %v645
      %vm647 = vcmask 521216
      %648 = vst.msk [vmem:[%s168] sm:$0x3f] %vm647, %v646
      %p649 = scmp.lt.s32.totalorder %s14, 1
      %s650 = scalar_select %p649, %s14, 1
      %s651 = smul.addr %s650, 8
      %s652 = scalar_lea.vmem %s3, %s651
      // Predicated region
      $region33: #{encoder_forward.7} parent=31 // pred_check
        %p653 = pneg %p100
      $region34: #{encoder_forward.7} parent=31 // pred_check_branch
        %655 = sbr.rel (%p653) target = $region36
      $region35: #{encoder_forward.7} parent=31 // pred_region
        _
      $region36: #{encoder_forward.7} parent=31 // pred_fallthru
        _
    $region32: #{encoder_forward.7} parent=5 // pred_fallthru
      _
    %p656 = scmp.le.s32.totalorder 2, %s9
    // Predicated region
    $region37: #{encoder_forward.7} parent=5 // pred_check
      %p657 = pneg %p656
    $region38: #{encoder_forward.7} parent=5 // pred_check_branch
      %659 = sbr.rel (%p657) target = $region40
    $region39: #{encoder_forward.7} parent=5 // pred_region
      %s660 = ssub.s32 %s9, 2
      // Predicated region
      $region41: #{encoder_forward.7} parent=39 // pred_check
        %p661 = pneg %p106
      $region42: #{encoder_forward.7} parent=39 // pred_check_branch
        %663 = sbr.rel (%p661) target = $region44
      $region43: #{encoder_forward.7} parent=39 // pred_region
        %p664 = scmp.lt.s32.totalorder %s15, 1
        %s665 = scalar_select %p664, %s15, 1
        %s666 = smul.addr %s665, 8
        %s667 = scalar_lea.vmem %s3, %s666
      $region44: #{encoder_forward.7} parent=39 // pred_fallthru
        _
    $region40: #{encoder_forward.7} parent=5 // pred_fallthru
      _
  $region6: #{encoder_forward.7} parent=0 // loop_footer
    %s13 = sadd.s32 1, %s9
  $region7: #{encoder_forward.7} parent=0 // loop_footer_branch
    %8 = sbr.rel target = $region3
  $region8: #{encoder_forward.7} parent=0 // loop_exit
    _

</llo_original>
